<compile_context>
chip_gen: v5e
topology: v5e:2x2
jax: 0.10.0
libtpu: 0.0.40
codegen_flags: <defaults>
</compile_context>

<pallas_src>
import jax
import jax.numpy as jnp
from jax.experimental import pallas as pl
from jax.experimental.pallas import tpu as pltpu


def basic_block_kernel(x_ref, w1_ref, b1_ref, w2_ref, b2_ref, out_ref, pad_ref):
    # x_ref/out_ref: (Bt, H, W, Cp) bf16   (batch tile per grid step)
    # w1_ref/w2_ref: (3, 3*Cp, Cp) bf16    packed [dh, dw*Cp + ci, co], BN folded
    # b1_ref/b2_ref: (1, Cp) f32           folded BN bias
    # pad_ref:       (H+2, W, 3*Cp) bf16   scratch: row-padded, width-shifted LHS
    Bt, H, W, Cp = x_ref.shape
    K = 3 * Cp
    pdt = pad_ref.dtype

    # Top/bottom halo rows: zero once per grid step.  They are never written
    # below, but scratch persists across grid steps and is core-private under
    # megacore, so do not gate this on program_id == 0.
    zrow = jnp.zeros((1, W, K), pdt)
    pad_ref[0:1, :, :] = zrow
    pad_ref[H + 1:H + 2, :, :] = zrow

    zcol = jnp.zeros((H, 1, Cp), pdt)

    def stage_shifted(act):
        """Store the 3 width-shifts of act ((H,W,Cp) bf16) into pad_ref.

        Mapping: pad_ref[1+h, w, dw*Cp + ci] == in_pad[1+h, w+dw, ci], where
        in_pad is the (H+2, W+2, Cp) zero-padded activation.  Column shifts
        are done in-register so every store is sublane/lane aligned.
        """
        left = jnp.concatenate([zcol, act[:, :W - 1, :]], axis=1)    # dw = 0
        right = jnp.concatenate([act[:, 1:, :], zcol], axis=1)       # dw = 2
        pad_ref[1:H + 1, :, 0:Cp] = left
        pad_ref[1:H + 1, :, Cp:2 * Cp] = act                         # dw = 1
        pad_ref[1:H + 1, :, 2 * Cp:K] = right

    def conv3x3(w_ref):
        """3x3 conv as 3 MXU matmuls (one per dh), K = 3*Cp, f32 accumulation."""
        acc = None
        for dh in range(3):
            # Row slice at a W-multiple sublane offset + merge of (H, W) with
            # W % 8 == 0 -> layout-preserving (zero-copy) LHS view.
            lhs = pad_ref[dh:dh + H, :, :].reshape(H * W, K)
            c = jnp.dot(lhs, w_ref[dh], preferred_element_type=jnp.float32)
            acc = c if acc is None else acc + c
        return acc                                                   # (H*W, Cp) f32

    for b in range(Bt):
        # --- conv1 (3x3, pad=1) + folded bn1 + relu -------------------------
        stage_shifted(x_ref[b])
        h1 = jnp.maximum(conv3x3(w1_ref) + b1_ref[...], 0.0)         # f32

        # --- conv2 (3x3, pad=1) + folded bn2 --------------------------------
        # conv1 result goes straight back into the LHS scratch in bf16.
        stage_shifted(h1.reshape(H, W, Cp).astype(pdt))
        h2 = conv3x3(w2_ref) + b2_ref[...]

        # --- residual add (re-read x; identity path) + relu -----------------
        resid = x_ref[b].reshape(H * W, Cp).astype(jnp.float32)
        out = jnp.maximum(h2 + resid, 0.0)
        out_ref[b] = out.reshape(H, W, Cp).astype(out_ref.dtype)


def _pick_batch_tile(n, cap=8):
    """Largest divisor of n that is <= cap, preferring grid length >= 2
    (so v7x's two TensorCores both get work)."""
    best_any, best_grid2 = 1, None
    for d in range(1, min(n, cap) + 1):
        if n % d == 0:
            best_any = d
            if n // d >= 2:
                best_grid2 = d
    return best_grid2 if best_grid2 is not None else best_any


def basic_block_pallas(x_nchw, params, eps=1e-5, batch_tile=None):
    """Fused BasicBlock forward. x_nchw: (N, C, H, W) f32, NCHW like PyTorch."""
    (w1, g1, be1, m1, v1, w2, g2, be2, m2, v2) = params
    N, Cin, H, W = x_nchw.shape
    planes = w1.shape[-1]
    # identity residual path requires inplanes == planes (stride=1, no downsample)
    assert Cin == planes, "BasicBlock identity add requires inplanes == planes"
    assert W % 8 == 0, "W must be a multiple of 8 for layout-preserving reshapes"

    Cp = max(128, ((max(Cin, planes) + 127) // 128) * 128)   # lane-dense channels
    Bt = batch_tile if batch_tile is not None else _pick_batch_tile(N)

    def fold_and_pack(w, gamma, beta, mean, var, cin, cout):
        scale = gamma / jnp.sqrt(var + eps)
        bias = beta - mean * scale
        wf = w * scale                                       # (3,3,cin,cout) * (cout,)
        wp = jnp.zeros((3, 3, Cp, Cp), jnp.float32)
        wp = wp.at[:, :, :cin, :cout].set(wf)
        wp = wp.reshape(3, 3 * Cp, Cp).astype(jnp.bfloat16)  # [dh, dw*Cp+ci, co]
        bp = jnp.zeros((1, Cp), jnp.float32).at[0, :cout].set(bias)
        return wp, bp

    w1p, b1p = fold_and_pack(w1, g1, be1, m1, v1, Cin, planes)
    w2p, b2p = fold_and_pack(w2, g2, be2, m2, v2, planes, planes)

    # Glue: NCHW -> NHWC + bf16 cast (one fused pass), zero-pad channels to Cp.
    # For chained blocks, keep activations in this NHWC/Cp-padded bf16 form.
    x_nhwc = jnp.transpose(x_nchw, (0, 2, 3, 1)).astype(jnp.bfloat16)
    x_pad = jnp.pad(x_nhwc, ((0, 0), (0, 0), (0, 0), (0, Cp - Cin)))

    out = pl.pallas_call(
        basic_block_kernel,
        out_shape=jax.ShapeDtypeStruct((N, H, W, Cp), jnp.bfloat16),
        grid_spec=pltpu.PrefetchScalarGridSpec(
            num_scalar_prefetch=0,
            grid=(N // Bt,),
            in_specs=[
                pl.BlockSpec((Bt, H, W, Cp), lambda n: (n, 0, 0, 0)),   # x tile
                pl.BlockSpec((3, 3 * Cp, Cp), lambda n: (0, 0, 0)),     # w1 (resident)
                pl.BlockSpec((1, Cp), lambda n: (0, 0)),                # b1
                pl.BlockSpec((3, 3 * Cp, Cp), lambda n: (0, 0, 0)),     # w2 (resident)
                pl.BlockSpec((1, Cp), lambda n: (0, 0)),                # b2
            ],
            out_specs=pl.BlockSpec((Bt, H, W, Cp), lambda n: (n, 0, 0, 0)),
            scratch_shapes=[pltpu.VMEM((H + 2, W, 3 * Cp), jnp.bfloat16)],
        ),
        compiler_params=pltpu.CompilerParams(
            dimension_semantics=("parallel",),       # shard batch tiles across TCs
            # Comfortably above actual usage (~2 MiB at CIFAR scale, Bt<=8);
            # raise on v5e/v6e (128 MiB VMEM) if a much larger Bt is desired.
            vmem_limit_bytes=32 * 1024 * 1024,
        ),
    )(x_pad, w1p, b1p, w2p, b2p)

    out = out[..., :planes].astype(jnp.float32)      # drop lane padding, f32 out
    return jnp.transpose(out, (0, 3, 1, 2))          # glue: NHWC -> NCHW


def make_params(key, inplanes, planes):
    """Deterministic synthetic parameters matching BasicBlock.__init__ shapes."""
    ks = jax.random.split(key, 4)

    def bn(k, c):
        kg, kb, km, kv = jax.random.split(k, 4)
        gamma = 1.0 + 0.1 * jax.random.normal(kg, (c,), jnp.float32)
        beta = 0.1 * jax.random.normal(kb, (c,), jnp.float32)
        mean = 0.1 * jax.random.normal(km, (c,), jnp.float32)
        var = jnp.abs(jax.random.normal(kv, (c,), jnp.float32)) + 0.5
        return gamma, beta, mean, var

    # conv3x3 weights in HWIO layout (torch: (out, in, 3, 3) <-> (3, 3, in, out))
    w1 = 0.1 * jax.random.normal(ks[0], (3, 3, inplanes, planes), jnp.float32)
    g1, be1, m1, v1 = bn(ks[1], planes)
    w2 = 0.1 * jax.random.normal(ks[2], (3, 3, planes, planes), jnp.float32)
    g2, be2, m2, v2 = bn(ks[3], planes)
    return (w1, g1, be1, m1, v1, w2, g2, be2, m2, v2)


def basic_block_reference(x_nchw, params, eps=1e-5):
    """Pure-JAX f32 reference matching the PyTorch module in eval mode."""
    (w1, g1, be1, m1, v1, w2, g2, be2, m2, v2) = params
    x = jnp.transpose(x_nchw, (0, 2, 3, 1))
    h = jax.lax.conv_general_dilated(
        x, w1, window_strides=(1, 1), padding=((1, 1), (1, 1)),
        dimension_numbers=('NHWC', 'HWIO', 'NHWC'))
    h = (h - m1) * (g1 / jnp.sqrt(v1 + eps)) + be1
    h = jnp.maximum(h, 0.0)
    h = jax.lax.conv_general_dilated(
        h, w2, window_strides=(1, 1), padding=((1, 1), (1, 1)),
        dimension_numbers=('NHWC', 'HWIO', 'NHWC'))
    h = (h - m2) * (g2 / jnp.sqrt(v2 + eps)) + be2
    out = jnp.maximum(h + x, 0.0)
    return jnp.transpose(out, (0, 3, 1, 2))


if __name__ == "__main__":
    key = jax.random.PRNGKey(0)
    kx, kp = jax.random.split(key)

    # Small shapes consistent with BasicBlock (inplanes == planes, stride=1).
    # N=4 exercises batch tiling (B_tile=2, grid=(2,)).
    N, C, H, W = 4, 4, 16, 16
    x = jax.random.normal(kx, (N, C, H, W), jnp.float32)
    params = make_params(kp, inplanes=C, planes=C)

    out = jax.block_until_ready(basic_block_pallas(x, params))
    ref = basic_block_reference(x, params)

    assert out.shape == (N, C, H, W)
    max_err = float(jnp.max(jnp.abs(out - ref)))
    # bf16 activations + bf16 MXU operands (f32 accumulation) -> small rounding
    # vs the f32 reference.
    assert jnp.allclose(out, ref, atol=5e-2, rtol=5e-2), max_err

    print("KERNEL_OK")
</pallas_src>

<mosaic_0001>
module attributes {stable_mosaic.version = 11 : i64} {
  func.func @basic_block_kernel(%arg0: i32, %arg1: memref<2x16x16x128xbf16, #tpu.memory_space<vmem>>, %arg2: memref<3x384x128xbf16, #tpu.memory_space<vmem>>, %arg3: memref<1x128xf32, #tpu.memory_space<vmem>>, %arg4: memref<3x384x128xbf16, #tpu.memory_space<vmem>>, %arg5: memref<1x128xf32, #tpu.memory_space<vmem>>, %arg6: memref<2x16x16x128xbf16, #tpu.memory_space<vmem>>, %arg7: memref<18x16x384xbf16, #tpu.memory_space<vmem>>) attributes {dimension_semantics = [#tpu.dimension_semantics<parallel>], iteration_bounds = array<i64: 2>, scalar_prefetch = 0 : i64, scratch_operands = 1 : i64, tpu.core_type = #tpu.core_type<tc>, window_params = [{transform_indices = @transform_0, window_bounds = array<i64: 2, 16, 16, 128>}, {pipeline_mode = #tpu.pipeline_mode<synchronous>, transform_indices = @transform_1, window_bounds = array<i64: 3, 384, 128>}, {pipeline_mode = #tpu.pipeline_mode<synchronous>, transform_indices = @transform_2, window_bounds = array<i64: 1, 128>}, {pipeline_mode = #tpu.pipeline_mode<synchronous>, transform_indices = @transform_3, window_bounds = array<i64: 3, 384, 128>}, {pipeline_mode = #tpu.pipeline_mode<synchronous>, transform_indices = @transform_4, window_bounds = array<i64: 1, 128>}, {transform_indices = @transform_5, window_bounds = array<i64: 2, 16, 16, 128>}]} {
    %cst = arith.constant 0.000000e+00 : bf16
    %0 = vector.broadcast %cst : bf16 to vector<1x16x384xbf16>
    %c0 = arith.constant 0 : index
    %c0_0 = arith.constant 0 : index
    %c0_1 = arith.constant 0 : index
    %1 = vector.load %arg7[%c0, %c0_0, %c0_1] : memref<18x16x384xbf16, #tpu.memory_space<vmem>>, vector<1x16x384xbf16>
    tpu.vector_store %arg7[%c0, %c0_0, %c0_1], %0 {strides = array<i32>} : memref<18x16x384xbf16, #tpu.memory_space<vmem>>, vector<1x16x384xbf16>,
    %c17 = arith.constant 17 : index
    %c0_2 = arith.constant 0 : index
    %c0_3 = arith.constant 0 : index
    %2 = vector.load %arg7[%c17, %c0_2, %c0_3] : memref<18x16x384xbf16, #tpu.memory_space<vmem>>, vector<1x16x384xbf16>
    tpu.vector_store %arg7[%c17, %c0_2, %c0_3], %0 {strides = array<i32>} : memref<18x16x384xbf16, #tpu.memory_space<vmem>>, vector<1x16x384xbf16>,
    %cst_4 = arith.constant 0.000000e+00 : bf16
    %3 = vector.broadcast %cst_4 : bf16 to vector<16x1x128xbf16>
    %c0_5 = arith.constant 0 : index
    %c0_6 = arith.constant 0 : index
    %c0_7 = arith.constant 0 : index
    %c0_8 = arith.constant 0 : index
    %4 = vector.load %arg1[%c0_5, %c0_6, %c0_7, %c0_8] : memref<2x16x16x128xbf16, #tpu.memory_space<vmem>>, vector<1x16x16x128xbf16>
    %5 = vector.shape_cast %4 : vector<1x16x16x128xbf16> to vector<16x16x128xbf16>
    %6 = vector.extract_strided_slice %5 {offsets = [0, 0, 0], sizes = [16, 15, 128], strides = [1, 1, 1]} : vector<16x16x128xbf16> to vector<16x15x128xbf16>
    %7 = tpu.concatenate %3, %6 in 1 : vector<16x1x128xbf16>, vector<16x15x128xbf16> -> vector<16x16x128xbf16>
    %8 = vector.extract_strided_slice %5 {offsets = [0, 1, 0], sizes = [16, 15, 128], strides = [1, 1, 1]} : vector<16x16x128xbf16> to vector<16x15x128xbf16>
    %9 = tpu.concatenate %8, %3 in 1 : vector<16x15x128xbf16>, vector<16x1x128xbf16> -> vector<16x16x128xbf16>
    %c1 = arith.constant 1 : index
    %c0_9 = arith.constant 0 : index
    %c0_10 = arith.constant 0 : index
    %10 = vector.load %arg7[%c1, %c0_9, %c0_10] : memref<18x16x384xbf16, #tpu.memory_space<vmem>>, vector<16x16x128xbf16>
    tpu.vector_store %arg7[%c1, %c0_9, %c0_10], %7 {strides = array<i32>} : memref<18x16x384xbf16, #tpu.memory_space<vmem>>, vector<16x16x128xbf16>,
    %c1_11 = arith.constant 1 : index
    %c0_12 = arith.constant 0 : index
    %c128 = arith.constant 128 : index
    %11 = vector.load %arg7[%c1_11, %c0_12, %c128] : memref<18x16x384xbf16, #tpu.memory_space<vmem>>, vector<16x16x128xbf16>
    tpu.vector_store %arg7[%c1_11, %c0_12, %c128], %5 {strides = array<i32>} : memref<18x16x384xbf16, #tpu.memory_space<vmem>>, vector<16x16x128xbf16>,
    %c1_13 = arith.constant 1 : index
    %c0_14 = arith.constant 0 : index
    %c256 = arith.constant 256 : index
    %12 = vector.load %arg7[%c1_13, %c0_14, %c256] : memref<18x16x384xbf16, #tpu.memory_space<vmem>>, vector<16x16x128xbf16>
    tpu.vector_store %arg7[%c1_13, %c0_14, %c256], %9 {strides = array<i32>} : memref<18x16x384xbf16, #tpu.memory_space<vmem>>, vector<16x16x128xbf16>,
    %c0_15 = arith.constant 0 : index
    %c0_16 = arith.constant 0 : index
    %c0_17 = arith.constant 0 : index
    %13 = vector.load %arg7[%c0_15, %c0_16, %c0_17] : memref<18x16x384xbf16, #tpu.memory_space<vmem>>, vector<16x16x384xbf16>
    %14 = vector.shape_cast %13 : vector<16x16x384xbf16> to vector<256x384xbf16>
    %c0_18 = arith.constant 0 : index
    %c0_19 = arith.constant 0 : index
    %c0_20 = arith.constant 0 : index
    %15 = vector.load %arg2[%c0_18, %c0_19, %c0_20] : memref<3x384x128xbf16, #tpu.memory_space<vmem>>, vector<1x384x128xbf16>
    %16 = vector.shape_cast %15 : vector<1x384x128xbf16> to vector<384x128xbf16>
    %cst_21 = arith.constant dense<0.000000e+00> : vector<256x128xf32>
    %17 = tpu.matmul %14, %16, %cst_21 {dimension_numbers = #tpu.dot_dimension_numbers<[1], [0], [0], [1], [0, 0, 1, 1], [], []>} : vector<256x384xbf16>, vector<384x128xbf16>, vector<256x128xf32> -> vector<256x128xf32>
    %c1_22 = arith.constant 1 : index
    %c0_23 = arith.constant 0 : index
    %c0_24 = arith.constant 0 : index
    %18 = vector.load %arg7[%c1_22, %c0_23, %c0_24] : memref<18x16x384xbf16, #tpu.memory_space<vmem>>, vector<16x16x384xbf16>
    %19 = vector.shape_cast %18 : vector<16x16x384xbf16> to vector<256x384xbf16>
    %c1_25 = arith.constant 1 : index
    %c0_26 = arith.constant 0 : index
    %c0_27 = arith.constant 0 : index
    %20 = vector.load %arg2[%c1_25, %c0_26, %c0_27] : memref<3x384x128xbf16, #tpu.memory_space<vmem>>, vector<1x384x128xbf16>
    %21 = vector.shape_cast %20 : vector<1x384x128xbf16> to vector<384x128xbf16>
    %cst_28 = arith.constant dense<0.000000e+00> : vector<256x128xf32>
    %22 = tpu.matmul %19, %21, %cst_28 {dimension_numbers = #tpu.dot_dimension_numbers<[1], [0], [0], [1], [0, 0, 1, 1], [], []>} : vector<256x384xbf16>, vector<384x128xbf16>, vector<256x128xf32> -> vector<256x128xf32>
    %23 = arith.addf %17, %22 : vector<256x128xf32>
    %c2 = arith.constant 2 : index
    %c0_29 = arith.constant 0 : index
    %c0_30 = arith.constant 0 : index
    %24 = vector.load %arg7[%c2, %c0_29, %c0_30] : memref<18x16x384xbf16, #tpu.memory_space<vmem>>, vector<16x16x384xbf16>
    %25 = vector.shape_cast %24 : vector<16x16x384xbf16> to vector<256x384xbf16>
    %c2_31 = arith.constant 2 : index
    %c0_32 = arith.constant 0 : index
    %c0_33 = arith.constant 0 : index
    %26 = vector.load %arg2[%c2_31, %c0_32, %c0_33] : memref<3x384x128xbf16, #tpu.memory_space<vmem>>, vector<1x384x128xbf16>
    %27 = vector.shape_cast %26 : vector<1x384x128xbf16> to vector<384x128xbf16>
    %cst_34 = arith.constant dense<0.000000e+00> : vector<256x128xf32>
    %28 = tpu.matmul %25, %27, %cst_34 {dimension_numbers = #tpu.dot_dimension_numbers<[1], [0], [0], [1], [0, 0, 1, 1], [], []>} : vector<256x384xbf16>, vector<384x128xbf16>, vector<256x128xf32> -> vector<256x128xf32>
    %29 = arith.addf %23, %28 : vector<256x128xf32>
    %c0_35 = arith.constant 0 : index
    %c0_36 = arith.constant 0 : index
    %30 = vector.load %arg3[%c0_35, %c0_36] : memref<1x128xf32, #tpu.memory_space<vmem>>, vector<1x128xf32>
    %31 = vector.broadcast %30 : vector<1x128xf32> to vector<256x128xf32>
    %32 = arith.addf %29, %31 : vector<256x128xf32>
    %cst_37 = arith.constant 0.000000e+00 : f32
    %33 = vector.broadcast %cst_37 : f32 to vector<256x128xf32>
    %34 = arith.maximumf %32, %33 : vector<256x128xf32>
    %35 = vector.shape_cast %34 : vector<256x128xf32> to vector<16x16x128xf32>
    %36 = arith.truncf %35 : vector<16x16x128xf32> to vector<16x16x128xbf16>
    %37 = vector.extract_strided_slice %36 {offsets = [0, 0, 0], sizes = [16, 15, 128], strides = [1, 1, 1]} : vector<16x16x128xbf16> to vector<16x15x128xbf16>
    %38 = tpu.concatenate %3, %37 in 1 : vector<16x1x128xbf16>, vector<16x15x128xbf16> -> vector<16x16x128xbf16>
    %39 = vector.extract_strided_slice %36 {offsets = [0, 1, 0], sizes = [16, 15, 128], strides = [1, 1, 1]} : vector<16x16x128xbf16> to vector<16x15x128xbf16>
    %40 = tpu.concatenate %39, %3 in 1 : vector<16x15x128xbf16>, vector<16x1x128xbf16> -> vector<16x16x128xbf16>
    %c1_38 = arith.constant 1 : index
    %c0_39 = arith.constant 0 : index
    %c0_40 = arith.constant 0 : index
    %41 = vector.load %arg7[%c1_38, %c0_39, %c0_40] : memref<18x16x384xbf16, #tpu.memory_space<vmem>>, vector<16x16x128xbf16>
    tpu.vector_store %arg7[%c1_38, %c0_39, %c0_40], %38 {strides = array<i32>} : memref<18x16x384xbf16, #tpu.memory_space<vmem>>, vector<16x16x128xbf16>,
    %c1_41 = arith.constant 1 : index
    %c0_42 = arith.constant 0 : index
    %c128_43 = arith.constant 128 : index
    %42 = vector.load %arg7[%c1_41, %c0_42, %c128_43] : memref<18x16x384xbf16, #tpu.memory_space<vmem>>, vector<16x16x128xbf16>
    tpu.vector_store %arg7[%c1_41, %c0_42, %c128_43], %36 {strides = array<i32>} : memref<18x16x384xbf16, #tpu.memory_space<vmem>>, vector<16x16x128xbf16>,
    %c1_44 = arith.constant 1 : index
    %c0_45 = arith.constant 0 : index
    %c256_46 = arith.constant 256 : index
    %43 = vector.load %arg7[%c1_44, %c0_45, %c256_46] : memref<18x16x384xbf16, #tpu.memory_space<vmem>>, vector<16x16x128xbf16>
    tpu.vector_store %arg7[%c1_44, %c0_45, %c256_46], %40 {strides = array<i32>} : memref<18x16x384xbf16, #tpu.memory_space<vmem>>, vector<16x16x128xbf16>,
    %c0_47 = arith.constant 0 : index
    %c0_48 = arith.constant 0 : index
    %c0_49 = arith.constant 0 : index
    %44 = vector.load %arg7[%c0_47, %c0_48, %c0_49] : memref<18x16x384xbf16, #tpu.memory_space<vmem>>, vector<16x16x384xbf16>
    %45 = vector.shape_cast %44 : vector<16x16x384xbf16> to vector<256x384xbf16>
    %c0_50 = arith.constant 0 : index
    %c0_51 = arith.constant 0 : index
    %c0_52 = arith.constant 0 : index
    %46 = vector.load %arg4[%c0_50, %c0_51, %c0_52] : memref<3x384x128xbf16, #tpu.memory_space<vmem>>, vector<1x384x128xbf16>
    %47 = vector.shape_cast %46 : vector<1x384x128xbf16> to vector<384x128xbf16>
    %cst_53 = arith.constant dense<0.000000e+00> : vector<256x128xf32>
    %48 = tpu.matmul %45, %47, %cst_53 {dimension_numbers = #tpu.dot_dimension_numbers<[1], [0], [0], [1], [0, 0, 1, 1], [], []>} : vector<256x384xbf16>, vector<384x128xbf16>, vector<256x128xf32> -> vector<256x128xf32>
    %c1_54 = arith.constant 1 : index
    %c0_55 = arith.constant 0 : index
    %c0_56 = arith.constant 0 : index
    %49 = vector.load %arg7[%c1_54, %c0_55, %c0_56] : memref<18x16x384xbf16, #tpu.memory_space<vmem>>, vector<16x16x384xbf16>
    %50 = vector.shape_cast %49 : vector<16x16x384xbf16> to vector<256x384xbf16>
    %c1_57 = arith.constant 1 : index
    %c0_58 = arith.constant 0 : index
    %c0_59 = arith.constant 0 : index
    %51 = vector.load %arg4[%c1_57, %c0_58, %c0_59] : memref<3x384x128xbf16, #tpu.memory_space<vmem>>, vector<1x384x128xbf16>
    %52 = vector.shape_cast %51 : vector<1x384x128xbf16> to vector<384x128xbf16>
    %cst_60 = arith.constant dense<0.000000e+00> : vector<256x128xf32>
    %53 = tpu.matmul %50, %52, %cst_60 {dimension_numbers = #tpu.dot_dimension_numbers<[1], [0], [0], [1], [0, 0, 1, 1], [], []>} : vector<256x384xbf16>, vector<384x128xbf16>, vector<256x128xf32> -> vector<256x128xf32>
    %54 = arith.addf %48, %53 : vector<256x128xf32>
    %c2_61 = arith.constant 2 : index
    %c0_62 = arith.constant 0 : index
    %c0_63 = arith.constant 0 : index
    %55 = vector.load %arg7[%c2_61, %c0_62, %c0_63] : memref<18x16x384xbf16, #tpu.memory_space<vmem>>, vector<16x16x384xbf16>
    %56 = vector.shape_cast %55 : vector<16x16x384xbf16> to vector<256x384xbf16>
    %c2_64 = arith.constant 2 : index
    %c0_65 = arith.constant 0 : index
    %c0_66 = arith.constant 0 : index
    %57 = vector.load %arg4[%c2_64, %c0_65, %c0_66] : memref<3x384x128xbf16, #tpu.memory_space<vmem>>, vector<1x384x128xbf16>
    %58 = vector.shape_cast %57 : vector<1x384x128xbf16> to vector<384x128xbf16>
    %cst_67 = arith.constant dense<0.000000e+00> : vector<256x128xf32>
    %59 = tpu.matmul %56, %58, %cst_67 {dimension_numbers = #tpu.dot_dimension_numbers<[1], [0], [0], [1], [0, 0, 1, 1], [], []>} : vector<256x384xbf16>, vector<384x128xbf16>, vector<256x128xf32> -> vector<256x128xf32>
    %60 = arith.addf %54, %59 : vector<256x128xf32>
    %c0_68 = arith.constant 0 : index
    %c0_69 = arith.constant 0 : index
    %61 = vector.load %arg5[%c0_68, %c0_69] : memref<1x128xf32, #tpu.memory_space<vmem>>, vector<1x128xf32>
    %62 = vector.broadcast %61 : vector<1x128xf32> to vector<256x128xf32>
    %63 = arith.addf %60, %62 : vector<256x128xf32>
    %c0_70 = arith.constant 0 : index
    %c0_71 = arith.constant 0 : index
    %c0_72 = arith.constant 0 : index
    %c0_73 = arith.constant 0 : index
    %64 = vector.load %arg1[%c0_70, %c0_71, %c0_72, %c0_73] : memref<2x16x16x128xbf16, #tpu.memory_space<vmem>>, vector<1x16x16x128xbf16>
    %65 = vector.shape_cast %64 : vector<1x16x16x128xbf16> to vector<16x16x128xbf16>
    %66 = vector.shape_cast %65 : vector<16x16x128xbf16> to vector<256x128xbf16>
    %67 = arith.extf %66 : vector<256x128xbf16> to vector<256x128xf32>
    %68 = arith.addf %63, %67 : vector<256x128xf32>
    %cst_74 = arith.constant 0.000000e+00 : f32
    %69 = vector.broadcast %cst_74 : f32 to vector<256x128xf32>
    %70 = arith.maximumf %68, %69 : vector<256x128xf32>
    %71 = vector.shape_cast %70 : vector<256x128xf32> to vector<16x16x128xf32>
    %72 = arith.truncf %71 : vector<16x16x128xf32> to vector<16x16x128xbf16>
    %c0_75 = arith.constant 0 : index
    %c0_76 = arith.constant 0 : index
    %c0_77 = arith.constant 0 : index
    %c0_78 = arith.constant 0 : index
    %73 = vector.load %arg6[%c0_75, %c0_76, %c0_77, %c0_78] : memref<2x16x16x128xbf16, #tpu.memory_space<vmem>>, vector<1x16x16x128xbf16>
    %74 = vector.shape_cast %73 : vector<1x16x16x128xbf16> to vector<16x16x128xbf16>
    %75 = vector.shape_cast %72 : vector<16x16x128xbf16> to vector<1x16x16x128xbf16>
    tpu.vector_store %arg6[%c0_75, %c0_76, %c0_77, %c0_78], %75 {strides = array<i32>} : memref<2x16x16x128xbf16, #tpu.memory_space<vmem>>, vector<1x16x16x128xbf16>,
    %c1_79 = arith.constant 1 : index
    %c0_80 = arith.constant 0 : index
    %c0_81 = arith.constant 0 : index
    %c0_82 = arith.constant 0 : index
    %76 = vector.load %arg1[%c1_79, %c0_80, %c0_81, %c0_82] : memref<2x16x16x128xbf16, #tpu.memory_space<vmem>>, vector<1x16x16x128xbf16>
    %77 = vector.shape_cast %76 : vector<1x16x16x128xbf16> to vector<16x16x128xbf16>
    %78 = vector.extract_strided_slice %77 {offsets = [0, 0, 0], sizes = [16, 15, 128], strides = [1, 1, 1]} : vector<16x16x128xbf16> to vector<16x15x128xbf16>
    %79 = tpu.concatenate %3, %78 in 1 : vector<16x1x128xbf16>, vector<16x15x128xbf16> -> vector<16x16x128xbf16>
    %80 = vector.extract_strided_slice %77 {offsets = [0, 1, 0], sizes = [16, 15, 128], strides = [1, 1, 1]} : vector<16x16x128xbf16> to vector<16x15x128xbf16>
    %81 = tpu.concatenate %80, %3 in 1 : vector<16x15x128xbf16>, vector<16x1x128xbf16> -> vector<16x16x128xbf16>
    %c1_83 = arith.constant 1 : index
    %c0_84 = arith.constant 0 : index
    %c0_85 = arith.constant 0 : index
    %82 = vector.load %arg7[%c1_83, %c0_84, %c0_85] : memref<18x16x384xbf16, #tpu.memory_space<vmem>>, vector<16x16x128xbf16>
    tpu.vector_store %arg7[%c1_83, %c0_84, %c0_85], %79 {strides = array<i32>} : memref<18x16x384xbf16, #tpu.memory_space<vmem>>, vector<16x16x128xbf16>,
    %c1_86 = arith.constant 1 : index
    %c0_87 = arith.constant 0 : index
    %c128_88 = arith.constant 128 : index
    %83 = vector.load %arg7[%c1_86, %c0_87, %c128_88] : memref<18x16x384xbf16, #tpu.memory_space<vmem>>, vector<16x16x128xbf16>
    tpu.vector_store %arg7[%c1_86, %c0_87, %c128_88], %77 {strides = array<i32>} : memref<18x16x384xbf16, #tpu.memory_space<vmem>>, vector<16x16x128xbf16>,
    %c1_89 = arith.constant 1 : index
    %c0_90 = arith.constant 0 : index
    %c256_91 = arith.constant 256 : index
    %84 = vector.load %arg7[%c1_89, %c0_90, %c256_91] : memref<18x16x384xbf16, #tpu.memory_space<vmem>>, vector<16x16x128xbf16>
    tpu.vector_store %arg7[%c1_89, %c0_90, %c256_91], %81 {strides = array<i32>} : memref<18x16x384xbf16, #tpu.memory_space<vmem>>, vector<16x16x128xbf16>,
    %c0_92 = arith.constant 0 : index
    %c0_93 = arith.constant 0 : index
    %c0_94 = arith.constant 0 : index
    %85 = vector.load %arg7[%c0_92, %c0_93, %c0_94] : memref<18x16x384xbf16, #tpu.memory_space<vmem>>, vector<16x16x384xbf16>
    %86 = vector.shape_cast %85 : vector<16x16x384xbf16> to vector<256x384xbf16>
    %c0_95 = arith.constant 0 : index
    %c0_96 = arith.constant 0 : index
    %c0_97 = arith.constant 0 : index
    %87 = vector.load %arg2[%c0_95, %c0_96, %c0_97] : memref<3x384x128xbf16, #tpu.memory_space<vmem>>, vector<1x384x128xbf16>
    %88 = vector.shape_cast %87 : vector<1x384x128xbf16> to vector<384x128xbf16>
    %cst_98 = arith.constant dense<0.000000e+00> : vector<256x128xf32>
    %89 = tpu.matmul %86, %88, %cst_98 {dimension_numbers = #tpu.dot_dimension_numbers<[1], [0], [0], [1], [0, 0, 1, 1], [], []>} : vector<256x384xbf16>, vector<384x128xbf16>, vector<256x128xf32> -> vector<256x128xf32>
    %c1_99 = arith.constant 1 : index
    %c0_100 = arith.constant 0 : index
    %c0_101 = arith.constant 0 : index
    %90 = vector.load %arg7[%c1_99, %c0_100, %c0_101] : memref<18x16x384xbf16, #tpu.memory_space<vmem>>, vector<16x16x384xbf16>
    %91 = vector.shape_cast %90 : vector<16x16x384xbf16> to vector<256x384xbf16>
    %c1_102 = arith.constant 1 : index
    %c0_103 = arith.constant 0 : index
    %c0_104 = arith.constant 0 : index
    %92 = vector.load %arg2[%c1_102, %c0_103, %c0_104] : memref<3x384x128xbf16, #tpu.memory_space<vmem>>, vector<1x384x128xbf16>
    %93 = vector.shape_cast %92 : vector<1x384x128xbf16> to vector<384x128xbf16>
    %cst_105 = arith.constant dense<0.000000e+00> : vector<256x128xf32>
    %94 = tpu.matmul %91, %93, %cst_105 {dimension_numbers = #tpu.dot_dimension_numbers<[1], [0], [0], [1], [0, 0, 1, 1], [], []>} : vector<256x384xbf16>, vector<384x128xbf16>, vector<256x128xf32> -> vector<256x128xf32>
    %95 = arith.addf %89, %94 : vector<256x128xf32>
    %c2_106 = arith.constant 2 : index
    %c0_107 = arith.constant 0 : index
    %c0_108 = arith.constant 0 : index
    %96 = vector.load %arg7[%c2_106, %c0_107, %c0_108] : memref<18x16x384xbf16, #tpu.memory_space<vmem>>, vector<16x16x384xbf16>
    %97 = vector.shape_cast %96 : vector<16x16x384xbf16> to vector<256x384xbf16>
    %c2_109 = arith.constant 2 : index
    %c0_110 = arith.constant 0 : index
    %c0_111 = arith.constant 0 : index
    %98 = vector.load %arg2[%c2_109, %c0_110, %c0_111] : memref<3x384x128xbf16, #tpu.memory_space<vmem>>, vector<1x384x128xbf16>
    %99 = vector.shape_cast %98 : vector<1x384x128xbf16> to vector<384x128xbf16>
    %cst_112 = arith.constant dense<0.000000e+00> : vector<256x128xf32>
    %100 = tpu.matmul %97, %99, %cst_112 {dimension_numbers = #tpu.dot_dimension_numbers<[1], [0], [0], [1], [0, 0, 1, 1], [], []>} : vector<256x384xbf16>, vector<384x128xbf16>, vector<256x128xf32> -> vector<256x128xf32>
    %101 = arith.addf %95, %100 : vector<256x128xf32>
    %c0_113 = arith.constant 0 : index
    %c0_114 = arith.constant 0 : index
    %102 = vector.load %arg3[%c0_113, %c0_114] : memref<1x128xf32, #tpu.memory_space<vmem>>, vector<1x128xf32>
    %103 = vector.broadcast %102 : vector<1x128xf32> to vector<256x128xf32>
    %104 = arith.addf %101, %103 : vector<256x128xf32>
    %cst_115 = arith.constant 0.000000e+00 : f32
    %105 = vector.broadcast %cst_115 : f32 to vector<256x128xf32>
    %106 = arith.maximumf %104, %105 : vector<256x128xf32>
    %107 = vector.shape_cast %106 : vector<256x128xf32> to vector<16x16x128xf32>
    %108 = arith.truncf %107 : vector<16x16x128xf32> to vector<16x16x128xbf16>
    %109 = vector.extract_strided_slice %108 {offsets = [0, 0, 0], sizes = [16, 15, 128], strides = [1, 1, 1]} : vector<16x16x128xbf16> to vector<16x15x128xbf16>
    %110 = tpu.concatenate %3, %109 in 1 : vector<16x1x128xbf16>, vector<16x15x128xbf16> -> vector<16x16x128xbf16>
    %111 = vector.extract_strided_slice %108 {offsets = [0, 1, 0], sizes = [16, 15, 128], strides = [1, 1, 1]} : vector<16x16x128xbf16> to vector<16x15x128xbf16>
    %112 = tpu.concatenate %111, %3 in 1 : vector<16x15x128xbf16>, vector<16x1x128xbf16> -> vector<16x16x128xbf16>
    %c1_116 = arith.constant 1 : index
    %c0_117 = arith.constant 0 : index
    %c0_118 = arith.constant 0 : index
    %113 = vector.load %arg7[%c1_116, %c0_117, %c0_118] : memref<18x16x384xbf16, #tpu.memory_space<vmem>>, vector<16x16x128xbf16>
    tpu.vector_store %arg7[%c1_116, %c0_117, %c0_118], %110 {strides = array<i32>} : memref<18x16x384xbf16, #tpu.memory_space<vmem>>, vector<16x16x128xbf16>,
    %c1_119 = arith.constant 1 : index
    %c0_120 = arith.constant 0 : index
    %c128_121 = arith.constant 128 : index
    %114 = vector.load %arg7[%c1_119, %c0_120, %c128_121] : memref<18x16x384xbf16, #tpu.memory_space<vmem>>, vector<16x16x128xbf16>
    tpu.vector_store %arg7[%c1_119, %c0_120, %c128_121], %108 {strides = array<i32>} : memref<18x16x384xbf16, #tpu.memory_space<vmem>>, vector<16x16x128xbf16>,
    %c1_122 = arith.constant 1 : index
    %c0_123 = arith.constant 0 : index
    %c256_124 = arith.constant 256 : index
    %115 = vector.load %arg7[%c1_122, %c0_123, %c256_124] : memref<18x16x384xbf16, #tpu.memory_space<vmem>>, vector<16x16x128xbf16>
    tpu.vector_store %arg7[%c1_122, %c0_123, %c256_124], %112 {strides = array<i32>} : memref<18x16x384xbf16, #tpu.memory_space<vmem>>, vector<16x16x128xbf16>,
    %c0_125 = arith.constant 0 : index
    %c0_126 = arith.constant 0 : index
    %c0_127 = arith.constant 0 : index
    %116 = vector.load %arg7[%c0_125, %c0_126, %c0_127] : memref<18x16x384xbf16, #tpu.memory_space<vmem>>, vector<16x16x384xbf16>
    %117 = vector.shape_cast %116 : vector<16x16x384xbf16> to vector<256x384xbf16>
    %c0_128 = arith.constant 0 : index
    %c0_129 = arith.constant 0 : index
    %c0_130 = arith.constant 0 : index
    %118 = vector.load %arg4[%c0_128, %c0_129, %c0_130] : memref<3x384x128xbf16, #tpu.memory_space<vmem>>, vector<1x384x128xbf16>
    %119 = vector.shape_cast %118 : vector<1x384x128xbf16> to vector<384x128xbf16>
    %cst_131 = arith.constant dense<0.000000e+00> : vector<256x128xf32>
    %120 = tpu.matmul %117, %119, %cst_131 {dimension_numbers = #tpu.dot_dimension_numbers<[1], [0], [0], [1], [0, 0, 1, 1], [], []>} : vector<256x384xbf16>, vector<384x128xbf16>, vector<256x128xf32> -> vector<256x128xf32>
    %c1_132 = arith.constant 1 : index
    %c0_133 = arith.constant 0 : index
    %c0_134 = arith.constant 0 : index
    %121 = vector.load %arg7[%c1_132, %c0_133, %c0_134] : memref<18x16x384xbf16, #tpu.memory_space<vmem>>, vector<16x16x384xbf16>
    %122 = vector.shape_cast %121 : vector<16x16x384xbf16> to vector<256x384xbf16>
    %c1_135 = arith.constant 1 : index
    %c0_136 = arith.constant 0 : index
    %c0_137 = arith.constant 0 : index
    %123 = vector.load %arg4[%c1_135, %c0_136, %c0_137] : memref<3x384x128xbf16, #tpu.memory_space<vmem>>, vector<1x384x128xbf16>
    %124 = vector.shape_cast %123 : vector<1x384x128xbf16> to vector<384x128xbf16>
    %cst_138 = arith.constant dense<0.000000e+00> : vector<256x128xf32>
    %125 = tpu.matmul %122, %124, %cst_138 {dimension_numbers = #tpu.dot_dimension_numbers<[1], [0], [0], [1], [0, 0, 1, 1], [], []>} : vector<256x384xbf16>, vector<384x128xbf16>, vector<256x128xf32> -> vector<256x128xf32>
    %126 = arith.addf %120, %125 : vector<256x128xf32>
    %c2_139 = arith.constant 2 : index
    %c0_140 = arith.constant 0 : index
    %c0_141 = arith.constant 0 : index
    %127 = vector.load %arg7[%c2_139, %c0_140, %c0_141] : memref<18x16x384xbf16, #tpu.memory_space<vmem>>, vector<16x16x384xbf16>
    %128 = vector.shape_cast %127 : vector<16x16x384xbf16> to vector<256x384xbf16>
    %c2_142 = arith.constant 2 : index
    %c0_143 = arith.constant 0 : index
    %c0_144 = arith.constant 0 : index
    %129 = vector.load %arg4[%c2_142, %c0_143, %c0_144] : memref<3x384x128xbf16, #tpu.memory_space<vmem>>, vector<1x384x128xbf16>
    %130 = vector.shape_cast %129 : vector<1x384x128xbf16> to vector<384x128xbf16>
    %cst_145 = arith.constant dense<0.000000e+00> : vector<256x128xf32>
    %131 = tpu.matmul %128, %130, %cst_145 {dimension_numbers = #tpu.dot_dimension_numbers<[1], [0], [0], [1], [0, 0, 1, 1], [], []>} : vector<256x384xbf16>, vector<384x128xbf16>, vector<256x128xf32> -> vector<256x128xf32>
    %132 = arith.addf %126, %131 : vector<256x128xf32>
    %c0_146 = arith.constant 0 : index
    %c0_147 = arith.constant 0 : index
    %133 = vector.load %arg5[%c0_146, %c0_147] : memref<1x128xf32, #tpu.memory_space<vmem>>, vector<1x128xf32>
    %134 = vector.broadcast %133 : vector<1x128xf32> to vector<256x128xf32>
    %135 = arith.addf %132, %134 : vector<256x128xf32>
    %c1_148 = arith.constant 1 : index
    %c0_149 = arith.constant 0 : index
    %c0_150 = arith.constant 0 : index
    %c0_151 = arith.constant 0 : index
    %136 = vector.load %arg1[%c1_148, %c0_149, %c0_150, %c0_151] : memref<2x16x16x128xbf16, #tpu.memory_space<vmem>>, vector<1x16x16x128xbf16>
    %137 = vector.shape_cast %136 : vector<1x16x16x128xbf16> to vector<16x16x128xbf16>
    %138 = vector.shape_cast %137 : vector<16x16x128xbf16> to vector<256x128xbf16>
    %139 = arith.extf %138 : vector<256x128xbf16> to vector<256x128xf32>
    %140 = arith.addf %135, %139 : vector<256x128xf32>
    %cst_152 = arith.constant 0.000000e+00 : f32
    %141 = vector.broadcast %cst_152 : f32 to vector<256x128xf32>
    %142 = arith.maximumf %140, %141 : vector<256x128xf32>
    %143 = vector.shape_cast %142 : vector<256x128xf32> to vector<16x16x128xf32>
    %144 = arith.truncf %143 : vector<16x16x128xf32> to vector<16x16x128xbf16>
    %c1_153 = arith.constant 1 : index
    %c0_154 = arith.constant 0 : index
    %c0_155 = arith.constant 0 : index
    %c0_156 = arith.constant 0 : index
    %145 = vector.load %arg6[%c1_153, %c0_154, %c0_155, %c0_156] : memref<2x16x16x128xbf16, #tpu.memory_space<vmem>>, vector<1x16x16x128xbf16>
    %146 = vector.shape_cast %145 : vector<1x16x16x128xbf16> to vector<16x16x128xbf16>
    %147 = vector.shape_cast %144 : vector<16x16x128xbf16> to vector<1x16x16x128xbf16>
    tpu.vector_store %arg6[%c1_153, %c0_154, %c0_155, %c0_156], %147 {strides = array<i32>} : memref<2x16x16x128xbf16, #tpu.memory_space<vmem>>, vector<1x16x16x128xbf16>,
    return
  }
  func.func @transform_0(%arg0: i32) -> (i32, i32, i32, i32) {
    %c0_i32 = arith.constant 0 : i32
    %c0_i32_0 = arith.constant 0 : i32
    %c0_i32_1 = arith.constant 0 : i32
    %c0_i32_2 = arith.constant 0 : i32
    return %arg0, %c0_i32, %c0_i32_0, %c0_i32_1 : i32, i32, i32, i32
  }
  func.func @transform_1(%arg0: i32) -> (i32, i32, i32) {
    %c0_i32 = arith.constant 0 : i32
    %c0_i32_0 = arith.constant 0 : i32
    %c0_i32_1 = arith.constant 0 : i32
    %c0_i32_2 = arith.constant 0 : i32
    return %c0_i32, %c0_i32_0, %c0_i32_1 : i32, i32, i32
  }
  func.func @transform_2(%arg0: i32) -> (i32, i32) {
    %c0_i32 = arith.constant 0 : i32
    %c0_i32_0 = arith.constant 0 : i32
    %c0_i32_1 = arith.constant 0 : i32
    return %c0_i32, %c0_i32_0 : i32, i32
  }
  func.func @transform_3(%arg0: i32) -> (i32, i32, i32) {
    %c0_i32 = arith.constant 0 : i32
    %c0_i32_0 = arith.constant 0 : i32
    %c0_i32_1 = arith.constant 0 : i32
    %c0_i32_2 = arith.constant 0 : i32
    return %c0_i32, %c0_i32_0, %c0_i32_1 : i32, i32, i32
  }
  func.func @transform_4(%arg0: i32) -> (i32, i32) {
    %c0_i32 = arith.constant 0 : i32
    %c0_i32_0 = arith.constant 0 : i32
    %c0_i32_1 = arith.constant 0 : i32
    return %c0_i32, %c0_i32_0 : i32, i32
  }
  func.func @transform_5(%arg0: i32) -> (i32, i32, i32, i32) {
    %c0_i32 = arith.constant 0 : i32
    %c0_i32_0 = arith.constant 0 : i32
    %c0_i32_1 = arith.constant 0 : i32
    %c0_i32_2 = arith.constant 0 : i32
    return %arg0, %c0_i32, %c0_i32_0, %c0_i32_1 : i32, i32, i32, i32
  }
}

</mosaic_0001>

<llo_original>
// kernel: tpu_custom_call.1
$region0: #{tpu_custom_call.1}
  #allocation0 [shape = 'u32[]', space=smem, size = 0x4, offset = 0x4, fixed_abs, tag = 'smem constant byte address 0x4 - core index']
  #allocation1 [shape = 'u32[72,128]{1,0:T(1,128)}', space=vmem, size = 0x9000, scoped, tag = 'internal scratch']
  #allocation2 [shape = 'bf16[18,16,384]{2,1,0:T(8,128)(2,1)}', space=vmem, size = 0x36000, scoped, tag = 'scratch operand']
  %s0 = inlined_call_operand.hbm [shape: bf16[4,16,16,128], index: 0, kind: input, shape index: {}]
  %s1 = inlined_call_operand.hbm [shape: bf16[3,384,128], index: 1, kind: input, shape index: {}]
  %s2 = inlined_call_operand.vmem [shape: f32[1,128], index: 2, kind: input, shape index: {}]
  %s3 = inlined_call_operand.hbm [shape: bf16[3,384,128], index: 3, kind: input, shape index: {}]
  %s4 = inlined_call_operand.vmem [shape: f32[1,128], index: 4, kind: input, shape index: {}]
  %s5 = inlined_call_operand.hbm [shape: bf16[4,16,16,128], index: 5, kind: output, shape index: {}]
  %s6 = sld [smem:[#allocation0]]
  $region65: #{tpu_custom_call.1} parent=0
    _
  %s8 = ssub.s32 1, %s6
  %s9 = scalar_select 0, %s8, %s6
  $region1: #{tpu_custom_call.1} parent=0
    #allocation3 [shape = 'u8[262144]{0}', space=vmem, size = 0x40000, scoped, tag = 'input window, operand 0']
    #allocation4 [shape = 's32[2]{0}', space=sflag, size = 0x8, scoped, tag = 'scoped memory for tpu_custom_call.1']
    #allocation5 [shape = 's32[2]{0}', space=sflag, size = 0x8, scoped, tag = 'scoped memory for tpu_custom_call.1']
    #allocation6 [shape = 'u8[294912]{0}', space=vmem, size = 0x48000, scoped, tag = 'input window, operand 1, single buffered']
    #allocation7 [shape = 's32[1]{0}', space=sflag, size = 0x4, scoped, tag = 'scoped memory for tpu_custom_call.1']
    #allocation8 [shape = 'u8[294912]{0}', space=vmem, size = 0x48000, scoped, tag = 'input window, operand 3, single buffered']
    #allocation9 [shape = 'u8[262144]{0}', space=vmem, size = 0x40000, scoped, tag = 'output window, operand 0']
    %10 = vsyncpa [#allocation4], 0
    %s11 = scalar_lea.sflag [#allocation4], 1
    %12 = vsyncpa %s11, 0
    %13 = vsyncpa [#allocation7], 0
    %14 = vsyncpa [#allocation5], 0
    %s15 = scalar_lea.sflag [#allocation5], 1
    %16 = vsyncpa %s15, 0
    loop: start=0, step=1, limit=4
    $region2: #{tpu_custom_call.1} parent=1 // loop_pre_header
      _
    $region3: #{tpu_custom_call.1} parent=1 // loop_header
      %s18 = sphi 0, %s22
      %p19 = scmp.ge.s32.totalorder %s18, 4
      %s28 = sphi 0, %s30
      %s31 = sphi 0, %s28
      %s32 = sphi 0, %s31
      %s48 = sphi 0, %s32
      %s52 = sphi 0, %s52
      %s54 = sphi 0, %s52
      %s55 = sphi 0, %s54
      %s69 = sphi 0, %s55
      %s73 = sphi 0, %s73
      %s75 = sphi 0, %s73
      %s76 = sphi 0, %s75
      %s90 = sphi 0, %s76
      %s94 = sphi 0, %s94
      %s96 = sphi 0, %s94
      %s97 = sphi 0, %s96
      %s111 = sphi 0, %s97
      %s115 = sphi 0, %s115
      %s117 = sphi 0, %s115
      %s118 = sphi 0, %s117
      %s132 = sphi 0, %s118
      %s138 = sphi 0, %s140
      %s141 = sphi 0, %s138
      %s142 = sphi 0, %s141
      %s158 = sphi 0, %s142
    $region4: #{tpu_custom_call.1} parent=1 // loop_header_branch
      %21 = sbr.rel (%p19) target = $region8
    $region5: #{tpu_custom_call.1} parent=1 // loop_body
      %s23 = ssub.s32 %s18, 1
      %s24 = ssub.s32 %s18, 2
      %s25 = sadd.s32 %s18, 1
      %s26 = ssub.s32 %s18, %s25
      %p27 = scmp.eq.s32.totalorder %s26, 0
      %s29 = sadd.s32 %s28, 1
      %s30 = scalar_select %p27, %s28, %s29
      %p33 = pneg %p27
      %p34 = scmp.eq.s32.totalorder %s18, 1
      %p35 = por %p33, %p34
      %p36 = scmp.ne.s32.totalorder %s28, %s31
      %p37 = scmp.eq.s32.totalorder %s18, 0
      %p38 = por %p36, %p37
      %p39 = scmp.ne.s32.totalorder %s28, %s31
      %p40 = scmp.eq.s32.totalorder %s23, 1
      %p41 = por %p39, %p40
      %p42 = scmp.ne.s32.totalorder %s31, %s32
      %p43 = scmp.eq.s32.totalorder %s23, 0
      %p44 = por %p42, %p43
      %p45 = scmp.ne.s32.totalorder %s31, %s32
      %p46 = scmp.eq.s32.totalorder %s24, 1
      %p47 = por %p45, %p46
      %p49 = scmp.ne.s32.totalorder %s32, %s48
      %p50 = scmp.eq.s32.totalorder %s24, 0
      %p51 = por %p49, %p50
      %s53 = sadd.s32 %s52, 1
      %p56 = scmp.eq.s32.totalorder %s18, 1
      %p57 = scmp.ne.s32.totalorder %s52, %s54
      %p58 = scmp.eq.s32.totalorder %s18, 0
      %p59 = por %p57, %p58
      %p60 = scmp.ne.s32.totalorder %s52, %s54
      %p61 = scmp.eq.s32.totalorder %s23, 1
      %p62 = por %p60, %p61
      %p63 = scmp.ne.s32.totalorder %s54, %s55
      %p64 = scmp.eq.s32.totalorder %s23, 0
      %p65 = por %p63, %p64
      %p66 = scmp.ne.s32.totalorder %s54, %s55
      %p67 = scmp.eq.s32.totalorder %s24, 1
      %p68 = por %p66, %p67
      %p70 = scmp.ne.s32.totalorder %s55, %s69
      %p71 = scmp.eq.s32.totalorder %s24, 0
      %p72 = por %p70, %p71
      %s74 = sadd.s32 %s73, 1
      %p77 = scmp.eq.s32.totalorder %s18, 1
      %p78 = scmp.ne.s32.totalorder %s73, %s75
      %p79 = scmp.eq.s32.totalorder %s18, 0
      %p80 = por %p78, %p79
      %p81 = scmp.ne.s32.totalorder %s73, %s75
      %p82 = scmp.eq.s32.totalorder %s23, 1
      %p83 = por %p81, %p82
      %p84 = scmp.ne.s32.totalorder %s75, %s76
      %p85 = scmp.eq.s32.totalorder %s23, 0
      %p86 = por %p84, %p85
      %p87 = scmp.ne.s32.totalorder %s75, %s76
      %p88 = scmp.eq.s32.totalorder %s24, 1
      %p89 = por %p87, %p88
      %p91 = scmp.ne.s32.totalorder %s76, %s90
      %p92 = scmp.eq.s32.totalorder %s24, 0
      %p93 = por %p91, %p92
      %s95 = sadd.s32 %s94, 1
      %p98 = scmp.eq.s32.totalorder %s18, 1
      %p99 = scmp.ne.s32.totalorder %s94, %s96
      %p100 = scmp.eq.s32.totalorder %s18, 0
      %p101 = por %p99, %p100
      %p102 = scmp.ne.s32.totalorder %s94, %s96
      %p103 = scmp.eq.s32.totalorder %s23, 1
      %p104 = por %p102, %p103
      %p105 = scmp.ne.s32.totalorder %s96, %s97
      %p106 = scmp.eq.s32.totalorder %s23, 0
      %p107 = por %p105, %p106
      %p108 = scmp.ne.s32.totalorder %s96, %s97
      %p109 = scmp.eq.s32.totalorder %s24, 1
      %p110 = por %p108, %p109
      %p112 = scmp.ne.s32.totalorder %s97, %s111
      %p113 = scmp.eq.s32.totalorder %s24, 0
      %p114 = por %p112, %p113
      %s116 = sadd.s32 %s115, 1
      %p119 = scmp.eq.s32.totalorder %s18, 1
      %p120 = scmp.ne.s32.totalorder %s115, %s117
      %p121 = scmp.eq.s32.totalorder %s18, 0
      %p122 = por %p120, %p121
      %p123 = scmp.ne.s32.totalorder %s115, %s117
      %p124 = scmp.eq.s32.totalorder %s23, 1
      %p125 = por %p123, %p124
      %p126 = scmp.ne.s32.totalorder %s117, %s118
      %p127 = scmp.eq.s32.totalorder %s23, 0
      %p128 = por %p126, %p127
      %p129 = scmp.ne.s32.totalorder %s117, %s118
      %p130 = scmp.eq.s32.totalorder %s24, 1
      %p131 = por %p129, %p130
      %p133 = scmp.ne.s32.totalorder %s118, %s132
      %p134 = scmp.eq.s32.totalorder %s24, 0
      %p135 = por %p133, %p134
      %s136 = ssub.s32 %s18, %s25
      %p137 = scmp.eq.s32.totalorder %s136, 0
      %s139 = sadd.s32 %s138, 1
      %s140 = scalar_select %p137, %s138, %s139
      %p143 = pneg %p137
      %p144 = scmp.eq.s32.totalorder %s18, 1
      %p145 = por %p143, %p144
      %p146 = scmp.ne.s32.totalorder %s138, %s141
      %p147 = scmp.eq.s32.totalorder %s18, 0
      %p148 = por %p146, %p147
      %p149 = scmp.ne.s32.totalorder %s138, %s141
      %p150 = scmp.eq.s32.totalorder %s23, 1
      %p151 = por %p149, %p150
      %p152 = scmp.ne.s32.totalorder %s141, %s142
      %p153 = scmp.eq.s32.totalorder %s23, 0
      %p154 = por %p152, %p153
      %p155 = scmp.ne.s32.totalorder %s141, %s142
      %p156 = scmp.eq.s32.totalorder %s24, 1
      %p157 = por %p155, %p156
      %p159 = scmp.ne.s32.totalorder %s142, %s158
      %p160 = scmp.eq.s32.totalorder %s24, 0
      %p161 = por %p159, %p160
      %p162 = scmp.le.s32.totalorder 1, %s18
      %p163 = scmp.lt.s32.totalorder %s18, 3
      %p164 = pnand %p162, %p163
      %p165 = pneg %p164
      // Predicated region
      $region9: #{tpu_custom_call.1} parent=5 // pred_check
        _
      $region10: #{tpu_custom_call.1} parent=5 // pred_check_branch
        %167 = sbr.rel (%p164) target = $region12
      $region11: #{tpu_custom_call.1} parent=5 // pred_region
        %s168 = ssub.s32 %s18, 1
        // Predicated region
        $region13: #{tpu_custom_call.1} parent=11 // pred_check
          %p169 = pneg %p65
        $region14: #{tpu_custom_call.1} parent=11 // pred_check_branch
          %171 = sbr.rel (%p169) target = $region16
        $region15: #{tpu_custom_call.1} parent=11 // pred_region
          %173 = vsyncadd [#allocation7], 0
          %s174 = sshll.u32 %s1, 4
          %s175 = int_to_ptr.hbm [resolvable:$true] %s174
          %s176 = sshll.u32 [#allocation6], 4
          %s177 = int_to_ptr.vmem [resolvable:$true] %s176
          %182 = dma.hbm_to_vmem [thread:$0]  %s175, 9216, %s177, [#allocation7], 64, 64, 4
        $region16: #{tpu_custom_call.1} parent=11 // pred_fallthru
          _
        // Predicated region
        $region17: #{tpu_custom_call.1} parent=11 // pred_check
          %p183 = pneg %p86
        $region18: #{tpu_custom_call.1} parent=11 // pred_check_branch
          %185 = sbr.rel (%p183) target = $region20
        $region19: #{tpu_custom_call.1} parent=11 // pred_region
          _
        $region20: #{tpu_custom_call.1} parent=11 // pred_fallthru
          _
        // Predicated region
        $region21: #{tpu_custom_call.1} parent=11 // pred_check
          %p186 = pneg %p107
        $region22: #{tpu_custom_call.1} parent=11 // pred_check_branch
          %188 = sbr.rel (%p186) target = $region24
        $region23: #{tpu_custom_call.1} parent=11 // pred_region
          %190 = vsyncadd [#allocation7], 0
          %s191 = sshll.u32 %s3, 4
          %s192 = int_to_ptr.hbm [resolvable:$true] %s191
          %s193 = sshll.u32 [#allocation8], 4
          %s194 = int_to_ptr.vmem [resolvable:$true] %s193
          %199 = dma.hbm_to_vmem [thread:$0]  %s192, 9216, %s194, [#allocation7], 64, 64, 4
        $region24: #{tpu_custom_call.1} parent=11 // pred_fallthru
          _
        // Predicated region
        $region25: #{tpu_custom_call.1} parent=11 // pred_check
          %p200 = pneg %p128
        $region26: #{tpu_custom_call.1} parent=11 // pred_check_branch
          %202 = sbr.rel (%p200) target = $region28
        $region27: #{tpu_custom_call.1} parent=11 // pred_region
          _
        $region28: #{tpu_custom_call.1} parent=11 // pred_fallthru
          _
      $region12: #{tpu_custom_call.1} parent=5 // pred_fallthru
        _
      %p203 = scmp.lt.s32.totalorder %s18, 2
      // Predicated region
      $region29: #{tpu_custom_call.1} parent=5 // pred_check
        %p204 = pneg %p203
      $region30: #{tpu_custom_call.1} parent=5 // pred_check_branch
        %206 = sbr.rel (%p204) target = $region32
      $region31: #{tpu_custom_call.1} parent=5 // pred_region
        // Predicated region
        $region33: #{tpu_custom_call.1} parent=31 // pred_check
          %p207 = pneg %p38
        $region34: #{tpu_custom_call.1} parent=31 // pred_check_branch
          %209 = sbr.rel (%p207) target = $region36
        $region35: #{tpu_custom_call.1} parent=31 // pred_region
          %s210 = sand.u32 %s28, 1
          %s211 = scalar_lea.sflag [#allocation4], %s210
          %s212 = sand.u32 %s28, 1
          %s213 = smul.addr %s212, 256
          %s214 = scalar_lea.vmem [#allocation3], %s213
          %s215 = smul.u32 2, %s18
          %217 = vsyncadd %s211, 0
          %s218 = smul.addr %s215, 32
          %s219 = smul.addr %s218, 4
          %s220 = scalar_lea.hbm %s0, %s219
          %s221 = sshll.u32 %s220, 4
          %s222 = int_to_ptr.hbm [resolvable:$true] %s221
          %s223 = sshll.u32 %s214, 4
          %s224 = int_to_ptr.vmem [resolvable:$true] %s223
          %229 = dma.hbm_to_vmem [thread:$0]  %s222, 4096, %s224, %s211, 64, 64, 4
        $region36: #{tpu_custom_call.1} parent=31 // pred_fallthru
          _
      $region32: #{tpu_custom_call.1} parent=5 // pred_fallthru
        _
      %p230 = scmp.le.s32.totalorder 1, %s18
      %p231 = scmp.lt.s32.totalorder %s18, 3
      %p232 = pnand %p230, %p231
      %p233 = pneg %p232
      // Predicated region
      $region37: #{tpu_custom_call.1} parent=5 // pred_check
        _
      $region38: #{tpu_custom_call.1} parent=5 // pred_check_branch
        %235 = sbr.rel (%p232) target = $region40
      $region39: #{tpu_custom_call.1} parent=5 // pred_region
        %s236 = ssub.s32 %s18, 1
        %s237 = sand.u32 %s31, 1
        %s238 = scalar_lea.sflag [#allocation4], %s237
        %s239 = sand.u32 %s31, 1
        %s240 = smul.addr %s239, 256
        %s241 = scalar_lea.vmem [#allocation3], %s240
        // Predicated region
        $region41: #{tpu_custom_call.1} parent=39 // pred_check
          %p242 = pneg %p44
        $region42: #{tpu_custom_call.1} parent=39 // pred_check_branch
          %244 = sbr.rel (%p242) target = $region44
        $region43: #{tpu_custom_call.1} parent=39 // pred_region
          %246 = dma.done %s238, 4096
        $region44: #{tpu_custom_call.1} parent=39 // pred_fallthru
          _
        // Predicated region
        $region45: #{tpu_custom_call.1} parent=39 // pred_check
          %p247 = pneg %p65
        $region46: #{tpu_custom_call.1} parent=39 // pred_check_branch
          %249 = sbr.rel (%p247) target = $region48
        $region47: #{tpu_custom_call.1} parent=39 // pred_region
          %251 = dma.done [#allocation7], 9216
        $region48: #{tpu_custom_call.1} parent=39 // pred_fallthru
          _
        // Predicated region
        $region49: #{tpu_custom_call.1} parent=39 // pred_check
          %p252 = pneg %p107
        $region50: #{tpu_custom_call.1} parent=39 // pred_check_branch
          %254 = sbr.rel (%p252) target = $region52
        $region51: #{tpu_custom_call.1} parent=39 // pred_region
          %256 = dma.done [#allocation7], 9216
        $region52: #{tpu_custom_call.1} parent=39 // pred_fallthru
          _
        %s257 = sand.u32 %s31, 1
        %s258 = scalar_lea.sflag [#allocation4], %s257
        %s259 = sand.u32 %s31, 1
        %s260 = smul.addr %s259, 256
        %s261 = scalar_lea.vmem [#allocation3], %s260
        %p262 = pneg %p44
        %p263 = pneg %p41
        %p264 = pneg %p65
        %p265 = pneg %p62
        %p266 = pneg %p86
        %p267 = pneg %p83
        %p268 = pneg %p107
        %p269 = pneg %p104
        %p270 = pneg %p128
        %p271 = pneg %p125
        %p272 = pneg %p154
        %p273 = pneg %p151
        %s274 = sand.u32 %s141, 1
        %s275 = scalar_lea.sflag [#allocation5], %s274
        %s276 = sand.u32 %s141, 1
        %s277 = smul.addr %s276, 256
        %s278 = scalar_lea.vmem [#allocation9], %s277
        %s279 = smul.u32 2, %s23
        %s280 = smul.u32 2, %s23
        %282 = vst [vmem:[#allocation2] sm:$0xff] 0
        %283 = vst [vmem:[#allocation2 + $0x8] sm:$0xf] 0
        %284 = vst [vmem:[#allocation2 + $0xc] sm:$0xff] 0
        %285 = vst [vmem:[#allocation2 + $0x14] sm:$0xf] 0
        %s286 = scalar_lea.vmem [#allocation2], 408
        %287 = vst [vmem:[%s286] sm:$0xff] 0
        %288 = vst [vmem:[%s286 + $0x8] sm:$0xf] 0
        %289 = vst [vmem:[%s286 + $0xc] sm:$0xff] 0
        %290 = vst [vmem:[%s286 + $0x14] sm:$0xf] 0
        %v291 = vld [vmem:[%s241] sm:$0xf]
        %v292 = vld [vmem:[%s241 + $0x4] sm:$0xf]
        %v293 = vld [vmem:[%s241 + $0x8] sm:$0xf]
        %v294 = vld [vmem:[%s241 + $0xc] sm:$0xf]
        %v295 = vld [vmem:[%s241 + $0x10] sm:$0xf]
        %v296 = vld [vmem:[%s241 + $0x14] sm:$0xf]
        %v297 = vld [vmem:[%s241 + $0x18] sm:$0xf]
        %v298 = vld [vmem:[%s241 + $0x1c] sm:$0xf]
        %v299 = vld [vmem:[%s241 + $0x20] sm:$0xf]
        %v300 = vld [vmem:[%s241 + $0x24] sm:$0xf]
        %v301 = vld [vmem:[%s241 + $0x28] sm:$0xf]
        %v302 = vld [vmem:[%s241 + $0x2c] sm:$0xf]
        %v303 = vld [vmem:[%s241 + $0x30] sm:$0xf]
        %v304 = vld [vmem:[%s241 + $0x34] sm:$0xf]
        %v305 = vld [vmem:[%s241 + $0x38] sm:$0xf]
        %v306 = vld [vmem:[%s241 + $0x3c] sm:$0xf]
        %v307 = vld [vmem:[%s241 + $0x40] sm:$0xf]
        %v308 = vld [vmem:[%s241 + $0x44] sm:$0xf]
        %v309 = vld [vmem:[%s241 + $0x48] sm:$0xf]
        %v310 = vld [vmem:[%s241 + $0x4c] sm:$0xf]
        %v311 = vld [vmem:[%s241 + $0x50] sm:$0xf]
        %v312 = vld [vmem:[%s241 + $0x54] sm:$0xf]
        %v313 = vld [vmem:[%s241 + $0x58] sm:$0xf]
        %v314 = vld [vmem:[%s241 + $0x5c] sm:$0xf]
        %v315 = vld [vmem:[%s241 + $0x60] sm:$0xf]
        %v316 = vld [vmem:[%s241 + $0x64] sm:$0xf]
        %v317 = vld [vmem:[%s241 + $0x68] sm:$0xf]
        %v318 = vld [vmem:[%s241 + $0x6c] sm:$0xf]
        %v319 = vld [vmem:[%s241 + $0x70] sm:$0xf]
        %v320 = vld [vmem:[%s241 + $0x74] sm:$0xf]
        %v321 = vld [vmem:[%s241 + $0x78] sm:$0xf]
        %v322 = vld [vmem:[%s241 + $0x7c] sm:$0xf]
        %v355 = vunpack.c.l.b16 %v291
        %v356 = vunpack.c.l.b16 %v292
        %v357 = vunpack.c.l.b16 %v293
        %v358 = vunpack.c.l.b16 %v294
        %v359 = vunpack.c.l.b16 %v295
        %v360 = vunpack.c.l.b16 %v296
        %v361 = vunpack.c.l.b16 %v297
        %v362 = vunpack.c.l.b16 %v298
        %v363 = vunpack.c.l.b16 %v299
        %v364 = vunpack.c.l.b16 %v300
        %v365 = vunpack.c.l.b16 %v301
        %v366 = vunpack.c.l.b16 %v302
        %v367 = vunpack.c.l.b16 %v303
        %v368 = vunpack.c.l.b16 %v304
        %v369 = vunpack.c.l.b16 %v305
        %v370 = vunpack.c.l.b16 %v306
        %v371 = vunpack.c.l.b16 %v307
        %v372 = vunpack.c.l.b16 %v308
        %v373 = vunpack.c.l.b16 %v309
        %v374 = vunpack.c.l.b16 %v310
        %v375 = vunpack.c.l.b16 %v311
        %v376 = vunpack.c.l.b16 %v312
        %v377 = vunpack.c.l.b16 %v313
        %v378 = vunpack.c.l.b16 %v314
        %v379 = vunpack.c.l.b16 %v315
        %v380 = vunpack.c.l.b16 %v316
        %v381 = vunpack.c.l.b16 %v317
        %v382 = vunpack.c.l.b16 %v318
        %v383 = vunpack.c.l.b16 %v319
        %v384 = vunpack.c.l.b16 %v320
        %v385 = vunpack.c.l.b16 %v321
        %v386 = vunpack.c.l.b16 %v322
        %v387 = vpack.c.b16 %v356, %v355
        %v388 = vpack.c.b16 %v358, %v357
        %v389 = vpack.c.b16 %v360, %v359
        %v390 = vpack.c.b16 %v362, %v361
        %v391 = vpack.c.b16 %v364, %v363
        %v392 = vpack.c.b16 %v366, %v365
        %v393 = vpack.c.b16 %v368, %v367
        %v394 = vpack.c.b16 %v370, %v369
        %v395 = vpack.c.b16 %v372, %v371
        %v396 = vpack.c.b16 %v374, %v373
        %v397 = vpack.c.b16 %v376, %v375
        %v398 = vpack.c.b16 %v378, %v377
        %v399 = vpack.c.b16 %v380, %v379
        %v400 = vpack.c.b16 %v382, %v381
        %v401 = vpack.c.b16 %v384, %v383
        %v402 = vpack.c.b16 %v386, %v385
        %v404 = vshrl.u32 %v387, 16
        %v406 = vrot.slane %v404, 7
        %v407 = vshll.u32 %v387, 16
        %v409 = vor.u32 %v406, %v407
        %v411 = vshrl.u32 %v388, 16
        %v413 = vrot.slane %v411, 7
        %v414 = vshll.u32 %v388, 16
        %v416 = vor.u32 %v413, %v414
        %v418 = vshrl.u32 %v389, 16
        %v420 = vrot.slane %v418, 7
        %v421 = vshll.u32 %v389, 16
        %v423 = vor.u32 %v420, %v421
        %v425 = vshrl.u32 %v390, 16
        %v427 = vrot.slane %v425, 7
        %v428 = vshll.u32 %v390, 16
        %v430 = vor.u32 %v427, %v428
        %v432 = vshrl.u32 %v391, 16
        %v434 = vrot.slane %v432, 7
        %v435 = vshll.u32 %v391, 16
        %v437 = vor.u32 %v434, %v435
        %v439 = vshrl.u32 %v392, 16
        %v441 = vrot.slane %v439, 7
        %v442 = vshll.u32 %v392, 16
        %v444 = vor.u32 %v441, %v442
        %v446 = vshrl.u32 %v393, 16
        %v448 = vrot.slane %v446, 7
        %v449 = vshll.u32 %v393, 16
        %v451 = vor.u32 %v448, %v449
        %v453 = vshrl.u32 %v394, 16
        %v455 = vrot.slane %v453, 7
        %v456 = vshll.u32 %v394, 16
        %v458 = vor.u32 %v455, %v456
        %v460 = vshrl.u32 %v395, 16
        %v462 = vrot.slane %v460, 7
        %v463 = vshll.u32 %v395, 16
        %v465 = vor.u32 %v462, %v463
        %v467 = vshrl.u32 %v396, 16
        %v469 = vrot.slane %v467, 7
        %v470 = vshll.u32 %v396, 16
        %v472 = vor.u32 %v469, %v470
        %v474 = vshrl.u32 %v397, 16
        %v476 = vrot.slane %v474, 7
        %v477 = vshll.u32 %v397, 16
        %v479 = vor.u32 %v476, %v477
        %v481 = vshrl.u32 %v398, 16
        %v483 = vrot.slane %v481, 7
        %v484 = vshll.u32 %v398, 16
        %v486 = vor.u32 %v483, %v484
        %v488 = vshrl.u32 %v399, 16
        %v490 = vrot.slane %v488, 7
        %v491 = vshll.u32 %v399, 16
        %v493 = vor.u32 %v490, %v491
        %v495 = vshrl.u32 %v400, 16
        %v497 = vrot.slane %v495, 7
        %v498 = vshll.u32 %v400, 16
        %v500 = vor.u32 %v497, %v498
        %v502 = vshrl.u32 %v401, 16
        %v504 = vrot.slane %v502, 7
        %v505 = vshll.u32 %v401, 16
        %v507 = vor.u32 %v504, %v505
        %v509 = vshrl.u32 %v402, 16
        %v511 = vrot.slane %v509, 7
        %v512 = vshll.u32 %v402, 16
        %v514 = vor.u32 %v511, %v512
        %vm531 = vcmask 1040384
        %vm532 = vsmask.f32 256
        %vm533 = vmand %vm531, %vm532
        %v534 = vsel %vm533, 0, %v409
        %v535 = vsel %vm533, 0, %v416
        %v536 = vsel %vm533, 0, %v423
        %v537 = vsel %vm533, 0, %v430
        %v538 = vsel %vm533, 0, %v437
        %v539 = vsel %vm533, 0, %v444
        %v540 = vsel %vm533, 0, %v451
        %v541 = vsel %vm533, 0, %v458
        %v542 = vsel %vm533, 0, %v465
        %v543 = vsel %vm533, 0, %v472
        %v544 = vsel %vm533, 0, %v479
        %v545 = vsel %vm533, 0, %v486
        %v546 = vsel %vm533, 0, %v493
        %v547 = vsel %vm533, 0, %v500
        %v548 = vsel %vm533, 0, %v507
        %v549 = vsel %vm533, 0, %v514
        %v550 = vrot.slane %v407, 1
        %v551 = vor.u32 %v404, %v550
        %v552 = vrot.slane %v414, 1
        %v553 = vor.u32 %v411, %v552
        %v554 = vrot.slane %v421, 1
        %v555 = vor.u32 %v418, %v554
        %v556 = vrot.slane %v428, 1
        %v557 = vor.u32 %v425, %v556
        %v558 = vrot.slane %v435, 1
        %v559 = vor.u32 %v432, %v558
        %v560 = vrot.slane %v442, 1
        %v561 = vor.u32 %v439, %v560
        %v562 = vrot.slane %v449, 1
        %v563 = vor.u32 %v446, %v562
        %v564 = vrot.slane %v456, 1
        %v565 = vor.u32 %v453, %v564
        %v566 = vrot.slane %v463, 1
        %v567 = vor.u32 %v460, %v566
        %v568 = vrot.slane %v470, 1
        %v569 = vor.u32 %v467, %v568
        %v570 = vrot.slane %v477, 1
        %v571 = vor.u32 %v474, %v570
        %v572 = vrot.slane %v484, 1
        %v573 = vor.u32 %v481, %v572
        %v574 = vrot.slane %v491, 1
        %v575 = vor.u32 %v488, %v574
        %v576 = vrot.slane %v498, 1
        %v577 = vor.u32 %v495, %v576
        %v578 = vrot.slane %v505, 1
        %v579 = vor.u32 %v502, %v578
        %v580 = vrot.slane %v512, 1
        %v581 = vor.u32 %v509, %v580
        %vm598 = vcmask 1047552
        %vm599 = vsmask.f32 7424
        %vm600 = vmand %vm598, %vm599
        %v601 = vsel %vm600, %v551, 0
        %v602 = vsel %vm600, %v553, 0
        %v603 = vsel %vm600, %v555, 0
        %v604 = vsel %vm600, %v557, 0
        %v605 = vsel %vm600, %v559, 0
        %v606 = vsel %vm600, %v561, 0
        %v607 = vsel %vm600, %v563, 0
        %v608 = vsel %vm600, %v565, 0
        %v609 = vsel %vm600, %v567, 0
        %v610 = vsel %vm600, %v569, 0
        %v611 = vsel %vm600, %v571, 0
        %v612 = vsel %vm600, %v573, 0
        %v613 = vsel %vm600, %v575, 0
        %v614 = vsel %vm600, %v577, 0
        %v615 = vsel %vm600, %v579, 0
        %v616 = vsel %vm600, %v581, 0
        %v633 = vunpack.c.l.b16 %v534
        %v634 = vunpack.c.h.b16 %v534
        %v635 = vunpack.c.l.b16 %v535
        %v636 = vunpack.c.h.b16 %v535
        %v637 = vunpack.c.l.b16 %v536
        %v638 = vunpack.c.h.b16 %v536
        %v639 = vunpack.c.l.b16 %v537
        %v640 = vunpack.c.h.b16 %v537
        %v641 = vunpack.c.l.b16 %v538
        %v642 = vunpack.c.h.b16 %v538
        %v643 = vunpack.c.l.b16 %v539
        %v644 = vunpack.c.h.b16 %v539
        %v645 = vunpack.c.l.b16 %v540
        %v646 = vunpack.c.h.b16 %v540
        %v647 = vunpack.c.l.b16 %v541
        %v648 = vunpack.c.h.b16 %v541
        %v649 = vunpack.c.l.b16 %v542
        %v650 = vunpack.c.h.b16 %v542
        %v651 = vunpack.c.l.b16 %v543
        %v652 = vunpack.c.h.b16 %v543
        %v653 = vunpack.c.l.b16 %v544
        %v654 = vunpack.c.h.b16 %v544
        %v655 = vunpack.c.l.b16 %v545
        %v656 = vunpack.c.h.b16 %v545
        %v657 = vunpack.c.l.b16 %v546
        %v658 = vunpack.c.h.b16 %v546
        %v659 = vunpack.c.l.b16 %v547
        %v660 = vunpack.c.h.b16 %v547
        %v661 = vunpack.c.l.b16 %v548
        %v662 = vunpack.c.h.b16 %v548
        %v663 = vunpack.c.l.b16 %v549
        %v664 = vunpack.c.h.b16 %v549
        %v665 = vpack.c.b16 %v633, %v633
        %v666 = vpack.c.b16 %v634, %v634
        %v667 = vpack.c.b16 %v635, %v635
        %v668 = vpack.c.b16 %v636, %v636
        %v669 = vpack.c.b16 %v637, %v637
        %v670 = vpack.c.b16 %v638, %v638
        %v671 = vpack.c.b16 %v639, %v639
        %v672 = vpack.c.b16 %v640, %v640
        %v673 = vpack.c.b16 %v641, %v641
        %v674 = vpack.c.b16 %v642, %v642
        %v675 = vpack.c.b16 %v643, %v643
        %v676 = vpack.c.b16 %v644, %v644
        %v677 = vpack.c.b16 %v645, %v645
        %v678 = vpack.c.b16 %v646, %v646
        %v679 = vpack.c.b16 %v647, %v647
        %v680 = vpack.c.b16 %v648, %v648
        %v681 = vpack.c.b16 %v649, %v649
        %v682 = vpack.c.b16 %v650, %v650
        %v683 = vpack.c.b16 %v651, %v651
        %v684 = vpack.c.b16 %v652, %v652
        %v685 = vpack.c.b16 %v653, %v653
        %v686 = vpack.c.b16 %v654, %v654
        %v687 = vpack.c.b16 %v655, %v655
        %v688 = vpack.c.b16 %v656, %v656
        %v689 = vpack.c.b16 %v657, %v657
        %v690 = vpack.c.b16 %v658, %v658
        %v691 = vpack.c.b16 %v659, %v659
        %v692 = vpack.c.b16 %v660, %v660
        %v693 = vpack.c.b16 %v661, %v661
        %v694 = vpack.c.b16 %v662, %v662
        %v695 = vpack.c.b16 %v663, %v663
        %v696 = vpack.c.b16 %v664, %v664
        %s729 = scalar_lea.vmem [#allocation2], 24
        %730 = vst [vmem:[%s729] sm:$0xf] %v665
        %731 = vst [vmem:[%s729 + $0xc] sm:$0xf] %v666
        %732 = vst [vmem:[%s729 + $0x18] sm:$0xf] %v667
        %733 = vst [vmem:[%s729 + $0x24] sm:$0xf] %v668
        %734 = vst [vmem:[%s729 + $0x30] sm:$0xf] %v669
        %735 = vst [vmem:[%s729 + $0x3c] sm:$0xf] %v670
        %736 = vst [vmem:[%s729 + $0x48] sm:$0xf] %v671
        %737 = vst [vmem:[%s729 + $0x54] sm:$0xf] %v672
        %738 = vst [vmem:[%s729 + $0x60] sm:$0xf] %v673
        %739 = vst [vmem:[%s729 + $0x6c] sm:$0xf] %v674
        %740 = vst [vmem:[%s729 + $0x78] sm:$0xf] %v675
        %741 = vst [vmem:[%s729 + $0x84] sm:$0xf] %v676
        %742 = vst [vmem:[%s729 + $0x90] sm:$0xf] %v677
        %743 = vst [vmem:[%s729 + $0x9c] sm:$0xf] %v678
        %744 = vst [vmem:[%s729 + $0xa8] sm:$0xf] %v679
        %745 = vst [vmem:[%s729 + $0xb4] sm:$0xf] %v680
        %746 = vst [vmem:[%s729 + $0xc0] sm:$0xf] %v681
        %747 = vst [vmem:[%s729 + $0xcc] sm:$0xf] %v682
        %748 = vst [vmem:[%s729 + $0xd8] sm:$0xf] %v683
        %749 = vst [vmem:[%s729 + $0xe4] sm:$0xf] %v684
        %750 = vst [vmem:[%s729 + $0xf0] sm:$0xf] %v685
        %751 = vst [vmem:[%s729 + $0xfc] sm:$0xf] %v686
        %752 = vst [vmem:[%s729 + $0x108] sm:$0xf] %v687
        %753 = vst [vmem:[%s729 + $0x114] sm:$0xf] %v688
        %754 = vst [vmem:[%s729 + $0x120] sm:$0xf] %v689
        %755 = vst [vmem:[%s729 + $0x12c] sm:$0xf] %v690
        %756 = vst [vmem:[%s729 + $0x138] sm:$0xf] %v691
        %757 = vst [vmem:[%s729 + $0x144] sm:$0xf] %v692
        %758 = vst [vmem:[%s729 + $0x150] sm:$0xf] %v693
        %759 = vst [vmem:[%s729 + $0x15c] sm:$0xf] %v694
        %760 = vst [vmem:[%s729 + $0x168] sm:$0xf] %v695
        %761 = vst [vmem:[%s729 + $0x174] sm:$0xf] %v696
        %762 = vst [vmem:[%s729 + $0x4] sm:$0xf] %v291
        %763 = vst [vmem:[%s729 + $0x10] sm:$0xf] %v292
        %764 = vst [vmem:[%s729 + $0x1c] sm:$0xf] %v293
        %765 = vst [vmem:[%s729 + $0x28] sm:$0xf] %v294
        %766 = vst [vmem:[%s729 + $0x34] sm:$0xf] %v295
        %767 = vst [vmem:[%s729 + $0x40] sm:$0xf] %v296
        %768 = vst [vmem:[%s729 + $0x4c] sm:$0xf] %v297
        %769 = vst [vmem:[%s729 + $0x58] sm:$0xf] %v298
        %770 = vst [vmem:[%s729 + $0x64] sm:$0xf] %v299
        %771 = vst [vmem:[%s729 + $0x70] sm:$0xf] %v300
        %772 = vst [vmem:[%s729 + $0x7c] sm:$0xf] %v301
        %773 = vst [vmem:[%s729 + $0x88] sm:$0xf] %v302
        %774 = vst [vmem:[%s729 + $0x94] sm:$0xf] %v303
        %775 = vst [vmem:[%s729 + $0xa0] sm:$0xf] %v304
        %776 = vst [vmem:[%s729 + $0xac] sm:$0xf] %v305
        %777 = vst [vmem:[%s729 + $0xb8] sm:$0xf] %v306
        %778 = vst [vmem:[%s729 + $0xc4] sm:$0xf] %v307
        %779 = vst [vmem:[%s729 + $0xd0] sm:$0xf] %v308
        %780 = vst [vmem:[%s729 + $0xdc] sm:$0xf] %v309
        %781 = vst [vmem:[%s729 + $0xe8] sm:$0xf] %v310
        %782 = vst [vmem:[%s729 + $0xf4] sm:$0xf] %v311
        %783 = vst [vmem:[%s729 + $0x100] sm:$0xf] %v312
        %784 = vst [vmem:[%s729 + $0x10c] sm:$0xf] %v313
        %785 = vst [vmem:[%s729 + $0x118] sm:$0xf] %v314
        %786 = vst [vmem:[%s729 + $0x124] sm:$0xf] %v315
        %787 = vst [vmem:[%s729 + $0x130] sm:$0xf] %v316
        %788 = vst [vmem:[%s729 + $0x13c] sm:$0xf] %v317
        %789 = vst [vmem:[%s729 + $0x148] sm:$0xf] %v318
        %790 = vst [vmem:[%s729 + $0x154] sm:$0xf] %v319
        %791 = vst [vmem:[%s729 + $0x160] sm:$0xf] %v320
        %792 = vst [vmem:[%s729 + $0x16c] sm:$0xf] %v321
        %793 = vst [vmem:[%s729 + $0x178] sm:$0xf] %v322
        %v810 = vunpack.c.l.b16 %v601
        %v811 = vunpack.c.h.b16 %v601
        %v812 = vunpack.c.l.b16 %v602
        %v813 = vunpack.c.h.b16 %v602
        %v814 = vunpack.c.l.b16 %v603
        %v815 = vunpack.c.h.b16 %v603
        %v816 = vunpack.c.l.b16 %v604
        %v817 = vunpack.c.h.b16 %v604
        %v818 = vunpack.c.l.b16 %v605
        %v819 = vunpack.c.h.b16 %v605
        %v820 = vunpack.c.l.b16 %v606
        %v821 = vunpack.c.h.b16 %v606
        %v822 = vunpack.c.l.b16 %v607
        %v823 = vunpack.c.h.b16 %v607
        %v824 = vunpack.c.l.b16 %v608
        %v825 = vunpack.c.h.b16 %v608
        %v826 = vunpack.c.l.b16 %v609
        %v827 = vunpack.c.h.b16 %v609
        %v828 = vunpack.c.l.b16 %v610
        %v829 = vunpack.c.h.b16 %v610
        %v830 = vunpack.c.l.b16 %v611
        %v831 = vunpack.c.h.b16 %v611
        %v832 = vunpack.c.l.b16 %v612
        %v833 = vunpack.c.h.b16 %v612
        %v834 = vunpack.c.l.b16 %v613
        %v835 = vunpack.c.h.b16 %v613
        %v836 = vunpack.c.l.b16 %v614
        %v837 = vunpack.c.h.b16 %v614
        %v838 = vunpack.c.l.b16 %v615
        %v839 = vunpack.c.h.b16 %v615
        %v840 = vunpack.c.l.b16 %v616
        %v841 = vunpack.c.h.b16 %v616
        %v842 = vpack.c.b16 %v810, %v810
        %v843 = vpack.c.b16 %v811, %v811
        %v844 = vpack.c.b16 %v812, %v812
        %v845 = vpack.c.b16 %v813, %v813
        %v846 = vpack.c.b16 %v814, %v814
        %v847 = vpack.c.b16 %v815, %v815
        %v848 = vpack.c.b16 %v816, %v816
        %v849 = vpack.c.b16 %v817, %v817
        %v850 = vpack.c.b16 %v818, %v818
        %v851 = vpack.c.b16 %v819, %v819
        %v852 = vpack.c.b16 %v820, %v820
        %v853 = vpack.c.b16 %v821, %v821
        %v854 = vpack.c.b16 %v822, %v822
        %v855 = vpack.c.b16 %v823, %v823
        %v856 = vpack.c.b16 %v824, %v824
        %v857 = vpack.c.b16 %v825, %v825
        %v858 = vpack.c.b16 %v826, %v826
        %v859 = vpack.c.b16 %v827, %v827
        %v860 = vpack.c.b16 %v828, %v828
        %v861 = vpack.c.b16 %v829, %v829
        %v862 = vpack.c.b16 %v830, %v830
        %v863 = vpack.c.b16 %v831, %v831
        %v864 = vpack.c.b16 %v832, %v832
        %v865 = vpack.c.b16 %v833, %v833
        %v866 = vpack.c.b16 %v834, %v834
        %v867 = vpack.c.b16 %v835, %v835
        %v868 = vpack.c.b16 %v836, %v836
        %v869 = vpack.c.b16 %v837, %v837
        %v870 = vpack.c.b16 %v838, %v838
        %v871 = vpack.c.b16 %v839, %v839
        %v872 = vpack.c.b16 %v840, %v840
        %v873 = vpack.c.b16 %v841, %v841
        %906 = vst [vmem:[%s729 + $0x8] sm:$0xf] %v842
        %907 = vst [vmem:[%s729 + $0x14] sm:$0xf] %v843
        %908 = vst [vmem:[%s729 + $0x20] sm:$0xf] %v844
        %909 = vst [vmem:[%s729 + $0x2c] sm:$0xf] %v845
        %910 = vst [vmem:[%s729 + $0x38] sm:$0xf] %v846
        %911 = vst [vmem:[%s729 + $0x44] sm:$0xf] %v847
        %912 = vst [vmem:[%s729 + $0x50] sm:$0xf] %v848
        %913 = vst [vmem:[%s729 + $0x5c] sm:$0xf] %v849
        %914 = vst [vmem:[%s729 + $0x68] sm:$0xf] %v850
        %915 = vst [vmem:[%s729 + $0x74] sm:$0xf] %v851
        %916 = vst [vmem:[%s729 + $0x80] sm:$0xf] %v852
        %917 = vst [vmem:[%s729 + $0x8c] sm:$0xf] %v853
        %918 = vst [vmem:[%s729 + $0x98] sm:$0xf] %v854
        %919 = vst [vmem:[%s729 + $0xa4] sm:$0xf] %v855
        %920 = vst [vmem:[%s729 + $0xb0] sm:$0xf] %v856
        %921 = vst [vmem:[%s729 + $0xbc] sm:$0xf] %v857
        %922 = vst [vmem:[%s729 + $0xc8] sm:$0xf] %v858
        %923 = vst [vmem:[%s729 + $0xd4] sm:$0xf] %v859
        %924 = vst [vmem:[%s729 + $0xe0] sm:$0xf] %v860
        %925 = vst [vmem:[%s729 + $0xec] sm:$0xf] %v861
        %926 = vst [vmem:[%s729 + $0xf8] sm:$0xf] %v862
        %927 = vst [vmem:[%s729 + $0x104] sm:$0xf] %v863
        %928 = vst [vmem:[%s729 + $0x110] sm:$0xf] %v864
        %929 = vst [vmem:[%s729 + $0x11c] sm:$0xf] %v865
        %930 = vst [vmem:[%s729 + $0x128] sm:$0xf] %v866
        %931 = vst [vmem:[%s729 + $0x134] sm:$0xf] %v867
        %932 = vst [vmem:[%s729 + $0x140] sm:$0xf] %v868
        %933 = vst [vmem:[%s729 + $0x14c] sm:$0xf] %v869
        %934 = vst [vmem:[%s729 + $0x158] sm:$0xf] %v870
        %935 = vst [vmem:[%s729 + $0x164] sm:$0xf] %v871
        %936 = vst [vmem:[%s729 + $0x170] sm:$0xf] %v872
        %937 = vst [vmem:[%s729 + $0x17c] sm:$0xf] %v873
        %v938 = vld [vmem:[#allocation2] sm:$0xff]
        %v939 = vld [vmem:[#allocation2 + $0x8] sm:$0xf]
        %v940 = vld [vmem:[#allocation2 + $0xc] sm:$0xff]
        %v941 = vld [vmem:[#allocation2 + $0x14] sm:$0xf]
        %v942 = vld [vmem:[#allocation2 + $0x18] sm:$0xff]
        %v943 = vld [vmem:[#allocation2 + $0x20] sm:$0xf]
        %v944 = vld [vmem:[#allocation2 + $0x24] sm:$0xff]
        %v945 = vld [vmem:[#allocation2 + $0x2c] sm:$0xf]
        %v946 = vld [vmem:[#allocation2 + $0x30] sm:$0xff]
        %v947 = vld [vmem:[#allocation2 + $0x38] sm:$0xf]
        %v948 = vld [vmem:[#allocation2 + $0x3c] sm:$0xff]
        %v949 = vld [vmem:[#allocation2 + $0x44] sm:$0xf]
        %v950 = vld [vmem:[#allocation2 + $0x48] sm:$0xff]
        %v951 = vld [vmem:[#allocation2 + $0x50] sm:$0xf]
        %v952 = vld [vmem:[#allocation2 + $0x54] sm:$0xff]
        %v953 = vld [vmem:[#allocation2 + $0x5c] sm:$0xf]
        %v954 = vld [vmem:[#allocation2 + $0x60] sm:$0xff]
        %v955 = vld [vmem:[#allocation2 + $0x68] sm:$0xf]
        %v956 = vld [vmem:[#allocation2 + $0x6c] sm:$0xff]
        %v957 = vld [vmem:[#allocation2 + $0x74] sm:$0xf]
        %v958 = vld [vmem:[#allocation2 + $0x78] sm:$0xff]
        %v959 = vld [vmem:[#allocation2 + $0x80] sm:$0xf]
        %v960 = vld [vmem:[#allocation2 + $0x84] sm:$0xff]
        %v961 = vld [vmem:[#allocation2 + $0x8c] sm:$0xf]
        %v962 = vld [vmem:[#allocation2 + $0x90] sm:$0xff]
        %v963 = vld [vmem:[#allocation2 + $0x98] sm:$0xf]
        %v964 = vld [vmem:[#allocation2 + $0x9c] sm:$0xff]
        %v965 = vld [vmem:[#allocation2 + $0xa4] sm:$0xf]
        %v966 = vld [vmem:[#allocation2 + $0xa8] sm:$0xff]
        %v967 = vld [vmem:[#allocation2 + $0xb0] sm:$0xf]
        %v968 = vld [vmem:[#allocation2 + $0xb4] sm:$0xff]
        %v969 = vld [vmem:[#allocation2 + $0xbc] sm:$0xf]
        %v970 = vld [vmem:[#allocation2 + $0xc0] sm:$0xff]
        %v971 = vld [vmem:[#allocation2 + $0xc8] sm:$0xf]
        %v972 = vld [vmem:[#allocation2 + $0xcc] sm:$0xff]
        %v973 = vld [vmem:[#allocation2 + $0xd4] sm:$0xf]
        %v974 = vld [vmem:[#allocation2 + $0xd8] sm:$0xff]
        %v975 = vld [vmem:[#allocation2 + $0xe0] sm:$0xf]
        %v976 = vld [vmem:[#allocation2 + $0xe4] sm:$0xff]
        %v977 = vld [vmem:[#allocation2 + $0xec] sm:$0xf]
        %v978 = vld [vmem:[#allocation2 + $0xf0] sm:$0xff]
        %v979 = vld [vmem:[#allocation2 + $0xf8] sm:$0xf]
        %v980 = vld [vmem:[#allocation2 + $0xfc] sm:$0xff]
        %v981 = vld [vmem:[#allocation2 + $0x104] sm:$0xf]
        %v982 = vld [vmem:[#allocation2 + $0x108] sm:$0xff]
        %v983 = vld [vmem:[#allocation2 + $0x110] sm:$0xf]
        %v984 = vld [vmem:[#allocation2 + $0x114] sm:$0xff]
        %v985 = vld [vmem:[#allocation2 + $0x11c] sm:$0xf]
        %v986 = vld [vmem:[#allocation2 + $0x120] sm:$0xff]
        %v987 = vld [vmem:[#allocation2 + $0x128] sm:$0xf]
        %v988 = vld [vmem:[#allocation2 + $0x12c] sm:$0xff]
        %v989 = vld [vmem:[#allocation2 + $0x134] sm:$0xf]
        %v990 = vld [vmem:[#allocation2 + $0x138] sm:$0xff]
        %v991 = vld [vmem:[#allocation2 + $0x140] sm:$0xf]
        %v992 = vld [vmem:[#allocation2 + $0x144] sm:$0xff]
        %v993 = vld [vmem:[#allocation2 + $0x14c] sm:$0xf]
        %v994 = vld [vmem:[#allocation2 + $0x150] sm:$0xff]
        %v995 = vld [vmem:[#allocation2 + $0x158] sm:$0xf]
        %v996 = vld [vmem:[#allocation2 + $0x15c] sm:$0xff]
        %v997 = vld [vmem:[#allocation2 + $0x164] sm:$0xf]
        %v998 = vld [vmem:[#allocation2 + $0x168] sm:$0xff]
        %v999 = vld [vmem:[#allocation2 + $0x170] sm:$0xf]
        %v1000 = vld [vmem:[#allocation2 + $0x174] sm:$0xff]
        %v1001 = vld [vmem:[#allocation2 + $0x17c] sm:$0xf]
        %v1002 = vld [vmem:[#allocation6] sm:$0xf]
        %v1003 = vld [vmem:[#allocation6 + $0x4] sm:$0xf]
        %v1004 = vld [vmem:[#allocation6 + $0x8] sm:$0xf]
        %v1005 = vld [vmem:[#allocation6 + $0xc] sm:$0xf]
        %v1006 = vld [vmem:[#allocation6 + $0x10] sm:$0xf]
        %v1007 = vld [vmem:[#allocation6 + $0x14] sm:$0xf]
        %v1008 = vld [vmem:[#allocation6 + $0x18] sm:$0xf]
        %v1009 = vld [vmem:[#allocation6 + $0x1c] sm:$0xf]
        %v1010 = vld [vmem:[#allocation6 + $0x20] sm:$0xf]
        %v1011 = vld [vmem:[#allocation6 + $0x24] sm:$0xf]
        %v1012 = vld [vmem:[#allocation6 + $0x28] sm:$0xf]
        %v1013 = vld [vmem:[#allocation6 + $0x2c] sm:$0xf]
        %v1014 = vld [vmem:[#allocation6 + $0x30] sm:$0xf]
        %v1015 = vld [vmem:[#allocation6 + $0x34] sm:$0xf]
        %v1016 = vld [vmem:[#allocation6 + $0x38] sm:$0xf]
        %v1017 = vld [vmem:[#allocation6 + $0x3c] sm:$0xf]
        %v1018 = vld [vmem:[#allocation6 + $0x40] sm:$0xf]
        %v1019 = vld [vmem:[#allocation6 + $0x44] sm:$0xf]
        %v1020 = vld [vmem:[#allocation6 + $0x48] sm:$0xf]
        %v1021 = vld [vmem:[#allocation6 + $0x4c] sm:$0xf]
        %v1022 = vld [vmem:[#allocation6 + $0x50] sm:$0xf]
        %v1023 = vld [vmem:[#allocation6 + $0x54] sm:$0xf]
        %v1024 = vld [vmem:[#allocation6 + $0x58] sm:$0xf]
        %v1025 = vld [vmem:[#allocation6 + $0x5c] sm:$0xf]
        %v1026 = vld [vmem:[#allocation6 + $0x60] sm:$0xf]
        %v1027 = vld [vmem:[#allocation6 + $0x64] sm:$0xf]
        %v1028 = vld [vmem:[#allocation6 + $0x68] sm:$0xf]
        %v1029 = vld [vmem:[#allocation6 + $0x6c] sm:$0xf]
        %v1030 = vld [vmem:[#allocation6 + $0x70] sm:$0xf]
        %v1031 = vld [vmem:[#allocation6 + $0x74] sm:$0xf]
        %v1032 = vld [vmem:[#allocation6 + $0x78] sm:$0xf]
        %v1033 = vld [vmem:[#allocation6 + $0x7c] sm:$0xf]
        %v1034 = vld [vmem:[#allocation6 + $0x80] sm:$0xf]
        %v1035 = vld [vmem:[#allocation6 + $0x84] sm:$0xf]
        %v1036 = vld [vmem:[#allocation6 + $0x88] sm:$0xf]
        %v1037 = vld [vmem:[#allocation6 + $0x8c] sm:$0xf]
        %v1038 = vld [vmem:[#allocation6 + $0x90] sm:$0xf]
        %v1039 = vld [vmem:[#allocation6 + $0x94] sm:$0xf]
        %v1040 = vld [vmem:[#allocation6 + $0x98] sm:$0xf]
        %v1041 = vld [vmem:[#allocation6 + $0x9c] sm:$0xf]
        %v1042 = vld [vmem:[#allocation6 + $0xa0] sm:$0xf]
        %v1043 = vld [vmem:[#allocation6 + $0xa4] sm:$0xf]
        %v1044 = vld [vmem:[#allocation6 + $0xa8] sm:$0xf]
        %v1045 = vld [vmem:[#allocation6 + $0xac] sm:$0xf]
        %v1046 = vld [vmem:[#allocation6 + $0xb0] sm:$0xf]
        %v1047 = vld [vmem:[#allocation6 + $0xb4] sm:$0xf]
        %v1048 = vld [vmem:[#allocation6 + $0xb8] sm:$0xf]
        %v1049 = vld [vmem:[#allocation6 + $0xbc] sm:$0xf]
        %v1050 = vld [vmem:[%s729] sm:$0xff]
        %v1051 = vld [vmem:[%s729 + $0x8] sm:$0xf]
        %v1052 = vld [vmem:[%s729 + $0xc] sm:$0xff]
        %v1053 = vld [vmem:[%s729 + $0x14] sm:$0xf]
        %v1054 = vld [vmem:[%s729 + $0x18] sm:$0xff]
        %v1055 = vld [vmem:[%s729 + $0x20] sm:$0xf]
        %v1056 = vld [vmem:[%s729 + $0x24] sm:$0xff]
        %v1057 = vld [vmem:[%s729 + $0x2c] sm:$0xf]
        %v1058 = vld [vmem:[%s729 + $0x30] sm:$0xff]
        %v1059 = vld [vmem:[%s729 + $0x38] sm:$0xf]
        %v1060 = vld [vmem:[%s729 + $0x3c] sm:$0xff]
        %v1061 = vld [vmem:[%s729 + $0x44] sm:$0xf]
        %v1062 = vld [vmem:[%s729 + $0x48] sm:$0xff]
        %v1063 = vld [vmem:[%s729 + $0x50] sm:$0xf]
        %v1064 = vld [vmem:[%s729 + $0x54] sm:$0xff]
        %v1065 = vld [vmem:[%s729 + $0x5c] sm:$0xf]
        %v1066 = vld [vmem:[%s729 + $0x60] sm:$0xff]
        %v1067 = vld [vmem:[%s729 + $0x68] sm:$0xf]
        %v1068 = vld [vmem:[%s729 + $0x6c] sm:$0xff]
        %v1069 = vld [vmem:[%s729 + $0x74] sm:$0xf]
        %v1070 = vld [vmem:[%s729 + $0x78] sm:$0xff]
        %v1071 = vld [vmem:[%s729 + $0x80] sm:$0xf]
        %v1072 = vld [vmem:[%s729 + $0x84] sm:$0xff]
        %v1073 = vld [vmem:[%s729 + $0x8c] sm:$0xf]
        %v1074 = vld [vmem:[%s729 + $0x90] sm:$0xff]
        %v1075 = vld [vmem:[%s729 + $0x98] sm:$0xf]
        %v1076 = vld [vmem:[%s729 + $0x9c] sm:$0xff]
        %v1077 = vld [vmem:[%s729 + $0xa4] sm:$0xf]
        %v1078 = vld [vmem:[%s729 + $0xa8] sm:$0xff]
        %v1079 = vld [vmem:[%s729 + $0xb0] sm:$0xf]
        %v1080 = vld [vmem:[%s729 + $0xb4] sm:$0xff]
        %v1081 = vld [vmem:[%s729 + $0xbc] sm:$0xf]
        %v1082 = vld [vmem:[%s729 + $0xc0] sm:$0xff]
        %v1083 = vld [vmem:[%s729 + $0xc8] sm:$0xf]
        %v1084 = vld [vmem:[%s729 + $0xcc] sm:$0xff]
        %v1085 = vld [vmem:[%s729 + $0xd4] sm:$0xf]
        %v1086 = vld [vmem:[%s729 + $0xd8] sm:$0xff]
        %v1087 = vld [vmem:[%s729 + $0xe0] sm:$0xf]
        %v1088 = vld [vmem:[%s729 + $0xe4] sm:$0xff]
        %v1089 = vld [vmem:[%s729 + $0xec] sm:$0xf]
        %v1090 = vld [vmem:[%s729 + $0xf0] sm:$0xff]
        %v1091 = vld [vmem:[%s729 + $0xf8] sm:$0xf]
        %v1092 = vld [vmem:[%s729 + $0xfc] sm:$0xff]
        %v1093 = vld [vmem:[%s729 + $0x104] sm:$0xf]
        %v1094 = vld [vmem:[%s729 + $0x108] sm:$0xff]
        %v1095 = vld [vmem:[%s729 + $0x110] sm:$0xf]
        %v1096 = vld [vmem:[%s729 + $0x114] sm:$0xff]
        %v1097 = vld [vmem:[%s729 + $0x11c] sm:$0xf]
        %v1098 = vld [vmem:[%s729 + $0x120] sm:$0xff]
        %v1099 = vld [vmem:[%s729 + $0x128] sm:$0xf]
        %v1100 = vld [vmem:[%s729 + $0x12c] sm:$0xff]
        %v1101 = vld [vmem:[%s729 + $0x134] sm:$0xf]
        %v1102 = vld [vmem:[%s729 + $0x138] sm:$0xff]
        %v1103 = vld [vmem:[%s729 + $0x140] sm:$0xf]
        %v1104 = vld [vmem:[%s729 + $0x144] sm:$0xff]
        %v1105 = vld [vmem:[%s729 + $0x14c] sm:$0xf]
        %v1106 = vld [vmem:[%s729 + $0x150] sm:$0xff]
        %v1107 = vld [vmem:[%s729 + $0x158] sm:$0xf]
        %v1108 = vld [vmem:[%s729 + $0x15c] sm:$0xff]
        %v1109 = vld [vmem:[%s729 + $0x164] sm:$0xf]
        %v1110 = vld [vmem:[%s729 + $0x168] sm:$0xff]
        %v1111 = vld [vmem:[%s729 + $0x170] sm:$0xf]
        %v1112 = vld [vmem:[%s729 + $0x174] sm:$0xff]
        %v1113 = vld [vmem:[%s729 + $0x17c] sm:$0xf]
        %s1114 = scalar_lea.vmem [#allocation6], 192
        %v1115 = vld [vmem:[%s1114] sm:$0xf]
        %v1116 = vld [vmem:[%s1114 + $0x4] sm:$0xf]
        %v1117 = vld [vmem:[%s1114 + $0x8] sm:$0xf]
        %v1118 = vld [vmem:[%s1114 + $0xc] sm:$0xf]
        %v1119 = vld [vmem:[%s1114 + $0x10] sm:$0xf]
        %v1120 = vld [vmem:[%s1114 + $0x14] sm:$0xf]
        %v1121 = vld [vmem:[%s1114 + $0x18] sm:$0xf]
        %v1122 = vld [vmem:[%s1114 + $0x1c] sm:$0xf]
        %v1123 = vld [vmem:[%s1114 + $0x20] sm:$0xf]
        %v1124 = vld [vmem:[%s1114 + $0x24] sm:$0xf]
        %v1125 = vld [vmem:[%s1114 + $0x28] sm:$0xf]
        %v1126 = vld [vmem:[%s1114 + $0x2c] sm:$0xf]
        %v1127 = vld [vmem:[%s1114 + $0x30] sm:$0xf]
        %v1128 = vld [vmem:[%s1114 + $0x34] sm:$0xf]
        %v1129 = vld [vmem:[%s1114 + $0x38] sm:$0xf]
        %v1130 = vld [vmem:[%s1114 + $0x3c] sm:$0xf]
        %v1131 = vld [vmem:[%s1114 + $0x40] sm:$0xf]
        %v1132 = vld [vmem:[%s1114 + $0x44] sm:$0xf]
        %v1133 = vld [vmem:[%s1114 + $0x48] sm:$0xf]
        %v1134 = vld [vmem:[%s1114 + $0x4c] sm:$0xf]
        %v1135 = vld [vmem:[%s1114 + $0x50] sm:$0xf]
        %v1136 = vld [vmem:[%s1114 + $0x54] sm:$0xf]
        %v1137 = vld [vmem:[%s1114 + $0x58] sm:$0xf]
        %v1138 = vld [vmem:[%s1114 + $0x5c] sm:$0xf]
        %v1139 = vld [vmem:[%s1114 + $0x60] sm:$0xf]
        %v1140 = vld [vmem:[%s1114 + $0x64] sm:$0xf]
        %v1141 = vld [vmem:[%s1114 + $0x68] sm:$0xf]
        %v1142 = vld [vmem:[%s1114 + $0x6c] sm:$0xf]
        %v1143 = vld [vmem:[%s1114 + $0x70] sm:$0xf]
        %v1144 = vld [vmem:[%s1114 + $0x74] sm:$0xf]
        %v1145 = vld [vmem:[%s1114 + $0x78] sm:$0xf]
        %v1146 = vld [vmem:[%s1114 + $0x7c] sm:$0xf]
        %v1147 = vld [vmem:[%s1114 + $0x80] sm:$0xf]
        %v1148 = vld [vmem:[%s1114 + $0x84] sm:$0xf]
        %v1149 = vld [vmem:[%s1114 + $0x88] sm:$0xf]
        %v1150 = vld [vmem:[%s1114 + $0x8c] sm:$0xf]
        %v1151 = vld [vmem:[%s1114 + $0x90] sm:$0xf]
        %v1152 = vld [vmem:[%s1114 + $0x94] sm:$0xf]
        %v1153 = vld [vmem:[%s1114 + $0x98] sm:$0xf]
        %v1154 = vld [vmem:[%s1114 + $0x9c] sm:$0xf]
        %v1155 = vld [vmem:[%s1114 + $0xa0] sm:$0xf]
        %v1156 = vld [vmem:[%s1114 + $0xa4] sm:$0xf]
        %v1157 = vld [vmem:[%s1114 + $0xa8] sm:$0xf]
        %v1158 = vld [vmem:[%s1114 + $0xac] sm:$0xf]
        %v1159 = vld [vmem:[%s1114 + $0xb0] sm:$0xf]
        %v1160 = vld [vmem:[%s1114 + $0xb4] sm:$0xf]
        %v1161 = vld [vmem:[%s1114 + $0xb8] sm:$0xf]
        %v1162 = vld [vmem:[%s1114 + $0xbc] sm:$0xf]
        %v1227 = vunpack.c.l.b16 %v1050
        %v1228 = vunpack.c.h.b16 %v1050
        %v1229 = vunpack.c.l.b16 %v1051
        %v1230 = vunpack.c.l.b16 %v1052
        %v1231 = vunpack.c.h.b16 %v1052
        %v1232 = vunpack.c.l.b16 %v1053
        %v1233 = vunpack.c.l.b16 %v1054
        %v1234 = vunpack.c.h.b16 %v1054
        %v1235 = vunpack.c.l.b16 %v1055
        %v1236 = vunpack.c.l.b16 %v1056
        %v1237 = vunpack.c.h.b16 %v1056
        %v1238 = vunpack.c.l.b16 %v1057
        %v1239 = vunpack.c.l.b16 %v1058
        %v1240 = vunpack.c.h.b16 %v1058
        %v1241 = vunpack.c.l.b16 %v1059
        %v1242 = vunpack.c.l.b16 %v1060
        %v1243 = vunpack.c.h.b16 %v1060
        %v1244 = vunpack.c.l.b16 %v1061
        %v1245 = vunpack.c.l.b16 %v1062
        %v1246 = vunpack.c.h.b16 %v1062
        %v1247 = vunpack.c.l.b16 %v1063
        %v1248 = vunpack.c.l.b16 %v1064
        %v1249 = vunpack.c.h.b16 %v1064
        %v1250 = vunpack.c.l.b16 %v1065
        %v1251 = vunpack.c.l.b16 %v1066
        %v1252 = vunpack.c.h.b16 %v1066
        %v1253 = vunpack.c.l.b16 %v1067
        %v1254 = vunpack.c.l.b16 %v1068
        %v1255 = vunpack.c.h.b16 %v1068
        %v1256 = vunpack.c.l.b16 %v1069
        %v1257 = vunpack.c.l.b16 %v1070
        %v1258 = vunpack.c.h.b16 %v1070
        %v1259 = vunpack.c.l.b16 %v1071
        %v1260 = vunpack.c.l.b16 %v1072
        %v1261 = vunpack.c.h.b16 %v1072
        %v1262 = vunpack.c.l.b16 %v1073
        %v1263 = vunpack.c.l.b16 %v1074
        %v1264 = vunpack.c.h.b16 %v1074
        %v1265 = vunpack.c.l.b16 %v1075
        %v1266 = vunpack.c.l.b16 %v1076
        %v1267 = vunpack.c.h.b16 %v1076
        %v1268 = vunpack.c.l.b16 %v1077
        %v1269 = vunpack.c.l.b16 %v1078
        %v1270 = vunpack.c.h.b16 %v1078
        %v1271 = vunpack.c.l.b16 %v1079
        %v1272 = vunpack.c.l.b16 %v1080
        %v1273 = vunpack.c.h.b16 %v1080
        %v1274 = vunpack.c.l.b16 %v1081
        %v1275 = vunpack.c.l.b16 %v1082
        %v1276 = vunpack.c.h.b16 %v1082
        %v1277 = vunpack.c.l.b16 %v1083
        %v1278 = vunpack.c.l.b16 %v1084
        %v1279 = vunpack.c.h.b16 %v1084
        %v1280 = vunpack.c.l.b16 %v1085
        %v1281 = vunpack.c.l.b16 %v1086
        %v1282 = vunpack.c.h.b16 %v1086
        %v1283 = vunpack.c.l.b16 %v1087
        %v1284 = vunpack.c.l.b16 %v1088
        %v1285 = vunpack.c.h.b16 %v1088
        %v1286 = vunpack.c.l.b16 %v1089
        %v1287 = vunpack.c.l.b16 %v1090
        %v1288 = vunpack.c.h.b16 %v1090
        %v1289 = vunpack.c.l.b16 %v1091
        %v1290 = vunpack.c.l.b16 %v1092
        %v1291 = vunpack.c.h.b16 %v1092
        %v1292 = vunpack.c.l.b16 %v1093
        %v1293 = vunpack.c.l.b16 %v1094
        %v1294 = vunpack.c.h.b16 %v1094
        %v1295 = vunpack.c.l.b16 %v1095
        %v1296 = vunpack.c.l.b16 %v1096
        %v1297 = vunpack.c.h.b16 %v1096
        %v1298 = vunpack.c.l.b16 %v1097
        %v1299 = vunpack.c.l.b16 %v1098
        %v1300 = vunpack.c.h.b16 %v1098
        %v1301 = vunpack.c.l.b16 %v1099
        %v1302 = vunpack.c.l.b16 %v1100
        %v1303 = vunpack.c.h.b16 %v1100
        %v1304 = vunpack.c.l.b16 %v1101
        %v1305 = vunpack.c.l.b16 %v1102
        %v1306 = vunpack.c.h.b16 %v1102
        %v1307 = vunpack.c.l.b16 %v1103
        %v1308 = vunpack.c.l.b16 %v1104
        %v1309 = vunpack.c.h.b16 %v1104
        %v1310 = vunpack.c.l.b16 %v1105
        %v1311 = vunpack.c.l.b16 %v1106
        %v1312 = vunpack.c.h.b16 %v1106
        %v1313 = vunpack.c.l.b16 %v1107
        %v1314 = vunpack.c.l.b16 %v1108
        %v1315 = vunpack.c.h.b16 %v1108
        %v1316 = vunpack.c.l.b16 %v1109
        %v1317 = vunpack.c.l.b16 %v1110
        %v1318 = vunpack.c.h.b16 %v1110
        %v1319 = vunpack.c.l.b16 %v1111
        %v1320 = vunpack.c.l.b16 %v1112
        %v1321 = vunpack.c.h.b16 %v1112
        %v1322 = vunpack.c.l.b16 %v1113
        %v1323 = vpack.c.b16 %v1230, %v1227
        %v1324 = vpack.c.b16 %v1231, %v1228
        %v1325 = vpack.c.b16 %v1232, %v1229
        %v1326 = vpack.c.b16 %v1236, %v1233
        %v1327 = vpack.c.b16 %v1237, %v1234
        %v1328 = vpack.c.b16 %v1238, %v1235
        %v1329 = vpack.c.b16 %v1242, %v1239
        %v1330 = vpack.c.b16 %v1243, %v1240
        %v1331 = vpack.c.b16 %v1244, %v1241
        %v1332 = vpack.c.b16 %v1248, %v1245
        %v1333 = vpack.c.b16 %v1249, %v1246
        %v1334 = vpack.c.b16 %v1250, %v1247
        %v1335 = vpack.c.b16 %v1254, %v1251
        %v1336 = vpack.c.b16 %v1255, %v1252
        %v1337 = vpack.c.b16 %v1256, %v1253
        %v1338 = vpack.c.b16 %v1260, %v1257
        %v1339 = vpack.c.b16 %v1261, %v1258
        %v1340 = vpack.c.b16 %v1262, %v1259
        %v1341 = vpack.c.b16 %v1266, %v1263
        %v1342 = vpack.c.b16 %v1267, %v1264
        %v1343 = vpack.c.b16 %v1268, %v1265
        %v1344 = vpack.c.b16 %v1272, %v1269
        %v1345 = vpack.c.b16 %v1273, %v1270
        %v1346 = vpack.c.b16 %v1274, %v1271
        %v1347 = vpack.c.b16 %v1278, %v1275
        %v1348 = vpack.c.b16 %v1279, %v1276
        %v1349 = vpack.c.b16 %v1280, %v1277
        %v1350 = vpack.c.b16 %v1284, %v1281
        %v1351 = vpack.c.b16 %v1285, %v1282
        %v1352 = vpack.c.b16 %v1286, %v1283
        %v1353 = vpack.c.b16 %v1290, %v1287
        %v1354 = vpack.c.b16 %v1291, %v1288
        %v1355 = vpack.c.b16 %v1292, %v1289
        %v1356 = vpack.c.b16 %v1296, %v1293
        %v1357 = vpack.c.b16 %v1297, %v1294
        %v1358 = vpack.c.b16 %v1298, %v1295
        %v1359 = vpack.c.b16 %v1302, %v1299
        %v1360 = vpack.c.b16 %v1303, %v1300
        %v1361 = vpack.c.b16 %v1304, %v1301
        %v1362 = vpack.c.b16 %v1308, %v1305
        %v1363 = vpack.c.b16 %v1309, %v1306
        %v1364 = vpack.c.b16 %v1310, %v1307
        %v1365 = vpack.c.b16 %v1314, %v1311
        %v1366 = vpack.c.b16 %v1315, %v1312
        %v1367 = vpack.c.b16 %v1316, %v1313
        %v1368 = vpack.c.b16 %v1320, %v1317
        %v1369 = vpack.c.b16 %v1321, %v1318
        %v1370 = vpack.c.b16 %v1322, %v1319
        %v1467 = vunpack.c.l.b16 %v1115
        %v1468 = vunpack.c.l.b16 %v1116
        %v1469 = vunpack.c.l.b16 %v1117
        %v1470 = vunpack.c.l.b16 %v1118
        %v1471 = vunpack.c.l.b16 %v1119
        %v1472 = vunpack.c.l.b16 %v1120
        %v1473 = vunpack.c.l.b16 %v1121
        %v1474 = vunpack.c.l.b16 %v1122
        %v1475 = vunpack.c.l.b16 %v1123
        %v1476 = vunpack.c.l.b16 %v1124
        %v1477 = vunpack.c.l.b16 %v1125
        %v1478 = vunpack.c.l.b16 %v1126
        %v1479 = vunpack.c.l.b16 %v1127
        %v1480 = vunpack.c.l.b16 %v1128
        %v1481 = vunpack.c.l.b16 %v1129
        %v1482 = vunpack.c.l.b16 %v1130
        %v1483 = vunpack.c.l.b16 %v1131
        %v1484 = vunpack.c.l.b16 %v1132
        %v1485 = vunpack.c.l.b16 %v1133
        %v1486 = vunpack.c.l.b16 %v1134
        %v1487 = vunpack.c.l.b16 %v1135
        %v1488 = vunpack.c.l.b16 %v1136
        %v1489 = vunpack.c.l.b16 %v1137
        %v1490 = vunpack.c.l.b16 %v1138
        %v1491 = vunpack.c.l.b16 %v1139
        %v1492 = vunpack.c.l.b16 %v1140
        %v1493 = vunpack.c.l.b16 %v1141
        %v1494 = vunpack.c.l.b16 %v1142
        %v1495 = vunpack.c.l.b16 %v1143
        %v1496 = vunpack.c.l.b16 %v1144
        %v1497 = vunpack.c.l.b16 %v1145
        %v1498 = vunpack.c.l.b16 %v1146
        %v1499 = vunpack.c.l.b16 %v1147
        %v1500 = vunpack.c.l.b16 %v1148
        %v1501 = vunpack.c.l.b16 %v1149
        %v1502 = vunpack.c.l.b16 %v1150
        %v1503 = vunpack.c.l.b16 %v1151
        %v1504 = vunpack.c.l.b16 %v1152
        %v1505 = vunpack.c.l.b16 %v1153
        %v1506 = vunpack.c.l.b16 %v1154
        %v1507 = vunpack.c.l.b16 %v1155
        %v1508 = vunpack.c.l.b16 %v1156
        %v1509 = vunpack.c.l.b16 %v1157
        %v1510 = vunpack.c.l.b16 %v1158
        %v1511 = vunpack.c.l.b16 %v1159
        %v1512 = vunpack.c.l.b16 %v1160
        %v1513 = vunpack.c.l.b16 %v1161
        %v1514 = vunpack.c.l.b16 %v1162
        %v1515 = vpack.c.b16 %v1468, %v1467
        %v1516 = vpack.c.b16 %v1470, %v1469
        %v1517 = vpack.c.b16 %v1472, %v1471
        %v1518 = vpack.c.b16 %v1474, %v1473
        %v1519 = vpack.c.b16 %v1476, %v1475
        %v1520 = vpack.c.b16 %v1478, %v1477
        %v1521 = vpack.c.b16 %v1480, %v1479
        %v1522 = vpack.c.b16 %v1482, %v1481
        %v1523 = vpack.c.b16 %v1484, %v1483
        %v1524 = vpack.c.b16 %v1486, %v1485
        %v1525 = vpack.c.b16 %v1488, %v1487
        %v1526 = vpack.c.b16 %v1490, %v1489
        %v1527 = vpack.c.b16 %v1492, %v1491
        %v1528 = vpack.c.b16 %v1494, %v1493
        %v1529 = vpack.c.b16 %v1496, %v1495
        %v1530 = vpack.c.b16 %v1498, %v1497
        %v1531 = vpack.c.b16 %v1500, %v1499
        %v1532 = vpack.c.b16 %v1502, %v1501
        %v1533 = vpack.c.b16 %v1504, %v1503
        %v1534 = vpack.c.b16 %v1506, %v1505
        %v1535 = vpack.c.b16 %v1508, %v1507
        %v1536 = vpack.c.b16 %v1510, %v1509
        %v1537 = vpack.c.b16 %v1512, %v1511
        %v1538 = vpack.c.b16 %v1514, %v1513
        %1563 = vmatpush.bf16.msra.mxu0 %v1522
        %1564 = vmatpush.bf16.msra.mxu0 %v1521
        %1565 = vmatpush.bf16.msra.mxu0 %v1520
        %1566 = vmatpush.bf16.msra.mxu0 %v1519
        %1567 = vmatpush.bf16.msra.mxu0 %v1518
        %1568 = vmatpush.bf16.msra.mxu0 %v1517
        %1569 = vmatpush.bf16.msra.mxu0 %v1516
        %1570 = vmatpush.bf16.msra.mxu0 %v1515
        %1571 = vmatmul.bf16.gmra.mxu0 %v1323
        %v1572 = vpop.f32.mrf.mxu0
        %v1573 = vadd.f32 0.0, %v1572
        %v1574 = vpop.f32.mrf.mxu0
        %v1575 = vadd.f32 0.0, %v1574
        %1576 = vmatmul.bf16.gmra.mxu0 %v1326
        %v1577 = vpop.f32.mrf.mxu0
        %v1578 = vadd.f32 0.0, %v1577
        %v1579 = vpop.f32.mrf.mxu0
        %v1580 = vadd.f32 0.0, %v1579
        %1581 = vmatmul.bf16.gmra.mxu0 %v1329
        %v1582 = vpop.f32.mrf.mxu0
        %v1583 = vadd.f32 0.0, %v1582
        %v1584 = vpop.f32.mrf.mxu0
        %v1585 = vadd.f32 0.0, %v1584
        %1586 = vmatmul.bf16.gmra.mxu0 %v1332
        %v1587 = vpop.f32.mrf.mxu0
        %v1588 = vadd.f32 0.0, %v1587
        %v1589 = vpop.f32.mrf.mxu0
        %v1590 = vadd.f32 0.0, %v1589
        %1591 = vmatmul.bf16.gmra.mxu0 %v1335
        %v1592 = vpop.f32.mrf.mxu0
        %v1593 = vadd.f32 0.0, %v1592
        %v1594 = vpop.f32.mrf.mxu0
        %v1595 = vadd.f32 0.0, %v1594
        %1596 = vmatmul.bf16.gmra.mxu0 %v1338
        %v1597 = vpop.f32.mrf.mxu0
        %v1598 = vadd.f32 0.0, %v1597
        %v1599 = vpop.f32.mrf.mxu0
        %v1600 = vadd.f32 0.0, %v1599
        %1601 = vmatmul.bf16.gmra.mxu0 %v1341
        %v1602 = vpop.f32.mrf.mxu0
        %v1603 = vadd.f32 0.0, %v1602
        %v1604 = vpop.f32.mrf.mxu0
        %v1605 = vadd.f32 0.0, %v1604
        %1606 = vmatmul.bf16.gmra.mxu0 %v1344
        %v1607 = vpop.f32.mrf.mxu0
        %v1608 = vadd.f32 0.0, %v1607
        %v1609 = vpop.f32.mrf.mxu0
        %v1610 = vadd.f32 0.0, %v1609
        %1611 = vmatmul.bf16.gmra.mxu0 %v1347
        %v1612 = vpop.f32.mrf.mxu0
        %v1613 = vadd.f32 0.0, %v1612
        %v1614 = vpop.f32.mrf.mxu0
        %v1615 = vadd.f32 0.0, %v1614
        %1616 = vmatmul.bf16.gmra.mxu0 %v1350
        %v1617 = vpop.f32.mrf.mxu0
        %v1618 = vadd.f32 0.0, %v1617
        %v1619 = vpop.f32.mrf.mxu0
        %v1620 = vadd.f32 0.0, %v1619
        %1621 = vmatmul.bf16.gmra.mxu0 %v1353
        %v1622 = vpop.f32.mrf.mxu0
        %v1623 = vadd.f32 0.0, %v1622
        %v1624 = vpop.f32.mrf.mxu0
        %v1625 = vadd.f32 0.0, %v1624
        %1626 = vmatmul.bf16.gmra.mxu0 %v1356
        %v1627 = vpop.f32.mrf.mxu0
        %v1628 = vadd.f32 0.0, %v1627
        %v1629 = vpop.f32.mrf.mxu0
        %v1630 = vadd.f32 0.0, %v1629
        %1631 = vmatmul.bf16.gmra.mxu0 %v1359
        %v1632 = vpop.f32.mrf.mxu0
        %v1633 = vadd.f32 0.0, %v1632
        %v1634 = vpop.f32.mrf.mxu0
        %v1635 = vadd.f32 0.0, %v1634
        %1636 = vmatmul.bf16.gmra.mxu0 %v1362
        %v1637 = vpop.f32.mrf.mxu0
        %v1638 = vadd.f32 0.0, %v1637
        %v1639 = vpop.f32.mrf.mxu0
        %v1640 = vadd.f32 0.0, %v1639
        %1641 = vmatmul.bf16.gmra.mxu0 %v1365
        %v1642 = vpop.f32.mrf.mxu0
        %v1643 = vadd.f32 0.0, %v1642
        %v1644 = vpop.f32.mrf.mxu0
        %v1645 = vadd.f32 0.0, %v1644
        %1646 = vmatmul.bf16.gmra.mxu0 %v1368
        %v1647 = vpop.f32.mrf.mxu0
        %v1648 = vadd.f32 0.0, %v1647
        %v1649 = vpop.f32.mrf.mxu0
        %v1650 = vadd.f32 0.0, %v1649
        %1651 = vdwg.mxu0
        %1652 = vmatpush.bf16.msra.mxu0 %v1530
        %1653 = vmatpush.bf16.msra.mxu0 %v1529
        %1654 = vmatpush.bf16.msra.mxu0 %v1528
        %1655 = vmatpush.bf16.msra.mxu0 %v1527
        %1656 = vmatpush.bf16.msra.mxu0 %v1526
        %1657 = vmatpush.bf16.msra.mxu0 %v1525
        %1658 = vmatpush.bf16.msra.mxu0 %v1524
        %1659 = vmatpush.bf16.msra.mxu0 %v1523
        %1660 = vmatmul.bf16.gmra.mxu0 %v1324
        %v1661 = vpop.f32.mrf.mxu0
        %v1662 = vadd.f32 %v1573, %v1661
        %v1663 = vpop.f32.mrf.mxu0
        %v1664 = vadd.f32 %v1575, %v1663
        %1665 = vmatmul.bf16.gmra.mxu0 %v1327
        %v1666 = vpop.f32.mrf.mxu0
        %v1667 = vadd.f32 %v1578, %v1666
        %v1668 = vpop.f32.mrf.mxu0
        %v1669 = vadd.f32 %v1580, %v1668
        %1670 = vmatmul.bf16.gmra.mxu0 %v1330
        %v1671 = vpop.f32.mrf.mxu0
        %v1672 = vadd.f32 %v1583, %v1671
        %v1673 = vpop.f32.mrf.mxu0
        %v1674 = vadd.f32 %v1585, %v1673
        %1675 = vmatmul.bf16.gmra.mxu0 %v1333
        %v1676 = vpop.f32.mrf.mxu0
        %v1677 = vadd.f32 %v1588, %v1676
        %v1678 = vpop.f32.mrf.mxu0
        %v1679 = vadd.f32 %v1590, %v1678
        %1680 = vmatmul.bf16.gmra.mxu0 %v1336
        %v1681 = vpop.f32.mrf.mxu0
        %v1682 = vadd.f32 %v1593, %v1681
        %v1683 = vpop.f32.mrf.mxu0
        %v1684 = vadd.f32 %v1595, %v1683
        %1685 = vmatmul.bf16.gmra.mxu0 %v1339
        %v1686 = vpop.f32.mrf.mxu0
        %v1687 = vadd.f32 %v1598, %v1686
        %v1688 = vpop.f32.mrf.mxu0
        %v1689 = vadd.f32 %v1600, %v1688
        %1690 = vmatmul.bf16.gmra.mxu0 %v1342
        %v1691 = vpop.f32.mrf.mxu0
        %v1692 = vadd.f32 %v1603, %v1691
        %v1693 = vpop.f32.mrf.mxu0
        %v1694 = vadd.f32 %v1605, %v1693
        %1695 = vmatmul.bf16.gmra.mxu0 %v1345
        %v1696 = vpop.f32.mrf.mxu0
        %v1697 = vadd.f32 %v1608, %v1696
        %v1698 = vpop.f32.mrf.mxu0
        %v1699 = vadd.f32 %v1610, %v1698
        %1700 = vmatmul.bf16.gmra.mxu0 %v1348
        %v1701 = vpop.f32.mrf.mxu0
        %v1702 = vadd.f32 %v1613, %v1701
        %v1703 = vpop.f32.mrf.mxu0
        %v1704 = vadd.f32 %v1615, %v1703
        %1705 = vmatmul.bf16.gmra.mxu0 %v1351
        %v1706 = vpop.f32.mrf.mxu0
        %v1707 = vadd.f32 %v1618, %v1706
        %v1708 = vpop.f32.mrf.mxu0
        %v1709 = vadd.f32 %v1620, %v1708
        %1710 = vmatmul.bf16.gmra.mxu0 %v1354
        %v1711 = vpop.f32.mrf.mxu0
        %v1712 = vadd.f32 %v1623, %v1711
        %v1713 = vpop.f32.mrf.mxu0
        %v1714 = vadd.f32 %v1625, %v1713
        %1715 = vmatmul.bf16.gmra.mxu0 %v1357
        %v1716 = vpop.f32.mrf.mxu0
        %v1717 = vadd.f32 %v1628, %v1716
        %v1718 = vpop.f32.mrf.mxu0
        %v1719 = vadd.f32 %v1630, %v1718
        %1720 = vmatmul.bf16.gmra.mxu0 %v1360
        %v1721 = vpop.f32.mrf.mxu0
        %v1722 = vadd.f32 %v1633, %v1721
        %v1723 = vpop.f32.mrf.mxu0
        %v1724 = vadd.f32 %v1635, %v1723
        %1725 = vmatmul.bf16.gmra.mxu0 %v1363
        %v1726 = vpop.f32.mrf.mxu0
        %v1727 = vadd.f32 %v1638, %v1726
        %v1728 = vpop.f32.mrf.mxu0
        %v1729 = vadd.f32 %v1640, %v1728
        %1730 = vmatmul.bf16.gmra.mxu0 %v1366
        %v1731 = vpop.f32.mrf.mxu0
        %v1732 = vadd.f32 %v1643, %v1731
        %v1733 = vpop.f32.mrf.mxu0
        %v1734 = vadd.f32 %v1645, %v1733
        %1735 = vmatmul.bf16.gmra.mxu0 %v1369
        %v1736 = vpop.f32.mrf.mxu0
        %v1737 = vadd.f32 %v1648, %v1736
        %v1738 = vpop.f32.mrf.mxu0
        %v1739 = vadd.f32 %v1650, %v1738
        %1740 = vdwg.mxu0
        %1741 = vmatpush.bf16.msra.mxu0 %v1538
        %1742 = vmatpush.bf16.msra.mxu0 %v1537
        %1743 = vmatpush.bf16.msra.mxu0 %v1536
        %1744 = vmatpush.bf16.msra.mxu0 %v1535
        %1745 = vmatpush.bf16.msra.mxu0 %v1534
        %1746 = vmatpush.bf16.msra.mxu0 %v1533
        %1747 = vmatpush.bf16.msra.mxu0 %v1532
        %1748 = vmatpush.bf16.msra.mxu0 %v1531
        %1749 = vmatmul.bf16.gmra.mxu0 %v1325
        %v1750 = vpop.f32.mrf.mxu0
        %v1751 = vadd.f32 %v1662, %v1750
        %v1752 = vpop.f32.mrf.mxu0
        %v1753 = vadd.f32 %v1664, %v1752
        %1754 = vmatmul.bf16.gmra.mxu0 %v1328
        %v1755 = vpop.f32.mrf.mxu0
        %v1756 = vadd.f32 %v1667, %v1755
        %v1757 = vpop.f32.mrf.mxu0
        %v1758 = vadd.f32 %v1669, %v1757
        %1759 = vmatmul.bf16.gmra.mxu0 %v1331
        %v1760 = vpop.f32.mrf.mxu0
        %v1761 = vadd.f32 %v1672, %v1760
        %v1762 = vpop.f32.mrf.mxu0
        %v1763 = vadd.f32 %v1674, %v1762
        %1764 = vmatmul.bf16.gmra.mxu0 %v1334
        %v1765 = vpop.f32.mrf.mxu0
        %v1766 = vadd.f32 %v1677, %v1765
        %v1767 = vpop.f32.mrf.mxu0
        %v1768 = vadd.f32 %v1679, %v1767
        %1769 = vmatmul.bf16.gmra.mxu0 %v1337
        %v1770 = vpop.f32.mrf.mxu0
        %v1771 = vadd.f32 %v1682, %v1770
        %v1772 = vpop.f32.mrf.mxu0
        %v1773 = vadd.f32 %v1684, %v1772
        %1774 = vmatmul.bf16.gmra.mxu0 %v1340
        %v1775 = vpop.f32.mrf.mxu0
        %v1776 = vadd.f32 %v1687, %v1775
        %v1777 = vpop.f32.mrf.mxu0
        %v1778 = vadd.f32 %v1689, %v1777
        %1779 = vmatmul.bf16.gmra.mxu0 %v1343
        %v1780 = vpop.f32.mrf.mxu0
        %v1781 = vadd.f32 %v1692, %v1780
        %v1782 = vpop.f32.mrf.mxu0
        %v1783 = vadd.f32 %v1694, %v1782
        %1784 = vmatmul.bf16.gmra.mxu0 %v1346
        %v1785 = vpop.f32.mrf.mxu0
        %v1786 = vadd.f32 %v1697, %v1785
        %v1787 = vpop.f32.mrf.mxu0
        %v1788 = vadd.f32 %v1699, %v1787
        %1789 = vmatmul.bf16.gmra.mxu0 %v1349
        %v1790 = vpop.f32.mrf.mxu0
        %v1791 = vadd.f32 %v1702, %v1790
        %v1792 = vpop.f32.mrf.mxu0
        %v1793 = vadd.f32 %v1704, %v1792
        %1794 = vmatmul.bf16.gmra.mxu0 %v1352
        %v1795 = vpop.f32.mrf.mxu0
        %v1796 = vadd.f32 %v1707, %v1795
        %v1797 = vpop.f32.mrf.mxu0
        %v1798 = vadd.f32 %v1709, %v1797
        %1799 = vmatmul.bf16.gmra.mxu0 %v1355
        %v1800 = vpop.f32.mrf.mxu0
        %v1801 = vadd.f32 %v1712, %v1800
        %v1802 = vpop.f32.mrf.mxu0
        %v1803 = vadd.f32 %v1714, %v1802
        %1804 = vmatmul.bf16.gmra.mxu0 %v1358
        %v1805 = vpop.f32.mrf.mxu0
        %v1806 = vadd.f32 %v1717, %v1805
        %v1807 = vpop.f32.mrf.mxu0
        %v1808 = vadd.f32 %v1719, %v1807
        %1809 = vmatmul.bf16.gmra.mxu0 %v1361
        %v1810 = vpop.f32.mrf.mxu0
        %v1811 = vadd.f32 %v1722, %v1810
        %v1812 = vpop.f32.mrf.mxu0
        %v1813 = vadd.f32 %v1724, %v1812
        %1814 = vmatmul.bf16.gmra.mxu0 %v1364
        %v1815 = vpop.f32.mrf.mxu0
        %v1816 = vadd.f32 %v1727, %v1815
        %v1817 = vpop.f32.mrf.mxu0
        %v1818 = vadd.f32 %v1729, %v1817
        %1819 = vmatmul.bf16.gmra.mxu0 %v1367
        %v1820 = vpop.f32.mrf.mxu0
        %v1821 = vadd.f32 %v1732, %v1820
        %v1822 = vpop.f32.mrf.mxu0
        %v1823 = vadd.f32 %v1734, %v1822
        %1824 = vmatmul.bf16.gmra.mxu0 %v1370
        %v1825 = vpop.f32.mrf.mxu0
        %v1826 = vadd.f32 %v1737, %v1825
        %v1827 = vpop.f32.mrf.mxu0
        %v1828 = vadd.f32 %v1739, %v1827
        %1829 = vdwg.mxu0
        %v1894 = vunpack.c.l.b16 %v938
        %v1895 = vunpack.c.h.b16 %v938
        %v1896 = vunpack.c.l.b16 %v939
        %v1897 = vunpack.c.l.b16 %v940
        %v1898 = vunpack.c.h.b16 %v940
        %v1899 = vunpack.c.l.b16 %v941
        %v1900 = vunpack.c.l.b16 %v942
        %v1901 = vunpack.c.h.b16 %v942
        %v1902 = vunpack.c.l.b16 %v943
        %v1903 = vunpack.c.l.b16 %v944
        %v1904 = vunpack.c.h.b16 %v944
        %v1905 = vunpack.c.l.b16 %v945
        %v1906 = vunpack.c.l.b16 %v946
        %v1907 = vunpack.c.h.b16 %v946
        %v1908 = vunpack.c.l.b16 %v947
        %v1909 = vunpack.c.l.b16 %v948
        %v1910 = vunpack.c.h.b16 %v948
        %v1911 = vunpack.c.l.b16 %v949
        %v1912 = vunpack.c.l.b16 %v950
        %v1913 = vunpack.c.h.b16 %v950
        %v1914 = vunpack.c.l.b16 %v951
        %v1915 = vunpack.c.l.b16 %v952
        %v1916 = vunpack.c.h.b16 %v952
        %v1917 = vunpack.c.l.b16 %v953
        %v1918 = vunpack.c.l.b16 %v954
        %v1919 = vunpack.c.h.b16 %v954
        %v1920 = vunpack.c.l.b16 %v955
        %v1921 = vunpack.c.l.b16 %v956
        %v1922 = vunpack.c.h.b16 %v956
        %v1923 = vunpack.c.l.b16 %v957
        %v1924 = vunpack.c.l.b16 %v958
        %v1925 = vunpack.c.h.b16 %v958
        %v1926 = vunpack.c.l.b16 %v959
        %v1927 = vunpack.c.l.b16 %v960
        %v1928 = vunpack.c.h.b16 %v960
        %v1929 = vunpack.c.l.b16 %v961
        %v1930 = vunpack.c.l.b16 %v962
        %v1931 = vunpack.c.h.b16 %v962
        %v1932 = vunpack.c.l.b16 %v963
        %v1933 = vunpack.c.l.b16 %v964
        %v1934 = vunpack.c.h.b16 %v964
        %v1935 = vunpack.c.l.b16 %v965
        %v1936 = vunpack.c.l.b16 %v966
        %v1937 = vunpack.c.h.b16 %v966
        %v1938 = vunpack.c.l.b16 %v967
        %v1939 = vunpack.c.l.b16 %v968
        %v1940 = vunpack.c.h.b16 %v968
        %v1941 = vunpack.c.l.b16 %v969
        %v1942 = vunpack.c.l.b16 %v970
        %v1943 = vunpack.c.h.b16 %v970
        %v1944 = vunpack.c.l.b16 %v971
        %v1945 = vunpack.c.l.b16 %v972
        %v1946 = vunpack.c.h.b16 %v972
        %v1947 = vunpack.c.l.b16 %v973
        %v1948 = vunpack.c.l.b16 %v974
        %v1949 = vunpack.c.h.b16 %v974
        %v1950 = vunpack.c.l.b16 %v975
        %v1951 = vunpack.c.l.b16 %v976
        %v1952 = vunpack.c.h.b16 %v976
        %v1953 = vunpack.c.l.b16 %v977
        %v1954 = vunpack.c.l.b16 %v978
        %v1955 = vunpack.c.h.b16 %v978
        %v1956 = vunpack.c.l.b16 %v979
        %v1957 = vunpack.c.l.b16 %v980
        %v1958 = vunpack.c.h.b16 %v980
        %v1959 = vunpack.c.l.b16 %v981
        %v1960 = vunpack.c.l.b16 %v982
        %v1961 = vunpack.c.h.b16 %v982
        %v1962 = vunpack.c.l.b16 %v983
        %v1963 = vunpack.c.l.b16 %v984
        %v1964 = vunpack.c.h.b16 %v984
        %v1965 = vunpack.c.l.b16 %v985
        %v1966 = vunpack.c.l.b16 %v986
        %v1967 = vunpack.c.h.b16 %v986
        %v1968 = vunpack.c.l.b16 %v987
        %v1969 = vunpack.c.l.b16 %v988
        %v1970 = vunpack.c.h.b16 %v988
        %v1971 = vunpack.c.l.b16 %v989
        %v1972 = vunpack.c.l.b16 %v990
        %v1973 = vunpack.c.h.b16 %v990
        %v1974 = vunpack.c.l.b16 %v991
        %v1975 = vunpack.c.l.b16 %v992
        %v1976 = vunpack.c.h.b16 %v992
        %v1977 = vunpack.c.l.b16 %v993
        %v1978 = vunpack.c.l.b16 %v994
        %v1979 = vunpack.c.h.b16 %v994
        %v1980 = vunpack.c.l.b16 %v995
        %v1981 = vunpack.c.l.b16 %v996
        %v1982 = vunpack.c.h.b16 %v996
        %v1983 = vunpack.c.l.b16 %v997
        %v1984 = vunpack.c.l.b16 %v998
        %v1985 = vunpack.c.h.b16 %v998
        %v1986 = vunpack.c.l.b16 %v999
        %v1987 = vunpack.c.l.b16 %v1000
        %v1988 = vunpack.c.h.b16 %v1000
        %v1989 = vunpack.c.l.b16 %v1001
        %v1990 = vpack.c.b16 %v1897, %v1894
        %v1991 = vpack.c.b16 %v1898, %v1895
        %v1992 = vpack.c.b16 %v1899, %v1896
        %v1993 = vpack.c.b16 %v1903, %v1900
        %v1994 = vpack.c.b16 %v1904, %v1901
        %v1995 = vpack.c.b16 %v1905, %v1902
        %v1996 = vpack.c.b16 %v1909, %v1906
        %v1997 = vpack.c.b16 %v1910, %v1907
        %v1998 = vpack.c.b16 %v1911, %v1908
        %v1999 = vpack.c.b16 %v1915, %v1912
        %v2000 = vpack.c.b16 %v1916, %v1913
        %v2001 = vpack.c.b16 %v1917, %v1914
        %v2002 = vpack.c.b16 %v1921, %v1918
        %v2003 = vpack.c.b16 %v1922, %v1919
        %v2004 = vpack.c.b16 %v1923, %v1920
        %v2005 = vpack.c.b16 %v1927, %v1924
        %v2006 = vpack.c.b16 %v1928, %v1925
        %v2007 = vpack.c.b16 %v1929, %v1926
        %v2008 = vpack.c.b16 %v1933, %v1930
        %v2009 = vpack.c.b16 %v1934, %v1931
        %v2010 = vpack.c.b16 %v1935, %v1932
        %v2011 = vpack.c.b16 %v1939, %v1936
        %v2012 = vpack.c.b16 %v1940, %v1937
        %v2013 = vpack.c.b16 %v1941, %v1938
        %v2014 = vpack.c.b16 %v1945, %v1942
        %v2015 = vpack.c.b16 %v1946, %v1943
        %v2016 = vpack.c.b16 %v1947, %v1944
        %v2017 = vpack.c.b16 %v1951, %v1948
        %v2018 = vpack.c.b16 %v1952, %v1949
        %v2019 = vpack.c.b16 %v1953, %v1950
        %v2020 = vpack.c.b16 %v1957, %v1954
        %v2021 = vpack.c.b16 %v1958, %v1955
        %v2022 = vpack.c.b16 %v1959, %v1956
        %v2023 = vpack.c.b16 %v1963, %v1960
        %v2024 = vpack.c.b16 %v1964, %v1961
        %v2025 = vpack.c.b16 %v1965, %v1962
        %v2026 = vpack.c.b16 %v1969, %v1966
        %v2027 = vpack.c.b16 %v1970, %v1967
        %v2028 = vpack.c.b16 %v1971, %v1968
        %v2029 = vpack.c.b16 %v1975, %v1972
        %v2030 = vpack.c.b16 %v1976, %v1973
        %v2031 = vpack.c.b16 %v1977, %v1974
        %v2032 = vpack.c.b16 %v1981, %v1978
        %v2033 = vpack.c.b16 %v1982, %v1979
        %v2034 = vpack.c.b16 %v1983, %v1980
        %v2035 = vpack.c.b16 %v1987, %v1984
        %v2036 = vpack.c.b16 %v1988, %v1985
        %v2037 = vpack.c.b16 %v1989, %v1986
        %v2134 = vunpack.c.l.b16 %v1002
        %v2135 = vunpack.c.l.b16 %v1003
        %v2136 = vunpack.c.l.b16 %v1004
        %v2137 = vunpack.c.l.b16 %v1005
        %v2138 = vunpack.c.l.b16 %v1006
        %v2139 = vunpack.c.l.b16 %v1007
        %v2140 = vunpack.c.l.b16 %v1008
        %v2141 = vunpack.c.l.b16 %v1009
        %v2142 = vunpack.c.l.b16 %v1010
        %v2143 = vunpack.c.l.b16 %v1011
        %v2144 = vunpack.c.l.b16 %v1012
        %v2145 = vunpack.c.l.b16 %v1013
        %v2146 = vunpack.c.l.b16 %v1014
        %v2147 = vunpack.c.l.b16 %v1015
        %v2148 = vunpack.c.l.b16 %v1016
        %v2149 = vunpack.c.l.b16 %v1017
        %v2150 = vunpack.c.l.b16 %v1018
        %v2151 = vunpack.c.l.b16 %v1019
        %v2152 = vunpack.c.l.b16 %v1020
        %v2153 = vunpack.c.l.b16 %v1021
        %v2154 = vunpack.c.l.b16 %v1022
        %v2155 = vunpack.c.l.b16 %v1023
        %v2156 = vunpack.c.l.b16 %v1024
        %v2157 = vunpack.c.l.b16 %v1025
        %v2158 = vunpack.c.l.b16 %v1026
        %v2159 = vunpack.c.l.b16 %v1027
        %v2160 = vunpack.c.l.b16 %v1028
        %v2161 = vunpack.c.l.b16 %v1029
        %v2162 = vunpack.c.l.b16 %v1030
        %v2163 = vunpack.c.l.b16 %v1031
        %v2164 = vunpack.c.l.b16 %v1032
        %v2165 = vunpack.c.l.b16 %v1033
        %v2166 = vunpack.c.l.b16 %v1034
        %v2167 = vunpack.c.l.b16 %v1035
        %v2168 = vunpack.c.l.b16 %v1036
        %v2169 = vunpack.c.l.b16 %v1037
        %v2170 = vunpack.c.l.b16 %v1038
        %v2171 = vunpack.c.l.b16 %v1039
        %v2172 = vunpack.c.l.b16 %v1040
        %v2173 = vunpack.c.l.b16 %v1041
        %v2174 = vunpack.c.l.b16 %v1042
        %v2175 = vunpack.c.l.b16 %v1043
        %v2176 = vunpack.c.l.b16 %v1044
        %v2177 = vunpack.c.l.b16 %v1045
        %v2178 = vunpack.c.l.b16 %v1046
        %v2179 = vunpack.c.l.b16 %v1047
        %v2180 = vunpack.c.l.b16 %v1048
        %v2181 = vunpack.c.l.b16 %v1049
        %v2182 = vpack.c.b16 %v2135, %v2134
        %v2183 = vpack.c.b16 %v2137, %v2136
        %v2184 = vpack.c.b16 %v2139, %v2138
        %v2185 = vpack.c.b16 %v2141, %v2140
        %v2186 = vpack.c.b16 %v2143, %v2142
        %v2187 = vpack.c.b16 %v2145, %v2144
        %v2188 = vpack.c.b16 %v2147, %v2146
        %v2189 = vpack.c.b16 %v2149, %v2148
        %v2190 = vpack.c.b16 %v2151, %v2150
        %v2191 = vpack.c.b16 %v2153, %v2152
        %v2192 = vpack.c.b16 %v2155, %v2154
        %v2193 = vpack.c.b16 %v2157, %v2156
        %v2194 = vpack.c.b16 %v2159, %v2158
        %v2195 = vpack.c.b16 %v2161, %v2160
        %v2196 = vpack.c.b16 %v2163, %v2162
        %v2197 = vpack.c.b16 %v2165, %v2164
        %v2198 = vpack.c.b16 %v2167, %v2166
        %v2199 = vpack.c.b16 %v2169, %v2168
        %v2200 = vpack.c.b16 %v2171, %v2170
        %v2201 = vpack.c.b16 %v2173, %v2172
        %v2202 = vpack.c.b16 %v2175, %v2174
        %v2203 = vpack.c.b16 %v2177, %v2176
        %v2204 = vpack.c.b16 %v2179, %v2178
        %v2205 = vpack.c.b16 %v2181, %v2180
        %2230 = vmatpush.bf16.msra.mxu0 %v2189
        %2231 = vmatpush.bf16.msra.mxu0 %v2188
        %2232 = vmatpush.bf16.msra.mxu0 %v2187
        %2233 = vmatpush.bf16.msra.mxu0 %v2186
        %2234 = vmatpush.bf16.msra.mxu0 %v2185
        %2235 = vmatpush.bf16.msra.mxu0 %v2184
        %2236 = vmatpush.bf16.msra.mxu0 %v2183
        %2237 = vmatpush.bf16.msra.mxu0 %v2182
        %2238 = vmatmul.bf16.gmra.mxu0 %v1990
        %v2239 = vpop.f32.mrf.mxu0
        %v2240 = vadd.f32 %v1751, %v2239
        %v2241 = vpop.f32.mrf.mxu0
        %v2242 = vadd.f32 %v1753, %v2241
        %2243 = vmatmul.bf16.gmra.mxu0 %v1993
        %v2244 = vpop.f32.mrf.mxu0
        %v2245 = vadd.f32 %v1756, %v2244
        %v2246 = vpop.f32.mrf.mxu0
        %v2247 = vadd.f32 %v1758, %v2246
        %2248 = vmatmul.bf16.gmra.mxu0 %v1996
        %v2249 = vpop.f32.mrf.mxu0
        %v2250 = vadd.f32 %v1761, %v2249
        %v2251 = vpop.f32.mrf.mxu0
        %v2252 = vadd.f32 %v1763, %v2251
        %2253 = vmatmul.bf16.gmra.mxu0 %v1999
        %v2254 = vpop.f32.mrf.mxu0
        %v2255 = vadd.f32 %v1766, %v2254
        %v2256 = vpop.f32.mrf.mxu0
        %v2257 = vadd.f32 %v1768, %v2256
        %2258 = vmatmul.bf16.gmra.mxu0 %v2002
        %v2259 = vpop.f32.mrf.mxu0
        %v2260 = vadd.f32 %v1771, %v2259
        %v2261 = vpop.f32.mrf.mxu0
        %v2262 = vadd.f32 %v1773, %v2261
        %2263 = vmatmul.bf16.gmra.mxu0 %v2005
        %v2264 = vpop.f32.mrf.mxu0
        %v2265 = vadd.f32 %v1776, %v2264
        %v2266 = vpop.f32.mrf.mxu0
        %v2267 = vadd.f32 %v1778, %v2266
        %2268 = vmatmul.bf16.gmra.mxu0 %v2008
        %v2269 = vpop.f32.mrf.mxu0
        %v2270 = vadd.f32 %v1781, %v2269
        %v2271 = vpop.f32.mrf.mxu0
        %v2272 = vadd.f32 %v1783, %v2271
        %2273 = vmatmul.bf16.gmra.mxu0 %v2011
        %v2274 = vpop.f32.mrf.mxu0
        %v2275 = vadd.f32 %v1786, %v2274
        %v2276 = vpop.f32.mrf.mxu0
        %v2277 = vadd.f32 %v1788, %v2276
        %2278 = vmatmul.bf16.gmra.mxu0 %v2014
        %v2279 = vpop.f32.mrf.mxu0
        %v2280 = vadd.f32 %v1791, %v2279
        %v2281 = vpop.f32.mrf.mxu0
        %v2282 = vadd.f32 %v1793, %v2281
        %2283 = vmatmul.bf16.gmra.mxu0 %v2017
        %v2284 = vpop.f32.mrf.mxu0
        %v2285 = vadd.f32 %v1796, %v2284
        %v2286 = vpop.f32.mrf.mxu0
        %v2287 = vadd.f32 %v1798, %v2286
        %2288 = vmatmul.bf16.gmra.mxu0 %v2020
        %v2289 = vpop.f32.mrf.mxu0
        %v2290 = vadd.f32 %v1801, %v2289
        %v2291 = vpop.f32.mrf.mxu0
        %v2292 = vadd.f32 %v1803, %v2291
        %2293 = vmatmul.bf16.gmra.mxu0 %v2023
        %v2294 = vpop.f32.mrf.mxu0
        %v2295 = vadd.f32 %v1806, %v2294
        %v2296 = vpop.f32.mrf.mxu0
        %v2297 = vadd.f32 %v1808, %v2296
        %2298 = vmatmul.bf16.gmra.mxu0 %v2026
        %v2299 = vpop.f32.mrf.mxu0
        %v2300 = vadd.f32 %v1811, %v2299
        %v2301 = vpop.f32.mrf.mxu0
        %v2302 = vadd.f32 %v1813, %v2301
        %2303 = vmatmul.bf16.gmra.mxu0 %v2029
        %v2304 = vpop.f32.mrf.mxu0
        %v2305 = vadd.f32 %v1816, %v2304
        %v2306 = vpop.f32.mrf.mxu0
        %v2307 = vadd.f32 %v1818, %v2306
        %2308 = vmatmul.bf16.gmra.mxu0 %v2032
        %v2309 = vpop.f32.mrf.mxu0
        %v2310 = vadd.f32 %v1821, %v2309
        %v2311 = vpop.f32.mrf.mxu0
        %v2312 = vadd.f32 %v1823, %v2311
        %2313 = vmatmul.bf16.gmra.mxu0 %v2035
        %v2314 = vpop.f32.mrf.mxu0
        %v2315 = vadd.f32 %v1826, %v2314
        %v2316 = vpop.f32.mrf.mxu0
        %v2317 = vadd.f32 %v1828, %v2316
        %2318 = vdwg.mxu0
        %2319 = vmatpush.bf16.msra.mxu0 %v2197
        %2320 = vmatpush.bf16.msra.mxu0 %v2196
        %2321 = vmatpush.bf16.msra.mxu0 %v2195
        %2322 = vmatpush.bf16.msra.mxu0 %v2194
        %2323 = vmatpush.bf16.msra.mxu0 %v2193
        %2324 = vmatpush.bf16.msra.mxu0 %v2192
        %2325 = vmatpush.bf16.msra.mxu0 %v2191
        %2326 = vmatpush.bf16.msra.mxu0 %v2190
        %2327 = vmatmul.bf16.gmra.mxu0 %v1991
        %v2328 = vpop.f32.mrf.mxu0
        %v2329 = vadd.f32 %v2240, %v2328
        %v2330 = vpop.f32.mrf.mxu0
        %v2331 = vadd.f32 %v2242, %v2330
        %2332 = vmatmul.bf16.gmra.mxu0 %v1994
        %v2333 = vpop.f32.mrf.mxu0
        %v2334 = vadd.f32 %v2245, %v2333
        %v2335 = vpop.f32.mrf.mxu0
        %v2336 = vadd.f32 %v2247, %v2335
        %2337 = vmatmul.bf16.gmra.mxu0 %v1997
        %v2338 = vpop.f32.mrf.mxu0
        %v2339 = vadd.f32 %v2250, %v2338
        %v2340 = vpop.f32.mrf.mxu0
        %v2341 = vadd.f32 %v2252, %v2340
        %2342 = vmatmul.bf16.gmra.mxu0 %v2000
        %v2343 = vpop.f32.mrf.mxu0
        %v2344 = vadd.f32 %v2255, %v2343
        %v2345 = vpop.f32.mrf.mxu0
        %v2346 = vadd.f32 %v2257, %v2345
        %2347 = vmatmul.bf16.gmra.mxu0 %v2003
        %v2348 = vpop.f32.mrf.mxu0
        %v2349 = vadd.f32 %v2260, %v2348
        %v2350 = vpop.f32.mrf.mxu0
        %v2351 = vadd.f32 %v2262, %v2350
        %2352 = vmatmul.bf16.gmra.mxu0 %v2006
        %v2353 = vpop.f32.mrf.mxu0
        %v2354 = vadd.f32 %v2265, %v2353
        %v2355 = vpop.f32.mrf.mxu0
        %v2356 = vadd.f32 %v2267, %v2355
        %2357 = vmatmul.bf16.gmra.mxu0 %v2009
        %v2358 = vpop.f32.mrf.mxu0
        %v2359 = vadd.f32 %v2270, %v2358
        %v2360 = vpop.f32.mrf.mxu0
        %v2361 = vadd.f32 %v2272, %v2360
        %2362 = vmatmul.bf16.gmra.mxu0 %v2012
        %v2363 = vpop.f32.mrf.mxu0
        %v2364 = vadd.f32 %v2275, %v2363
        %v2365 = vpop.f32.mrf.mxu0
        %v2366 = vadd.f32 %v2277, %v2365
        %2367 = vmatmul.bf16.gmra.mxu0 %v2015
        %v2368 = vpop.f32.mrf.mxu0
        %v2369 = vadd.f32 %v2280, %v2368
        %v2370 = vpop.f32.mrf.mxu0
        %v2371 = vadd.f32 %v2282, %v2370
        %2372 = vmatmul.bf16.gmra.mxu0 %v2018
        %v2373 = vpop.f32.mrf.mxu0
        %v2374 = vadd.f32 %v2285, %v2373
        %v2375 = vpop.f32.mrf.mxu0
        %v2376 = vadd.f32 %v2287, %v2375
        %2377 = vmatmul.bf16.gmra.mxu0 %v2021
        %v2378 = vpop.f32.mrf.mxu0
        %v2379 = vadd.f32 %v2290, %v2378
        %v2380 = vpop.f32.mrf.mxu0
        %v2381 = vadd.f32 %v2292, %v2380
        %2382 = vmatmul.bf16.gmra.mxu0 %v2024
        %v2383 = vpop.f32.mrf.mxu0
        %v2384 = vadd.f32 %v2295, %v2383
        %v2385 = vpop.f32.mrf.mxu0
        %v2386 = vadd.f32 %v2297, %v2385
        %2387 = vmatmul.bf16.gmra.mxu0 %v2027
        %v2388 = vpop.f32.mrf.mxu0
        %v2389 = vadd.f32 %v2300, %v2388
        %v2390 = vpop.f32.mrf.mxu0
        %v2391 = vadd.f32 %v2302, %v2390
        %2392 = vmatmul.bf16.gmra.mxu0 %v2030
        %v2393 = vpop.f32.mrf.mxu0
        %v2394 = vadd.f32 %v2305, %v2393
        %v2395 = vpop.f32.mrf.mxu0
        %v2396 = vadd.f32 %v2307, %v2395
        %2397 = vmatmul.bf16.gmra.mxu0 %v2033
        %v2398 = vpop.f32.mrf.mxu0
        %v2399 = vadd.f32 %v2310, %v2398
        %v2400 = vpop.f32.mrf.mxu0
        %v2401 = vadd.f32 %v2312, %v2400
        %2402 = vmatmul.bf16.gmra.mxu0 %v2036
        %v2403 = vpop.f32.mrf.mxu0
        %v2404 = vadd.f32 %v2315, %v2403
        %v2405 = vpop.f32.mrf.mxu0
        %v2406 = vadd.f32 %v2317, %v2405
        %2407 = vdwg.mxu0
        %2408 = vmatpush.bf16.msra.mxu0 %v2205
        %2409 = vmatpush.bf16.msra.mxu0 %v2204
        %2410 = vmatpush.bf16.msra.mxu0 %v2203
        %2411 = vmatpush.bf16.msra.mxu0 %v2202
        %2412 = vmatpush.bf16.msra.mxu0 %v2201
        %2413 = vmatpush.bf16.msra.mxu0 %v2200
        %2414 = vmatpush.bf16.msra.mxu0 %v2199
        %2415 = vmatpush.bf16.msra.mxu0 %v2198
        %2416 = vmatmul.bf16.gmra.mxu0 %v1992
        %v2417 = vpop.f32.mrf.mxu0
        %v2418 = vadd.f32 %v2329, %v2417
        %v2419 = vpop.f32.mrf.mxu0
        %v2420 = vadd.f32 %v2331, %v2419
        %2421 = vmatmul.bf16.gmra.mxu0 %v1995
        %v2422 = vpop.f32.mrf.mxu0
        %v2423 = vadd.f32 %v2334, %v2422
        %v2424 = vpop.f32.mrf.mxu0
        %v2425 = vadd.f32 %v2336, %v2424
        %2426 = vmatmul.bf16.gmra.mxu0 %v1998
        %v2427 = vpop.f32.mrf.mxu0
        %v2428 = vadd.f32 %v2339, %v2427
        %v2429 = vpop.f32.mrf.mxu0
        %v2430 = vadd.f32 %v2341, %v2429
        %2431 = vmatmul.bf16.gmra.mxu0 %v2001
        %v2432 = vpop.f32.mrf.mxu0
        %v2433 = vadd.f32 %v2344, %v2432
        %v2434 = vpop.f32.mrf.mxu0
        %v2435 = vadd.f32 %v2346, %v2434
        %2436 = vmatmul.bf16.gmra.mxu0 %v2004
        %v2437 = vpop.f32.mrf.mxu0
        %v2438 = vadd.f32 %v2349, %v2437
        %v2439 = vpop.f32.mrf.mxu0
        %v2440 = vadd.f32 %v2351, %v2439
        %2441 = vmatmul.bf16.gmra.mxu0 %v2007
        %v2442 = vpop.f32.mrf.mxu0
        %v2443 = vadd.f32 %v2354, %v2442
        %v2444 = vpop.f32.mrf.mxu0
        %v2445 = vadd.f32 %v2356, %v2444
        %2446 = vmatmul.bf16.gmra.mxu0 %v2010
        %v2447 = vpop.f32.mrf.mxu0
        %v2448 = vadd.f32 %v2359, %v2447
        %v2449 = vpop.f32.mrf.mxu0
        %v2450 = vadd.f32 %v2361, %v2449
        %2451 = vmatmul.bf16.gmra.mxu0 %v2013
        %v2452 = vpop.f32.mrf.mxu0
        %v2453 = vadd.f32 %v2364, %v2452
        %v2454 = vpop.f32.mrf.mxu0
        %v2455 = vadd.f32 %v2366, %v2454
        %2456 = vmatmul.bf16.gmra.mxu0 %v2016
        %v2457 = vpop.f32.mrf.mxu0
        %v2458 = vadd.f32 %v2369, %v2457
        %v2459 = vpop.f32.mrf.mxu0
        %v2460 = vadd.f32 %v2371, %v2459
        %2461 = vmatmul.bf16.gmra.mxu0 %v2019
        %v2462 = vpop.f32.mrf.mxu0
        %v2463 = vadd.f32 %v2374, %v2462
        %v2464 = vpop.f32.mrf.mxu0
        %v2465 = vadd.f32 %v2376, %v2464
        %2466 = vmatmul.bf16.gmra.mxu0 %v2022
        %v2467 = vpop.f32.mrf.mxu0
        %v2468 = vadd.f32 %v2379, %v2467
        %v2469 = vpop.f32.mrf.mxu0
        %v2470 = vadd.f32 %v2381, %v2469
        %2471 = vmatmul.bf16.gmra.mxu0 %v2025
        %v2472 = vpop.f32.mrf.mxu0
        %v2473 = vadd.f32 %v2384, %v2472
        %v2474 = vpop.f32.mrf.mxu0
        %v2475 = vadd.f32 %v2386, %v2474
        %2476 = vmatmul.bf16.gmra.mxu0 %v2028
        %v2477 = vpop.f32.mrf.mxu0
        %v2478 = vadd.f32 %v2389, %v2477
        %v2479 = vpop.f32.mrf.mxu0
        %v2480 = vadd.f32 %v2391, %v2479
        %2481 = vmatmul.bf16.gmra.mxu0 %v2031
        %v2482 = vpop.f32.mrf.mxu0
        %v2483 = vadd.f32 %v2394, %v2482
        %v2484 = vpop.f32.mrf.mxu0
        %v2485 = vadd.f32 %v2396, %v2484
        %2486 = vmatmul.bf16.gmra.mxu0 %v2034
        %v2487 = vpop.f32.mrf.mxu0
        %v2488 = vadd.f32 %v2399, %v2487
        %v2489 = vpop.f32.mrf.mxu0
        %v2490 = vadd.f32 %v2401, %v2489
        %2491 = vmatmul.bf16.gmra.mxu0 %v2037
        %v2492 = vpop.f32.mrf.mxu0
        %v2493 = vadd.f32 %v2404, %v2492
        %v2494 = vpop.f32.mrf.mxu0
        %v2495 = vadd.f32 %v2406, %v2494
        %2496 = vdwg.mxu0
        %s2497 = scalar_lea.vmem [#allocation2], 48
        %v2498 = vld [vmem:[%s2497] sm:$0xff]
        %v2499 = vld [vmem:[%s2497 + $0x8] sm:$0xf]
        %v2500 = vld [vmem:[%s2497 + $0xc] sm:$0xff]
        %v2501 = vld [vmem:[%s2497 + $0x14] sm:$0xf]
        %v2502 = vld [vmem:[%s2497 + $0x18] sm:$0xff]
        %v2503 = vld [vmem:[%s2497 + $0x20] sm:$0xf]
        %v2504 = vld [vmem:[%s2497 + $0x24] sm:$0xff]
        %v2505 = vld [vmem:[%s2497 + $0x2c] sm:$0xf]
        %v2506 = vld [vmem:[%s2497 + $0x30] sm:$0xff]
        %v2507 = vld [vmem:[%s2497 + $0x38] sm:$0xf]
        %v2508 = vld [vmem:[%s2497 + $0x3c] sm:$0xff]
        %v2509 = vld [vmem:[%s2497 + $0x44] sm:$0xf]
        %v2510 = vld [vmem:[%s2497 + $0x48] sm:$0xff]
        %v2511 = vld [vmem:[%s2497 + $0x50] sm:$0xf]
        %v2512 = vld [vmem:[%s2497 + $0x54] sm:$0xff]
        %v2513 = vld [vmem:[%s2497 + $0x5c] sm:$0xf]
        %v2514 = vld [vmem:[%s2497 + $0x60] sm:$0xff]
        %v2515 = vld [vmem:[%s2497 + $0x68] sm:$0xf]
        %v2516 = vld [vmem:[%s2497 + $0x6c] sm:$0xff]
        %v2517 = vld [vmem:[%s2497 + $0x74] sm:$0xf]
        %v2518 = vld [vmem:[%s2497 + $0x78] sm:$0xff]
        %v2519 = vld [vmem:[%s2497 + $0x80] sm:$0xf]
        %v2520 = vld [vmem:[%s2497 + $0x84] sm:$0xff]
        %v2521 = vld [vmem:[%s2497 + $0x8c] sm:$0xf]
        %v2522 = vld [vmem:[%s2497 + $0x90] sm:$0xff]
        %v2523 = vld [vmem:[%s2497 + $0x98] sm:$0xf]
        %v2524 = vld [vmem:[%s2497 + $0x9c] sm:$0xff]
        %v2525 = vld [vmem:[%s2497 + $0xa4] sm:$0xf]
        %v2526 = vld [vmem:[%s2497 + $0xa8] sm:$0xff]
        %v2527 = vld [vmem:[%s2497 + $0xb0] sm:$0xf]
        %v2528 = vld [vmem:[%s2497 + $0xb4] sm:$0xff]
        %v2529 = vld [vmem:[%s2497 + $0xbc] sm:$0xf]
        %v2530 = vld [vmem:[%s2497 + $0xc0] sm:$0xff]
        %v2531 = vld [vmem:[%s2497 + $0xc8] sm:$0xf]
        %v2532 = vld [vmem:[%s2497 + $0xcc] sm:$0xff]
        %v2533 = vld [vmem:[%s2497 + $0xd4] sm:$0xf]
        %v2534 = vld [vmem:[%s2497 + $0xd8] sm:$0xff]
        %v2535 = vld [vmem:[%s2497 + $0xe0] sm:$0xf]
        %v2536 = vld [vmem:[%s2497 + $0xe4] sm:$0xff]
        %v2537 = vld [vmem:[%s2497 + $0xec] sm:$0xf]
        %v2538 = vld [vmem:[%s2497 + $0xf0] sm:$0xff]
        %v2539 = vld [vmem:[%s2497 + $0xf8] sm:$0xf]
        %v2540 = vld [vmem:[%s2497 + $0xfc] sm:$0xff]
        %v2541 = vld [vmem:[%s2497 + $0x104] sm:$0xf]
        %v2542 = vld [vmem:[%s2497 + $0x108] sm:$0xff]
        %v2543 = vld [vmem:[%s2497 + $0x110] sm:$0xf]
        %v2544 = vld [vmem:[%s2497 + $0x114] sm:$0xff]
        %v2545 = vld [vmem:[%s2497 + $0x11c] sm:$0xf]
        %v2546 = vld [vmem:[%s2497 + $0x120] sm:$0xff]
        %v2547 = vld [vmem:[%s2497 + $0x128] sm:$0xf]
        %v2548 = vld [vmem:[%s2497 + $0x12c] sm:$0xff]
        %v2549 = vld [vmem:[%s2497 + $0x134] sm:$0xf]
        %v2550 = vld [vmem:[%s2497 + $0x138] sm:$0xff]
        %v2551 = vld [vmem:[%s2497 + $0x140] sm:$0xf]
        %v2552 = vld [vmem:[%s2497 + $0x144] sm:$0xff]
        %v2553 = vld [vmem:[%s2497 + $0x14c] sm:$0xf]
        %v2554 = vld [vmem:[%s2497 + $0x150] sm:$0xff]
        %v2555 = vld [vmem:[%s2497 + $0x158] sm:$0xf]
        %v2556 = vld [vmem:[%s2497 + $0x15c] sm:$0xff]
        %v2557 = vld [vmem:[%s2497 + $0x164] sm:$0xf]
        %v2558 = vld [vmem:[%s2497 + $0x168] sm:$0xff]
        %v2559 = vld [vmem:[%s2497 + $0x170] sm:$0xf]
        %v2560 = vld [vmem:[%s2497 + $0x174] sm:$0xff]
        %v2561 = vld [vmem:[%s2497 + $0x17c] sm:$0xf]
        %s2562 = scalar_lea.vmem [#allocation6], 384
        %v2563 = vld [vmem:[%s2562] sm:$0xf]
        %v2564 = vld [vmem:[%s2562 + $0x4] sm:$0xf]
        %v2565 = vld [vmem:[%s2562 + $0x8] sm:$0xf]
        %v2566 = vld [vmem:[%s2562 + $0xc] sm:$0xf]
        %v2567 = vld [vmem:[%s2562 + $0x10] sm:$0xf]
        %v2568 = vld [vmem:[%s2562 + $0x14] sm:$0xf]
        %v2569 = vld [vmem:[%s2562 + $0x18] sm:$0xf]
        %v2570 = vld [vmem:[%s2562 + $0x1c] sm:$0xf]
        %v2571 = vld [vmem:[%s2562 + $0x20] sm:$0xf]
        %v2572 = vld [vmem:[%s2562 + $0x24] sm:$0xf]
        %v2573 = vld [vmem:[%s2562 + $0x28] sm:$0xf]
        %v2574 = vld [vmem:[%s2562 + $0x2c] sm:$0xf]
        %v2575 = vld [vmem:[%s2562 + $0x30] sm:$0xf]
        %v2576 = vld [vmem:[%s2562 + $0x34] sm:$0xf]
        %v2577 = vld [vmem:[%s2562 + $0x38] sm:$0xf]
        %v2578 = vld [vmem:[%s2562 + $0x3c] sm:$0xf]
        %v2579 = vld [vmem:[%s2562 + $0x40] sm:$0xf]
        %v2580 = vld [vmem:[%s2562 + $0x44] sm:$0xf]
        %v2581 = vld [vmem:[%s2562 + $0x48] sm:$0xf]
        %v2582 = vld [vmem:[%s2562 + $0x4c] sm:$0xf]
        %v2583 = vld [vmem:[%s2562 + $0x50] sm:$0xf]
        %v2584 = vld [vmem:[%s2562 + $0x54] sm:$0xf]
        %v2585 = vld [vmem:[%s2562 + $0x58] sm:$0xf]
        %v2586 = vld [vmem:[%s2562 + $0x5c] sm:$0xf]
        %v2587 = vld [vmem:[%s2562 + $0x60] sm:$0xf]
        %v2588 = vld [vmem:[%s2562 + $0x64] sm:$0xf]
        %v2589 = vld [vmem:[%s2562 + $0x68] sm:$0xf]
        %v2590 = vld [vmem:[%s2562 + $0x6c] sm:$0xf]
        %v2591 = vld [vmem:[%s2562 + $0x70] sm:$0xf]
        %v2592 = vld [vmem:[%s2562 + $0x74] sm:$0xf]
        %v2593 = vld [vmem:[%s2562 + $0x78] sm:$0xf]
        %v2594 = vld [vmem:[%s2562 + $0x7c] sm:$0xf]
        %v2595 = vld [vmem:[%s2562 + $0x80] sm:$0xf]
        %v2596 = vld [vmem:[%s2562 + $0x84] sm:$0xf]
        %v2597 = vld [vmem:[%s2562 + $0x88] sm:$0xf]
        %v2598 = vld [vmem:[%s2562 + $0x8c] sm:$0xf]
        %v2599 = vld [vmem:[%s2562 + $0x90] sm:$0xf]
        %v2600 = vld [vmem:[%s2562 + $0x94] sm:$0xf]
        %v2601 = vld [vmem:[%s2562 + $0x98] sm:$0xf]
        %v2602 = vld [vmem:[%s2562 + $0x9c] sm:$0xf]
        %v2603 = vld [vmem:[%s2562 + $0xa0] sm:$0xf]
        %v2604 = vld [vmem:[%s2562 + $0xa4] sm:$0xf]
        %v2605 = vld [vmem:[%s2562 + $0xa8] sm:$0xf]
        %v2606 = vld [vmem:[%s2562 + $0xac] sm:$0xf]
        %v2607 = vld [vmem:[%s2562 + $0xb0] sm:$0xf]
        %v2608 = vld [vmem:[%s2562 + $0xb4] sm:$0xf]
        %v2609 = vld [vmem:[%s2562 + $0xb8] sm:$0xf]
        %v2610 = vld [vmem:[%s2562 + $0xbc] sm:$0xf]
        %v2675 = vunpack.c.l.b16 %v2498
        %v2676 = vunpack.c.h.b16 %v2498
        %v2677 = vunpack.c.l.b16 %v2499
        %v2678 = vunpack.c.l.b16 %v2500
        %v2679 = vunpack.c.h.b16 %v2500
        %v2680 = vunpack.c.l.b16 %v2501
        %v2681 = vunpack.c.l.b16 %v2502
        %v2682 = vunpack.c.h.b16 %v2502
        %v2683 = vunpack.c.l.b16 %v2503
        %v2684 = vunpack.c.l.b16 %v2504
        %v2685 = vunpack.c.h.b16 %v2504
        %v2686 = vunpack.c.l.b16 %v2505
        %v2687 = vunpack.c.l.b16 %v2506
        %v2688 = vunpack.c.h.b16 %v2506
        %v2689 = vunpack.c.l.b16 %v2507
        %v2690 = vunpack.c.l.b16 %v2508
        %v2691 = vunpack.c.h.b16 %v2508
        %v2692 = vunpack.c.l.b16 %v2509
        %v2693 = vunpack.c.l.b16 %v2510
        %v2694 = vunpack.c.h.b16 %v2510
        %v2695 = vunpack.c.l.b16 %v2511
        %v2696 = vunpack.c.l.b16 %v2512
        %v2697 = vunpack.c.h.b16 %v2512
        %v2698 = vunpack.c.l.b16 %v2513
        %v2699 = vunpack.c.l.b16 %v2514
        %v2700 = vunpack.c.h.b16 %v2514
        %v2701 = vunpack.c.l.b16 %v2515
        %v2702 = vunpack.c.l.b16 %v2516
        %v2703 = vunpack.c.h.b16 %v2516
        %v2704 = vunpack.c.l.b16 %v2517
        %v2705 = vunpack.c.l.b16 %v2518
        %v2706 = vunpack.c.h.b16 %v2518
        %v2707 = vunpack.c.l.b16 %v2519
        %v2708 = vunpack.c.l.b16 %v2520
        %v2709 = vunpack.c.h.b16 %v2520
        %v2710 = vunpack.c.l.b16 %v2521
        %v2711 = vunpack.c.l.b16 %v2522
        %v2712 = vunpack.c.h.b16 %v2522
        %v2713 = vunpack.c.l.b16 %v2523
        %v2714 = vunpack.c.l.b16 %v2524
        %v2715 = vunpack.c.h.b16 %v2524
        %v2716 = vunpack.c.l.b16 %v2525
        %v2717 = vunpack.c.l.b16 %v2526
        %v2718 = vunpack.c.h.b16 %v2526
        %v2719 = vunpack.c.l.b16 %v2527
        %v2720 = vunpack.c.l.b16 %v2528
        %v2721 = vunpack.c.h.b16 %v2528
        %v2722 = vunpack.c.l.b16 %v2529
        %v2723 = vunpack.c.l.b16 %v2530
        %v2724 = vunpack.c.h.b16 %v2530
        %v2725 = vunpack.c.l.b16 %v2531
        %v2726 = vunpack.c.l.b16 %v2532
        %v2727 = vunpack.c.h.b16 %v2532
        %v2728 = vunpack.c.l.b16 %v2533
        %v2729 = vunpack.c.l.b16 %v2534
        %v2730 = vunpack.c.h.b16 %v2534
        %v2731 = vunpack.c.l.b16 %v2535
        %v2732 = vunpack.c.l.b16 %v2536
        %v2733 = vunpack.c.h.b16 %v2536
        %v2734 = vunpack.c.l.b16 %v2537
        %v2735 = vunpack.c.l.b16 %v2538
        %v2736 = vunpack.c.h.b16 %v2538
        %v2737 = vunpack.c.l.b16 %v2539
        %v2738 = vunpack.c.l.b16 %v2540
        %v2739 = vunpack.c.h.b16 %v2540
        %v2740 = vunpack.c.l.b16 %v2541
        %v2741 = vunpack.c.l.b16 %v2542
        %v2742 = vunpack.c.h.b16 %v2542
        %v2743 = vunpack.c.l.b16 %v2543
        %v2744 = vunpack.c.l.b16 %v2544
        %v2745 = vunpack.c.h.b16 %v2544
        %v2746 = vunpack.c.l.b16 %v2545
        %v2747 = vunpack.c.l.b16 %v2546
        %v2748 = vunpack.c.h.b16 %v2546
        %v2749 = vunpack.c.l.b16 %v2547
        %v2750 = vunpack.c.l.b16 %v2548
        %v2751 = vunpack.c.h.b16 %v2548
        %v2752 = vunpack.c.l.b16 %v2549
        %v2753 = vunpack.c.l.b16 %v2550
        %v2754 = vunpack.c.h.b16 %v2550
        %v2755 = vunpack.c.l.b16 %v2551
        %v2756 = vunpack.c.l.b16 %v2552
        %v2757 = vunpack.c.h.b16 %v2552
        %v2758 = vunpack.c.l.b16 %v2553
        %v2759 = vunpack.c.l.b16 %v2554
        %v2760 = vunpack.c.h.b16 %v2554
        %v2761 = vunpack.c.l.b16 %v2555
        %v2762 = vunpack.c.l.b16 %v2556
        %v2763 = vunpack.c.h.b16 %v2556
        %v2764 = vunpack.c.l.b16 %v2557
        %v2765 = vunpack.c.l.b16 %v2558
        %v2766 = vunpack.c.h.b16 %v2558
        %v2767 = vunpack.c.l.b16 %v2559
        %v2768 = vunpack.c.l.b16 %v2560
        %v2769 = vunpack.c.h.b16 %v2560
        %v2770 = vunpack.c.l.b16 %v2561
        %v2771 = vpack.c.b16 %v2678, %v2675
        %v2772 = vpack.c.b16 %v2679, %v2676
        %v2773 = vpack.c.b16 %v2680, %v2677
        %v2774 = vpack.c.b16 %v2684, %v2681
        %v2775 = vpack.c.b16 %v2685, %v2682
        %v2776 = vpack.c.b16 %v2686, %v2683
        %v2777 = vpack.c.b16 %v2690, %v2687
        %v2778 = vpack.c.b16 %v2691, %v2688
        %v2779 = vpack.c.b16 %v2692, %v2689
        %v2780 = vpack.c.b16 %v2696, %v2693
        %v2781 = vpack.c.b16 %v2697, %v2694
        %v2782 = vpack.c.b16 %v2698, %v2695
        %v2783 = vpack.c.b16 %v2702, %v2699
        %v2784 = vpack.c.b16 %v2703, %v2700
        %v2785 = vpack.c.b16 %v2704, %v2701
        %v2786 = vpack.c.b16 %v2708, %v2705
        %v2787 = vpack.c.b16 %v2709, %v2706
        %v2788 = vpack.c.b16 %v2710, %v2707
        %v2789 = vpack.c.b16 %v2714, %v2711
        %v2790 = vpack.c.b16 %v2715, %v2712
        %v2791 = vpack.c.b16 %v2716, %v2713
        %v2792 = vpack.c.b16 %v2720, %v2717
        %v2793 = vpack.c.b16 %v2721, %v2718
        %v2794 = vpack.c.b16 %v2722, %v2719
        %v2795 = vpack.c.b16 %v2726, %v2723
        %v2796 = vpack.c.b16 %v2727, %v2724
        %v2797 = vpack.c.b16 %v2728, %v2725
        %v2798 = vpack.c.b16 %v2732, %v2729
        %v2799 = vpack.c.b16 %v2733, %v2730
        %v2800 = vpack.c.b16 %v2734, %v2731
        %v2801 = vpack.c.b16 %v2738, %v2735
        %v2802 = vpack.c.b16 %v2739, %v2736
        %v2803 = vpack.c.b16 %v2740, %v2737
        %v2804 = vpack.c.b16 %v2744, %v2741
        %v2805 = vpack.c.b16 %v2745, %v2742
        %v2806 = vpack.c.b16 %v2746, %v2743
        %v2807 = vpack.c.b16 %v2750, %v2747
        %v2808 = vpack.c.b16 %v2751, %v2748
        %v2809 = vpack.c.b16 %v2752, %v2749
        %v2810 = vpack.c.b16 %v2756, %v2753
        %v2811 = vpack.c.b16 %v2757, %v2754
        %v2812 = vpack.c.b16 %v2758, %v2755
        %v2813 = vpack.c.b16 %v2762, %v2759
        %v2814 = vpack.c.b16 %v2763, %v2760
        %v2815 = vpack.c.b16 %v2764, %v2761
        %v2816 = vpack.c.b16 %v2768, %v2765
        %v2817 = vpack.c.b16 %v2769, %v2766
        %v2818 = vpack.c.b16 %v2770, %v2767
        %v2915 = vunpack.c.l.b16 %v2563
        %v2916 = vunpack.c.l.b16 %v2564
        %v2917 = vunpack.c.l.b16 %v2565
        %v2918 = vunpack.c.l.b16 %v2566
        %v2919 = vunpack.c.l.b16 %v2567
        %v2920 = vunpack.c.l.b16 %v2568
        %v2921 = vunpack.c.l.b16 %v2569
        %v2922 = vunpack.c.l.b16 %v2570
        %v2923 = vunpack.c.l.b16 %v2571
        %v2924 = vunpack.c.l.b16 %v2572
        %v2925 = vunpack.c.l.b16 %v2573
        %v2926 = vunpack.c.l.b16 %v2574
        %v2927 = vunpack.c.l.b16 %v2575
        %v2928 = vunpack.c.l.b16 %v2576
        %v2929 = vunpack.c.l.b16 %v2577
        %v2930 = vunpack.c.l.b16 %v2578
        %v2931 = vunpack.c.l.b16 %v2579
        %v2932 = vunpack.c.l.b16 %v2580
        %v2933 = vunpack.c.l.b16 %v2581
        %v2934 = vunpack.c.l.b16 %v2582
        %v2935 = vunpack.c.l.b16 %v2583
        %v2936 = vunpack.c.l.b16 %v2584
        %v2937 = vunpack.c.l.b16 %v2585
        %v2938 = vunpack.c.l.b16 %v2586
        %v2939 = vunpack.c.l.b16 %v2587
        %v2940 = vunpack.c.l.b16 %v2588
        %v2941 = vunpack.c.l.b16 %v2589
        %v2942 = vunpack.c.l.b16 %v2590
        %v2943 = vunpack.c.l.b16 %v2591
        %v2944 = vunpack.c.l.b16 %v2592
        %v2945 = vunpack.c.l.b16 %v2593
        %v2946 = vunpack.c.l.b16 %v2594
        %v2947 = vunpack.c.l.b16 %v2595
        %v2948 = vunpack.c.l.b16 %v2596
        %v2949 = vunpack.c.l.b16 %v2597
        %v2950 = vunpack.c.l.b16 %v2598
        %v2951 = vunpack.c.l.b16 %v2599
        %v2952 = vunpack.c.l.b16 %v2600
        %v2953 = vunpack.c.l.b16 %v2601
        %v2954 = vunpack.c.l.b16 %v2602
        %v2955 = vunpack.c.l.b16 %v2603
        %v2956 = vunpack.c.l.b16 %v2604
        %v2957 = vunpack.c.l.b16 %v2605
        %v2958 = vunpack.c.l.b16 %v2606
        %v2959 = vunpack.c.l.b16 %v2607
        %v2960 = vunpack.c.l.b16 %v2608
        %v2961 = vunpack.c.l.b16 %v2609
        %v2962 = vunpack.c.l.b16 %v2610
        %v2963 = vpack.c.b16 %v2916, %v2915
        %v2964 = vpack.c.b16 %v2918, %v2917
        %v2965 = vpack.c.b16 %v2920, %v2919
        %v2966 = vpack.c.b16 %v2922, %v2921
        %v2967 = vpack.c.b16 %v2924, %v2923
        %v2968 = vpack.c.b16 %v2926, %v2925
        %v2969 = vpack.c.b16 %v2928, %v2927
        %v2970 = vpack.c.b16 %v2930, %v2929
        %v2971 = vpack.c.b16 %v2932, %v2931
        %v2972 = vpack.c.b16 %v2934, %v2933
        %v2973 = vpack.c.b16 %v2936, %v2935
        %v2974 = vpack.c.b16 %v2938, %v2937
        %v2975 = vpack.c.b16 %v2940, %v2939
        %v2976 = vpack.c.b16 %v2942, %v2941
        %v2977 = vpack.c.b16 %v2944, %v2943
        %v2978 = vpack.c.b16 %v2946, %v2945
        %v2979 = vpack.c.b16 %v2948, %v2947
        %v2980 = vpack.c.b16 %v2950, %v2949
        %v2981 = vpack.c.b16 %v2952, %v2951
        %v2982 = vpack.c.b16 %v2954, %v2953
        %v2983 = vpack.c.b16 %v2956, %v2955
        %v2984 = vpack.c.b16 %v2958, %v2957
        %v2985 = vpack.c.b16 %v2960, %v2959
        %v2986 = vpack.c.b16 %v2962, %v2961
        %3011 = vmatpush.bf16.msra.mxu0 %v2970
        %3012 = vmatpush.bf16.msra.mxu0 %v2969
        %3013 = vmatpush.bf16.msra.mxu0 %v2968
        %3014 = vmatpush.bf16.msra.mxu0 %v2967
        %3015 = vmatpush.bf16.msra.mxu0 %v2966
        %3016 = vmatpush.bf16.msra.mxu0 %v2965
        %3017 = vmatpush.bf16.msra.mxu0 %v2964
        %3018 = vmatpush.bf16.msra.mxu0 %v2963
        %3019 = vmatmul.bf16.gmra.mxu0 %v2771
        %v3020 = vpop.f32.mrf.mxu0
        %v3021 = vadd.f32 0.0, %v3020
        %v3022 = vpop.f32.mrf.mxu0
        %v3023 = vadd.f32 0.0, %v3022
        %3024 = vmatmul.bf16.gmra.mxu0 %v2774
        %v3025 = vpop.f32.mrf.mxu0
        %v3026 = vadd.f32 0.0, %v3025
        %v3027 = vpop.f32.mrf.mxu0
        %v3028 = vadd.f32 0.0, %v3027
        %3029 = vmatmul.bf16.gmra.mxu0 %v2777
        %v3030 = vpop.f32.mrf.mxu0
        %v3031 = vadd.f32 0.0, %v3030
        %v3032 = vpop.f32.mrf.mxu0
        %v3033 = vadd.f32 0.0, %v3032
        %3034 = vmatmul.bf16.gmra.mxu0 %v2780
        %v3035 = vpop.f32.mrf.mxu0
        %v3036 = vadd.f32 0.0, %v3035
        %v3037 = vpop.f32.mrf.mxu0
        %v3038 = vadd.f32 0.0, %v3037
        %3039 = vmatmul.bf16.gmra.mxu0 %v2783
        %v3040 = vpop.f32.mrf.mxu0
        %v3041 = vadd.f32 0.0, %v3040
        %v3042 = vpop.f32.mrf.mxu0
        %v3043 = vadd.f32 0.0, %v3042
        %3044 = vmatmul.bf16.gmra.mxu0 %v2786
        %v3045 = vpop.f32.mrf.mxu0
        %v3046 = vadd.f32 0.0, %v3045
        %v3047 = vpop.f32.mrf.mxu0
        %v3048 = vadd.f32 0.0, %v3047
        %3049 = vmatmul.bf16.gmra.mxu0 %v2789
        %v3050 = vpop.f32.mrf.mxu0
        %v3051 = vadd.f32 0.0, %v3050
        %v3052 = vpop.f32.mrf.mxu0
        %v3053 = vadd.f32 0.0, %v3052
        %3054 = vmatmul.bf16.gmra.mxu0 %v2792
        %v3055 = vpop.f32.mrf.mxu0
        %v3056 = vadd.f32 0.0, %v3055
        %v3057 = vpop.f32.mrf.mxu0
        %v3058 = vadd.f32 0.0, %v3057
        %3059 = vmatmul.bf16.gmra.mxu0 %v2795
        %v3060 = vpop.f32.mrf.mxu0
        %v3061 = vadd.f32 0.0, %v3060
        %v3062 = vpop.f32.mrf.mxu0
        %v3063 = vadd.f32 0.0, %v3062
        %3064 = vmatmul.bf16.gmra.mxu0 %v2798
        %v3065 = vpop.f32.mrf.mxu0
        %v3066 = vadd.f32 0.0, %v3065
        %v3067 = vpop.f32.mrf.mxu0
        %v3068 = vadd.f32 0.0, %v3067
        %3069 = vmatmul.bf16.gmra.mxu0 %v2801
        %v3070 = vpop.f32.mrf.mxu0
        %v3071 = vadd.f32 0.0, %v3070
        %v3072 = vpop.f32.mrf.mxu0
        %v3073 = vadd.f32 0.0, %v3072
        %3074 = vmatmul.bf16.gmra.mxu0 %v2804
        %v3075 = vpop.f32.mrf.mxu0
        %v3076 = vadd.f32 0.0, %v3075
        %v3077 = vpop.f32.mrf.mxu0
        %v3078 = vadd.f32 0.0, %v3077
        %3079 = vmatmul.bf16.gmra.mxu0 %v2807
        %v3080 = vpop.f32.mrf.mxu0
        %v3081 = vadd.f32 0.0, %v3080
        %v3082 = vpop.f32.mrf.mxu0
        %v3083 = vadd.f32 0.0, %v3082
        %3084 = vmatmul.bf16.gmra.mxu0 %v2810
        %v3085 = vpop.f32.mrf.mxu0
        %v3086 = vadd.f32 0.0, %v3085
        %v3087 = vpop.f32.mrf.mxu0
        %v3088 = vadd.f32 0.0, %v3087
        %3089 = vmatmul.bf16.gmra.mxu0 %v2813
        %v3090 = vpop.f32.mrf.mxu0
        %v3091 = vadd.f32 0.0, %v3090
        %v3092 = vpop.f32.mrf.mxu0
        %v3093 = vadd.f32 0.0, %v3092
        %3094 = vmatmul.bf16.gmra.mxu0 %v2816
        %v3095 = vpop.f32.mrf.mxu0
        %v3096 = vadd.f32 0.0, %v3095
        %v3097 = vpop.f32.mrf.mxu0
        %v3098 = vadd.f32 0.0, %v3097
        %3099 = vdwg.mxu0
        %3100 = vmatpush.bf16.msra.mxu0 %v2978
        %3101 = vmatpush.bf16.msra.mxu0 %v2977
        %3102 = vmatpush.bf16.msra.mxu0 %v2976
        %3103 = vmatpush.bf16.msra.mxu0 %v2975
        %3104 = vmatpush.bf16.msra.mxu0 %v2974
        %3105 = vmatpush.bf16.msra.mxu0 %v2973
        %3106 = vmatpush.bf16.msra.mxu0 %v2972
        %3107 = vmatpush.bf16.msra.mxu0 %v2971
        %3108 = vmatmul.bf16.gmra.mxu0 %v2772
        %v3109 = vpop.f32.mrf.mxu0
        %v3110 = vadd.f32 %v3021, %v3109
        %v3111 = vpop.f32.mrf.mxu0
        %v3112 = vadd.f32 %v3023, %v3111
        %3113 = vmatmul.bf16.gmra.mxu0 %v2775
        %v3114 = vpop.f32.mrf.mxu0
        %v3115 = vadd.f32 %v3026, %v3114
        %v3116 = vpop.f32.mrf.mxu0
        %v3117 = vadd.f32 %v3028, %v3116
        %3118 = vmatmul.bf16.gmra.mxu0 %v2778
        %v3119 = vpop.f32.mrf.mxu0
        %v3120 = vadd.f32 %v3031, %v3119
        %v3121 = vpop.f32.mrf.mxu0
        %v3122 = vadd.f32 %v3033, %v3121
        %3123 = vmatmul.bf16.gmra.mxu0 %v2781
        %v3124 = vpop.f32.mrf.mxu0
        %v3125 = vadd.f32 %v3036, %v3124
        %v3126 = vpop.f32.mrf.mxu0
        %v3127 = vadd.f32 %v3038, %v3126
        %3128 = vmatmul.bf16.gmra.mxu0 %v2784
        %v3129 = vpop.f32.mrf.mxu0
        %v3130 = vadd.f32 %v3041, %v3129
        %v3131 = vpop.f32.mrf.mxu0
        %v3132 = vadd.f32 %v3043, %v3131
        %3133 = vmatmul.bf16.gmra.mxu0 %v2787
        %v3134 = vpop.f32.mrf.mxu0
        %v3135 = vadd.f32 %v3046, %v3134
        %v3136 = vpop.f32.mrf.mxu0
        %v3137 = vadd.f32 %v3048, %v3136
        %3138 = vmatmul.bf16.gmra.mxu0 %v2790
        %v3139 = vpop.f32.mrf.mxu0
        %v3140 = vadd.f32 %v3051, %v3139
        %v3141 = vpop.f32.mrf.mxu0
        %v3142 = vadd.f32 %v3053, %v3141
        %3143 = vmatmul.bf16.gmra.mxu0 %v2793
        %v3144 = vpop.f32.mrf.mxu0
        %v3145 = vadd.f32 %v3056, %v3144
        %v3146 = vpop.f32.mrf.mxu0
        %v3147 = vadd.f32 %v3058, %v3146
        %3148 = vmatmul.bf16.gmra.mxu0 %v2796
        %v3149 = vpop.f32.mrf.mxu0
        %v3150 = vadd.f32 %v3061, %v3149
        %v3151 = vpop.f32.mrf.mxu0
        %v3152 = vadd.f32 %v3063, %v3151
        %3153 = vmatmul.bf16.gmra.mxu0 %v2799
        %v3154 = vpop.f32.mrf.mxu0
        %v3155 = vadd.f32 %v3066, %v3154
        %v3156 = vpop.f32.mrf.mxu0
        %v3157 = vadd.f32 %v3068, %v3156
        %3158 = vmatmul.bf16.gmra.mxu0 %v2802
        %v3159 = vpop.f32.mrf.mxu0
        %v3160 = vadd.f32 %v3071, %v3159
        %v3161 = vpop.f32.mrf.mxu0
        %v3162 = vadd.f32 %v3073, %v3161
        %3163 = vmatmul.bf16.gmra.mxu0 %v2805
        %v3164 = vpop.f32.mrf.mxu0
        %v3165 = vadd.f32 %v3076, %v3164
        %v3166 = vpop.f32.mrf.mxu0
        %v3167 = vadd.f32 %v3078, %v3166
        %3168 = vmatmul.bf16.gmra.mxu0 %v2808
        %v3169 = vpop.f32.mrf.mxu0
        %v3170 = vadd.f32 %v3081, %v3169
        %v3171 = vpop.f32.mrf.mxu0
        %v3172 = vadd.f32 %v3083, %v3171
        %3173 = vmatmul.bf16.gmra.mxu0 %v2811
        %v3174 = vpop.f32.mrf.mxu0
        %v3175 = vadd.f32 %v3086, %v3174
        %v3176 = vpop.f32.mrf.mxu0
        %v3177 = vadd.f32 %v3088, %v3176
        %3178 = vmatmul.bf16.gmra.mxu0 %v2814
        %v3179 = vpop.f32.mrf.mxu0
        %v3180 = vadd.f32 %v3091, %v3179
        %v3181 = vpop.f32.mrf.mxu0
        %v3182 = vadd.f32 %v3093, %v3181
        %3183 = vmatmul.bf16.gmra.mxu0 %v2817
        %v3184 = vpop.f32.mrf.mxu0
        %v3185 = vadd.f32 %v3096, %v3184
        %v3186 = vpop.f32.mrf.mxu0
        %v3187 = vadd.f32 %v3098, %v3186
        %3188 = vdwg.mxu0
        %3189 = vmatpush.bf16.msra.mxu0 %v2986
        %3190 = vmatpush.bf16.msra.mxu0 %v2985
        %3191 = vmatpush.bf16.msra.mxu0 %v2984
        %3192 = vmatpush.bf16.msra.mxu0 %v2983
        %3193 = vmatpush.bf16.msra.mxu0 %v2982
        %3194 = vmatpush.bf16.msra.mxu0 %v2981
        %3195 = vmatpush.bf16.msra.mxu0 %v2980
        %3196 = vmatpush.bf16.msra.mxu0 %v2979
        %3197 = vmatmul.bf16.gmra.mxu0 %v2773
        %v3198 = vpop.f32.mrf.mxu0
        %v3199 = vadd.f32 %v3110, %v3198
        %v3200 = vpop.f32.mrf.mxu0
        %v3201 = vadd.f32 %v3112, %v3200
        %3202 = vmatmul.bf16.gmra.mxu0 %v2776
        %v3203 = vpop.f32.mrf.mxu0
        %v3204 = vadd.f32 %v3115, %v3203
        %v3205 = vpop.f32.mrf.mxu0
        %v3206 = vadd.f32 %v3117, %v3205
        %3207 = vmatmul.bf16.gmra.mxu0 %v2779
        %v3208 = vpop.f32.mrf.mxu0
        %v3209 = vadd.f32 %v3120, %v3208
        %v3210 = vpop.f32.mrf.mxu0
        %v3211 = vadd.f32 %v3122, %v3210
        %3212 = vmatmul.bf16.gmra.mxu0 %v2782
        %v3213 = vpop.f32.mrf.mxu0
        %v3214 = vadd.f32 %v3125, %v3213
        %v3215 = vpop.f32.mrf.mxu0
        %v3216 = vadd.f32 %v3127, %v3215
        %3217 = vmatmul.bf16.gmra.mxu0 %v2785
        %v3218 = vpop.f32.mrf.mxu0
        %v3219 = vadd.f32 %v3130, %v3218
        %v3220 = vpop.f32.mrf.mxu0
        %v3221 = vadd.f32 %v3132, %v3220
        %3222 = vmatmul.bf16.gmra.mxu0 %v2788
        %v3223 = vpop.f32.mrf.mxu0
        %v3224 = vadd.f32 %v3135, %v3223
        %v3225 = vpop.f32.mrf.mxu0
        %v3226 = vadd.f32 %v3137, %v3225
        %3227 = vmatmul.bf16.gmra.mxu0 %v2791
        %v3228 = vpop.f32.mrf.mxu0
        %v3229 = vadd.f32 %v3140, %v3228
        %v3230 = vpop.f32.mrf.mxu0
        %v3231 = vadd.f32 %v3142, %v3230
        %3232 = vmatmul.bf16.gmra.mxu0 %v2794
        %v3233 = vpop.f32.mrf.mxu0
        %v3234 = vadd.f32 %v3145, %v3233
        %v3235 = vpop.f32.mrf.mxu0
        %v3236 = vadd.f32 %v3147, %v3235
        %3237 = vmatmul.bf16.gmra.mxu0 %v2797
        %v3238 = vpop.f32.mrf.mxu0
        %v3239 = vadd.f32 %v3150, %v3238
        %v3240 = vpop.f32.mrf.mxu0
        %v3241 = vadd.f32 %v3152, %v3240
        %3242 = vmatmul.bf16.gmra.mxu0 %v2800
        %v3243 = vpop.f32.mrf.mxu0
        %v3244 = vadd.f32 %v3155, %v3243
        %v3245 = vpop.f32.mrf.mxu0
        %v3246 = vadd.f32 %v3157, %v3245
        %3247 = vmatmul.bf16.gmra.mxu0 %v2803
        %v3248 = vpop.f32.mrf.mxu0
        %v3249 = vadd.f32 %v3160, %v3248
        %v3250 = vpop.f32.mrf.mxu0
        %v3251 = vadd.f32 %v3162, %v3250
        %3252 = vmatmul.bf16.gmra.mxu0 %v2806
        %v3253 = vpop.f32.mrf.mxu0
        %v3254 = vadd.f32 %v3165, %v3253
        %v3255 = vpop.f32.mrf.mxu0
        %v3256 = vadd.f32 %v3167, %v3255
        %3257 = vmatmul.bf16.gmra.mxu0 %v2809
        %v3258 = vpop.f32.mrf.mxu0
        %v3259 = vadd.f32 %v3170, %v3258
        %v3260 = vpop.f32.mrf.mxu0
        %v3261 = vadd.f32 %v3172, %v3260
        %3262 = vmatmul.bf16.gmra.mxu0 %v2812
        %v3263 = vpop.f32.mrf.mxu0
        %v3264 = vadd.f32 %v3175, %v3263
        %v3265 = vpop.f32.mrf.mxu0
        %v3266 = vadd.f32 %v3177, %v3265
        %3267 = vmatmul.bf16.gmra.mxu0 %v2815
        %v3268 = vpop.f32.mrf.mxu0
        %v3269 = vadd.f32 %v3180, %v3268
        %v3270 = vpop.f32.mrf.mxu0
        %v3271 = vadd.f32 %v3182, %v3270
        %3272 = vmatmul.bf16.gmra.mxu0 %v2818
        %v3273 = vpop.f32.mrf.mxu0
        %v3274 = vadd.f32 %v3185, %v3273
        %v3275 = vpop.f32.mrf.mxu0
        %v3276 = vadd.f32 %v3187, %v3275
        %3277 = vdwg.mxu0
        %v3278 = vadd.f32 %v2418, %v3199
        %v3279 = vadd.f32 %v2420, %v3201
        %v3280 = vadd.f32 %v2423, %v3204
        %v3281 = vadd.f32 %v2425, %v3206
        %v3282 = vadd.f32 %v2428, %v3209
        %v3283 = vadd.f32 %v2430, %v3211
        %v3284 = vadd.f32 %v2433, %v3214
        %v3285 = vadd.f32 %v2435, %v3216
        %v3286 = vadd.f32 %v2438, %v3219
        %v3287 = vadd.f32 %v2440, %v3221
        %v3288 = vadd.f32 %v2443, %v3224
        %v3289 = vadd.f32 %v2445, %v3226
        %v3290 = vadd.f32 %v2448, %v3229
        %v3291 = vadd.f32 %v2450, %v3231
        %v3292 = vadd.f32 %v2453, %v3234
        %v3293 = vadd.f32 %v2455, %v3236
        %v3294 = vadd.f32 %v2458, %v3239
        %v3295 = vadd.f32 %v2460, %v3241
        %v3296 = vadd.f32 %v2463, %v3244
        %v3297 = vadd.f32 %v2465, %v3246
        %v3298 = vadd.f32 %v2468, %v3249
        %v3299 = vadd.f32 %v2470, %v3251
        %v3300 = vadd.f32 %v2473, %v3254
        %v3301 = vadd.f32 %v2475, %v3256
        %v3302 = vadd.f32 %v2478, %v3259
        %v3303 = vadd.f32 %v2480, %v3261
        %v3304 = vadd.f32 %v2483, %v3264
        %v3305 = vadd.f32 %v2485, %v3266
        %v3306 = vadd.f32 %v2488, %v3269
        %v3307 = vadd.f32 %v2490, %v3271
        %v3308 = vadd.f32 %v2493, %v3274
        %v3309 = vadd.f32 %v2495, %v3276
        %v3310 = vld [vmem:[%s2] sm:$0x1]
        %v3312 = vperm.slane %v3310, 0
        %v3314 = vadd.f32 %v3278, %v3312
        %v3315 = vadd.f32 %v3279, %v3312
        %v3316 = vadd.f32 %v3280, %v3312
        %v3317 = vadd.f32 %v3281, %v3312
        %v3318 = vadd.f32 %v3282, %v3312
        %v3319 = vadd.f32 %v3283, %v3312
        %v3320 = vadd.f32 %v3284, %v3312
        %v3321 = vadd.f32 %v3285, %v3312
        %v3322 = vadd.f32 %v3286, %v3312
        %v3323 = vadd.f32 %v3287, %v3312
        %v3324 = vadd.f32 %v3288, %v3312
        %v3325 = vadd.f32 %v3289, %v3312
        %v3326 = vadd.f32 %v3290, %v3312
        %v3327 = vadd.f32 %v3291, %v3312
        %v3328 = vadd.f32 %v3292, %v3312
        %v3329 = vadd.f32 %v3293, %v3312
        %v3330 = vadd.f32 %v3294, %v3312
        %v3331 = vadd.f32 %v3295, %v3312
        %v3332 = vadd.f32 %v3296, %v3312
        %v3333 = vadd.f32 %v3297, %v3312
        %v3334 = vadd.f32 %v3298, %v3312
        %v3335 = vadd.f32 %v3299, %v3312
        %v3336 = vadd.f32 %v3300, %v3312
        %v3337 = vadd.f32 %v3301, %v3312
        %v3338 = vadd.f32 %v3302, %v3312
        %v3339 = vadd.f32 %v3303, %v3312
        %v3340 = vadd.f32 %v3304, %v3312
        %v3341 = vadd.f32 %v3305, %v3312
        %v3342 = vadd.f32 %v3306, %v3312
        %v3343 = vadd.f32 %v3307, %v3312
        %v3344 = vadd.f32 %v3308, %v3312
        %v3345 = vadd.f32 %v3309, %v3312
        %v3346 = vmax.f32 %v3314, 0.0
        %v3347 = vmax.f32 %v3315, 0.0
        %v3348 = vmax.f32 %v3316, 0.0
        %v3349 = vmax.f32 %v3317, 0.0
        %v3350 = vmax.f32 %v3318, 0.0
        %v3351 = vmax.f32 %v3319, 0.0
        %v3352 = vmax.f32 %v3320, 0.0
        %v3353 = vmax.f32 %v3321, 0.0
        %v3354 = vmax.f32 %v3322, 0.0
        %v3355 = vmax.f32 %v3323, 0.0
        %v3356 = vmax.f32 %v3324, 0.0
        %v3357 = vmax.f32 %v3325, 0.0
        %v3358 = vmax.f32 %v3326, 0.0
        %v3359 = vmax.f32 %v3327, 0.0
        %v3360 = vmax.f32 %v3328, 0.0
        %v3361 = vmax.f32 %v3329, 0.0
        %v3362 = vmax.f32 %v3330, 0.0
        %v3363 = vmax.f32 %v3331, 0.0
        %v3364 = vmax.f32 %v3332, 0.0
        %v3365 = vmax.f32 %v3333, 0.0
        %v3366 = vmax.f32 %v3334, 0.0
        %v3367 = vmax.f32 %v3335, 0.0
        %v3368 = vmax.f32 %v3336, 0.0
        %v3369 = vmax.f32 %v3337, 0.0
        %v3370 = vmax.f32 %v3338, 0.0
        %v3371 = vmax.f32 %v3339, 0.0
        %v3372 = vmax.f32 %v3340, 0.0
        %v3373 = vmax.f32 %v3341, 0.0
        %v3374 = vmax.f32 %v3342, 0.0
        %v3375 = vmax.f32 %v3343, 0.0
        %v3376 = vmax.f32 %v3344, 0.0
        %v3377 = vmax.f32 %v3345, 0.0
        %v3378 = vpack.c.bf16 %v3346, %v3346
        %v3379 = vpack.c.bf16 %v3347, %v3347
        %v3380 = vpack.c.bf16 %v3348, %v3348
        %v3381 = vpack.c.bf16 %v3349, %v3349
        %v3382 = vpack.c.bf16 %v3350, %v3350
        %v3383 = vpack.c.bf16 %v3351, %v3351
        %v3384 = vpack.c.bf16 %v3352, %v3352
        %v3385 = vpack.c.bf16 %v3353, %v3353
        %v3386 = vpack.c.bf16 %v3354, %v3354
        %v3387 = vpack.c.bf16 %v3355, %v3355
        %v3388 = vpack.c.bf16 %v3356, %v3356
        %v3389 = vpack.c.bf16 %v3357, %v3357
        %v3390 = vpack.c.bf16 %v3358, %v3358
        %v3391 = vpack.c.bf16 %v3359, %v3359
        %v3392 = vpack.c.bf16 %v3360, %v3360
        %v3393 = vpack.c.bf16 %v3361, %v3361
        %v3394 = vpack.c.bf16 %v3362, %v3362
        %v3395 = vpack.c.bf16 %v3363, %v3363
        %v3396 = vpack.c.bf16 %v3364, %v3364
        %v3397 = vpack.c.bf16 %v3365, %v3365
        %v3398 = vpack.c.bf16 %v3366, %v3366
        %v3399 = vpack.c.bf16 %v3367, %v3367
        %v3400 = vpack.c.bf16 %v3368, %v3368
        %v3401 = vpack.c.bf16 %v3369, %v3369
        %v3402 = vpack.c.bf16 %v3370, %v3370
        %v3403 = vpack.c.bf16 %v3371, %v3371
        %v3404 = vpack.c.bf16 %v3372, %v3372
        %v3405 = vpack.c.bf16 %v3373, %v3373
        %v3406 = vpack.c.bf16 %v3374, %v3374
        %v3407 = vpack.c.bf16 %v3375, %v3375
        %v3408 = vpack.c.bf16 %v3376, %v3376
        %v3409 = vpack.c.bf16 %v3377, %v3377
        %v3442 = vunpack.c.l.b16 %v3378
        %v3443 = vunpack.c.l.b16 %v3379
        %v3444 = vunpack.c.l.b16 %v3380
        %v3445 = vunpack.c.l.b16 %v3381
        %v3446 = vunpack.c.l.b16 %v3382
        %v3447 = vunpack.c.l.b16 %v3383
        %v3448 = vunpack.c.l.b16 %v3384
        %v3449 = vunpack.c.l.b16 %v3385
        %v3450 = vunpack.c.l.b16 %v3386
        %v3451 = vunpack.c.l.b16 %v3387
        %v3452 = vunpack.c.l.b16 %v3388
        %v3453 = vunpack.c.l.b16 %v3389
        %v3454 = vunpack.c.l.b16 %v3390
        %v3455 = vunpack.c.l.b16 %v3391
        %v3456 = vunpack.c.l.b16 %v3392
        %v3457 = vunpack.c.l.b16 %v3393
        %v3458 = vunpack.c.l.b16 %v3394
        %v3459 = vunpack.c.l.b16 %v3395
        %v3460 = vunpack.c.l.b16 %v3396
        %v3461 = vunpack.c.l.b16 %v3397
        %v3462 = vunpack.c.l.b16 %v3398
        %v3463 = vunpack.c.l.b16 %v3399
        %v3464 = vunpack.c.l.b16 %v3400
        %v3465 = vunpack.c.l.b16 %v3401
        %v3466 = vunpack.c.l.b16 %v3402
        %v3467 = vunpack.c.l.b16 %v3403
        %v3468 = vunpack.c.l.b16 %v3404
        %v3469 = vunpack.c.l.b16 %v3405
        %v3470 = vunpack.c.l.b16 %v3406
        %v3471 = vunpack.c.l.b16 %v3407
        %v3472 = vunpack.c.l.b16 %v3408
        %v3473 = vunpack.c.l.b16 %v3409
        %v3474 = vpack.c.b16 %v3443, %v3442
        %v3475 = vpack.c.b16 %v3445, %v3444
        %v3476 = vpack.c.b16 %v3447, %v3446
        %v3477 = vpack.c.b16 %v3449, %v3448
        %v3478 = vpack.c.b16 %v3451, %v3450
        %v3479 = vpack.c.b16 %v3453, %v3452
        %v3480 = vpack.c.b16 %v3455, %v3454
        %v3481 = vpack.c.b16 %v3457, %v3456
        %v3482 = vpack.c.b16 %v3459, %v3458
        %v3483 = vpack.c.b16 %v3461, %v3460
        %v3484 = vpack.c.b16 %v3463, %v3462
        %v3485 = vpack.c.b16 %v3465, %v3464
        %v3486 = vpack.c.b16 %v3467, %v3466
        %v3487 = vpack.c.b16 %v3469, %v3468
        %v3488 = vpack.c.b16 %v3471, %v3470
        %v3489 = vpack.c.b16 %v3473, %v3472
        %v3491 = vshrl.u32 %v3474, 16
        %v3493 = vrot.slane %v3491, 7
        %v3494 = vshll.u32 %v3474, 16
        %v3496 = vor.u32 %v3493, %v3494
        %v3498 = vshrl.u32 %v3475, 16
        %v3500 = vrot.slane %v3498, 7
        %v3501 = vshll.u32 %v3475, 16
        %v3503 = vor.u32 %v3500, %v3501
        %v3505 = vshrl.u32 %v3476, 16
        %v3507 = vrot.slane %v3505, 7
        %v3508 = vshll.u32 %v3476, 16
        %v3510 = vor.u32 %v3507, %v3508
        %v3512 = vshrl.u32 %v3477, 16
        %v3514 = vrot.slane %v3512, 7
        %v3515 = vshll.u32 %v3477, 16
        %v3517 = vor.u32 %v3514, %v3515
        %v3519 = vshrl.u32 %v3478, 16
        %v3521 = vrot.slane %v3519, 7
        %v3522 = vshll.u32 %v3478, 16
        %v3524 = vor.u32 %v3521, %v3522
        %v3526 = vshrl.u32 %v3479, 16
        %v3528 = vrot.slane %v3526, 7
        %v3529 = vshll.u32 %v3479, 16
        %v3531 = vor.u32 %v3528, %v3529
        %v3533 = vshrl.u32 %v3480, 16
        %v3535 = vrot.slane %v3533, 7
        %v3536 = vshll.u32 %v3480, 16
        %v3538 = vor.u32 %v3535, %v3536
        %v3540 = vshrl.u32 %v3481, 16
        %v3542 = vrot.slane %v3540, 7
        %v3543 = vshll.u32 %v3481, 16
        %v3545 = vor.u32 %v3542, %v3543
        %v3547 = vshrl.u32 %v3482, 16
        %v3549 = vrot.slane %v3547, 7
        %v3550 = vshll.u32 %v3482, 16
        %v3552 = vor.u32 %v3549, %v3550
        %v3554 = vshrl.u32 %v3483, 16
        %v3556 = vrot.slane %v3554, 7
        %v3557 = vshll.u32 %v3483, 16
        %v3559 = vor.u32 %v3556, %v3557
        %v3561 = vshrl.u32 %v3484, 16
        %v3563 = vrot.slane %v3561, 7
        %v3564 = vshll.u32 %v3484, 16
        %v3566 = vor.u32 %v3563, %v3564
        %v3568 = vshrl.u32 %v3485, 16
        %v3570 = vrot.slane %v3568, 7
        %v3571 = vshll.u32 %v3485, 16
        %v3573 = vor.u32 %v3570, %v3571
        %v3575 = vshrl.u32 %v3486, 16
        %v3577 = vrot.slane %v3575, 7
        %v3578 = vshll.u32 %v3486, 16
        %v3580 = vor.u32 %v3577, %v3578
        %v3582 = vshrl.u32 %v3487, 16
        %v3584 = vrot.slane %v3582, 7
        %v3585 = vshll.u32 %v3487, 16
        %v3587 = vor.u32 %v3584, %v3585
        %v3589 = vshrl.u32 %v3488, 16
        %v3591 = vrot.slane %v3589, 7
        %v3592 = vshll.u32 %v3488, 16
        %v3594 = vor.u32 %v3591, %v3592
        %v3596 = vshrl.u32 %v3489, 16
        %v3598 = vrot.slane %v3596, 7
        %v3599 = vshll.u32 %v3489, 16
        %v3601 = vor.u32 %v3598, %v3599
        %v3618 = vsel %vm533, 0, %v3496
        %v3619 = vsel %vm533, 0, %v3503
        %v3620 = vsel %vm533, 0, %v3510
        %v3621 = vsel %vm533, 0, %v3517
        %v3622 = vsel %vm533, 0, %v3524
        %v3623 = vsel %vm533, 0, %v3531
        %v3624 = vsel %vm533, 0, %v3538
        %v3625 = vsel %vm533, 0, %v3545
        %v3626 = vsel %vm533, 0, %v3552
        %v3627 = vsel %vm533, 0, %v3559
        %v3628 = vsel %vm533, 0, %v3566
        %v3629 = vsel %vm533, 0, %v3573
        %v3630 = vsel %vm533, 0, %v3580
        %v3631 = vsel %vm533, 0, %v3587
        %v3632 = vsel %vm533, 0, %v3594
        %v3633 = vsel %vm533, 0, %v3601
        %v3634 = vrot.slane %v3494, 1
        %v3635 = vor.u32 %v3491, %v3634
        %v3636 = vrot.slane %v3501, 1
        %v3637 = vor.u32 %v3498, %v3636
        %v3638 = vrot.slane %v3508, 1
        %v3639 = vor.u32 %v3505, %v3638
        %v3640 = vrot.slane %v3515, 1
        %v3641 = vor.u32 %v3512, %v3640
        %v3642 = vrot.slane %v3522, 1
        %v3643 = vor.u32 %v3519, %v3642
        %v3644 = vrot.slane %v3529, 1
        %v3645 = vor.u32 %v3526, %v3644
        %v3646 = vrot.slane %v3536, 1
        %v3647 = vor.u32 %v3533, %v3646
        %v3648 = vrot.slane %v3543, 1
        %v3649 = vor.u32 %v3540, %v3648
        %v3650 = vrot.slane %v3550, 1
        %v3651 = vor.u32 %v3547, %v3650
        %v3652 = vrot.slane %v3557, 1
        %v3653 = vor.u32 %v3554, %v3652
        %v3654 = vrot.slane %v3564, 1
        %v3655 = vor.u32 %v3561, %v3654
        %v3656 = vrot.slane %v3571, 1
        %v3657 = vor.u32 %v3568, %v3656
        %v3658 = vrot.slane %v3578, 1
        %v3659 = vor.u32 %v3575, %v3658
        %v3660 = vrot.slane %v3585, 1
        %v3661 = vor.u32 %v3582, %v3660
        %v3662 = vrot.slane %v3592, 1
        %v3663 = vor.u32 %v3589, %v3662
        %v3664 = vrot.slane %v3599, 1
        %v3665 = vor.u32 %v3596, %v3664
        %v3682 = vsel %vm600, %v3635, 0
        %v3683 = vsel %vm600, %v3637, 0
        %v3684 = vsel %vm600, %v3639, 0
        %v3685 = vsel %vm600, %v3641, 0
        %v3686 = vsel %vm600, %v3643, 0
        %v3687 = vsel %vm600, %v3645, 0
        %v3688 = vsel %vm600, %v3647, 0
        %v3689 = vsel %vm600, %v3649, 0
        %v3690 = vsel %vm600, %v3651, 0
        %v3691 = vsel %vm600, %v3653, 0
        %v3692 = vsel %vm600, %v3655, 0
        %v3693 = vsel %vm600, %v3657, 0
        %v3694 = vsel %vm600, %v3659, 0
        %v3695 = vsel %vm600, %v3661, 0
        %v3696 = vsel %vm600, %v3663, 0
        %v3697 = vsel %vm600, %v3665, 0
        %v3714 = vunpack.c.l.b16 %v3618
        %v3715 = vunpack.c.h.b16 %v3618
        %v3716 = vunpack.c.l.b16 %v3619
        %v3717 = vunpack.c.h.b16 %v3619
        %v3718 = vunpack.c.l.b16 %v3620
        %v3719 = vunpack.c.h.b16 %v3620
        %v3720 = vunpack.c.l.b16 %v3621
        %v3721 = vunpack.c.h.b16 %v3621
        %v3722 = vunpack.c.l.b16 %v3622
        %v3723 = vunpack.c.h.b16 %v3622
        %v3724 = vunpack.c.l.b16 %v3623
        %v3725 = vunpack.c.h.b16 %v3623
        %v3726 = vunpack.c.l.b16 %v3624
        %v3727 = vunpack.c.h.b16 %v3624
        %v3728 = vunpack.c.l.b16 %v3625
        %v3729 = vunpack.c.h.b16 %v3625
        %v3730 = vunpack.c.l.b16 %v3626
        %v3731 = vunpack.c.h.b16 %v3626
        %v3732 = vunpack.c.l.b16 %v3627
        %v3733 = vunpack.c.h.b16 %v3627
        %v3734 = vunpack.c.l.b16 %v3628
        %v3735 = vunpack.c.h.b16 %v3628
        %v3736 = vunpack.c.l.b16 %v3629
        %v3737 = vunpack.c.h.b16 %v3629
        %v3738 = vunpack.c.l.b16 %v3630
        %v3739 = vunpack.c.h.b16 %v3630
        %v3740 = vunpack.c.l.b16 %v3631
        %v3741 = vunpack.c.h.b16 %v3631
        %v3742 = vunpack.c.l.b16 %v3632
        %v3743 = vunpack.c.h.b16 %v3632
        %v3744 = vunpack.c.l.b16 %v3633
        %v3745 = vunpack.c.h.b16 %v3633
        %v3746 = vpack.c.b16 %v3714, %v3714
        %v3747 = vpack.c.b16 %v3715, %v3715
        %v3748 = vpack.c.b16 %v3716, %v3716
        %v3749 = vpack.c.b16 %v3717, %v3717
        %v3750 = vpack.c.b16 %v3718, %v3718
        %v3751 = vpack.c.b16 %v3719, %v3719
        %v3752 = vpack.c.b16 %v3720, %v3720
        %v3753 = vpack.c.b16 %v3721, %v3721
        %v3754 = vpack.c.b16 %v3722, %v3722
        %v3755 = vpack.c.b16 %v3723, %v3723
        %v3756 = vpack.c.b16 %v3724, %v3724
        %v3757 = vpack.c.b16 %v3725, %v3725
        %v3758 = vpack.c.b16 %v3726, %v3726
        %v3759 = vpack.c.b16 %v3727, %v3727
        %v3760 = vpack.c.b16 %v3728, %v3728
        %v3761 = vpack.c.b16 %v3729, %v3729
        %v3762 = vpack.c.b16 %v3730, %v3730
        %v3763 = vpack.c.b16 %v3731, %v3731
        %v3764 = vpack.c.b16 %v3732, %v3732
        %v3765 = vpack.c.b16 %v3733, %v3733
        %v3766 = vpack.c.b16 %v3734, %v3734
        %v3767 = vpack.c.b16 %v3735, %v3735
        %v3768 = vpack.c.b16 %v3736, %v3736
        %v3769 = vpack.c.b16 %v3737, %v3737
        %v3770 = vpack.c.b16 %v3738, %v3738
        %v3771 = vpack.c.b16 %v3739, %v3739
        %v3772 = vpack.c.b16 %v3740, %v3740
        %v3773 = vpack.c.b16 %v3741, %v3741
        %v3774 = vpack.c.b16 %v3742, %v3742
        %v3775 = vpack.c.b16 %v3743, %v3743
        %v3776 = vpack.c.b16 %v3744, %v3744
        %v3777 = vpack.c.b16 %v3745, %v3745
        %3810 = vst [vmem:[%s729] sm:$0xf] %v3746
        %3811 = vst [vmem:[%s729 + $0xc] sm:$0xf] %v3747
        %3812 = vst [vmem:[%s729 + $0x18] sm:$0xf] %v3748
        %3813 = vst [vmem:[%s729 + $0x24] sm:$0xf] %v3749
        %3814 = vst [vmem:[%s729 + $0x30] sm:$0xf] %v3750
        %3815 = vst [vmem:[%s729 + $0x3c] sm:$0xf] %v3751
        %3816 = vst [vmem:[%s729 + $0x48] sm:$0xf] %v3752
        %3817 = vst [vmem:[%s729 + $0x54] sm:$0xf] %v3753
        %3818 = vst [vmem:[%s729 + $0x60] sm:$0xf] %v3754
        %3819 = vst [vmem:[%s729 + $0x6c] sm:$0xf] %v3755
        %3820 = vst [vmem:[%s729 + $0x78] sm:$0xf] %v3756
        %3821 = vst [vmem:[%s729 + $0x84] sm:$0xf] %v3757
        %3822 = vst [vmem:[%s729 + $0x90] sm:$0xf] %v3758
        %3823 = vst [vmem:[%s729 + $0x9c] sm:$0xf] %v3759
        %3824 = vst [vmem:[%s729 + $0xa8] sm:$0xf] %v3760
        %3825 = vst [vmem:[%s729 + $0xb4] sm:$0xf] %v3761
        %3826 = vst [vmem:[%s729 + $0xc0] sm:$0xf] %v3762
        %3827 = vst [vmem:[%s729 + $0xcc] sm:$0xf] %v3763
        %3828 = vst [vmem:[%s729 + $0xd8] sm:$0xf] %v3764
        %3829 = vst [vmem:[%s729 + $0xe4] sm:$0xf] %v3765
        %3830 = vst [vmem:[%s729 + $0xf0] sm:$0xf] %v3766
        %3831 = vst [vmem:[%s729 + $0xfc] sm:$0xf] %v3767
        %3832 = vst [vmem:[%s729 + $0x108] sm:$0xf] %v3768
        %3833 = vst [vmem:[%s729 + $0x114] sm:$0xf] %v3769
        %3834 = vst [vmem:[%s729 + $0x120] sm:$0xf] %v3770
        %3835 = vst [vmem:[%s729 + $0x12c] sm:$0xf] %v3771
        %3836 = vst [vmem:[%s729 + $0x138] sm:$0xf] %v3772
        %3837 = vst [vmem:[%s729 + $0x144] sm:$0xf] %v3773
        %3838 = vst [vmem:[%s729 + $0x150] sm:$0xf] %v3774
        %3839 = vst [vmem:[%s729 + $0x15c] sm:$0xf] %v3775
        %3840 = vst [vmem:[%s729 + $0x168] sm:$0xf] %v3776
        %3841 = vst [vmem:[%s729 + $0x174] sm:$0xf] %v3777
        %3842 = vst [vmem:[%s729 + $0x4] sm:$0xf] %v3378
        %3843 = vst [vmem:[%s729 + $0x10] sm:$0xf] %v3379
        %3844 = vst [vmem:[%s729 + $0x1c] sm:$0xf] %v3380
        %3845 = vst [vmem:[%s729 + $0x28] sm:$0xf] %v3381
        %3846 = vst [vmem:[%s729 + $0x34] sm:$0xf] %v3382
        %3847 = vst [vmem:[%s729 + $0x40] sm:$0xf] %v3383
        %3848 = vst [vmem:[%s729 + $0x4c] sm:$0xf] %v3384
        %3849 = vst [vmem:[%s729 + $0x58] sm:$0xf] %v3385
        %3850 = vst [vmem:[%s729 + $0x64] sm:$0xf] %v3386
        %3851 = vst [vmem:[%s729 + $0x70] sm:$0xf] %v3387
        %3852 = vst [vmem:[%s729 + $0x7c] sm:$0xf] %v3388
        %3853 = vst [vmem:[%s729 + $0x88] sm:$0xf] %v3389
        %3854 = vst [vmem:[%s729 + $0x94] sm:$0xf] %v3390
        %3855 = vst [vmem:[%s729 + $0xa0] sm:$0xf] %v3391
        %3856 = vst [vmem:[%s729 + $0xac] sm:$0xf] %v3392
        %3857 = vst [vmem:[%s729 + $0xb8] sm:$0xf] %v3393
        %3858 = vst [vmem:[%s729 + $0xc4] sm:$0xf] %v3394
        %3859 = vst [vmem:[%s729 + $0xd0] sm:$0xf] %v3395
        %3860 = vst [vmem:[%s729 + $0xdc] sm:$0xf] %v3396
        %3861 = vst [vmem:[%s729 + $0xe8] sm:$0xf] %v3397
        %3862 = vst [vmem:[%s729 + $0xf4] sm:$0xf] %v3398
        %3863 = vst [vmem:[%s729 + $0x100] sm:$0xf] %v3399
        %3864 = vst [vmem:[%s729 + $0x10c] sm:$0xf] %v3400
        %3865 = vst [vmem:[%s729 + $0x118] sm:$0xf] %v3401
        %3866 = vst [vmem:[%s729 + $0x124] sm:$0xf] %v3402
        %3867 = vst [vmem:[%s729 + $0x130] sm:$0xf] %v3403
        %3868 = vst [vmem:[%s729 + $0x13c] sm:$0xf] %v3404
        %3869 = vst [vmem:[%s729 + $0x148] sm:$0xf] %v3405
        %3870 = vst [vmem:[%s729 + $0x154] sm:$0xf] %v3406
        %3871 = vst [vmem:[%s729 + $0x160] sm:$0xf] %v3407
        %3872 = vst [vmem:[%s729 + $0x16c] sm:$0xf] %v3408
        %3873 = vst [vmem:[%s729 + $0x178] sm:$0xf] %v3409
        %v3890 = vunpack.c.l.b16 %v3682
        %v3891 = vunpack.c.h.b16 %v3682
        %v3892 = vunpack.c.l.b16 %v3683
        %v3893 = vunpack.c.h.b16 %v3683
        %v3894 = vunpack.c.l.b16 %v3684
        %v3895 = vunpack.c.h.b16 %v3684
        %v3896 = vunpack.c.l.b16 %v3685
        %v3897 = vunpack.c.h.b16 %v3685
        %v3898 = vunpack.c.l.b16 %v3686
        %v3899 = vunpack.c.h.b16 %v3686
        %v3900 = vunpack.c.l.b16 %v3687
        %v3901 = vunpack.c.h.b16 %v3687
        %v3902 = vunpack.c.l.b16 %v3688
        %v3903 = vunpack.c.h.b16 %v3688
        %v3904 = vunpack.c.l.b16 %v3689
        %v3905 = vunpack.c.h.b16 %v3689
        %v3906 = vunpack.c.l.b16 %v3690
        %v3907 = vunpack.c.h.b16 %v3690
        %v3908 = vunpack.c.l.b16 %v3691
        %v3909 = vunpack.c.h.b16 %v3691
        %v3910 = vunpack.c.l.b16 %v3692
        %v3911 = vunpack.c.h.b16 %v3692
        %v3912 = vunpack.c.l.b16 %v3693
        %v3913 = vunpack.c.h.b16 %v3693
        %v3914 = vunpack.c.l.b16 %v3694
        %v3915 = vunpack.c.h.b16 %v3694
        %v3916 = vunpack.c.l.b16 %v3695
        %v3917 = vunpack.c.h.b16 %v3695
        %v3918 = vunpack.c.l.b16 %v3696
        %v3919 = vunpack.c.h.b16 %v3696
        %v3920 = vunpack.c.l.b16 %v3697
        %v3921 = vunpack.c.h.b16 %v3697
        %v3922 = vpack.c.b16 %v3890, %v3890
        %v3923 = vpack.c.b16 %v3891, %v3891
        %v3924 = vpack.c.b16 %v3892, %v3892
        %v3925 = vpack.c.b16 %v3893, %v3893
        %v3926 = vpack.c.b16 %v3894, %v3894
        %v3927 = vpack.c.b16 %v3895, %v3895
        %v3928 = vpack.c.b16 %v3896, %v3896
        %v3929 = vpack.c.b16 %v3897, %v3897
        %v3930 = vpack.c.b16 %v3898, %v3898
        %v3931 = vpack.c.b16 %v3899, %v3899
        %v3932 = vpack.c.b16 %v3900, %v3900
        %v3933 = vpack.c.b16 %v3901, %v3901
        %v3934 = vpack.c.b16 %v3902, %v3902
        %v3935 = vpack.c.b16 %v3903, %v3903
        %v3936 = vpack.c.b16 %v3904, %v3904
        %v3937 = vpack.c.b16 %v3905, %v3905
        %v3938 = vpack.c.b16 %v3906, %v3906
        %v3939 = vpack.c.b16 %v3907, %v3907
        %v3940 = vpack.c.b16 %v3908, %v3908
        %v3941 = vpack.c.b16 %v3909, %v3909
        %v3942 = vpack.c.b16 %v3910, %v3910
        %v3943 = vpack.c.b16 %v3911, %v3911
        %v3944 = vpack.c.b16 %v3912, %v3912
        %v3945 = vpack.c.b16 %v3913, %v3913
        %v3946 = vpack.c.b16 %v3914, %v3914
        %v3947 = vpack.c.b16 %v3915, %v3915
        %v3948 = vpack.c.b16 %v3916, %v3916
        %v3949 = vpack.c.b16 %v3917, %v3917
        %v3950 = vpack.c.b16 %v3918, %v3918
        %v3951 = vpack.c.b16 %v3919, %v3919
        %v3952 = vpack.c.b16 %v3920, %v3920
        %v3953 = vpack.c.b16 %v3921, %v3921
        %3986 = vst [vmem:[%s729 + $0x8] sm:$0xf] %v3922
        %3987 = vst [vmem:[%s729 + $0x14] sm:$0xf] %v3923
        %3988 = vst [vmem:[%s729 + $0x20] sm:$0xf] %v3924
        %3989 = vst [vmem:[%s729 + $0x2c] sm:$0xf] %v3925
        %3990 = vst [vmem:[%s729 + $0x38] sm:$0xf] %v3926
        %3991 = vst [vmem:[%s729 + $0x44] sm:$0xf] %v3927
        %3992 = vst [vmem:[%s729 + $0x50] sm:$0xf] %v3928
        %3993 = vst [vmem:[%s729 + $0x5c] sm:$0xf] %v3929
        %3994 = vst [vmem:[%s729 + $0x68] sm:$0xf] %v3930
        %3995 = vst [vmem:[%s729 + $0x74] sm:$0xf] %v3931
        %3996 = vst [vmem:[%s729 + $0x80] sm:$0xf] %v3932
        %3997 = vst [vmem:[%s729 + $0x8c] sm:$0xf] %v3933
        %3998 = vst [vmem:[%s729 + $0x98] sm:$0xf] %v3934
        %3999 = vst [vmem:[%s729 + $0xa4] sm:$0xf] %v3935
        %4000 = vst [vmem:[%s729 + $0xb0] sm:$0xf] %v3936
        %4001 = vst [vmem:[%s729 + $0xbc] sm:$0xf] %v3937
        %4002 = vst [vmem:[%s729 + $0xc8] sm:$0xf] %v3938
        %4003 = vst [vmem:[%s729 + $0xd4] sm:$0xf] %v3939
        %4004 = vst [vmem:[%s729 + $0xe0] sm:$0xf] %v3940
        %4005 = vst [vmem:[%s729 + $0xec] sm:$0xf] %v3941
        %4006 = vst [vmem:[%s729 + $0xf8] sm:$0xf] %v3942
        %4007 = vst [vmem:[%s729 + $0x104] sm:$0xf] %v3943
        %4008 = vst [vmem:[%s729 + $0x110] sm:$0xf] %v3944
        %4009 = vst [vmem:[%s729 + $0x11c] sm:$0xf] %v3945
        %4010 = vst [vmem:[%s729 + $0x128] sm:$0xf] %v3946
        %4011 = vst [vmem:[%s729 + $0x134] sm:$0xf] %v3947
        %4012 = vst [vmem:[%s729 + $0x140] sm:$0xf] %v3948
        %4013 = vst [vmem:[%s729 + $0x14c] sm:$0xf] %v3949
        %4014 = vst [vmem:[%s729 + $0x158] sm:$0xf] %v3950
        %4015 = vst [vmem:[%s729 + $0x164] sm:$0xf] %v3951
        %4016 = vst [vmem:[%s729 + $0x170] sm:$0xf] %v3952
        %4017 = vst [vmem:[%s729 + $0x17c] sm:$0xf] %v3953
        %v4018 = vld [vmem:[#allocation2] sm:$0xff]
        %v4019 = vld [vmem:[#allocation2 + $0x8] sm:$0xf]
        %v4020 = vld [vmem:[#allocation2 + $0xc] sm:$0xff]
        %v4021 = vld [vmem:[#allocation2 + $0x14] sm:$0xf]
        %v4022 = vld [vmem:[#allocation2 + $0x18] sm:$0xff]
        %v4023 = vld [vmem:[#allocation2 + $0x20] sm:$0xf]
        %v4024 = vld [vmem:[#allocation2 + $0x24] sm:$0xff]
        %v4025 = vld [vmem:[#allocation2 + $0x2c] sm:$0xf]
        %v4026 = vld [vmem:[#allocation2 + $0x30] sm:$0xff]
        %v4027 = vld [vmem:[#allocation2 + $0x38] sm:$0xf]
        %v4028 = vld [vmem:[#allocation2 + $0x3c] sm:$0xff]
        %v4029 = vld [vmem:[#allocation2 + $0x44] sm:$0xf]
        %v4030 = vld [vmem:[#allocation2 + $0x48] sm:$0xff]
        %v4031 = vld [vmem:[#allocation2 + $0x50] sm:$0xf]
        %v4032 = vld [vmem:[#allocation2 + $0x54] sm:$0xff]
        %v4033 = vld [vmem:[#allocation2 + $0x5c] sm:$0xf]
        %v4034 = vld [vmem:[#allocation2 + $0x60] sm:$0xff]
        %v4035 = vld [vmem:[#allocation2 + $0x68] sm:$0xf]
        %v4036 = vld [vmem:[#allocation2 + $0x6c] sm:$0xff]
        %v4037 = vld [vmem:[#allocation2 + $0x74] sm:$0xf]
        %v4038 = vld [vmem:[#allocation2 + $0x78] sm:$0xff]
        %v4039 = vld [vmem:[#allocation2 + $0x80] sm:$0xf]
        %v4040 = vld [vmem:[#allocation2 + $0x84] sm:$0xff]
        %v4041 = vld [vmem:[#allocation2 + $0x8c] sm:$0xf]
        %v4042 = vld [vmem:[#allocation2 + $0x90] sm:$0xff]
        %v4043 = vld [vmem:[#allocation2 + $0x98] sm:$0xf]
        %v4044 = vld [vmem:[#allocation2 + $0x9c] sm:$0xff]
        %v4045 = vld [vmem:[#allocation2 + $0xa4] sm:$0xf]
        %v4046 = vld [vmem:[#allocation2 + $0xa8] sm:$0xff]
        %v4047 = vld [vmem:[#allocation2 + $0xb0] sm:$0xf]
        %v4048 = vld [vmem:[#allocation2 + $0xb4] sm:$0xff]
        %v4049 = vld [vmem:[#allocation2 + $0xbc] sm:$0xf]
        %v4050 = vld [vmem:[#allocation2 + $0xc0] sm:$0xff]
        %v4051 = vld [vmem:[#allocation2 + $0xc8] sm:$0xf]
        %v4052 = vld [vmem:[#allocation2 + $0xcc] sm:$0xff]
        %v4053 = vld [vmem:[#allocation2 + $0xd4] sm:$0xf]
        %v4054 = vld [vmem:[#allocation2 + $0xd8] sm:$0xff]
        %v4055 = vld [vmem:[#allocation2 + $0xe0] sm:$0xf]
        %v4056 = vld [vmem:[#allocation2 + $0xe4] sm:$0xff]
        %v4057 = vld [vmem:[#allocation2 + $0xec] sm:$0xf]
        %v4058 = vld [vmem:[#allocation2 + $0xf0] sm:$0xff]
        %v4059 = vld [vmem:[#allocation2 + $0xf8] sm:$0xf]
        %v4060 = vld [vmem:[#allocation2 + $0xfc] sm:$0xff]
        %v4061 = vld [vmem:[#allocation2 + $0x104] sm:$0xf]
        %v4062 = vld [vmem:[#allocation2 + $0x108] sm:$0xff]
        %v4063 = vld [vmem:[#allocation2 + $0x110] sm:$0xf]
        %v4064 = vld [vmem:[#allocation2 + $0x114] sm:$0xff]
        %v4065 = vld [vmem:[#allocation2 + $0x11c] sm:$0xf]
        %v4066 = vld [vmem:[#allocation2 + $0x120] sm:$0xff]
        %v4067 = vld [vmem:[#allocation2 + $0x128] sm:$0xf]
        %v4068 = vld [vmem:[#allocation2 + $0x12c] sm:$0xff]
        %v4069 = vld [vmem:[#allocation2 + $0x134] sm:$0xf]
        %v4070 = vld [vmem:[#allocation2 + $0x138] sm:$0xff]
        %v4071 = vld [vmem:[#allocation2 + $0x140] sm:$0xf]
        %v4072 = vld [vmem:[#allocation2 + $0x144] sm:$0xff]
        %v4073 = vld [vmem:[#allocation2 + $0x14c] sm:$0xf]
        %v4074 = vld [vmem:[#allocation2 + $0x150] sm:$0xff]
        %v4075 = vld [vmem:[#allocation2 + $0x158] sm:$0xf]
        %v4076 = vld [vmem:[#allocation2 + $0x15c] sm:$0xff]
        %v4077 = vld [vmem:[#allocation2 + $0x164] sm:$0xf]
        %v4078 = vld [vmem:[#allocation2 + $0x168] sm:$0xff]
        %v4079 = vld [vmem:[#allocation2 + $0x170] sm:$0xf]
        %v4080 = vld [vmem:[#allocation2 + $0x174] sm:$0xff]
        %v4081 = vld [vmem:[#allocation2 + $0x17c] sm:$0xf]
        %v4082 = vld [vmem:[#allocation8] sm:$0xf]
        %v4083 = vld [vmem:[#allocation8 + $0x4] sm:$0xf]
        %v4084 = vld [vmem:[#allocation8 + $0x8] sm:$0xf]
        %v4085 = vld [vmem:[#allocation8 + $0xc] sm:$0xf]
        %v4086 = vld [vmem:[#allocation8 + $0x10] sm:$0xf]
        %v4087 = vld [vmem:[#allocation8 + $0x14] sm:$0xf]
        %v4088 = vld [vmem:[#allocation8 + $0x18] sm:$0xf]
        %v4089 = vld [vmem:[#allocation8 + $0x1c] sm:$0xf]
        %v4090 = vld [vmem:[#allocation8 + $0x20] sm:$0xf]
        %v4091 = vld [vmem:[#allocation8 + $0x24] sm:$0xf]
        %v4092 = vld [vmem:[#allocation8 + $0x28] sm:$0xf]
        %v4093 = vld [vmem:[#allocation8 + $0x2c] sm:$0xf]
        %v4094 = vld [vmem:[#allocation8 + $0x30] sm:$0xf]
        %v4095 = vld [vmem:[#allocation8 + $0x34] sm:$0xf]
        %v4096 = vld [vmem:[#allocation8 + $0x38] sm:$0xf]
        %v4097 = vld [vmem:[#allocation8 + $0x3c] sm:$0xf]
        %v4098 = vld [vmem:[#allocation8 + $0x40] sm:$0xf]
        %v4099 = vld [vmem:[#allocation8 + $0x44] sm:$0xf]
        %v4100 = vld [vmem:[#allocation8 + $0x48] sm:$0xf]
        %v4101 = vld [vmem:[#allocation8 + $0x4c] sm:$0xf]
        %v4102 = vld [vmem:[#allocation8 + $0x50] sm:$0xf]
        %v4103 = vld [vmem:[#allocation8 + $0x54] sm:$0xf]
        %v4104 = vld [vmem:[#allocation8 + $0x58] sm:$0xf]
        %v4105 = vld [vmem:[#allocation8 + $0x5c] sm:$0xf]
        %v4106 = vld [vmem:[#allocation8 + $0x60] sm:$0xf]
        %v4107 = vld [vmem:[#allocation8 + $0x64] sm:$0xf]
        %v4108 = vld [vmem:[#allocation8 + $0x68] sm:$0xf]
        %v4109 = vld [vmem:[#allocation8 + $0x6c] sm:$0xf]
        %v4110 = vld [vmem:[#allocation8 + $0x70] sm:$0xf]
        %v4111 = vld [vmem:[#allocation8 + $0x74] sm:$0xf]
        %v4112 = vld [vmem:[#allocation8 + $0x78] sm:$0xf]
        %v4113 = vld [vmem:[#allocation8 + $0x7c] sm:$0xf]
        %v4114 = vld [vmem:[#allocation8 + $0x80] sm:$0xf]
        %v4115 = vld [vmem:[#allocation8 + $0x84] sm:$0xf]
        %v4116 = vld [vmem:[#allocation8 + $0x88] sm:$0xf]
        %v4117 = vld [vmem:[#allocation8 + $0x8c] sm:$0xf]
        %v4118 = vld [vmem:[#allocation8 + $0x90] sm:$0xf]
        %v4119 = vld [vmem:[#allocation8 + $0x94] sm:$0xf]
        %v4120 = vld [vmem:[#allocation8 + $0x98] sm:$0xf]
        %v4121 = vld [vmem:[#allocation8 + $0x9c] sm:$0xf]
        %v4122 = vld [vmem:[#allocation8 + $0xa0] sm:$0xf]
        %v4123 = vld [vmem:[#allocation8 + $0xa4] sm:$0xf]
        %v4124 = vld [vmem:[#allocation8 + $0xa8] sm:$0xf]
        %v4125 = vld [vmem:[#allocation8 + $0xac] sm:$0xf]
        %v4126 = vld [vmem:[#allocation8 + $0xb0] sm:$0xf]
        %v4127 = vld [vmem:[#allocation8 + $0xb4] sm:$0xf]
        %v4128 = vld [vmem:[#allocation8 + $0xb8] sm:$0xf]
        %v4129 = vld [vmem:[#allocation8 + $0xbc] sm:$0xf]
        %v4130 = vld [vmem:[%s729] sm:$0xff]
        %v4131 = vld [vmem:[%s729 + $0x8] sm:$0xf]
        %v4132 = vld [vmem:[%s729 + $0xc] sm:$0xff]
        %v4133 = vld [vmem:[%s729 + $0x14] sm:$0xf]
        %v4134 = vld [vmem:[%s729 + $0x18] sm:$0xff]
        %v4135 = vld [vmem:[%s729 + $0x20] sm:$0xf]
        %v4136 = vld [vmem:[%s729 + $0x24] sm:$0xff]
        %v4137 = vld [vmem:[%s729 + $0x2c] sm:$0xf]
        %v4138 = vld [vmem:[%s729 + $0x30] sm:$0xff]
        %v4139 = vld [vmem:[%s729 + $0x38] sm:$0xf]
        %v4140 = vld [vmem:[%s729 + $0x3c] sm:$0xff]
        %v4141 = vld [vmem:[%s729 + $0x44] sm:$0xf]
        %v4142 = vld [vmem:[%s729 + $0x48] sm:$0xff]
        %v4143 = vld [vmem:[%s729 + $0x50] sm:$0xf]
        %v4144 = vld [vmem:[%s729 + $0x54] sm:$0xff]
        %v4145 = vld [vmem:[%s729 + $0x5c] sm:$0xf]
        %v4146 = vld [vmem:[%s729 + $0x60] sm:$0xff]
        %v4147 = vld [vmem:[%s729 + $0x68] sm:$0xf]
        %v4148 = vld [vmem:[%s729 + $0x6c] sm:$0xff]
        %v4149 = vld [vmem:[%s729 + $0x74] sm:$0xf]
        %v4150 = vld [vmem:[%s729 + $0x78] sm:$0xff]
        %v4151 = vld [vmem:[%s729 + $0x80] sm:$0xf]
        %v4152 = vld [vmem:[%s729 + $0x84] sm:$0xff]
        %v4153 = vld [vmem:[%s729 + $0x8c] sm:$0xf]
        %v4154 = vld [vmem:[%s729 + $0x90] sm:$0xff]
        %v4155 = vld [vmem:[%s729 + $0x98] sm:$0xf]
        %v4156 = vld [vmem:[%s729 + $0x9c] sm:$0xff]
        %v4157 = vld [vmem:[%s729 + $0xa4] sm:$0xf]
        %v4158 = vld [vmem:[%s729 + $0xa8] sm:$0xff]
        %v4159 = vld [vmem:[%s729 + $0xb0] sm:$0xf]
        %v4160 = vld [vmem:[%s729 + $0xb4] sm:$0xff]
        %v4161 = vld [vmem:[%s729 + $0xbc] sm:$0xf]
        %v4162 = vld [vmem:[%s729 + $0xc0] sm:$0xff]
        %v4163 = vld [vmem:[%s729 + $0xc8] sm:$0xf]
        %v4164 = vld [vmem:[%s729 + $0xcc] sm:$0xff]
        %v4165 = vld [vmem:[%s729 + $0xd4] sm:$0xf]
        %v4166 = vld [vmem:[%s729 + $0xd8] sm:$0xff]
        %v4167 = vld [vmem:[%s729 + $0xe0] sm:$0xf]
        %v4168 = vld [vmem:[%s729 + $0xe4] sm:$0xff]
        %v4169 = vld [vmem:[%s729 + $0xec] sm:$0xf]
        %v4170 = vld [vmem:[%s729 + $0xf0] sm:$0xff]
        %v4171 = vld [vmem:[%s729 + $0xf8] sm:$0xf]
        %v4172 = vld [vmem:[%s729 + $0xfc] sm:$0xff]
        %v4173 = vld [vmem:[%s729 + $0x104] sm:$0xf]
        %v4174 = vld [vmem:[%s729 + $0x108] sm:$0xff]
        %v4175 = vld [vmem:[%s729 + $0x110] sm:$0xf]
        %v4176 = vld [vmem:[%s729 + $0x114] sm:$0xff]
        %v4177 = vld [vmem:[%s729 + $0x11c] sm:$0xf]
        %v4178 = vld [vmem:[%s729 + $0x120] sm:$0xff]
        %v4179 = vld [vmem:[%s729 + $0x128] sm:$0xf]
        %v4180 = vld [vmem:[%s729 + $0x12c] sm:$0xff]
        %v4181 = vld [vmem:[%s729 + $0x134] sm:$0xf]
        %v4182 = vld [vmem:[%s729 + $0x138] sm:$0xff]
        %v4183 = vld [vmem:[%s729 + $0x140] sm:$0xf]
        %v4184 = vld [vmem:[%s729 + $0x144] sm:$0xff]
        %v4185 = vld [vmem:[%s729 + $0x14c] sm:$0xf]
        %v4186 = vld [vmem:[%s729 + $0x150] sm:$0xff]
        %v4187 = vld [vmem:[%s729 + $0x158] sm:$0xf]
        %v4188 = vld [vmem:[%s729 + $0x15c] sm:$0xff]
        %v4189 = vld [vmem:[%s729 + $0x164] sm:$0xf]
        %v4190 = vld [vmem:[%s729 + $0x168] sm:$0xff]
        %v4191 = vld [vmem:[%s729 + $0x170] sm:$0xf]
        %v4192 = vld [vmem:[%s729 + $0x174] sm:$0xff]
        %v4193 = vld [vmem:[%s729 + $0x17c] sm:$0xf]
        %s4194 = scalar_lea.vmem [#allocation8], 192
        %v4195 = vld [vmem:[%s4194] sm:$0xf]
        %v4196 = vld [vmem:[%s4194 + $0x4] sm:$0xf]
        %v4197 = vld [vmem:[%s4194 + $0x8] sm:$0xf]
        %v4198 = vld [vmem:[%s4194 + $0xc] sm:$0xf]
        %v4199 = vld [vmem:[%s4194 + $0x10] sm:$0xf]
        %v4200 = vld [vmem:[%s4194 + $0x14] sm:$0xf]
        %v4201 = vld [vmem:[%s4194 + $0x18] sm:$0xf]
        %v4202 = vld [vmem:[%s4194 + $0x1c] sm:$0xf]
        %v4203 = vld [vmem:[%s4194 + $0x20] sm:$0xf]
        %v4204 = vld [vmem:[%s4194 + $0x24] sm:$0xf]
        %v4205 = vld [vmem:[%s4194 + $0x28] sm:$0xf]
        %v4206 = vld [vmem:[%s4194 + $0x2c] sm:$0xf]
        %v4207 = vld [vmem:[%s4194 + $0x30] sm:$0xf]
        %v4208 = vld [vmem:[%s4194 + $0x34] sm:$0xf]
        %v4209 = vld [vmem:[%s4194 + $0x38] sm:$0xf]
        %v4210 = vld [vmem:[%s4194 + $0x3c] sm:$0xf]
        %v4211 = vld [vmem:[%s4194 + $0x40] sm:$0xf]
        %v4212 = vld [vmem:[%s4194 + $0x44] sm:$0xf]
        %v4213 = vld [vmem:[%s4194 + $0x48] sm:$0xf]
        %v4214 = vld [vmem:[%s4194 + $0x4c] sm:$0xf]
        %v4215 = vld [vmem:[%s4194 + $0x50] sm:$0xf]
        %v4216 = vld [vmem:[%s4194 + $0x54] sm:$0xf]
        %v4217 = vld [vmem:[%s4194 + $0x58] sm:$0xf]
        %v4218 = vld [vmem:[%s4194 + $0x5c] sm:$0xf]
        %v4219 = vld [vmem:[%s4194 + $0x60] sm:$0xf]
        %v4220 = vld [vmem:[%s4194 + $0x64] sm:$0xf]
        %v4221 = vld [vmem:[%s4194 + $0x68] sm:$0xf]
        %v4222 = vld [vmem:[%s4194 + $0x6c] sm:$0xf]
        %v4223 = vld [vmem:[%s4194 + $0x70] sm:$0xf]
        %v4224 = vld [vmem:[%s4194 + $0x74] sm:$0xf]
        %v4225 = vld [vmem:[%s4194 + $0x78] sm:$0xf]
        %v4226 = vld [vmem:[%s4194 + $0x7c] sm:$0xf]
        %v4227 = vld [vmem:[%s4194 + $0x80] sm:$0xf]
        %v4228 = vld [vmem:[%s4194 + $0x84] sm:$0xf]
        %v4229 = vld [vmem:[%s4194 + $0x88] sm:$0xf]
        %v4230 = vld [vmem:[%s4194 + $0x8c] sm:$0xf]
        %v4231 = vld [vmem:[%s4194 + $0x90] sm:$0xf]
        %v4232 = vld [vmem:[%s4194 + $0x94] sm:$0xf]
        %v4233 = vld [vmem:[%s4194 + $0x98] sm:$0xf]
        %v4234 = vld [vmem:[%s4194 + $0x9c] sm:$0xf]
        %v4235 = vld [vmem:[%s4194 + $0xa0] sm:$0xf]
        %v4236 = vld [vmem:[%s4194 + $0xa4] sm:$0xf]
        %v4237 = vld [vmem:[%s4194 + $0xa8] sm:$0xf]
        %v4238 = vld [vmem:[%s4194 + $0xac] sm:$0xf]
        %v4239 = vld [vmem:[%s4194 + $0xb0] sm:$0xf]
        %v4240 = vld [vmem:[%s4194 + $0xb4] sm:$0xf]
        %v4241 = vld [vmem:[%s4194 + $0xb8] sm:$0xf]
        %v4242 = vld [vmem:[%s4194 + $0xbc] sm:$0xf]
        %v4307 = vunpack.c.l.b16 %v4130
        %v4308 = vunpack.c.h.b16 %v4130
        %v4309 = vunpack.c.l.b16 %v4131
        %v4310 = vunpack.c.l.b16 %v4132
        %v4311 = vunpack.c.h.b16 %v4132
        %v4312 = vunpack.c.l.b16 %v4133
        %v4313 = vunpack.c.l.b16 %v4134
        %v4314 = vunpack.c.h.b16 %v4134
        %v4315 = vunpack.c.l.b16 %v4135
        %v4316 = vunpack.c.l.b16 %v4136
        %v4317 = vunpack.c.h.b16 %v4136
        %v4318 = vunpack.c.l.b16 %v4137
        %v4319 = vunpack.c.l.b16 %v4138
        %v4320 = vunpack.c.h.b16 %v4138
        %v4321 = vunpack.c.l.b16 %v4139
        %v4322 = vunpack.c.l.b16 %v4140
        %v4323 = vunpack.c.h.b16 %v4140
        %v4324 = vunpack.c.l.b16 %v4141
        %v4325 = vunpack.c.l.b16 %v4142
        %v4326 = vunpack.c.h.b16 %v4142
        %v4327 = vunpack.c.l.b16 %v4143
        %v4328 = vunpack.c.l.b16 %v4144
        %v4329 = vunpack.c.h.b16 %v4144
        %v4330 = vunpack.c.l.b16 %v4145
        %v4331 = vunpack.c.l.b16 %v4146
        %v4332 = vunpack.c.h.b16 %v4146
        %v4333 = vunpack.c.l.b16 %v4147
        %v4334 = vunpack.c.l.b16 %v4148
        %v4335 = vunpack.c.h.b16 %v4148
        %v4336 = vunpack.c.l.b16 %v4149
        %v4337 = vunpack.c.l.b16 %v4150
        %v4338 = vunpack.c.h.b16 %v4150
        %v4339 = vunpack.c.l.b16 %v4151
        %v4340 = vunpack.c.l.b16 %v4152
        %v4341 = vunpack.c.h.b16 %v4152
        %v4342 = vunpack.c.l.b16 %v4153
        %v4343 = vunpack.c.l.b16 %v4154
        %v4344 = vunpack.c.h.b16 %v4154
        %v4345 = vunpack.c.l.b16 %v4155
        %v4346 = vunpack.c.l.b16 %v4156
        %v4347 = vunpack.c.h.b16 %v4156
        %v4348 = vunpack.c.l.b16 %v4157
        %v4349 = vunpack.c.l.b16 %v4158
        %v4350 = vunpack.c.h.b16 %v4158
        %v4351 = vunpack.c.l.b16 %v4159
        %v4352 = vunpack.c.l.b16 %v4160
        %v4353 = vunpack.c.h.b16 %v4160
        %v4354 = vunpack.c.l.b16 %v4161
        %v4355 = vunpack.c.l.b16 %v4162
        %v4356 = vunpack.c.h.b16 %v4162
        %v4357 = vunpack.c.l.b16 %v4163
        %v4358 = vunpack.c.l.b16 %v4164
        %v4359 = vunpack.c.h.b16 %v4164
        %v4360 = vunpack.c.l.b16 %v4165
        %v4361 = vunpack.c.l.b16 %v4166
        %v4362 = vunpack.c.h.b16 %v4166
        %v4363 = vunpack.c.l.b16 %v4167
        %v4364 = vunpack.c.l.b16 %v4168
        %v4365 = vunpack.c.h.b16 %v4168
        %v4366 = vunpack.c.l.b16 %v4169
        %v4367 = vunpack.c.l.b16 %v4170
        %v4368 = vunpack.c.h.b16 %v4170
        %v4369 = vunpack.c.l.b16 %v4171
        %v4370 = vunpack.c.l.b16 %v4172
        %v4371 = vunpack.c.h.b16 %v4172
        %v4372 = vunpack.c.l.b16 %v4173
        %v4373 = vunpack.c.l.b16 %v4174
        %v4374 = vunpack.c.h.b16 %v4174
        %v4375 = vunpack.c.l.b16 %v4175
        %v4376 = vunpack.c.l.b16 %v4176
        %v4377 = vunpack.c.h.b16 %v4176
        %v4378 = vunpack.c.l.b16 %v4177
        %v4379 = vunpack.c.l.b16 %v4178
        %v4380 = vunpack.c.h.b16 %v4178
        %v4381 = vunpack.c.l.b16 %v4179
        %v4382 = vunpack.c.l.b16 %v4180
        %v4383 = vunpack.c.h.b16 %v4180
        %v4384 = vunpack.c.l.b16 %v4181
        %v4385 = vunpack.c.l.b16 %v4182
        %v4386 = vunpack.c.h.b16 %v4182
        %v4387 = vunpack.c.l.b16 %v4183
        %v4388 = vunpack.c.l.b16 %v4184
        %v4389 = vunpack.c.h.b16 %v4184
        %v4390 = vunpack.c.l.b16 %v4185
        %v4391 = vunpack.c.l.b16 %v4186
        %v4392 = vunpack.c.h.b16 %v4186
        %v4393 = vunpack.c.l.b16 %v4187
        %v4394 = vunpack.c.l.b16 %v4188
        %v4395 = vunpack.c.h.b16 %v4188
        %v4396 = vunpack.c.l.b16 %v4189
        %v4397 = vunpack.c.l.b16 %v4190
        %v4398 = vunpack.c.h.b16 %v4190
        %v4399 = vunpack.c.l.b16 %v4191
        %v4400 = vunpack.c.l.b16 %v4192
        %v4401 = vunpack.c.h.b16 %v4192
        %v4402 = vunpack.c.l.b16 %v4193
        %v4403 = vpack.c.b16 %v4310, %v4307
        %v4404 = vpack.c.b16 %v4311, %v4308
        %v4405 = vpack.c.b16 %v4312, %v4309
        %v4406 = vpack.c.b16 %v4316, %v4313
        %v4407 = vpack.c.b16 %v4317, %v4314
        %v4408 = vpack.c.b16 %v4318, %v4315
        %v4409 = vpack.c.b16 %v4322, %v4319
        %v4410 = vpack.c.b16 %v4323, %v4320
        %v4411 = vpack.c.b16 %v4324, %v4321
        %v4412 = vpack.c.b16 %v4328, %v4325
        %v4413 = vpack.c.b16 %v4329, %v4326
        %v4414 = vpack.c.b16 %v4330, %v4327
        %v4415 = vpack.c.b16 %v4334, %v4331
        %v4416 = vpack.c.b16 %v4335, %v4332
        %v4417 = vpack.c.b16 %v4336, %v4333
        %v4418 = vpack.c.b16 %v4340, %v4337
        %v4419 = vpack.c.b16 %v4341, %v4338
        %v4420 = vpack.c.b16 %v4342, %v4339
        %v4421 = vpack.c.b16 %v4346, %v4343
        %v4422 = vpack.c.b16 %v4347, %v4344
        %v4423 = vpack.c.b16 %v4348, %v4345
        %v4424 = vpack.c.b16 %v4352, %v4349
        %v4425 = vpack.c.b16 %v4353, %v4350
        %v4426 = vpack.c.b16 %v4354, %v4351
        %v4427 = vpack.c.b16 %v4358, %v4355
        %v4428 = vpack.c.b16 %v4359, %v4356
        %v4429 = vpack.c.b16 %v4360, %v4357
        %v4430 = vpack.c.b16 %v4364, %v4361
        %v4431 = vpack.c.b16 %v4365, %v4362
        %v4432 = vpack.c.b16 %v4366, %v4363
        %v4433 = vpack.c.b16 %v4370, %v4367
        %v4434 = vpack.c.b16 %v4371, %v4368
        %v4435 = vpack.c.b16 %v4372, %v4369
        %v4436 = vpack.c.b16 %v4376, %v4373
        %v4437 = vpack.c.b16 %v4377, %v4374
        %v4438 = vpack.c.b16 %v4378, %v4375
        %v4439 = vpack.c.b16 %v4382, %v4379
        %v4440 = vpack.c.b16 %v4383, %v4380
        %v4441 = vpack.c.b16 %v4384, %v4381
        %v4442 = vpack.c.b16 %v4388, %v4385
        %v4443 = vpack.c.b16 %v4389, %v4386
        %v4444 = vpack.c.b16 %v4390, %v4387
        %v4445 = vpack.c.b16 %v4394, %v4391
        %v4446 = vpack.c.b16 %v4395, %v4392
        %v4447 = vpack.c.b16 %v4396, %v4393
        %v4448 = vpack.c.b16 %v4400, %v4397
        %v4449 = vpack.c.b16 %v4401, %v4398
        %v4450 = vpack.c.b16 %v4402, %v4399
        %v4547 = vunpack.c.l.b16 %v4195
        %v4548 = vunpack.c.l.b16 %v4196
        %v4549 = vunpack.c.l.b16 %v4197
        %v4550 = vunpack.c.l.b16 %v4198
        %v4551 = vunpack.c.l.b16 %v4199
        %v4552 = vunpack.c.l.b16 %v4200
        %v4553 = vunpack.c.l.b16 %v4201
        %v4554 = vunpack.c.l.b16 %v4202
        %v4555 = vunpack.c.l.b16 %v4203
        %v4556 = vunpack.c.l.b16 %v4204
        %v4557 = vunpack.c.l.b16 %v4205
        %v4558 = vunpack.c.l.b16 %v4206
        %v4559 = vunpack.c.l.b16 %v4207
        %v4560 = vunpack.c.l.b16 %v4208
        %v4561 = vunpack.c.l.b16 %v4209
        %v4562 = vunpack.c.l.b16 %v4210
        %v4563 = vunpack.c.l.b16 %v4211
        %v4564 = vunpack.c.l.b16 %v4212
        %v4565 = vunpack.c.l.b16 %v4213
        %v4566 = vunpack.c.l.b16 %v4214
        %v4567 = vunpack.c.l.b16 %v4215
        %v4568 = vunpack.c.l.b16 %v4216
        %v4569 = vunpack.c.l.b16 %v4217
        %v4570 = vunpack.c.l.b16 %v4218
        %v4571 = vunpack.c.l.b16 %v4219
        %v4572 = vunpack.c.l.b16 %v4220
        %v4573 = vunpack.c.l.b16 %v4221
        %v4574 = vunpack.c.l.b16 %v4222
        %v4575 = vunpack.c.l.b16 %v4223
        %v4576 = vunpack.c.l.b16 %v4224
        %v4577 = vunpack.c.l.b16 %v4225
        %v4578 = vunpack.c.l.b16 %v4226
        %v4579 = vunpack.c.l.b16 %v4227
        %v4580 = vunpack.c.l.b16 %v4228
        %v4581 = vunpack.c.l.b16 %v4229
        %v4582 = vunpack.c.l.b16 %v4230
        %v4583 = vunpack.c.l.b16 %v4231
        %v4584 = vunpack.c.l.b16 %v4232
        %v4585 = vunpack.c.l.b16 %v4233
        %v4586 = vunpack.c.l.b16 %v4234
        %v4587 = vunpack.c.l.b16 %v4235
        %v4588 = vunpack.c.l.b16 %v4236
        %v4589 = vunpack.c.l.b16 %v4237
        %v4590 = vunpack.c.l.b16 %v4238
        %v4591 = vunpack.c.l.b16 %v4239
        %v4592 = vunpack.c.l.b16 %v4240
        %v4593 = vunpack.c.l.b16 %v4241
        %v4594 = vunpack.c.l.b16 %v4242
        %v4595 = vpack.c.b16 %v4548, %v4547
        %v4596 = vpack.c.b16 %v4550, %v4549
        %v4597 = vpack.c.b16 %v4552, %v4551
        %v4598 = vpack.c.b16 %v4554, %v4553
        %v4599 = vpack.c.b16 %v4556, %v4555
        %v4600 = vpack.c.b16 %v4558, %v4557
        %v4601 = vpack.c.b16 %v4560, %v4559
        %v4602 = vpack.c.b16 %v4562, %v4561
        %v4603 = vpack.c.b16 %v4564, %v4563
        %v4604 = vpack.c.b16 %v4566, %v4565
        %v4605 = vpack.c.b16 %v4568, %v4567
        %v4606 = vpack.c.b16 %v4570, %v4569
        %v4607 = vpack.c.b16 %v4572, %v4571
        %v4608 = vpack.c.b16 %v4574, %v4573
        %v4609 = vpack.c.b16 %v4576, %v4575
        %v4610 = vpack.c.b16 %v4578, %v4577
        %v4611 = vpack.c.b16 %v4580, %v4579
        %v4612 = vpack.c.b16 %v4582, %v4581
        %v4613 = vpack.c.b16 %v4584, %v4583
        %v4614 = vpack.c.b16 %v4586, %v4585
        %v4615 = vpack.c.b16 %v4588, %v4587
        %v4616 = vpack.c.b16 %v4590, %v4589
        %v4617 = vpack.c.b16 %v4592, %v4591
        %v4618 = vpack.c.b16 %v4594, %v4593
        %4643 = vmatpush.bf16.msra.mxu0 %v4602
        %4644 = vmatpush.bf16.msra.mxu0 %v4601
        %4645 = vmatpush.bf16.msra.mxu0 %v4600
        %4646 = vmatpush.bf16.msra.mxu0 %v4599
        %4647 = vmatpush.bf16.msra.mxu0 %v4598
        %4648 = vmatpush.bf16.msra.mxu0 %v4597
        %4649 = vmatpush.bf16.msra.mxu0 %v4596
        %4650 = vmatpush.bf16.msra.mxu0 %v4595
        %4651 = vmatmul.bf16.gmra.mxu0 %v4403
        %v4652 = vpop.f32.mrf.mxu0
        %v4653 = vadd.f32 0.0, %v4652
        %v4654 = vpop.f32.mrf.mxu0
        %v4655 = vadd.f32 0.0, %v4654
        %4656 = vmatmul.bf16.gmra.mxu0 %v4406
        %v4657 = vpop.f32.mrf.mxu0
        %v4658 = vadd.f32 0.0, %v4657
        %v4659 = vpop.f32.mrf.mxu0
        %v4660 = vadd.f32 0.0, %v4659
        %4661 = vmatmul.bf16.gmra.mxu0 %v4409
        %v4662 = vpop.f32.mrf.mxu0
        %v4663 = vadd.f32 0.0, %v4662
        %v4664 = vpop.f32.mrf.mxu0
        %v4665 = vadd.f32 0.0, %v4664
        %4666 = vmatmul.bf16.gmra.mxu0 %v4412
        %v4667 = vpop.f32.mrf.mxu0
        %v4668 = vadd.f32 0.0, %v4667
        %v4669 = vpop.f32.mrf.mxu0
        %v4670 = vadd.f32 0.0, %v4669
        %4671 = vmatmul.bf16.gmra.mxu0 %v4415
        %v4672 = vpop.f32.mrf.mxu0
        %v4673 = vadd.f32 0.0, %v4672
        %v4674 = vpop.f32.mrf.mxu0
        %v4675 = vadd.f32 0.0, %v4674
        %4676 = vmatmul.bf16.gmra.mxu0 %v4418
        %v4677 = vpop.f32.mrf.mxu0
        %v4678 = vadd.f32 0.0, %v4677
        %v4679 = vpop.f32.mrf.mxu0
        %v4680 = vadd.f32 0.0, %v4679
        %4681 = vmatmul.bf16.gmra.mxu0 %v4421
        %v4682 = vpop.f32.mrf.mxu0
        %v4683 = vadd.f32 0.0, %v4682
        %v4684 = vpop.f32.mrf.mxu0
        %v4685 = vadd.f32 0.0, %v4684
        %4686 = vmatmul.bf16.gmra.mxu0 %v4424
        %v4687 = vpop.f32.mrf.mxu0
        %v4688 = vadd.f32 0.0, %v4687
        %v4689 = vpop.f32.mrf.mxu0
        %v4690 = vadd.f32 0.0, %v4689
        %4691 = vmatmul.bf16.gmra.mxu0 %v4427
        %v4692 = vpop.f32.mrf.mxu0
        %v4693 = vadd.f32 0.0, %v4692
        %v4694 = vpop.f32.mrf.mxu0
        %v4695 = vadd.f32 0.0, %v4694
        %4696 = vmatmul.bf16.gmra.mxu0 %v4430
        %v4697 = vpop.f32.mrf.mxu0
        %v4698 = vadd.f32 0.0, %v4697
        %v4699 = vpop.f32.mrf.mxu0
        %v4700 = vadd.f32 0.0, %v4699
        %4701 = vmatmul.bf16.gmra.mxu0 %v4433
        %v4702 = vpop.f32.mrf.mxu0
        %v4703 = vadd.f32 0.0, %v4702
        %v4704 = vpop.f32.mrf.mxu0
        %v4705 = vadd.f32 0.0, %v4704
        %4706 = vmatmul.bf16.gmra.mxu0 %v4436
        %v4707 = vpop.f32.mrf.mxu0
        %v4708 = vadd.f32 0.0, %v4707
        %v4709 = vpop.f32.mrf.mxu0
        %v4710 = vadd.f32 0.0, %v4709
        %4711 = vmatmul.bf16.gmra.mxu0 %v4439
        %v4712 = vpop.f32.mrf.mxu0
        %v4713 = vadd.f32 0.0, %v4712
        %v4714 = vpop.f32.mrf.mxu0
        %v4715 = vadd.f32 0.0, %v4714
        %4716 = vmatmul.bf16.gmra.mxu0 %v4442
        %v4717 = vpop.f32.mrf.mxu0
        %v4718 = vadd.f32 0.0, %v4717
        %v4719 = vpop.f32.mrf.mxu0
        %v4720 = vadd.f32 0.0, %v4719
        %4721 = vmatmul.bf16.gmra.mxu0 %v4445
        %v4722 = vpop.f32.mrf.mxu0
        %v4723 = vadd.f32 0.0, %v4722
        %v4724 = vpop.f32.mrf.mxu0
        %v4725 = vadd.f32 0.0, %v4724
        %4726 = vmatmul.bf16.gmra.mxu0 %v4448
        %v4727 = vpop.f32.mrf.mxu0
        %v4728 = vadd.f32 0.0, %v4727
        %v4729 = vpop.f32.mrf.mxu0
        %v4730 = vadd.f32 0.0, %v4729
        %4731 = vdwg.mxu0
        %4732 = vmatpush.bf16.msra.mxu0 %v4610
        %4733 = vmatpush.bf16.msra.mxu0 %v4609
        %4734 = vmatpush.bf16.msra.mxu0 %v4608
        %4735 = vmatpush.bf16.msra.mxu0 %v4607
        %4736 = vmatpush.bf16.msra.mxu0 %v4606
        %4737 = vmatpush.bf16.msra.mxu0 %v4605
        %4738 = vmatpush.bf16.msra.mxu0 %v4604
        %4739 = vmatpush.bf16.msra.mxu0 %v4603
        %4740 = vmatmul.bf16.gmra.mxu0 %v4404
        %v4741 = vpop.f32.mrf.mxu0
        %v4742 = vadd.f32 %v4653, %v4741
        %v4743 = vpop.f32.mrf.mxu0
        %v4744 = vadd.f32 %v4655, %v4743
        %4745 = vmatmul.bf16.gmra.mxu0 %v4407
        %v4746 = vpop.f32.mrf.mxu0
        %v4747 = vadd.f32 %v4658, %v4746
        %v4748 = vpop.f32.mrf.mxu0
        %v4749 = vadd.f32 %v4660, %v4748
        %4750 = vmatmul.bf16.gmra.mxu0 %v4410
        %v4751 = vpop.f32.mrf.mxu0
        %v4752 = vadd.f32 %v4663, %v4751
        %v4753 = vpop.f32.mrf.mxu0
        %v4754 = vadd.f32 %v4665, %v4753
        %4755 = vmatmul.bf16.gmra.mxu0 %v4413
        %v4756 = vpop.f32.mrf.mxu0
        %v4757 = vadd.f32 %v4668, %v4756
        %v4758 = vpop.f32.mrf.mxu0
        %v4759 = vadd.f32 %v4670, %v4758
        %4760 = vmatmul.bf16.gmra.mxu0 %v4416
        %v4761 = vpop.f32.mrf.mxu0
        %v4762 = vadd.f32 %v4673, %v4761
        %v4763 = vpop.f32.mrf.mxu0
        %v4764 = vadd.f32 %v4675, %v4763
        %4765 = vmatmul.bf16.gmra.mxu0 %v4419
        %v4766 = vpop.f32.mrf.mxu0
        %v4767 = vadd.f32 %v4678, %v4766
        %v4768 = vpop.f32.mrf.mxu0
        %v4769 = vadd.f32 %v4680, %v4768
        %4770 = vmatmul.bf16.gmra.mxu0 %v4422
        %v4771 = vpop.f32.mrf.mxu0
        %v4772 = vadd.f32 %v4683, %v4771
        %v4773 = vpop.f32.mrf.mxu0
        %v4774 = vadd.f32 %v4685, %v4773
        %4775 = vmatmul.bf16.gmra.mxu0 %v4425
        %v4776 = vpop.f32.mrf.mxu0
        %v4777 = vadd.f32 %v4688, %v4776
        %v4778 = vpop.f32.mrf.mxu0
        %v4779 = vadd.f32 %v4690, %v4778
        %4780 = vmatmul.bf16.gmra.mxu0 %v4428
        %v4781 = vpop.f32.mrf.mxu0
        %v4782 = vadd.f32 %v4693, %v4781
        %v4783 = vpop.f32.mrf.mxu0
        %v4784 = vadd.f32 %v4695, %v4783
        %4785 = vmatmul.bf16.gmra.mxu0 %v4431
        %v4786 = vpop.f32.mrf.mxu0
        %v4787 = vadd.f32 %v4698, %v4786
        %v4788 = vpop.f32.mrf.mxu0
        %v4789 = vadd.f32 %v4700, %v4788
        %4790 = vmatmul.bf16.gmra.mxu0 %v4434
        %v4791 = vpop.f32.mrf.mxu0
        %v4792 = vadd.f32 %v4703, %v4791
        %v4793 = vpop.f32.mrf.mxu0
        %v4794 = vadd.f32 %v4705, %v4793
        %4795 = vmatmul.bf16.gmra.mxu0 %v4437
        %v4796 = vpop.f32.mrf.mxu0
        %v4797 = vadd.f32 %v4708, %v4796
        %v4798 = vpop.f32.mrf.mxu0
        %v4799 = vadd.f32 %v4710, %v4798
        %4800 = vmatmul.bf16.gmra.mxu0 %v4440
        %v4801 = vpop.f32.mrf.mxu0
        %v4802 = vadd.f32 %v4713, %v4801
        %v4803 = vpop.f32.mrf.mxu0
        %v4804 = vadd.f32 %v4715, %v4803
        %4805 = vmatmul.bf16.gmra.mxu0 %v4443
        %v4806 = vpop.f32.mrf.mxu0
        %v4807 = vadd.f32 %v4718, %v4806
        %v4808 = vpop.f32.mrf.mxu0
        %v4809 = vadd.f32 %v4720, %v4808
        %4810 = vmatmul.bf16.gmra.mxu0 %v4446
        %v4811 = vpop.f32.mrf.mxu0
        %v4812 = vadd.f32 %v4723, %v4811
        %v4813 = vpop.f32.mrf.mxu0
        %v4814 = vadd.f32 %v4725, %v4813
        %4815 = vmatmul.bf16.gmra.mxu0 %v4449
        %v4816 = vpop.f32.mrf.mxu0
        %v4817 = vadd.f32 %v4728, %v4816
        %v4818 = vpop.f32.mrf.mxu0
        %v4819 = vadd.f32 %v4730, %v4818
        %4820 = vdwg.mxu0
        %4821 = vmatpush.bf16.msra.mxu0 %v4618
        %4822 = vmatpush.bf16.msra.mxu0 %v4617
        %4823 = vmatpush.bf16.msra.mxu0 %v4616
        %4824 = vmatpush.bf16.msra.mxu0 %v4615
        %4825 = vmatpush.bf16.msra.mxu0 %v4614
        %4826 = vmatpush.bf16.msra.mxu0 %v4613
        %4827 = vmatpush.bf16.msra.mxu0 %v4612
        %4828 = vmatpush.bf16.msra.mxu0 %v4611
        %4829 = vmatmul.bf16.gmra.mxu0 %v4405
        %v4830 = vpop.f32.mrf.mxu0
        %v4831 = vadd.f32 %v4742, %v4830
        %v4832 = vpop.f32.mrf.mxu0
        %v4833 = vadd.f32 %v4744, %v4832
        %4834 = vmatmul.bf16.gmra.mxu0 %v4408
        %v4835 = vpop.f32.mrf.mxu0
        %v4836 = vadd.f32 %v4747, %v4835
        %v4837 = vpop.f32.mrf.mxu0
        %v4838 = vadd.f32 %v4749, %v4837
        %4839 = vmatmul.bf16.gmra.mxu0 %v4411
        %v4840 = vpop.f32.mrf.mxu0
        %v4841 = vadd.f32 %v4752, %v4840
        %v4842 = vpop.f32.mrf.mxu0
        %v4843 = vadd.f32 %v4754, %v4842
        %4844 = vmatmul.bf16.gmra.mxu0 %v4414
        %v4845 = vpop.f32.mrf.mxu0
        %v4846 = vadd.f32 %v4757, %v4845
        %v4847 = vpop.f32.mrf.mxu0
        %v4848 = vadd.f32 %v4759, %v4847
        %4849 = vmatmul.bf16.gmra.mxu0 %v4417
        %v4850 = vpop.f32.mrf.mxu0
        %v4851 = vadd.f32 %v4762, %v4850
        %v4852 = vpop.f32.mrf.mxu0
        %v4853 = vadd.f32 %v4764, %v4852
        %4854 = vmatmul.bf16.gmra.mxu0 %v4420
        %v4855 = vpop.f32.mrf.mxu0
        %v4856 = vadd.f32 %v4767, %v4855
        %v4857 = vpop.f32.mrf.mxu0
        %v4858 = vadd.f32 %v4769, %v4857
        %4859 = vmatmul.bf16.gmra.mxu0 %v4423
        %v4860 = vpop.f32.mrf.mxu0
        %v4861 = vadd.f32 %v4772, %v4860
        %v4862 = vpop.f32.mrf.mxu0
        %v4863 = vadd.f32 %v4774, %v4862
        %4864 = vmatmul.bf16.gmra.mxu0 %v4426
        %v4865 = vpop.f32.mrf.mxu0
        %v4866 = vadd.f32 %v4777, %v4865
        %v4867 = vpop.f32.mrf.mxu0
        %v4868 = vadd.f32 %v4779, %v4867
        %4869 = vmatmul.bf16.gmra.mxu0 %v4429
        %v4870 = vpop.f32.mrf.mxu0
        %v4871 = vadd.f32 %v4782, %v4870
        %v4872 = vpop.f32.mrf.mxu0
        %v4873 = vadd.f32 %v4784, %v4872
        %4874 = vmatmul.bf16.gmra.mxu0 %v4432
        %v4875 = vpop.f32.mrf.mxu0
        %v4876 = vadd.f32 %v4787, %v4875
        %v4877 = vpop.f32.mrf.mxu0
        %v4878 = vadd.f32 %v4789, %v4877
        %4879 = vmatmul.bf16.gmra.mxu0 %v4435
        %v4880 = vpop.f32.mrf.mxu0
        %v4881 = vadd.f32 %v4792, %v4880
        %v4882 = vpop.f32.mrf.mxu0
        %v4883 = vadd.f32 %v4794, %v4882
        %4884 = vmatmul.bf16.gmra.mxu0 %v4438
        %v4885 = vpop.f32.mrf.mxu0
        %v4886 = vadd.f32 %v4797, %v4885
        %v4887 = vpop.f32.mrf.mxu0
        %v4888 = vadd.f32 %v4799, %v4887
        %4889 = vmatmul.bf16.gmra.mxu0 %v4441
        %v4890 = vpop.f32.mrf.mxu0
        %v4891 = vadd.f32 %v4802, %v4890
        %v4892 = vpop.f32.mrf.mxu0
        %v4893 = vadd.f32 %v4804, %v4892
        %4894 = vmatmul.bf16.gmra.mxu0 %v4444
        %v4895 = vpop.f32.mrf.mxu0
        %v4896 = vadd.f32 %v4807, %v4895
        %v4897 = vpop.f32.mrf.mxu0
        %v4898 = vadd.f32 %v4809, %v4897
        %4899 = vmatmul.bf16.gmra.mxu0 %v4447
        %v4900 = vpop.f32.mrf.mxu0
        %v4901 = vadd.f32 %v4812, %v4900
        %v4902 = vpop.f32.mrf.mxu0
        %v4903 = vadd.f32 %v4814, %v4902
        %4904 = vmatmul.bf16.gmra.mxu0 %v4450
        %v4905 = vpop.f32.mrf.mxu0
        %v4906 = vadd.f32 %v4817, %v4905
        %v4907 = vpop.f32.mrf.mxu0
        %v4908 = vadd.f32 %v4819, %v4907
        %4909 = vdwg.mxu0
        %v4974 = vunpack.c.l.b16 %v4018
        %v4975 = vunpack.c.h.b16 %v4018
        %v4976 = vunpack.c.l.b16 %v4019
        %v4977 = vunpack.c.l.b16 %v4020
        %v4978 = vunpack.c.h.b16 %v4020
        %v4979 = vunpack.c.l.b16 %v4021
        %v4980 = vunpack.c.l.b16 %v4022
        %v4981 = vunpack.c.h.b16 %v4022
        %v4982 = vunpack.c.l.b16 %v4023
        %v4983 = vunpack.c.l.b16 %v4024
        %v4984 = vunpack.c.h.b16 %v4024
        %v4985 = vunpack.c.l.b16 %v4025
        %v4986 = vunpack.c.l.b16 %v4026
        %v4987 = vunpack.c.h.b16 %v4026
        %v4988 = vunpack.c.l.b16 %v4027
        %v4989 = vunpack.c.l.b16 %v4028
        %v4990 = vunpack.c.h.b16 %v4028
        %v4991 = vunpack.c.l.b16 %v4029
        %v4992 = vunpack.c.l.b16 %v4030
        %v4993 = vunpack.c.h.b16 %v4030
        %v4994 = vunpack.c.l.b16 %v4031
        %v4995 = vunpack.c.l.b16 %v4032
        %v4996 = vunpack.c.h.b16 %v4032
        %v4997 = vunpack.c.l.b16 %v4033
        %v4998 = vunpack.c.l.b16 %v4034
        %v4999 = vunpack.c.h.b16 %v4034
        %v5000 = vunpack.c.l.b16 %v4035
        %v5001 = vunpack.c.l.b16 %v4036
        %v5002 = vunpack.c.h.b16 %v4036
        %v5003 = vunpack.c.l.b16 %v4037
        %v5004 = vunpack.c.l.b16 %v4038
        %v5005 = vunpack.c.h.b16 %v4038
        %v5006 = vunpack.c.l.b16 %v4039
        %v5007 = vunpack.c.l.b16 %v4040
        %v5008 = vunpack.c.h.b16 %v4040
        %v5009 = vunpack.c.l.b16 %v4041
        %v5010 = vunpack.c.l.b16 %v4042
        %v5011 = vunpack.c.h.b16 %v4042
        %v5012 = vunpack.c.l.b16 %v4043
        %v5013 = vunpack.c.l.b16 %v4044
        %v5014 = vunpack.c.h.b16 %v4044
        %v5015 = vunpack.c.l.b16 %v4045
        %v5016 = vunpack.c.l.b16 %v4046
        %v5017 = vunpack.c.h.b16 %v4046
        %v5018 = vunpack.c.l.b16 %v4047
        %v5019 = vunpack.c.l.b16 %v4048
        %v5020 = vunpack.c.h.b16 %v4048
        %v5021 = vunpack.c.l.b16 %v4049
        %v5022 = vunpack.c.l.b16 %v4050
        %v5023 = vunpack.c.h.b16 %v4050
        %v5024 = vunpack.c.l.b16 %v4051
        %v5025 = vunpack.c.l.b16 %v4052
        %v5026 = vunpack.c.h.b16 %v4052
        %v5027 = vunpack.c.l.b16 %v4053
        %v5028 = vunpack.c.l.b16 %v4054
        %v5029 = vunpack.c.h.b16 %v4054
        %v5030 = vunpack.c.l.b16 %v4055
        %v5031 = vunpack.c.l.b16 %v4056
        %v5032 = vunpack.c.h.b16 %v4056
        %v5033 = vunpack.c.l.b16 %v4057
        %v5034 = vunpack.c.l.b16 %v4058
        %v5035 = vunpack.c.h.b16 %v4058
        %v5036 = vunpack.c.l.b16 %v4059
        %v5037 = vunpack.c.l.b16 %v4060
        %v5038 = vunpack.c.h.b16 %v4060
        %v5039 = vunpack.c.l.b16 %v4061
        %v5040 = vunpack.c.l.b16 %v4062
        %v5041 = vunpack.c.h.b16 %v4062
        %v5042 = vunpack.c.l.b16 %v4063
        %v5043 = vunpack.c.l.b16 %v4064
        %v5044 = vunpack.c.h.b16 %v4064
        %v5045 = vunpack.c.l.b16 %v4065
        %v5046 = vunpack.c.l.b16 %v4066
        %v5047 = vunpack.c.h.b16 %v4066
        %v5048 = vunpack.c.l.b16 %v4067
        %v5049 = vunpack.c.l.b16 %v4068
        %v5050 = vunpack.c.h.b16 %v4068
        %v5051 = vunpack.c.l.b16 %v4069
        %v5052 = vunpack.c.l.b16 %v4070
        %v5053 = vunpack.c.h.b16 %v4070
        %v5054 = vunpack.c.l.b16 %v4071
        %v5055 = vunpack.c.l.b16 %v4072
        %v5056 = vunpack.c.h.b16 %v4072
        %v5057 = vunpack.c.l.b16 %v4073
        %v5058 = vunpack.c.l.b16 %v4074
        %v5059 = vunpack.c.h.b16 %v4074
        %v5060 = vunpack.c.l.b16 %v4075
        %v5061 = vunpack.c.l.b16 %v4076
        %v5062 = vunpack.c.h.b16 %v4076
        %v5063 = vunpack.c.l.b16 %v4077
        %v5064 = vunpack.c.l.b16 %v4078
        %v5065 = vunpack.c.h.b16 %v4078
        %v5066 = vunpack.c.l.b16 %v4079
        %v5067 = vunpack.c.l.b16 %v4080
        %v5068 = vunpack.c.h.b16 %v4080
        %v5069 = vunpack.c.l.b16 %v4081
        %v5070 = vpack.c.b16 %v4977, %v4974
        %v5071 = vpack.c.b16 %v4978, %v4975
        %v5072 = vpack.c.b16 %v4979, %v4976
        %v5073 = vpack.c.b16 %v4983, %v4980
        %v5074 = vpack.c.b16 %v4984, %v4981
        %v5075 = vpack.c.b16 %v4985, %v4982
        %v5076 = vpack.c.b16 %v4989, %v4986
        %v5077 = vpack.c.b16 %v4990, %v4987
        %v5078 = vpack.c.b16 %v4991, %v4988
        %v5079 = vpack.c.b16 %v4995, %v4992
        %v5080 = vpack.c.b16 %v4996, %v4993
        %v5081 = vpack.c.b16 %v4997, %v4994
        %v5082 = vpack.c.b16 %v5001, %v4998
        %v5083 = vpack.c.b16 %v5002, %v4999
        %v5084 = vpack.c.b16 %v5003, %v5000
        %v5085 = vpack.c.b16 %v5007, %v5004
        %v5086 = vpack.c.b16 %v5008, %v5005
        %v5087 = vpack.c.b16 %v5009, %v5006
        %v5088 = vpack.c.b16 %v5013, %v5010
        %v5089 = vpack.c.b16 %v5014, %v5011
        %v5090 = vpack.c.b16 %v5015, %v5012
        %v5091 = vpack.c.b16 %v5019, %v5016
        %v5092 = vpack.c.b16 %v5020, %v5017
        %v5093 = vpack.c.b16 %v5021, %v5018
        %v5094 = vpack.c.b16 %v5025, %v5022
        %v5095 = vpack.c.b16 %v5026, %v5023
        %v5096 = vpack.c.b16 %v5027, %v5024
        %v5097 = vpack.c.b16 %v5031, %v5028
        %v5098 = vpack.c.b16 %v5032, %v5029
        %v5099 = vpack.c.b16 %v5033, %v5030
        %v5100 = vpack.c.b16 %v5037, %v5034
        %v5101 = vpack.c.b16 %v5038, %v5035
        %v5102 = vpack.c.b16 %v5039, %v5036
        %v5103 = vpack.c.b16 %v5043, %v5040
        %v5104 = vpack.c.b16 %v5044, %v5041
        %v5105 = vpack.c.b16 %v5045, %v5042
        %v5106 = vpack.c.b16 %v5049, %v5046
        %v5107 = vpack.c.b16 %v5050, %v5047
        %v5108 = vpack.c.b16 %v5051, %v5048
        %v5109 = vpack.c.b16 %v5055, %v5052
        %v5110 = vpack.c.b16 %v5056, %v5053
        %v5111 = vpack.c.b16 %v5057, %v5054
        %v5112 = vpack.c.b16 %v5061, %v5058
        %v5113 = vpack.c.b16 %v5062, %v5059
        %v5114 = vpack.c.b16 %v5063, %v5060
        %v5115 = vpack.c.b16 %v5067, %v5064
        %v5116 = vpack.c.b16 %v5068, %v5065
        %v5117 = vpack.c.b16 %v5069, %v5066
        %v5214 = vunpack.c.l.b16 %v4082
        %v5215 = vunpack.c.l.b16 %v4083
        %v5216 = vunpack.c.l.b16 %v4084
        %v5217 = vunpack.c.l.b16 %v4085
        %v5218 = vunpack.c.l.b16 %v4086
        %v5219 = vunpack.c.l.b16 %v4087
        %v5220 = vunpack.c.l.b16 %v4088
        %v5221 = vunpack.c.l.b16 %v4089
        %v5222 = vunpack.c.l.b16 %v4090
        %v5223 = vunpack.c.l.b16 %v4091
        %v5224 = vunpack.c.l.b16 %v4092
        %v5225 = vunpack.c.l.b16 %v4093
        %v5226 = vunpack.c.l.b16 %v4094
        %v5227 = vunpack.c.l.b16 %v4095
        %v5228 = vunpack.c.l.b16 %v4096
        %v5229 = vunpack.c.l.b16 %v4097
        %v5230 = vunpack.c.l.b16 %v4098
        %v5231 = vunpack.c.l.b16 %v4099
        %v5232 = vunpack.c.l.b16 %v4100
        %v5233 = vunpack.c.l.b16 %v4101
        %v5234 = vunpack.c.l.b16 %v4102
        %v5235 = vunpack.c.l.b16 %v4103
        %v5236 = vunpack.c.l.b16 %v4104
        %v5237 = vunpack.c.l.b16 %v4105
        %v5238 = vunpack.c.l.b16 %v4106
        %v5239 = vunpack.c.l.b16 %v4107
        %v5240 = vunpack.c.l.b16 %v4108
        %v5241 = vunpack.c.l.b16 %v4109
        %v5242 = vunpack.c.l.b16 %v4110
        %v5243 = vunpack.c.l.b16 %v4111
        %v5244 = vunpack.c.l.b16 %v4112
        %v5245 = vunpack.c.l.b16 %v4113
        %v5246 = vunpack.c.l.b16 %v4114
        %v5247 = vunpack.c.l.b16 %v4115
        %v5248 = vunpack.c.l.b16 %v4116
        %v5249 = vunpack.c.l.b16 %v4117
        %v5250 = vunpack.c.l.b16 %v4118
        %v5251 = vunpack.c.l.b16 %v4119
        %v5252 = vunpack.c.l.b16 %v4120
        %v5253 = vunpack.c.l.b16 %v4121
        %v5254 = vunpack.c.l.b16 %v4122
        %v5255 = vunpack.c.l.b16 %v4123
        %v5256 = vunpack.c.l.b16 %v4124
        %v5257 = vunpack.c.l.b16 %v4125
        %v5258 = vunpack.c.l.b16 %v4126
        %v5259 = vunpack.c.l.b16 %v4127
        %v5260 = vunpack.c.l.b16 %v4128
        %v5261 = vunpack.c.l.b16 %v4129
        %v5262 = vpack.c.b16 %v5215, %v5214
        %v5263 = vpack.c.b16 %v5217, %v5216
        %v5264 = vpack.c.b16 %v5219, %v5218
        %v5265 = vpack.c.b16 %v5221, %v5220
        %v5266 = vpack.c.b16 %v5223, %v5222
        %v5267 = vpack.c.b16 %v5225, %v5224
        %v5268 = vpack.c.b16 %v5227, %v5226
        %v5269 = vpack.c.b16 %v5229, %v5228
        %v5270 = vpack.c.b16 %v5231, %v5230
        %v5271 = vpack.c.b16 %v5233, %v5232
        %v5272 = vpack.c.b16 %v5235, %v5234
        %v5273 = vpack.c.b16 %v5237, %v5236
        %v5274 = vpack.c.b16 %v5239, %v5238
        %v5275 = vpack.c.b16 %v5241, %v5240
        %v5276 = vpack.c.b16 %v5243, %v5242
        %v5277 = vpack.c.b16 %v5245, %v5244
        %v5278 = vpack.c.b16 %v5247, %v5246
        %v5279 = vpack.c.b16 %v5249, %v5248
        %v5280 = vpack.c.b16 %v5251, %v5250
        %v5281 = vpack.c.b16 %v5253, %v5252
        %v5282 = vpack.c.b16 %v5255, %v5254
        %v5283 = vpack.c.b16 %v5257, %v5256
        %v5284 = vpack.c.b16 %v5259, %v5258
        %v5285 = vpack.c.b16 %v5261, %v5260
        %5310 = vmatpush.bf16.msra.mxu0 %v5269
        %5311 = vmatpush.bf16.msra.mxu0 %v5268
        %5312 = vmatpush.bf16.msra.mxu0 %v5267
        %5313 = vmatpush.bf16.msra.mxu0 %v5266
        %5314 = vmatpush.bf16.msra.mxu0 %v5265
        %5315 = vmatpush.bf16.msra.mxu0 %v5264
        %5316 = vmatpush.bf16.msra.mxu0 %v5263
        %5317 = vmatpush.bf16.msra.mxu0 %v5262
        %5318 = vmatmul.bf16.gmra.mxu0 %v5070
        %v5319 = vpop.f32.mrf.mxu0
        %v5320 = vadd.f32 %v4831, %v5319
        %v5321 = vpop.f32.mrf.mxu0
        %v5322 = vadd.f32 %v4833, %v5321
        %5323 = vmatmul.bf16.gmra.mxu0 %v5073
        %v5324 = vpop.f32.mrf.mxu0
        %v5325 = vadd.f32 %v4836, %v5324
        %v5326 = vpop.f32.mrf.mxu0
        %v5327 = vadd.f32 %v4838, %v5326
        %5328 = vmatmul.bf16.gmra.mxu0 %v5076
        %v5329 = vpop.f32.mrf.mxu0
        %v5330 = vadd.f32 %v4841, %v5329
        %v5331 = vpop.f32.mrf.mxu0
        %v5332 = vadd.f32 %v4843, %v5331
        %5333 = vmatmul.bf16.gmra.mxu0 %v5079
        %v5334 = vpop.f32.mrf.mxu0
        %v5335 = vadd.f32 %v4846, %v5334
        %v5336 = vpop.f32.mrf.mxu0
        %v5337 = vadd.f32 %v4848, %v5336
        %5338 = vmatmul.bf16.gmra.mxu0 %v5082
        %v5339 = vpop.f32.mrf.mxu0
        %v5340 = vadd.f32 %v4851, %v5339
        %v5341 = vpop.f32.mrf.mxu0
        %v5342 = vadd.f32 %v4853, %v5341
        %5343 = vmatmul.bf16.gmra.mxu0 %v5085
        %v5344 = vpop.f32.mrf.mxu0
        %v5345 = vadd.f32 %v4856, %v5344
        %v5346 = vpop.f32.mrf.mxu0
        %v5347 = vadd.f32 %v4858, %v5346
        %5348 = vmatmul.bf16.gmra.mxu0 %v5088
        %v5349 = vpop.f32.mrf.mxu0
        %v5350 = vadd.f32 %v4861, %v5349
        %v5351 = vpop.f32.mrf.mxu0
        %v5352 = vadd.f32 %v4863, %v5351
        %5353 = vmatmul.bf16.gmra.mxu0 %v5091
        %v5354 = vpop.f32.mrf.mxu0
        %v5355 = vadd.f32 %v4866, %v5354
        %v5356 = vpop.f32.mrf.mxu0
        %v5357 = vadd.f32 %v4868, %v5356
        %5358 = vmatmul.bf16.gmra.mxu0 %v5094
        %v5359 = vpop.f32.mrf.mxu0
        %v5360 = vadd.f32 %v4871, %v5359
        %v5361 = vpop.f32.mrf.mxu0
        %v5362 = vadd.f32 %v4873, %v5361
        %5363 = vmatmul.bf16.gmra.mxu0 %v5097
        %v5364 = vpop.f32.mrf.mxu0
        %v5365 = vadd.f32 %v4876, %v5364
        %v5366 = vpop.f32.mrf.mxu0
        %v5367 = vadd.f32 %v4878, %v5366
        %5368 = vmatmul.bf16.gmra.mxu0 %v5100
        %v5369 = vpop.f32.mrf.mxu0
        %v5370 = vadd.f32 %v4881, %v5369
        %v5371 = vpop.f32.mrf.mxu0
        %v5372 = vadd.f32 %v4883, %v5371
        %5373 = vmatmul.bf16.gmra.mxu0 %v5103
        %v5374 = vpop.f32.mrf.mxu0
        %v5375 = vadd.f32 %v4886, %v5374
        %v5376 = vpop.f32.mrf.mxu0
        %v5377 = vadd.f32 %v4888, %v5376
        %5378 = vmatmul.bf16.gmra.mxu0 %v5106
        %v5379 = vpop.f32.mrf.mxu0
        %v5380 = vadd.f32 %v4891, %v5379
        %v5381 = vpop.f32.mrf.mxu0
        %v5382 = vadd.f32 %v4893, %v5381
        %5383 = vmatmul.bf16.gmra.mxu0 %v5109
        %v5384 = vpop.f32.mrf.mxu0
        %v5385 = vadd.f32 %v4896, %v5384
        %v5386 = vpop.f32.mrf.mxu0
        %v5387 = vadd.f32 %v4898, %v5386
        %5388 = vmatmul.bf16.gmra.mxu0 %v5112
        %v5389 = vpop.f32.mrf.mxu0
        %v5390 = vadd.f32 %v4901, %v5389
        %v5391 = vpop.f32.mrf.mxu0
        %v5392 = vadd.f32 %v4903, %v5391
        %5393 = vmatmul.bf16.gmra.mxu0 %v5115
        %v5394 = vpop.f32.mrf.mxu0
        %v5395 = vadd.f32 %v4906, %v5394
        %v5396 = vpop.f32.mrf.mxu0
        %v5397 = vadd.f32 %v4908, %v5396
        %5398 = vdwg.mxu0
        %5399 = vmatpush.bf16.msra.mxu0 %v5277
        %5400 = vmatpush.bf16.msra.mxu0 %v5276
        %5401 = vmatpush.bf16.msra.mxu0 %v5275
        %5402 = vmatpush.bf16.msra.mxu0 %v5274
        %5403 = vmatpush.bf16.msra.mxu0 %v5273
        %5404 = vmatpush.bf16.msra.mxu0 %v5272
        %5405 = vmatpush.bf16.msra.mxu0 %v5271
        %5406 = vmatpush.bf16.msra.mxu0 %v5270
        %5407 = vmatmul.bf16.gmra.mxu0 %v5071
        %v5408 = vpop.f32.mrf.mxu0
        %v5409 = vadd.f32 %v5320, %v5408
        %v5410 = vpop.f32.mrf.mxu0
        %v5411 = vadd.f32 %v5322, %v5410
        %5412 = vmatmul.bf16.gmra.mxu0 %v5074
        %v5413 = vpop.f32.mrf.mxu0
        %v5414 = vadd.f32 %v5325, %v5413
        %v5415 = vpop.f32.mrf.mxu0
        %v5416 = vadd.f32 %v5327, %v5415
        %5417 = vmatmul.bf16.gmra.mxu0 %v5077
        %v5418 = vpop.f32.mrf.mxu0
        %v5419 = vadd.f32 %v5330, %v5418
        %v5420 = vpop.f32.mrf.mxu0
        %v5421 = vadd.f32 %v5332, %v5420
        %5422 = vmatmul.bf16.gmra.mxu0 %v5080
        %v5423 = vpop.f32.mrf.mxu0
        %v5424 = vadd.f32 %v5335, %v5423
        %v5425 = vpop.f32.mrf.mxu0
        %v5426 = vadd.f32 %v5337, %v5425
        %5427 = vmatmul.bf16.gmra.mxu0 %v5083
        %v5428 = vpop.f32.mrf.mxu0
        %v5429 = vadd.f32 %v5340, %v5428
        %v5430 = vpop.f32.mrf.mxu0
        %v5431 = vadd.f32 %v5342, %v5430
        %5432 = vmatmul.bf16.gmra.mxu0 %v5086
        %v5433 = vpop.f32.mrf.mxu0
        %v5434 = vadd.f32 %v5345, %v5433
        %v5435 = vpop.f32.mrf.mxu0
        %v5436 = vadd.f32 %v5347, %v5435
        %5437 = vmatmul.bf16.gmra.mxu0 %v5089
        %v5438 = vpop.f32.mrf.mxu0
        %v5439 = vadd.f32 %v5350, %v5438
        %v5440 = vpop.f32.mrf.mxu0
        %v5441 = vadd.f32 %v5352, %v5440
        %5442 = vmatmul.bf16.gmra.mxu0 %v5092
        %v5443 = vpop.f32.mrf.mxu0
        %v5444 = vadd.f32 %v5355, %v5443
        %v5445 = vpop.f32.mrf.mxu0
        %v5446 = vadd.f32 %v5357, %v5445
        %5447 = vmatmul.bf16.gmra.mxu0 %v5095
        %v5448 = vpop.f32.mrf.mxu0
        %v5449 = vadd.f32 %v5360, %v5448
        %v5450 = vpop.f32.mrf.mxu0
        %v5451 = vadd.f32 %v5362, %v5450
        %5452 = vmatmul.bf16.gmra.mxu0 %v5098
        %v5453 = vpop.f32.mrf.mxu0
        %v5454 = vadd.f32 %v5365, %v5453
        %v5455 = vpop.f32.mrf.mxu0
        %v5456 = vadd.f32 %v5367, %v5455
        %5457 = vmatmul.bf16.gmra.mxu0 %v5101
        %v5458 = vpop.f32.mrf.mxu0
        %v5459 = vadd.f32 %v5370, %v5458
        %v5460 = vpop.f32.mrf.mxu0
        %v5461 = vadd.f32 %v5372, %v5460
        %5462 = vmatmul.bf16.gmra.mxu0 %v5104
        %v5463 = vpop.f32.mrf.mxu0
        %v5464 = vadd.f32 %v5375, %v5463
        %v5465 = vpop.f32.mrf.mxu0
        %v5466 = vadd.f32 %v5377, %v5465
        %5467 = vmatmul.bf16.gmra.mxu0 %v5107
        %v5468 = vpop.f32.mrf.mxu0
        %v5469 = vadd.f32 %v5380, %v5468
        %v5470 = vpop.f32.mrf.mxu0
        %v5471 = vadd.f32 %v5382, %v5470
        %5472 = vmatmul.bf16.gmra.mxu0 %v5110
        %v5473 = vpop.f32.mrf.mxu0
        %v5474 = vadd.f32 %v5385, %v5473
        %v5475 = vpop.f32.mrf.mxu0
        %v5476 = vadd.f32 %v5387, %v5475
        %5477 = vmatmul.bf16.gmra.mxu0 %v5113
        %v5478 = vpop.f32.mrf.mxu0
        %v5479 = vadd.f32 %v5390, %v5478
        %v5480 = vpop.f32.mrf.mxu0
        %v5481 = vadd.f32 %v5392, %v5480
        %5482 = vmatmul.bf16.gmra.mxu0 %v5116
        %v5483 = vpop.f32.mrf.mxu0
        %v5484 = vadd.f32 %v5395, %v5483
        %v5485 = vpop.f32.mrf.mxu0
        %v5486 = vadd.f32 %v5397, %v5485
        %5487 = vdwg.mxu0
        %5488 = vmatpush.bf16.msra.mxu0 %v5285
        %5489 = vmatpush.bf16.msra.mxu0 %v5284
        %5490 = vmatpush.bf16.msra.mxu0 %v5283
        %5491 = vmatpush.bf16.msra.mxu0 %v5282
        %5492 = vmatpush.bf16.msra.mxu0 %v5281
        %5493 = vmatpush.bf16.msra.mxu0 %v5280
        %5494 = vmatpush.bf16.msra.mxu0 %v5279
        %5495 = vmatpush.bf16.msra.mxu0 %v5278
        %5496 = vmatmul.bf16.gmra.mxu0 %v5072
        %v5497 = vpop.f32.mrf.mxu0
        %v5498 = vadd.f32 %v5409, %v5497
        %v5499 = vpop.f32.mrf.mxu0
        %v5500 = vadd.f32 %v5411, %v5499
        %5501 = vmatmul.bf16.gmra.mxu0 %v5075
        %v5502 = vpop.f32.mrf.mxu0
        %v5503 = vadd.f32 %v5414, %v5502
        %v5504 = vpop.f32.mrf.mxu0
        %v5505 = vadd.f32 %v5416, %v5504
        %5506 = vmatmul.bf16.gmra.mxu0 %v5078
        %v5507 = vpop.f32.mrf.mxu0
        %v5508 = vadd.f32 %v5419, %v5507
        %v5509 = vpop.f32.mrf.mxu0
        %v5510 = vadd.f32 %v5421, %v5509
        %5511 = vmatmul.bf16.gmra.mxu0 %v5081
        %v5512 = vpop.f32.mrf.mxu0
        %v5513 = vadd.f32 %v5424, %v5512
        %v5514 = vpop.f32.mrf.mxu0
        %v5515 = vadd.f32 %v5426, %v5514
        %5516 = vmatmul.bf16.gmra.mxu0 %v5084
        %v5517 = vpop.f32.mrf.mxu0
        %v5518 = vadd.f32 %v5429, %v5517
        %v5519 = vpop.f32.mrf.mxu0
        %v5520 = vadd.f32 %v5431, %v5519
        %5521 = vmatmul.bf16.gmra.mxu0 %v5087
        %v5522 = vpop.f32.mrf.mxu0
        %v5523 = vadd.f32 %v5434, %v5522
        %v5524 = vpop.f32.mrf.mxu0
        %v5525 = vadd.f32 %v5436, %v5524
        %5526 = vmatmul.bf16.gmra.mxu0 %v5090
        %v5527 = vpop.f32.mrf.mxu0
        %v5528 = vadd.f32 %v5439, %v5527
        %v5529 = vpop.f32.mrf.mxu0
        %v5530 = vadd.f32 %v5441, %v5529
        %5531 = vmatmul.bf16.gmra.mxu0 %v5093
        %v5532 = vpop.f32.mrf.mxu0
        %v5533 = vadd.f32 %v5444, %v5532
        %v5534 = vpop.f32.mrf.mxu0
        %v5535 = vadd.f32 %v5446, %v5534
        %5536 = vmatmul.bf16.gmra.mxu0 %v5096
        %v5537 = vpop.f32.mrf.mxu0
        %v5538 = vadd.f32 %v5449, %v5537
        %v5539 = vpop.f32.mrf.mxu0
        %v5540 = vadd.f32 %v5451, %v5539
        %5541 = vmatmul.bf16.gmra.mxu0 %v5099
        %v5542 = vpop.f32.mrf.mxu0
        %v5543 = vadd.f32 %v5454, %v5542
        %v5544 = vpop.f32.mrf.mxu0
        %v5545 = vadd.f32 %v5456, %v5544
        %5546 = vmatmul.bf16.gmra.mxu0 %v5102
        %v5547 = vpop.f32.mrf.mxu0
        %v5548 = vadd.f32 %v5459, %v5547
        %v5549 = vpop.f32.mrf.mxu0
        %v5550 = vadd.f32 %v5461, %v5549
        %5551 = vmatmul.bf16.gmra.mxu0 %v5105
        %v5552 = vpop.f32.mrf.mxu0
        %v5553 = vadd.f32 %v5464, %v5552
        %v5554 = vpop.f32.mrf.mxu0
        %v5555 = vadd.f32 %v5466, %v5554
        %5556 = vmatmul.bf16.gmra.mxu0 %v5108
        %v5557 = vpop.f32.mrf.mxu0
        %v5558 = vadd.f32 %v5469, %v5557
        %v5559 = vpop.f32.mrf.mxu0
        %v5560 = vadd.f32 %v5471, %v5559
        %5561 = vmatmul.bf16.gmra.mxu0 %v5111
        %v5562 = vpop.f32.mrf.mxu0
        %v5563 = vadd.f32 %v5474, %v5562
        %v5564 = vpop.f32.mrf.mxu0
        %v5565 = vadd.f32 %v5476, %v5564
        %5566 = vmatmul.bf16.gmra.mxu0 %v5114
        %v5567 = vpop.f32.mrf.mxu0
        %v5568 = vadd.f32 %v5479, %v5567
        %v5569 = vpop.f32.mrf.mxu0
        %v5570 = vadd.f32 %v5481, %v5569
        %5571 = vmatmul.bf16.gmra.mxu0 %v5117
        %v5572 = vpop.f32.mrf.mxu0
        %v5573 = vadd.f32 %v5484, %v5572
        %v5574 = vpop.f32.mrf.mxu0
        %v5575 = vadd.f32 %v5486, %v5574
        %5576 = vdwg.mxu0
        %v5577 = vld [vmem:[%s2497] sm:$0xff]
        %v5578 = vld [vmem:[%s2497 + $0x8] sm:$0xf]
        %v5579 = vld [vmem:[%s2497 + $0xc] sm:$0xff]
        %v5580 = vld [vmem:[%s2497 + $0x14] sm:$0xf]
        %v5581 = vld [vmem:[%s2497 + $0x18] sm:$0xff]
        %v5582 = vld [vmem:[%s2497 + $0x20] sm:$0xf]
        %v5583 = vld [vmem:[%s2497 + $0x24] sm:$0xff]
        %v5584 = vld [vmem:[%s2497 + $0x2c] sm:$0xf]
        %v5585 = vld [vmem:[%s2497 + $0x30] sm:$0xff]
        %v5586 = vld [vmem:[%s2497 + $0x38] sm:$0xf]
        %v5587 = vld [vmem:[%s2497 + $0x3c] sm:$0xff]
        %v5588 = vld [vmem:[%s2497 + $0x44] sm:$0xf]
        %v5589 = vld [vmem:[%s2497 + $0x48] sm:$0xff]
        %v5590 = vld [vmem:[%s2497 + $0x50] sm:$0xf]
        %v5591 = vld [vmem:[%s2497 + $0x54] sm:$0xff]
        %v5592 = vld [vmem:[%s2497 + $0x5c] sm:$0xf]
        %v5593 = vld [vmem:[%s2497 + $0x60] sm:$0xff]
        %v5594 = vld [vmem:[%s2497 + $0x68] sm:$0xf]
        %v5595 = vld [vmem:[%s2497 + $0x6c] sm:$0xff]
        %v5596 = vld [vmem:[%s2497 + $0x74] sm:$0xf]
        %v5597 = vld [vmem:[%s2497 + $0x78] sm:$0xff]
        %v5598 = vld [vmem:[%s2497 + $0x80] sm:$0xf]
        %v5599 = vld [vmem:[%s2497 + $0x84] sm:$0xff]
        %v5600 = vld [vmem:[%s2497 + $0x8c] sm:$0xf]
        %v5601 = vld [vmem:[%s2497 + $0x90] sm:$0xff]
        %v5602 = vld [vmem:[%s2497 + $0x98] sm:$0xf]
        %v5603 = vld [vmem:[%s2497 + $0x9c] sm:$0xff]
        %v5604 = vld [vmem:[%s2497 + $0xa4] sm:$0xf]
        %v5605 = vld [vmem:[%s2497 + $0xa8] sm:$0xff]
        %v5606 = vld [vmem:[%s2497 + $0xb0] sm:$0xf]
        %v5607 = vld [vmem:[%s2497 + $0xb4] sm:$0xff]
        %v5608 = vld [vmem:[%s2497 + $0xbc] sm:$0xf]
        %v5609 = vld [vmem:[%s2497 + $0xc0] sm:$0xff]
        %v5610 = vld [vmem:[%s2497 + $0xc8] sm:$0xf]
        %v5611 = vld [vmem:[%s2497 + $0xcc] sm:$0xff]
        %v5612 = vld [vmem:[%s2497 + $0xd4] sm:$0xf]
        %v5613 = vld [vmem:[%s2497 + $0xd8] sm:$0xff]
        %v5614 = vld [vmem:[%s2497 + $0xe0] sm:$0xf]
        %v5615 = vld [vmem:[%s2497 + $0xe4] sm:$0xff]
        %v5616 = vld [vmem:[%s2497 + $0xec] sm:$0xf]
        %v5617 = vld [vmem:[%s2497 + $0xf0] sm:$0xff]
        %v5618 = vld [vmem:[%s2497 + $0xf8] sm:$0xf]
        %v5619 = vld [vmem:[%s2497 + $0xfc] sm:$0xff]
        %v5620 = vld [vmem:[%s2497 + $0x104] sm:$0xf]
        %v5621 = vld [vmem:[%s2497 + $0x108] sm:$0xff]
        %v5622 = vld [vmem:[%s2497 + $0x110] sm:$0xf]
        %v5623 = vld [vmem:[%s2497 + $0x114] sm:$0xff]
        %v5624 = vld [vmem:[%s2497 + $0x11c] sm:$0xf]
        %v5625 = vld [vmem:[%s2497 + $0x120] sm:$0xff]
        %v5626 = vld [vmem:[%s2497 + $0x128] sm:$0xf]
        %v5627 = vld [vmem:[%s2497 + $0x12c] sm:$0xff]
        %v5628 = vld [vmem:[%s2497 + $0x134] sm:$0xf]
        %v5629 = vld [vmem:[%s2497 + $0x138] sm:$0xff]
        %v5630 = vld [vmem:[%s2497 + $0x140] sm:$0xf]
        %v5631 = vld [vmem:[%s2497 + $0x144] sm:$0xff]
        %v5632 = vld [vmem:[%s2497 + $0x14c] sm:$0xf]
        %v5633 = vld [vmem:[%s2497 + $0x150] sm:$0xff]
        %v5634 = vld [vmem:[%s2497 + $0x158] sm:$0xf]
        %v5635 = vld [vmem:[%s2497 + $0x15c] sm:$0xff]
        %v5636 = vld [vmem:[%s2497 + $0x164] sm:$0xf]
        %v5637 = vld [vmem:[%s2497 + $0x168] sm:$0xff]
        %v5638 = vld [vmem:[%s2497 + $0x170] sm:$0xf]
        %v5639 = vld [vmem:[%s2497 + $0x174] sm:$0xff]
        %v5640 = vld [vmem:[%s2497 + $0x17c] sm:$0xf]
        %s5641 = scalar_lea.vmem [#allocation8], 384
        %v5642 = vld [vmem:[%s5641] sm:$0xf]
        %v5643 = vld [vmem:[%s5641 + $0x4] sm:$0xf]
        %v5644 = vld [vmem:[%s5641 + $0x8] sm:$0xf]
        %v5645 = vld [vmem:[%s5641 + $0xc] sm:$0xf]
        %v5646 = vld [vmem:[%s5641 + $0x10] sm:$0xf]
        %v5647 = vld [vmem:[%s5641 + $0x14] sm:$0xf]
        %v5648 = vld [vmem:[%s5641 + $0x18] sm:$0xf]
        %v5649 = vld [vmem:[%s5641 + $0x1c] sm:$0xf]
        %v5650 = vld [vmem:[%s5641 + $0x20] sm:$0xf]
        %v5651 = vld [vmem:[%s5641 + $0x24] sm:$0xf]
        %v5652 = vld [vmem:[%s5641 + $0x28] sm:$0xf]
        %v5653 = vld [vmem:[%s5641 + $0x2c] sm:$0xf]
        %v5654 = vld [vmem:[%s5641 + $0x30] sm:$0xf]
        %v5655 = vld [vmem:[%s5641 + $0x34] sm:$0xf]
        %v5656 = vld [vmem:[%s5641 + $0x38] sm:$0xf]
        %v5657 = vld [vmem:[%s5641 + $0x3c] sm:$0xf]
        %v5658 = vld [vmem:[%s5641 + $0x40] sm:$0xf]
        %v5659 = vld [vmem:[%s5641 + $0x44] sm:$0xf]
        %v5660 = vld [vmem:[%s5641 + $0x48] sm:$0xf]
        %v5661 = vld [vmem:[%s5641 + $0x4c] sm:$0xf]
        %v5662 = vld [vmem:[%s5641 + $0x50] sm:$0xf]
        %v5663 = vld [vmem:[%s5641 + $0x54] sm:$0xf]
        %v5664 = vld [vmem:[%s5641 + $0x58] sm:$0xf]
        %v5665 = vld [vmem:[%s5641 + $0x5c] sm:$0xf]
        %v5666 = vld [vmem:[%s5641 + $0x60] sm:$0xf]
        %v5667 = vld [vmem:[%s5641 + $0x64] sm:$0xf]
        %v5668 = vld [vmem:[%s5641 + $0x68] sm:$0xf]
        %v5669 = vld [vmem:[%s5641 + $0x6c] sm:$0xf]
        %v5670 = vld [vmem:[%s5641 + $0x70] sm:$0xf]
        %v5671 = vld [vmem:[%s5641 + $0x74] sm:$0xf]
        %v5672 = vld [vmem:[%s5641 + $0x78] sm:$0xf]
        %v5673 = vld [vmem:[%s5641 + $0x7c] sm:$0xf]
        %v5674 = vld [vmem:[%s5641 + $0x80] sm:$0xf]
        %v5675 = vld [vmem:[%s5641 + $0x84] sm:$0xf]
        %v5676 = vld [vmem:[%s5641 + $0x88] sm:$0xf]
        %v5677 = vld [vmem:[%s5641 + $0x8c] sm:$0xf]
        %v5678 = vld [vmem:[%s5641 + $0x90] sm:$0xf]
        %v5679 = vld [vmem:[%s5641 + $0x94] sm:$0xf]
        %v5680 = vld [vmem:[%s5641 + $0x98] sm:$0xf]
        %v5681 = vld [vmem:[%s5641 + $0x9c] sm:$0xf]
        %v5682 = vld [vmem:[%s5641 + $0xa0] sm:$0xf]
        %v5683 = vld [vmem:[%s5641 + $0xa4] sm:$0xf]
        %v5684 = vld [vmem:[%s5641 + $0xa8] sm:$0xf]
        %v5685 = vld [vmem:[%s5641 + $0xac] sm:$0xf]
        %v5686 = vld [vmem:[%s5641 + $0xb0] sm:$0xf]
        %v5687 = vld [vmem:[%s5641 + $0xb4] sm:$0xf]
        %v5688 = vld [vmem:[%s5641 + $0xb8] sm:$0xf]
        %v5689 = vld [vmem:[%s5641 + $0xbc] sm:$0xf]
        %v5754 = vunpack.c.l.b16 %v5577
        %v5755 = vunpack.c.h.b16 %v5577
        %v5756 = vunpack.c.l.b16 %v5578
        %v5757 = vunpack.c.l.b16 %v5579
        %v5758 = vunpack.c.h.b16 %v5579
        %v5759 = vunpack.c.l.b16 %v5580
        %v5760 = vunpack.c.l.b16 %v5581
        %v5761 = vunpack.c.h.b16 %v5581
        %v5762 = vunpack.c.l.b16 %v5582
        %v5763 = vunpack.c.l.b16 %v5583
        %v5764 = vunpack.c.h.b16 %v5583
        %v5765 = vunpack.c.l.b16 %v5584
        %v5766 = vunpack.c.l.b16 %v5585
        %v5767 = vunpack.c.h.b16 %v5585
        %v5768 = vunpack.c.l.b16 %v5586
        %v5769 = vunpack.c.l.b16 %v5587
        %v5770 = vunpack.c.h.b16 %v5587
        %v5771 = vunpack.c.l.b16 %v5588
        %v5772 = vunpack.c.l.b16 %v5589
        %v5773 = vunpack.c.h.b16 %v5589
        %v5774 = vunpack.c.l.b16 %v5590
        %v5775 = vunpack.c.l.b16 %v5591
        %v5776 = vunpack.c.h.b16 %v5591
        %v5777 = vunpack.c.l.b16 %v5592
        %v5778 = vunpack.c.l.b16 %v5593
        %v5779 = vunpack.c.h.b16 %v5593
        %v5780 = vunpack.c.l.b16 %v5594
        %v5781 = vunpack.c.l.b16 %v5595
        %v5782 = vunpack.c.h.b16 %v5595
        %v5783 = vunpack.c.l.b16 %v5596
        %v5784 = vunpack.c.l.b16 %v5597
        %v5785 = vunpack.c.h.b16 %v5597
        %v5786 = vunpack.c.l.b16 %v5598
        %v5787 = vunpack.c.l.b16 %v5599
        %v5788 = vunpack.c.h.b16 %v5599
        %v5789 = vunpack.c.l.b16 %v5600
        %v5790 = vunpack.c.l.b16 %v5601
        %v5791 = vunpack.c.h.b16 %v5601
        %v5792 = vunpack.c.l.b16 %v5602
        %v5793 = vunpack.c.l.b16 %v5603
        %v5794 = vunpack.c.h.b16 %v5603
        %v5795 = vunpack.c.l.b16 %v5604
        %v5796 = vunpack.c.l.b16 %v5605
        %v5797 = vunpack.c.h.b16 %v5605
        %v5798 = vunpack.c.l.b16 %v5606
        %v5799 = vunpack.c.l.b16 %v5607
        %v5800 = vunpack.c.h.b16 %v5607
        %v5801 = vunpack.c.l.b16 %v5608
        %v5802 = vunpack.c.l.b16 %v5609
        %v5803 = vunpack.c.h.b16 %v5609
        %v5804 = vunpack.c.l.b16 %v5610
        %v5805 = vunpack.c.l.b16 %v5611
        %v5806 = vunpack.c.h.b16 %v5611
        %v5807 = vunpack.c.l.b16 %v5612
        %v5808 = vunpack.c.l.b16 %v5613
        %v5809 = vunpack.c.h.b16 %v5613
        %v5810 = vunpack.c.l.b16 %v5614
        %v5811 = vunpack.c.l.b16 %v5615
        %v5812 = vunpack.c.h.b16 %v5615
        %v5813 = vunpack.c.l.b16 %v5616
        %v5814 = vunpack.c.l.b16 %v5617
        %v5815 = vunpack.c.h.b16 %v5617
        %v5816 = vunpack.c.l.b16 %v5618
        %v5817 = vunpack.c.l.b16 %v5619
        %v5818 = vunpack.c.h.b16 %v5619
        %v5819 = vunpack.c.l.b16 %v5620
        %v5820 = vunpack.c.l.b16 %v5621
        %v5821 = vunpack.c.h.b16 %v5621
        %v5822 = vunpack.c.l.b16 %v5622
        %v5823 = vunpack.c.l.b16 %v5623
        %v5824 = vunpack.c.h.b16 %v5623
        %v5825 = vunpack.c.l.b16 %v5624
        %v5826 = vunpack.c.l.b16 %v5625
        %v5827 = vunpack.c.h.b16 %v5625
        %v5828 = vunpack.c.l.b16 %v5626
        %v5829 = vunpack.c.l.b16 %v5627
        %v5830 = vunpack.c.h.b16 %v5627
        %v5831 = vunpack.c.l.b16 %v5628
        %v5832 = vunpack.c.l.b16 %v5629
        %v5833 = vunpack.c.h.b16 %v5629
        %v5834 = vunpack.c.l.b16 %v5630
        %v5835 = vunpack.c.l.b16 %v5631
        %v5836 = vunpack.c.h.b16 %v5631
        %v5837 = vunpack.c.l.b16 %v5632
        %v5838 = vunpack.c.l.b16 %v5633
        %v5839 = vunpack.c.h.b16 %v5633
        %v5840 = vunpack.c.l.b16 %v5634
        %v5841 = vunpack.c.l.b16 %v5635
        %v5842 = vunpack.c.h.b16 %v5635
        %v5843 = vunpack.c.l.b16 %v5636
        %v5844 = vunpack.c.l.b16 %v5637
        %v5845 = vunpack.c.h.b16 %v5637
        %v5846 = vunpack.c.l.b16 %v5638
        %v5847 = vunpack.c.l.b16 %v5639
        %v5848 = vunpack.c.h.b16 %v5639
        %v5849 = vunpack.c.l.b16 %v5640
        %v5850 = vpack.c.b16 %v5757, %v5754
        %v5851 = vpack.c.b16 %v5758, %v5755
        %v5852 = vpack.c.b16 %v5759, %v5756
        %v5853 = vpack.c.b16 %v5763, %v5760
        %v5854 = vpack.c.b16 %v5764, %v5761
        %v5855 = vpack.c.b16 %v5765, %v5762
        %v5856 = vpack.c.b16 %v5769, %v5766
        %v5857 = vpack.c.b16 %v5770, %v5767
        %v5858 = vpack.c.b16 %v5771, %v5768
        %v5859 = vpack.c.b16 %v5775, %v5772
        %v5860 = vpack.c.b16 %v5776, %v5773
        %v5861 = vpack.c.b16 %v5777, %v5774
        %v5862 = vpack.c.b16 %v5781, %v5778
        %v5863 = vpack.c.b16 %v5782, %v5779
        %v5864 = vpack.c.b16 %v5783, %v5780
        %v5865 = vpack.c.b16 %v5787, %v5784
        %v5866 = vpack.c.b16 %v5788, %v5785
        %v5867 = vpack.c.b16 %v5789, %v5786
        %v5868 = vpack.c.b16 %v5793, %v5790
        %v5869 = vpack.c.b16 %v5794, %v5791
        %v5870 = vpack.c.b16 %v5795, %v5792
        %v5871 = vpack.c.b16 %v5799, %v5796
        %v5872 = vpack.c.b16 %v5800, %v5797
        %v5873 = vpack.c.b16 %v5801, %v5798
        %v5874 = vpack.c.b16 %v5805, %v5802
        %v5875 = vpack.c.b16 %v5806, %v5803
        %v5876 = vpack.c.b16 %v5807, %v5804
        %v5877 = vpack.c.b16 %v5811, %v5808
        %v5878 = vpack.c.b16 %v5812, %v5809
        %v5879 = vpack.c.b16 %v5813, %v5810
        %v5880 = vpack.c.b16 %v5817, %v5814
        %v5881 = vpack.c.b16 %v5818, %v5815
        %v5882 = vpack.c.b16 %v5819, %v5816
        %v5883 = vpack.c.b16 %v5823, %v5820
        %v5884 = vpack.c.b16 %v5824, %v5821
        %v5885 = vpack.c.b16 %v5825, %v5822
        %v5886 = vpack.c.b16 %v5829, %v5826
        %v5887 = vpack.c.b16 %v5830, %v5827
        %v5888 = vpack.c.b16 %v5831, %v5828
        %v5889 = vpack.c.b16 %v5835, %v5832
        %v5890 = vpack.c.b16 %v5836, %v5833
        %v5891 = vpack.c.b16 %v5837, %v5834
        %v5892 = vpack.c.b16 %v5841, %v5838
        %v5893 = vpack.c.b16 %v5842, %v5839
        %v5894 = vpack.c.b16 %v5843, %v5840
        %v5895 = vpack.c.b16 %v5847, %v5844
        %v5896 = vpack.c.b16 %v5848, %v5845
        %v5897 = vpack.c.b16 %v5849, %v5846
        %v5994 = vunpack.c.l.b16 %v5642
        %v5995 = vunpack.c.l.b16 %v5643
        %v5996 = vunpack.c.l.b16 %v5644
        %v5997 = vunpack.c.l.b16 %v5645
        %v5998 = vunpack.c.l.b16 %v5646
        %v5999 = vunpack.c.l.b16 %v5647
        %v6000 = vunpack.c.l.b16 %v5648
        %v6001 = vunpack.c.l.b16 %v5649
        %v6002 = vunpack.c.l.b16 %v5650
        %v6003 = vunpack.c.l.b16 %v5651
        %v6004 = vunpack.c.l.b16 %v5652
        %v6005 = vunpack.c.l.b16 %v5653
        %v6006 = vunpack.c.l.b16 %v5654
        %v6007 = vunpack.c.l.b16 %v5655
        %v6008 = vunpack.c.l.b16 %v5656
        %v6009 = vunpack.c.l.b16 %v5657
        %v6010 = vunpack.c.l.b16 %v5658
        %v6011 = vunpack.c.l.b16 %v5659
        %v6012 = vunpack.c.l.b16 %v5660
        %v6013 = vunpack.c.l.b16 %v5661
        %v6014 = vunpack.c.l.b16 %v5662
        %v6015 = vunpack.c.l.b16 %v5663
        %v6016 = vunpack.c.l.b16 %v5664
        %v6017 = vunpack.c.l.b16 %v5665
        %v6018 = vunpack.c.l.b16 %v5666
        %v6019 = vunpack.c.l.b16 %v5667
        %v6020 = vunpack.c.l.b16 %v5668
        %v6021 = vunpack.c.l.b16 %v5669
        %v6022 = vunpack.c.l.b16 %v5670
        %v6023 = vunpack.c.l.b16 %v5671
        %v6024 = vunpack.c.l.b16 %v5672
        %v6025 = vunpack.c.l.b16 %v5673
        %v6026 = vunpack.c.l.b16 %v5674
        %v6027 = vunpack.c.l.b16 %v5675
        %v6028 = vunpack.c.l.b16 %v5676
        %v6029 = vunpack.c.l.b16 %v5677
        %v6030 = vunpack.c.l.b16 %v5678
        %v6031 = vunpack.c.l.b16 %v5679
        %v6032 = vunpack.c.l.b16 %v5680
        %v6033 = vunpack.c.l.b16 %v5681
        %v6034 = vunpack.c.l.b16 %v5682
        %v6035 = vunpack.c.l.b16 %v5683
        %v6036 = vunpack.c.l.b16 %v5684
        %v6037 = vunpack.c.l.b16 %v5685
        %v6038 = vunpack.c.l.b16 %v5686
        %v6039 = vunpack.c.l.b16 %v5687
        %v6040 = vunpack.c.l.b16 %v5688
        %v6041 = vunpack.c.l.b16 %v5689
        %v6042 = vpack.c.b16 %v5995, %v5994
        %v6043 = vpack.c.b16 %v5997, %v5996
        %v6044 = vpack.c.b16 %v5999, %v5998
        %v6045 = vpack.c.b16 %v6001, %v6000
        %v6046 = vpack.c.b16 %v6003, %v6002
        %v6047 = vpack.c.b16 %v6005, %v6004
        %v6048 = vpack.c.b16 %v6007, %v6006
        %v6049 = vpack.c.b16 %v6009, %v6008
        %v6050 = vpack.c.b16 %v6011, %v6010
        %v6051 = vpack.c.b16 %v6013, %v6012
        %v6052 = vpack.c.b16 %v6015, %v6014
        %v6053 = vpack.c.b16 %v6017, %v6016
        %v6054 = vpack.c.b16 %v6019, %v6018
        %v6055 = vpack.c.b16 %v6021, %v6020
        %v6056 = vpack.c.b16 %v6023, %v6022
        %v6057 = vpack.c.b16 %v6025, %v6024
        %v6058 = vpack.c.b16 %v6027, %v6026
        %v6059 = vpack.c.b16 %v6029, %v6028
        %v6060 = vpack.c.b16 %v6031, %v6030
        %v6061 = vpack.c.b16 %v6033, %v6032
        %v6062 = vpack.c.b16 %v6035, %v6034
        %v6063 = vpack.c.b16 %v6037, %v6036
        %v6064 = vpack.c.b16 %v6039, %v6038
        %v6065 = vpack.c.b16 %v6041, %v6040
        %6090 = vmatpush.bf16.msra.mxu0 %v6049
        %6091 = vmatpush.bf16.msra.mxu0 %v6048
        %6092 = vmatpush.bf16.msra.mxu0 %v6047
        %6093 = vmatpush.bf16.msra.mxu0 %v6046
        %6094 = vmatpush.bf16.msra.mxu0 %v6045
        %6095 = vmatpush.bf16.msra.mxu0 %v6044
        %6096 = vmatpush.bf16.msra.mxu0 %v6043
        %6097 = vmatpush.bf16.msra.mxu0 %v6042
        %6098 = vmatmul.bf16.gmra.mxu0 %v5850
        %v6099 = vpop.f32.mrf.mxu0
        %v6100 = vadd.f32 0.0, %v6099
        %v6101 = vpop.f32.mrf.mxu0
        %v6102 = vadd.f32 0.0, %v6101
        %6103 = vmatmul.bf16.gmra.mxu0 %v5853
        %v6104 = vpop.f32.mrf.mxu0
        %v6105 = vadd.f32 0.0, %v6104
        %v6106 = vpop.f32.mrf.mxu0
        %v6107 = vadd.f32 0.0, %v6106
        %6108 = vmatmul.bf16.gmra.mxu0 %v5856
        %v6109 = vpop.f32.mrf.mxu0
        %v6110 = vadd.f32 0.0, %v6109
        %v6111 = vpop.f32.mrf.mxu0
        %v6112 = vadd.f32 0.0, %v6111
        %6113 = vmatmul.bf16.gmra.mxu0 %v5859
        %v6114 = vpop.f32.mrf.mxu0
        %v6115 = vadd.f32 0.0, %v6114
        %v6116 = vpop.f32.mrf.mxu0
        %v6117 = vadd.f32 0.0, %v6116
        %6118 = vmatmul.bf16.gmra.mxu0 %v5862
        %v6119 = vpop.f32.mrf.mxu0
        %v6120 = vadd.f32 0.0, %v6119
        %v6121 = vpop.f32.mrf.mxu0
        %v6122 = vadd.f32 0.0, %v6121
        %6123 = vmatmul.bf16.gmra.mxu0 %v5865
        %v6124 = vpop.f32.mrf.mxu0
        %v6125 = vadd.f32 0.0, %v6124
        %v6126 = vpop.f32.mrf.mxu0
        %v6127 = vadd.f32 0.0, %v6126
        %6128 = vmatmul.bf16.gmra.mxu0 %v5868
        %v6129 = vpop.f32.mrf.mxu0
        %v6130 = vadd.f32 0.0, %v6129
        %v6131 = vpop.f32.mrf.mxu0
        %v6132 = vadd.f32 0.0, %v6131
        %6133 = vmatmul.bf16.gmra.mxu0 %v5871
        %v6134 = vpop.f32.mrf.mxu0
        %v6135 = vadd.f32 0.0, %v6134
        %v6136 = vpop.f32.mrf.mxu0
        %v6137 = vadd.f32 0.0, %v6136
        %6138 = vmatmul.bf16.gmra.mxu0 %v5874
        %v6139 = vpop.f32.mrf.mxu0
        %v6140 = vadd.f32 0.0, %v6139
        %v6141 = vpop.f32.mrf.mxu0
        %v6142 = vadd.f32 0.0, %v6141
        %6143 = vmatmul.bf16.gmra.mxu0 %v5877
        %v6144 = vpop.f32.mrf.mxu0
        %v6145 = vadd.f32 0.0, %v6144
        %v6146 = vpop.f32.mrf.mxu0
        %v6147 = vadd.f32 0.0, %v6146
        %6148 = vmatmul.bf16.gmra.mxu0 %v5880
        %v6149 = vpop.f32.mrf.mxu0
        %v6150 = vadd.f32 0.0, %v6149
        %v6151 = vpop.f32.mrf.mxu0
        %v6152 = vadd.f32 0.0, %v6151
        %6153 = vmatmul.bf16.gmra.mxu0 %v5883
        %v6154 = vpop.f32.mrf.mxu0
        %v6155 = vadd.f32 0.0, %v6154
        %v6156 = vpop.f32.mrf.mxu0
        %v6157 = vadd.f32 0.0, %v6156
        %6158 = vmatmul.bf16.gmra.mxu0 %v5886
        %v6159 = vpop.f32.mrf.mxu0
        %v6160 = vadd.f32 0.0, %v6159
        %v6161 = vpop.f32.mrf.mxu0
        %v6162 = vadd.f32 0.0, %v6161
        %6163 = vmatmul.bf16.gmra.mxu0 %v5889
        %v6164 = vpop.f32.mrf.mxu0
        %v6165 = vadd.f32 0.0, %v6164
        %v6166 = vpop.f32.mrf.mxu0
        %v6167 = vadd.f32 0.0, %v6166
        %6168 = vmatmul.bf16.gmra.mxu0 %v5892
        %v6169 = vpop.f32.mrf.mxu0
        %v6170 = vadd.f32 0.0, %v6169
        %v6171 = vpop.f32.mrf.mxu0
        %v6172 = vadd.f32 0.0, %v6171
        %6173 = vmatmul.bf16.gmra.mxu0 %v5895
        %v6174 = vpop.f32.mrf.mxu0
        %v6175 = vadd.f32 0.0, %v6174
        %v6176 = vpop.f32.mrf.mxu0
        %v6177 = vadd.f32 0.0, %v6176
        %6178 = vdwg.mxu0
        %6179 = vmatpush.bf16.msra.mxu0 %v6057
        %6180 = vmatpush.bf16.msra.mxu0 %v6056
        %6181 = vmatpush.bf16.msra.mxu0 %v6055
        %6182 = vmatpush.bf16.msra.mxu0 %v6054
        %6183 = vmatpush.bf16.msra.mxu0 %v6053
        %6184 = vmatpush.bf16.msra.mxu0 %v6052
        %6185 = vmatpush.bf16.msra.mxu0 %v6051
        %6186 = vmatpush.bf16.msra.mxu0 %v6050
        %6187 = vmatmul.bf16.gmra.mxu0 %v5851
        %v6188 = vpop.f32.mrf.mxu0
        %v6189 = vadd.f32 %v6100, %v6188
        %v6190 = vpop.f32.mrf.mxu0
        %v6191 = vadd.f32 %v6102, %v6190
        %6192 = vmatmul.bf16.gmra.mxu0 %v5854
        %v6193 = vpop.f32.mrf.mxu0
        %v6194 = vadd.f32 %v6105, %v6193
        %v6195 = vpop.f32.mrf.mxu0
        %v6196 = vadd.f32 %v6107, %v6195
        %6197 = vmatmul.bf16.gmra.mxu0 %v5857
        %v6198 = vpop.f32.mrf.mxu0
        %v6199 = vadd.f32 %v6110, %v6198
        %v6200 = vpop.f32.mrf.mxu0
        %v6201 = vadd.f32 %v6112, %v6200
        %6202 = vmatmul.bf16.gmra.mxu0 %v5860
        %v6203 = vpop.f32.mrf.mxu0
        %v6204 = vadd.f32 %v6115, %v6203
        %v6205 = vpop.f32.mrf.mxu0
        %v6206 = vadd.f32 %v6117, %v6205
        %6207 = vmatmul.bf16.gmra.mxu0 %v5863
        %v6208 = vpop.f32.mrf.mxu0
        %v6209 = vadd.f32 %v6120, %v6208
        %v6210 = vpop.f32.mrf.mxu0
        %v6211 = vadd.f32 %v6122, %v6210
        %6212 = vmatmul.bf16.gmra.mxu0 %v5866
        %v6213 = vpop.f32.mrf.mxu0
        %v6214 = vadd.f32 %v6125, %v6213
        %v6215 = vpop.f32.mrf.mxu0
        %v6216 = vadd.f32 %v6127, %v6215
        %6217 = vmatmul.bf16.gmra.mxu0 %v5869
        %v6218 = vpop.f32.mrf.mxu0
        %v6219 = vadd.f32 %v6130, %v6218
        %v6220 = vpop.f32.mrf.mxu0
        %v6221 = vadd.f32 %v6132, %v6220
        %6222 = vmatmul.bf16.gmra.mxu0 %v5872
        %v6223 = vpop.f32.mrf.mxu0
        %v6224 = vadd.f32 %v6135, %v6223
        %v6225 = vpop.f32.mrf.mxu0
        %v6226 = vadd.f32 %v6137, %v6225
        %6227 = vmatmul.bf16.gmra.mxu0 %v5875
        %v6228 = vpop.f32.mrf.mxu0
        %v6229 = vadd.f32 %v6140, %v6228
        %v6230 = vpop.f32.mrf.mxu0
        %v6231 = vadd.f32 %v6142, %v6230
        %6232 = vmatmul.bf16.gmra.mxu0 %v5878
        %v6233 = vpop.f32.mrf.mxu0
        %v6234 = vadd.f32 %v6145, %v6233
        %v6235 = vpop.f32.mrf.mxu0
        %v6236 = vadd.f32 %v6147, %v6235
        %6237 = vmatmul.bf16.gmra.mxu0 %v5881
        %v6238 = vpop.f32.mrf.mxu0
        %v6239 = vadd.f32 %v6150, %v6238
        %v6240 = vpop.f32.mrf.mxu0
        %v6241 = vadd.f32 %v6152, %v6240
        %6242 = vmatmul.bf16.gmra.mxu0 %v5884
        %v6243 = vpop.f32.mrf.mxu0
        %v6244 = vadd.f32 %v6155, %v6243
        %v6245 = vpop.f32.mrf.mxu0
        %v6246 = vadd.f32 %v6157, %v6245
        %6247 = vmatmul.bf16.gmra.mxu0 %v5887
        %v6248 = vpop.f32.mrf.mxu0
        %v6249 = vadd.f32 %v6160, %v6248
        %v6250 = vpop.f32.mrf.mxu0
        %v6251 = vadd.f32 %v6162, %v6250
        %6252 = vmatmul.bf16.gmra.mxu0 %v5890
        %v6253 = vpop.f32.mrf.mxu0
        %v6254 = vadd.f32 %v6165, %v6253
        %v6255 = vpop.f32.mrf.mxu0
        %v6256 = vadd.f32 %v6167, %v6255
        %6257 = vmatmul.bf16.gmra.mxu0 %v5893
        %v6258 = vpop.f32.mrf.mxu0
        %v6259 = vadd.f32 %v6170, %v6258
        %v6260 = vpop.f32.mrf.mxu0
        %v6261 = vadd.f32 %v6172, %v6260
        %6262 = vmatmul.bf16.gmra.mxu0 %v5896
        %v6263 = vpop.f32.mrf.mxu0
        %v6264 = vadd.f32 %v6175, %v6263
        %v6265 = vpop.f32.mrf.mxu0
        %v6266 = vadd.f32 %v6177, %v6265
        %6267 = vdwg.mxu0
        %6268 = vmatpush.bf16.msra.mxu0 %v6065
        %6269 = vmatpush.bf16.msra.mxu0 %v6064
        %6270 = vmatpush.bf16.msra.mxu0 %v6063
        %6271 = vmatpush.bf16.msra.mxu0 %v6062
        %6272 = vmatpush.bf16.msra.mxu0 %v6061
        %6273 = vmatpush.bf16.msra.mxu0 %v6060
        %6274 = vmatpush.bf16.msra.mxu0 %v6059
        %6275 = vmatpush.bf16.msra.mxu0 %v6058
        %6276 = vmatmul.bf16.gmra.mxu0 %v5852
        %v6277 = vpop.f32.mrf.mxu0
        %v6278 = vadd.f32 %v6189, %v6277
        %v6279 = vpop.f32.mrf.mxu0
        %v6280 = vadd.f32 %v6191, %v6279
        %6281 = vmatmul.bf16.gmra.mxu0 %v5855
        %v6282 = vpop.f32.mrf.mxu0
        %v6283 = vadd.f32 %v6194, %v6282
        %v6284 = vpop.f32.mrf.mxu0
        %v6285 = vadd.f32 %v6196, %v6284
        %6286 = vmatmul.bf16.gmra.mxu0 %v5858
        %v6287 = vpop.f32.mrf.mxu0
        %v6288 = vadd.f32 %v6199, %v6287
        %v6289 = vpop.f32.mrf.mxu0
        %v6290 = vadd.f32 %v6201, %v6289
        %6291 = vmatmul.bf16.gmra.mxu0 %v5861
        %v6292 = vpop.f32.mrf.mxu0
        %v6293 = vadd.f32 %v6204, %v6292
        %v6294 = vpop.f32.mrf.mxu0
        %v6295 = vadd.f32 %v6206, %v6294
        %6296 = vmatmul.bf16.gmra.mxu0 %v5864
        %v6297 = vpop.f32.mrf.mxu0
        %v6298 = vadd.f32 %v6209, %v6297
        %v6299 = vpop.f32.mrf.mxu0
        %v6300 = vadd.f32 %v6211, %v6299
        %6301 = vmatmul.bf16.gmra.mxu0 %v5867
        %v6302 = vpop.f32.mrf.mxu0
        %v6303 = vadd.f32 %v6214, %v6302
        %v6304 = vpop.f32.mrf.mxu0
        %v6305 = vadd.f32 %v6216, %v6304
        %6306 = vmatmul.bf16.gmra.mxu0 %v5870
        %v6307 = vpop.f32.mrf.mxu0
        %v6308 = vadd.f32 %v6219, %v6307
        %v6309 = vpop.f32.mrf.mxu0
        %v6310 = vadd.f32 %v6221, %v6309
        %6311 = vmatmul.bf16.gmra.mxu0 %v5873
        %v6312 = vpop.f32.mrf.mxu0
        %v6313 = vadd.f32 %v6224, %v6312
        %v6314 = vpop.f32.mrf.mxu0
        %v6315 = vadd.f32 %v6226, %v6314
        %6316 = vmatmul.bf16.gmra.mxu0 %v5876
        %v6317 = vpop.f32.mrf.mxu0
        %v6318 = vadd.f32 %v6229, %v6317
        %v6319 = vpop.f32.mrf.mxu0
        %v6320 = vadd.f32 %v6231, %v6319
        %6321 = vmatmul.bf16.gmra.mxu0 %v5879
        %v6322 = vpop.f32.mrf.mxu0
        %v6323 = vadd.f32 %v6234, %v6322
        %v6324 = vpop.f32.mrf.mxu0
        %v6325 = vadd.f32 %v6236, %v6324
        %6326 = vmatmul.bf16.gmra.mxu0 %v5882
        %v6327 = vpop.f32.mrf.mxu0
        %v6328 = vadd.f32 %v6239, %v6327
        %v6329 = vpop.f32.mrf.mxu0
        %v6330 = vadd.f32 %v6241, %v6329
        %6331 = vmatmul.bf16.gmra.mxu0 %v5885
        %v6332 = vpop.f32.mrf.mxu0
        %v6333 = vadd.f32 %v6244, %v6332
        %v6334 = vpop.f32.mrf.mxu0
        %v6335 = vadd.f32 %v6246, %v6334
        %6336 = vmatmul.bf16.gmra.mxu0 %v5888
        %v6337 = vpop.f32.mrf.mxu0
        %v6338 = vadd.f32 %v6249, %v6337
        %v6339 = vpop.f32.mrf.mxu0
        %v6340 = vadd.f32 %v6251, %v6339
        %6341 = vmatmul.bf16.gmra.mxu0 %v5891
        %v6342 = vpop.f32.mrf.mxu0
        %v6343 = vadd.f32 %v6254, %v6342
        %v6344 = vpop.f32.mrf.mxu0
        %v6345 = vadd.f32 %v6256, %v6344
        %6346 = vmatmul.bf16.gmra.mxu0 %v5894
        %v6347 = vpop.f32.mrf.mxu0
        %v6348 = vadd.f32 %v6259, %v6347
        %v6349 = vpop.f32.mrf.mxu0
        %v6350 = vadd.f32 %v6261, %v6349
        %6351 = vmatmul.bf16.gmra.mxu0 %v5897
        %v6352 = vpop.f32.mrf.mxu0
        %v6353 = vadd.f32 %v6264, %v6352
        %v6354 = vpop.f32.mrf.mxu0
        %v6355 = vadd.f32 %v6266, %v6354
        %6356 = vdwg.mxu0
        %v6357 = vadd.f32 %v5498, %v6278
        %v6358 = vadd.f32 %v5500, %v6280
        %v6359 = vadd.f32 %v5503, %v6283
        %v6360 = vadd.f32 %v5505, %v6285
        %v6361 = vadd.f32 %v5508, %v6288
        %v6362 = vadd.f32 %v5510, %v6290
        %v6363 = vadd.f32 %v5513, %v6293
        %v6364 = vadd.f32 %v5515, %v6295
        %v6365 = vadd.f32 %v5518, %v6298
        %v6366 = vadd.f32 %v5520, %v6300
        %v6367 = vadd.f32 %v5523, %v6303
        %v6368 = vadd.f32 %v5525, %v6305
        %v6369 = vadd.f32 %v5528, %v6308
        %v6370 = vadd.f32 %v5530, %v6310
        %v6371 = vadd.f32 %v5533, %v6313
        %v6372 = vadd.f32 %v5535, %v6315
        %v6373 = vadd.f32 %v5538, %v6318
        %v6374 = vadd.f32 %v5540, %v6320
        %v6375 = vadd.f32 %v5543, %v6323
        %v6376 = vadd.f32 %v5545, %v6325
        %v6377 = vadd.f32 %v5548, %v6328
        %v6378 = vadd.f32 %v5550, %v6330
        %v6379 = vadd.f32 %v5553, %v6333
        %v6380 = vadd.f32 %v5555, %v6335
        %v6381 = vadd.f32 %v5558, %v6338
        %v6382 = vadd.f32 %v5560, %v6340
        %v6383 = vadd.f32 %v5563, %v6343
        %v6384 = vadd.f32 %v5565, %v6345
        %v6385 = vadd.f32 %v5568, %v6348
        %v6386 = vadd.f32 %v5570, %v6350
        %v6387 = vadd.f32 %v5573, %v6353
        %v6388 = vadd.f32 %v5575, %v6355
        %v6389 = vld [vmem:[%s4] sm:$0x1]
        %v6391 = vperm.slane %v6389, 0
        %v6393 = vadd.f32 %v6357, %v6391
        %v6394 = vadd.f32 %v6358, %v6391
        %v6395 = vadd.f32 %v6359, %v6391
        %v6396 = vadd.f32 %v6360, %v6391
        %v6397 = vadd.f32 %v6361, %v6391
        %v6398 = vadd.f32 %v6362, %v6391
        %v6399 = vadd.f32 %v6363, %v6391
        %v6400 = vadd.f32 %v6364, %v6391
        %v6401 = vadd.f32 %v6365, %v6391
        %v6402 = vadd.f32 %v6366, %v6391
        %v6403 = vadd.f32 %v6367, %v6391
        %v6404 = vadd.f32 %v6368, %v6391
        %v6405 = vadd.f32 %v6369, %v6391
        %v6406 = vadd.f32 %v6370, %v6391
        %v6407 = vadd.f32 %v6371, %v6391
        %v6408 = vadd.f32 %v6372, %v6391
        %v6409 = vadd.f32 %v6373, %v6391
        %v6410 = vadd.f32 %v6374, %v6391
        %v6411 = vadd.f32 %v6375, %v6391
        %v6412 = vadd.f32 %v6376, %v6391
        %v6413 = vadd.f32 %v6377, %v6391
        %v6414 = vadd.f32 %v6378, %v6391
        %v6415 = vadd.f32 %v6379, %v6391
        %v6416 = vadd.f32 %v6380, %v6391
        %v6417 = vadd.f32 %v6381, %v6391
        %v6418 = vadd.f32 %v6382, %v6391
        %v6419 = vadd.f32 %v6383, %v6391
        %v6420 = vadd.f32 %v6384, %v6391
        %v6421 = vadd.f32 %v6385, %v6391
        %v6422 = vadd.f32 %v6386, %v6391
        %v6423 = vadd.f32 %v6387, %v6391
        %v6424 = vadd.f32 %v6388, %v6391
        %v6425 = vld [vmem:[%s241] sm:$0xf]
        %v6426 = vld [vmem:[%s241 + $0x4] sm:$0xf]
        %v6427 = vld [vmem:[%s241 + $0x8] sm:$0xf]
        %v6428 = vld [vmem:[%s241 + $0xc] sm:$0xf]
        %v6429 = vld [vmem:[%s241 + $0x10] sm:$0xf]
        %v6430 = vld [vmem:[%s241 + $0x14] sm:$0xf]
        %v6431 = vld [vmem:[%s241 + $0x18] sm:$0xf]
        %v6432 = vld [vmem:[%s241 + $0x1c] sm:$0xf]
        %v6433 = vld [vmem:[%s241 + $0x20] sm:$0xf]
        %v6434 = vld [vmem:[%s241 + $0x24] sm:$0xf]
        %v6435 = vld [vmem:[%s241 + $0x28] sm:$0xf]
        %v6436 = vld [vmem:[%s241 + $0x2c] sm:$0xf]
        %v6437 = vld [vmem:[%s241 + $0x30] sm:$0xf]
        %v6438 = vld [vmem:[%s241 + $0x34] sm:$0xf]
        %v6439 = vld [vmem:[%s241 + $0x38] sm:$0xf]
        %v6440 = vld [vmem:[%s241 + $0x3c] sm:$0xf]
        %v6441 = vld [vmem:[%s241 + $0x40] sm:$0xf]
        %v6442 = vld [vmem:[%s241 + $0x44] sm:$0xf]
        %v6443 = vld [vmem:[%s241 + $0x48] sm:$0xf]
        %v6444 = vld [vmem:[%s241 + $0x4c] sm:$0xf]
        %v6445 = vld [vmem:[%s241 + $0x50] sm:$0xf]
        %v6446 = vld [vmem:[%s241 + $0x54] sm:$0xf]
        %v6447 = vld [vmem:[%s241 + $0x58] sm:$0xf]
        %v6448 = vld [vmem:[%s241 + $0x5c] sm:$0xf]
        %v6449 = vld [vmem:[%s241 + $0x60] sm:$0xf]
        %v6450 = vld [vmem:[%s241 + $0x64] sm:$0xf]
        %v6451 = vld [vmem:[%s241 + $0x68] sm:$0xf]
        %v6452 = vld [vmem:[%s241 + $0x6c] sm:$0xf]
        %v6453 = vld [vmem:[%s241 + $0x70] sm:$0xf]
        %v6454 = vld [vmem:[%s241 + $0x74] sm:$0xf]
        %v6455 = vld [vmem:[%s241 + $0x78] sm:$0xf]
        %v6456 = vld [vmem:[%s241 + $0x7c] sm:$0xf]
        %v6457 = vunpack.c.l.bf16 %v6425
        %v6458 = vunpack.c.l.bf16 %v6426
        %v6459 = vunpack.c.l.bf16 %v6427
        %v6460 = vunpack.c.l.bf16 %v6428
        %v6461 = vunpack.c.l.bf16 %v6429
        %v6462 = vunpack.c.l.bf16 %v6430
        %v6463 = vunpack.c.l.bf16 %v6431
        %v6464 = vunpack.c.l.bf16 %v6432
        %v6465 = vunpack.c.l.bf16 %v6433
        %v6466 = vunpack.c.l.bf16 %v6434
        %v6467 = vunpack.c.l.bf16 %v6435
        %v6468 = vunpack.c.l.bf16 %v6436
        %v6469 = vunpack.c.l.bf16 %v6437
        %v6470 = vunpack.c.l.bf16 %v6438
        %v6471 = vunpack.c.l.bf16 %v6439
        %v6472 = vunpack.c.l.bf16 %v6440
        %v6473 = vunpack.c.l.bf16 %v6441
        %v6474 = vunpack.c.l.bf16 %v6442
        %v6475 = vunpack.c.l.bf16 %v6443
        %v6476 = vunpack.c.l.bf16 %v6444
        %v6477 = vunpack.c.l.bf16 %v6445
        %v6478 = vunpack.c.l.bf16 %v6446
        %v6479 = vunpack.c.l.bf16 %v6447
        %v6480 = vunpack.c.l.bf16 %v6448
        %v6481 = vunpack.c.l.bf16 %v6449
        %v6482 = vunpack.c.l.bf16 %v6450
        %v6483 = vunpack.c.l.bf16 %v6451
        %v6484 = vunpack.c.l.bf16 %v6452
        %v6485 = vunpack.c.l.bf16 %v6453
        %v6486 = vunpack.c.l.bf16 %v6454
        %v6487 = vunpack.c.l.bf16 %v6455
        %v6488 = vunpack.c.l.bf16 %v6456
        %v6489 = vadd.f32 %v6393, %v6457
        %v6490 = vadd.f32 %v6394, %v6458
        %v6491 = vadd.f32 %v6395, %v6459
        %v6492 = vadd.f32 %v6396, %v6460
        %v6493 = vadd.f32 %v6397, %v6461
        %v6494 = vadd.f32 %v6398, %v6462
        %v6495 = vadd.f32 %v6399, %v6463
        %v6496 = vadd.f32 %v6400, %v6464
        %v6497 = vadd.f32 %v6401, %v6465
        %v6498 = vadd.f32 %v6402, %v6466
        %v6499 = vadd.f32 %v6403, %v6467
        %v6500 = vadd.f32 %v6404, %v6468
        %v6501 = vadd.f32 %v6405, %v6469
        %v6502 = vadd.f32 %v6406, %v6470
        %v6503 = vadd.f32 %v6407, %v6471
        %v6504 = vadd.f32 %v6408, %v6472
        %v6505 = vadd.f32 %v6409, %v6473
        %v6506 = vadd.f32 %v6410, %v6474
        %v6507 = vadd.f32 %v6411, %v6475
        %v6508 = vadd.f32 %v6412, %v6476
        %v6509 = vadd.f32 %v6413, %v6477
        %v6510 = vadd.f32 %v6414, %v6478
        %v6511 = vadd.f32 %v6415, %v6479
        %v6512 = vadd.f32 %v6416, %v6480
        %v6513 = vadd.f32 %v6417, %v6481
        %v6514 = vadd.f32 %v6418, %v6482
        %v6515 = vadd.f32 %v6419, %v6483
        %v6516 = vadd.f32 %v6420, %v6484
        %v6517 = vadd.f32 %v6421, %v6485
        %v6518 = vadd.f32 %v6422, %v6486
        %v6519 = vadd.f32 %v6423, %v6487
        %v6520 = vadd.f32 %v6424, %v6488
        %v6521 = vmax.f32 %v6489, 0.0
        %v6522 = vmax.f32 %v6490, 0.0
        %v6523 = vmax.f32 %v6491, 0.0
        %v6524 = vmax.f32 %v6492, 0.0
        %v6525 = vmax.f32 %v6493, 0.0
        %v6526 = vmax.f32 %v6494, 0.0
        %v6527 = vmax.f32 %v6495, 0.0
        %v6528 = vmax.f32 %v6496, 0.0
        %v6529 = vmax.f32 %v6497, 0.0
        %v6530 = vmax.f32 %v6498, 0.0
        %v6531 = vmax.f32 %v6499, 0.0
        %v6532 = vmax.f32 %v6500, 0.0
        %v6533 = vmax.f32 %v6501, 0.0
        %v6534 = vmax.f32 %v6502, 0.0
        %v6535 = vmax.f32 %v6503, 0.0
        %v6536 = vmax.f32 %v6504, 0.0
        %v6537 = vmax.f32 %v6505, 0.0
        %v6538 = vmax.f32 %v6506, 0.0
        %v6539 = vmax.f32 %v6507, 0.0
        %v6540 = vmax.f32 %v6508, 0.0
        %v6541 = vmax.f32 %v6509, 0.0
        %v6542 = vmax.f32 %v6510, 0.0
        %v6543 = vmax.f32 %v6511, 0.0
        %v6544 = vmax.f32 %v6512, 0.0
        %v6545 = vmax.f32 %v6513, 0.0
        %v6546 = vmax.f32 %v6514, 0.0
        %v6547 = vmax.f32 %v6515, 0.0
        %v6548 = vmax.f32 %v6516, 0.0
        %v6549 = vmax.f32 %v6517, 0.0
        %v6550 = vmax.f32 %v6518, 0.0
        %v6551 = vmax.f32 %v6519, 0.0
        %v6552 = vmax.f32 %v6520, 0.0
        %v6553 = vpack.c.bf16 %v6521, %v6521
        %v6554 = vpack.c.bf16 %v6522, %v6522
        %v6555 = vpack.c.bf16 %v6523, %v6523
        %v6556 = vpack.c.bf16 %v6524, %v6524
        %v6557 = vpack.c.bf16 %v6525, %v6525
        %v6558 = vpack.c.bf16 %v6526, %v6526
        %v6559 = vpack.c.bf16 %v6527, %v6527
        %v6560 = vpack.c.bf16 %v6528, %v6528
        %v6561 = vpack.c.bf16 %v6529, %v6529
        %v6562 = vpack.c.bf16 %v6530, %v6530
        %v6563 = vpack.c.bf16 %v6531, %v6531
        %v6564 = vpack.c.bf16 %v6532, %v6532
        %v6565 = vpack.c.bf16 %v6533, %v6533
        %v6566 = vpack.c.bf16 %v6534, %v6534
        %v6567 = vpack.c.bf16 %v6535, %v6535
        %v6568 = vpack.c.bf16 %v6536, %v6536
        %v6569 = vpack.c.bf16 %v6537, %v6537
        %v6570 = vpack.c.bf16 %v6538, %v6538
        %v6571 = vpack.c.bf16 %v6539, %v6539
        %v6572 = vpack.c.bf16 %v6540, %v6540
        %v6573 = vpack.c.bf16 %v6541, %v6541
        %v6574 = vpack.c.bf16 %v6542, %v6542
        %v6575 = vpack.c.bf16 %v6543, %v6543
        %v6576 = vpack.c.bf16 %v6544, %v6544
        %v6577 = vpack.c.bf16 %v6545, %v6545
        %v6578 = vpack.c.bf16 %v6546, %v6546
        %v6579 = vpack.c.bf16 %v6547, %v6547
        %v6580 = vpack.c.bf16 %v6548, %v6548
        %v6581 = vpack.c.bf16 %v6549, %v6549
        %v6582 = vpack.c.bf16 %v6550, %v6550
        %v6583 = vpack.c.bf16 %v6551, %v6551
        %v6584 = vpack.c.bf16 %v6552, %v6552
        %6585 = vst [vmem:[%s278] sm:$0xf] %v6553
        %6586 = vst [vmem:[%s278 + $0x4] sm:$0xf] %v6554
        %6587 = vst [vmem:[%s278 + $0x8] sm:$0xf] %v6555
        %6588 = vst [vmem:[%s278 + $0xc] sm:$0xf] %v6556
        %6589 = vst [vmem:[%s278 + $0x10] sm:$0xf] %v6557
        %6590 = vst [vmem:[%s278 + $0x14] sm:$0xf] %v6558
        %6591 = vst [vmem:[%s278 + $0x18] sm:$0xf] %v6559
        %6592 = vst [vmem:[%s278 + $0x1c] sm:$0xf] %v6560
        %6593 = vst [vmem:[%s278 + $0x20] sm:$0xf] %v6561
        %6594 = vst [vmem:[%s278 + $0x24] sm:$0xf] %v6562
        %6595 = vst [vmem:[%s278 + $0x28] sm:$0xf] %v6563
        %6596 = vst [vmem:[%s278 + $0x2c] sm:$0xf] %v6564
        %6597 = vst [vmem:[%s278 + $0x30] sm:$0xf] %v6565
        %6598 = vst [vmem:[%s278 + $0x34] sm:$0xf] %v6566
        %6599 = vst [vmem:[%s278 + $0x38] sm:$0xf] %v6567
        %6600 = vst [vmem:[%s278 + $0x3c] sm:$0xf] %v6568
        %6601 = vst [vmem:[%s278 + $0x40] sm:$0xf] %v6569
        %6602 = vst [vmem:[%s278 + $0x44] sm:$0xf] %v6570
        %6603 = vst [vmem:[%s278 + $0x48] sm:$0xf] %v6571
        %6604 = vst [vmem:[%s278 + $0x4c] sm:$0xf] %v6572
        %6605 = vst [vmem:[%s278 + $0x50] sm:$0xf] %v6573
        %6606 = vst [vmem:[%s278 + $0x54] sm:$0xf] %v6574
        %6607 = vst [vmem:[%s278 + $0x58] sm:$0xf] %v6575
        %6608 = vst [vmem:[%s278 + $0x5c] sm:$0xf] %v6576
        %6609 = vst [vmem:[%s278 + $0x60] sm:$0xf] %v6577
        %6610 = vst [vmem:[%s278 + $0x64] sm:$0xf] %v6578
        %6611 = vst [vmem:[%s278 + $0x68] sm:$0xf] %v6579
        %6612 = vst [vmem:[%s278 + $0x6c] sm:$0xf] %v6580
        %6613 = vst [vmem:[%s278 + $0x70] sm:$0xf] %v6581
        %6614 = vst [vmem:[%s278 + $0x74] sm:$0xf] %v6582
        %6615 = vst [vmem:[%s278 + $0x78] sm:$0xf] %v6583
        %6616 = vst [vmem:[%s278 + $0x7c] sm:$0xf] %v6584
        %s6617 = scalar_lea.vmem %s241, 128 [#allocation3]
        %v6618 = vld [vmem:[%s6617] sm:$0xf]
        %v6619 = vld [vmem:[%s6617 + $0x4] sm:$0xf]
        %v6620 = vld [vmem:[%s6617 + $0x8] sm:$0xf]
        %v6621 = vld [vmem:[%s6617 + $0xc] sm:$0xf]
        %v6622 = vld [vmem:[%s6617 + $0x10] sm:$0xf]
        %v6623 = vld [vmem:[%s6617 + $0x14] sm:$0xf]
        %v6624 = vld [vmem:[%s6617 + $0x18] sm:$0xf]
        %v6625 = vld [vmem:[%s6617 + $0x1c] sm:$0xf]
        %v6626 = vld [vmem:[%s6617 + $0x20] sm:$0xf]
        %v6627 = vld [vmem:[%s6617 + $0x24] sm:$0xf]
        %v6628 = vld [vmem:[%s6617 + $0x28] sm:$0xf]
        %v6629 = vld [vmem:[%s6617 + $0x2c] sm:$0xf]
        %v6630 = vld [vmem:[%s6617 + $0x30] sm:$0xf]
        %v6631 = vld [vmem:[%s6617 + $0x34] sm:$0xf]
        %v6632 = vld [vmem:[%s6617 + $0x38] sm:$0xf]
        %v6633 = vld [vmem:[%s6617 + $0x3c] sm:$0xf]
        %v6634 = vld [vmem:[%s6617 + $0x40] sm:$0xf]
        %v6635 = vld [vmem:[%s6617 + $0x44] sm:$0xf]
        %v6636 = vld [vmem:[%s6617 + $0x48] sm:$0xf]
        %v6637 = vld [vmem:[%s6617 + $0x4c] sm:$0xf]
        %v6638 = vld [vmem:[%s6617 + $0x50] sm:$0xf]
        %v6639 = vld [vmem:[%s6617 + $0x54] sm:$0xf]
        %v6640 = vld [vmem:[%s6617 + $0x58] sm:$0xf]
        %v6641 = vld [vmem:[%s6617 + $0x5c] sm:$0xf]
        %v6642 = vld [vmem:[%s6617 + $0x60] sm:$0xf]
        %v6643 = vld [vmem:[%s6617 + $0x64] sm:$0xf]
        %v6644 = vld [vmem:[%s6617 + $0x68] sm:$0xf]
        %v6645 = vld [vmem:[%s6617 + $0x6c] sm:$0xf]
        %v6646 = vld [vmem:[%s6617 + $0x70] sm:$0xf]
        %v6647 = vld [vmem:[%s6617 + $0x74] sm:$0xf]
        %v6648 = vld [vmem:[%s6617 + $0x78] sm:$0xf]
        %v6649 = vld [vmem:[%s6617 + $0x7c] sm:$0xf]
        %v6682 = vunpack.c.l.b16 %v6618
        %v6683 = vunpack.c.l.b16 %v6619
        %v6684 = vunpack.c.l.b16 %v6620
        %v6685 = vunpack.c.l.b16 %v6621
        %v6686 = vunpack.c.l.b16 %v6622
        %v6687 = vunpack.c.l.b16 %v6623
        %v6688 = vunpack.c.l.b16 %v6624
        %v6689 = vunpack.c.l.b16 %v6625
        %v6690 = vunpack.c.l.b16 %v6626
        %v6691 = vunpack.c.l.b16 %v6627
        %v6692 = vunpack.c.l.b16 %v6628
        %v6693 = vunpack.c.l.b16 %v6629
        %v6694 = vunpack.c.l.b16 %v6630
        %v6695 = vunpack.c.l.b16 %v6631
        %v6696 = vunpack.c.l.b16 %v6632
        %v6697 = vunpack.c.l.b16 %v6633
        %v6698 = vunpack.c.l.b16 %v6634
        %v6699 = vunpack.c.l.b16 %v6635
        %v6700 = vunpack.c.l.b16 %v6636
        %v6701 = vunpack.c.l.b16 %v6637
        %v6702 = vunpack.c.l.b16 %v6638
        %v6703 = vunpack.c.l.b16 %v6639
        %v6704 = vunpack.c.l.b16 %v6640
        %v6705 = vunpack.c.l.b16 %v6641
        %v6706 = vunpack.c.l.b16 %v6642
        %v6707 = vunpack.c.l.b16 %v6643
        %v6708 = vunpack.c.l.b16 %v6644
        %v6709 = vunpack.c.l.b16 %v6645
        %v6710 = vunpack.c.l.b16 %v6646
        %v6711 = vunpack.c.l.b16 %v6647
        %v6712 = vunpack.c.l.b16 %v6648
        %v6713 = vunpack.c.l.b16 %v6649
        %v6714 = vpack.c.b16 %v6683, %v6682
        %v6715 = vpack.c.b16 %v6685, %v6684
        %v6716 = vpack.c.b16 %v6687, %v6686
        %v6717 = vpack.c.b16 %v6689, %v6688
        %v6718 = vpack.c.b16 %v6691, %v6690
        %v6719 = vpack.c.b16 %v6693, %v6692
        %v6720 = vpack.c.b16 %v6695, %v6694
        %v6721 = vpack.c.b16 %v6697, %v6696
        %v6722 = vpack.c.b16 %v6699, %v6698
        %v6723 = vpack.c.b16 %v6701, %v6700
        %v6724 = vpack.c.b16 %v6703, %v6702
        %v6725 = vpack.c.b16 %v6705, %v6704
        %v6726 = vpack.c.b16 %v6707, %v6706
        %v6727 = vpack.c.b16 %v6709, %v6708
        %v6728 = vpack.c.b16 %v6711, %v6710
        %v6729 = vpack.c.b16 %v6713, %v6712
        %v6731 = vshrl.u32 %v6714, 16
        %v6733 = vrot.slane %v6731, 7
        %v6734 = vshll.u32 %v6714, 16
        %v6736 = vor.u32 %v6733, %v6734
        %v6738 = vshrl.u32 %v6715, 16
        %v6740 = vrot.slane %v6738, 7
        %v6741 = vshll.u32 %v6715, 16
        %v6743 = vor.u32 %v6740, %v6741
        %v6745 = vshrl.u32 %v6716, 16
        %v6747 = vrot.slane %v6745, 7
        %v6748 = vshll.u32 %v6716, 16
        %v6750 = vor.u32 %v6747, %v6748
        %v6752 = vshrl.u32 %v6717, 16
        %v6754 = vrot.slane %v6752, 7
        %v6755 = vshll.u32 %v6717, 16
        %v6757 = vor.u32 %v6754, %v6755
        %v6759 = vshrl.u32 %v6718, 16
        %v6761 = vrot.slane %v6759, 7
        %v6762 = vshll.u32 %v6718, 16
        %v6764 = vor.u32 %v6761, %v6762
        %v6766 = vshrl.u32 %v6719, 16
        %v6768 = vrot.slane %v6766, 7
        %v6769 = vshll.u32 %v6719, 16
        %v6771 = vor.u32 %v6768, %v6769
        %v6773 = vshrl.u32 %v6720, 16
        %v6775 = vrot.slane %v6773, 7
        %v6776 = vshll.u32 %v6720, 16
        %v6778 = vor.u32 %v6775, %v6776
        %v6780 = vshrl.u32 %v6721, 16
        %v6782 = vrot.slane %v6780, 7
        %v6783 = vshll.u32 %v6721, 16
        %v6785 = vor.u32 %v6782, %v6783
        %v6787 = vshrl.u32 %v6722, 16
        %v6789 = vrot.slane %v6787, 7
        %v6790 = vshll.u32 %v6722, 16
        %v6792 = vor.u32 %v6789, %v6790
        %v6794 = vshrl.u32 %v6723, 16
        %v6796 = vrot.slane %v6794, 7
        %v6797 = vshll.u32 %v6723, 16
        %v6799 = vor.u32 %v6796, %v6797
        %v6801 = vshrl.u32 %v6724, 16
        %v6803 = vrot.slane %v6801, 7
        %v6804 = vshll.u32 %v6724, 16
        %v6806 = vor.u32 %v6803, %v6804
        %v6808 = vshrl.u32 %v6725, 16
        %v6810 = vrot.slane %v6808, 7
        %v6811 = vshll.u32 %v6725, 16
        %v6813 = vor.u32 %v6810, %v6811
        %v6815 = vshrl.u32 %v6726, 16
        %v6817 = vrot.slane %v6815, 7
        %v6818 = vshll.u32 %v6726, 16
        %v6820 = vor.u32 %v6817, %v6818
        %v6822 = vshrl.u32 %v6727, 16
        %v6824 = vrot.slane %v6822, 7
        %v6825 = vshll.u32 %v6727, 16
        %v6827 = vor.u32 %v6824, %v6825
        %v6829 = vshrl.u32 %v6728, 16
        %v6831 = vrot.slane %v6829, 7
        %v6832 = vshll.u32 %v6728, 16
        %v6834 = vor.u32 %v6831, %v6832
        %v6836 = vshrl.u32 %v6729, 16
        %v6838 = vrot.slane %v6836, 7
        %v6839 = vshll.u32 %v6729, 16
        %v6841 = vor.u32 %v6838, %v6839
        %v6858 = vsel %vm533, 0, %v6736
        %v6859 = vsel %vm533, 0, %v6743
        %v6860 = vsel %vm533, 0, %v6750
        %v6861 = vsel %vm533, 0, %v6757
        %v6862 = vsel %vm533, 0, %v6764
        %v6863 = vsel %vm533, 0, %v6771
        %v6864 = vsel %vm533, 0, %v6778
        %v6865 = vsel %vm533, 0, %v6785
        %v6866 = vsel %vm533, 0, %v6792
        %v6867 = vsel %vm533, 0, %v6799
        %v6868 = vsel %vm533, 0, %v6806
        %v6869 = vsel %vm533, 0, %v6813
        %v6870 = vsel %vm533, 0, %v6820
        %v6871 = vsel %vm533, 0, %v6827
        %v6872 = vsel %vm533, 0, %v6834
        %v6873 = vsel %vm533, 0, %v6841
        %v6874 = vrot.slane %v6734, 1
        %v6875 = vor.u32 %v6731, %v6874
        %v6876 = vrot.slane %v6741, 1
        %v6877 = vor.u32 %v6738, %v6876
        %v6878 = vrot.slane %v6748, 1
        %v6879 = vor.u32 %v6745, %v6878
        %v6880 = vrot.slane %v6755, 1
        %v6881 = vor.u32 %v6752, %v6880
        %v6882 = vrot.slane %v6762, 1
        %v6883 = vor.u32 %v6759, %v6882
        %v6884 = vrot.slane %v6769, 1
        %v6885 = vor.u32 %v6766, %v6884
        %v6886 = vrot.slane %v6776, 1
        %v6887 = vor.u32 %v6773, %v6886
        %v6888 = vrot.slane %v6783, 1
        %v6889 = vor.u32 %v6780, %v6888
        %v6890 = vrot.slane %v6790, 1
        %v6891 = vor.u32 %v6787, %v6890
        %v6892 = vrot.slane %v6797, 1
        %v6893 = vor.u32 %v6794, %v6892
        %v6894 = vrot.slane %v6804, 1
        %v6895 = vor.u32 %v6801, %v6894
        %v6896 = vrot.slane %v6811, 1
        %v6897 = vor.u32 %v6808, %v6896
        %v6898 = vrot.slane %v6818, 1
        %v6899 = vor.u32 %v6815, %v6898
        %v6900 = vrot.slane %v6825, 1
        %v6901 = vor.u32 %v6822, %v6900
        %v6902 = vrot.slane %v6832, 1
        %v6903 = vor.u32 %v6829, %v6902
        %v6904 = vrot.slane %v6839, 1
        %v6905 = vor.u32 %v6836, %v6904
        %v6922 = vsel %vm600, %v6875, 0
        %v6923 = vsel %vm600, %v6877, 0
        %v6924 = vsel %vm600, %v6879, 0
        %v6925 = vsel %vm600, %v6881, 0
        %v6926 = vsel %vm600, %v6883, 0
        %v6927 = vsel %vm600, %v6885, 0
        %v6928 = vsel %vm600, %v6887, 0
        %v6929 = vsel %vm600, %v6889, 0
        %v6930 = vsel %vm600, %v6891, 0
        %v6931 = vsel %vm600, %v6893, 0
        %v6932 = vsel %vm600, %v6895, 0
        %v6933 = vsel %vm600, %v6897, 0
        %v6934 = vsel %vm600, %v6899, 0
        %v6935 = vsel %vm600, %v6901, 0
        %v6936 = vsel %vm600, %v6903, 0
        %v6937 = vsel %vm600, %v6905, 0
        %v6954 = vunpack.c.l.b16 %v6858
        %v6955 = vunpack.c.h.b16 %v6858
        %v6956 = vunpack.c.l.b16 %v6859
        %v6957 = vunpack.c.h.b16 %v6859
        %v6958 = vunpack.c.l.b16 %v6860
        %v6959 = vunpack.c.h.b16 %v6860
        %v6960 = vunpack.c.l.b16 %v6861
        %v6961 = vunpack.c.h.b16 %v6861
        %v6962 = vunpack.c.l.b16 %v6862
        %v6963 = vunpack.c.h.b16 %v6862
        %v6964 = vunpack.c.l.b16 %v6863
        %v6965 = vunpack.c.h.b16 %v6863
        %v6966 = vunpack.c.l.b16 %v6864
        %v6967 = vunpack.c.h.b16 %v6864
        %v6968 = vunpack.c.l.b16 %v6865
        %v6969 = vunpack.c.h.b16 %v6865
        %v6970 = vunpack.c.l.b16 %v6866
        %v6971 = vunpack.c.h.b16 %v6866
        %v6972 = vunpack.c.l.b16 %v6867
        %v6973 = vunpack.c.h.b16 %v6867
        %v6974 = vunpack.c.l.b16 %v6868
        %v6975 = vunpack.c.h.b16 %v6868
        %v6976 = vunpack.c.l.b16 %v6869
        %v6977 = vunpack.c.h.b16 %v6869
        %v6978 = vunpack.c.l.b16 %v6870
        %v6979 = vunpack.c.h.b16 %v6870
        %v6980 = vunpack.c.l.b16 %v6871
        %v6981 = vunpack.c.h.b16 %v6871
        %v6982 = vunpack.c.l.b16 %v6872
        %v6983 = vunpack.c.h.b16 %v6872
        %v6984 = vunpack.c.l.b16 %v6873
        %v6985 = vunpack.c.h.b16 %v6873
        %v6986 = vpack.c.b16 %v6954, %v6954
        %v6987 = vpack.c.b16 %v6955, %v6955
        %v6988 = vpack.c.b16 %v6956, %v6956
        %v6989 = vpack.c.b16 %v6957, %v6957
        %v6990 = vpack.c.b16 %v6958, %v6958
        %v6991 = vpack.c.b16 %v6959, %v6959
        %v6992 = vpack.c.b16 %v6960, %v6960
        %v6993 = vpack.c.b16 %v6961, %v6961
        %v6994 = vpack.c.b16 %v6962, %v6962
        %v6995 = vpack.c.b16 %v6963, %v6963
        %v6996 = vpack.c.b16 %v6964, %v6964
        %v6997 = vpack.c.b16 %v6965, %v6965
        %v6998 = vpack.c.b16 %v6966, %v6966
        %v6999 = vpack.c.b16 %v6967, %v6967
        %v7000 = vpack.c.b16 %v6968, %v6968
        %v7001 = vpack.c.b16 %v6969, %v6969
        %v7002 = vpack.c.b16 %v6970, %v6970
        %v7003 = vpack.c.b16 %v6971, %v6971
        %v7004 = vpack.c.b16 %v6972, %v6972
        %v7005 = vpack.c.b16 %v6973, %v6973
        %v7006 = vpack.c.b16 %v6974, %v6974
        %v7007 = vpack.c.b16 %v6975, %v6975
        %v7008 = vpack.c.b16 %v6976, %v6976
        %v7009 = vpack.c.b16 %v6977, %v6977
        %v7010 = vpack.c.b16 %v6978, %v6978
        %v7011 = vpack.c.b16 %v6979, %v6979
        %v7012 = vpack.c.b16 %v6980, %v6980
        %v7013 = vpack.c.b16 %v6981, %v6981
        %v7014 = vpack.c.b16 %v6982, %v6982
        %v7015 = vpack.c.b16 %v6983, %v6983
        %v7016 = vpack.c.b16 %v6984, %v6984
        %v7017 = vpack.c.b16 %v6985, %v6985
        %7050 = vst [vmem:[%s729] sm:$0xf] %v6986
        %7051 = vst [vmem:[%s729 + $0xc] sm:$0xf] %v6987
        %7052 = vst [vmem:[%s729 + $0x18] sm:$0xf] %v6988
        %7053 = vst [vmem:[%s729 + $0x24] sm:$0xf] %v6989
        %7054 = vst [vmem:[%s729 + $0x30] sm:$0xf] %v6990
        %7055 = vst [vmem:[%s729 + $0x3c] sm:$0xf] %v6991
        %7056 = vst [vmem:[%s729 + $0x48] sm:$0xf] %v6992
        %7057 = vst [vmem:[%s729 + $0x54] sm:$0xf] %v6993
        %7058 = vst [vmem:[%s729 + $0x60] sm:$0xf] %v6994
        %7059 = vst [vmem:[%s729 + $0x6c] sm:$0xf] %v6995
        %7060 = vst [vmem:[%s729 + $0x78] sm:$0xf] %v6996
        %7061 = vst [vmem:[%s729 + $0x84] sm:$0xf] %v6997
        %7062 = vst [vmem:[%s729 + $0x90] sm:$0xf] %v6998
        %7063 = vst [vmem:[%s729 + $0x9c] sm:$0xf] %v6999
        %7064 = vst [vmem:[%s729 + $0xa8] sm:$0xf] %v7000
        %7065 = vst [vmem:[%s729 + $0xb4] sm:$0xf] %v7001
        %7066 = vst [vmem:[%s729 + $0xc0] sm:$0xf] %v7002
        %7067 = vst [vmem:[%s729 + $0xcc] sm:$0xf] %v7003
        %7068 = vst [vmem:[%s729 + $0xd8] sm:$0xf] %v7004
        %7069 = vst [vmem:[%s729 + $0xe4] sm:$0xf] %v7005
        %7070 = vst [vmem:[%s729 + $0xf0] sm:$0xf] %v7006
        %7071 = vst [vmem:[%s729 + $0xfc] sm:$0xf] %v7007
        %7072 = vst [vmem:[%s729 + $0x108] sm:$0xf] %v7008
        %7073 = vst [vmem:[%s729 + $0x114] sm:$0xf] %v7009
        %7074 = vst [vmem:[%s729 + $0x120] sm:$0xf] %v7010
        %7075 = vst [vmem:[%s729 + $0x12c] sm:$0xf] %v7011
        %7076 = vst [vmem:[%s729 + $0x138] sm:$0xf] %v7012
        %7077 = vst [vmem:[%s729 + $0x144] sm:$0xf] %v7013
        %7078 = vst [vmem:[%s729 + $0x150] sm:$0xf] %v7014
        %7079 = vst [vmem:[%s729 + $0x15c] sm:$0xf] %v7015
        %7080 = vst [vmem:[%s729 + $0x168] sm:$0xf] %v7016
        %7081 = vst [vmem:[%s729 + $0x174] sm:$0xf] %v7017
        %7082 = vst [vmem:[%s729 + $0x4] sm:$0xf] %v6618
        %7083 = vst [vmem:[%s729 + $0x10] sm:$0xf] %v6619
        %7084 = vst [vmem:[%s729 + $0x1c] sm:$0xf] %v6620
        %7085 = vst [vmem:[%s729 + $0x28] sm:$0xf] %v6621
        %7086 = vst [vmem:[%s729 + $0x34] sm:$0xf] %v6622
        %7087 = vst [vmem:[%s729 + $0x40] sm:$0xf] %v6623
        %7088 = vst [vmem:[%s729 + $0x4c] sm:$0xf] %v6624
        %7089 = vst [vmem:[%s729 + $0x58] sm:$0xf] %v6625
        %7090 = vst [vmem:[%s729 + $0x64] sm:$0xf] %v6626
        %7091 = vst [vmem:[%s729 + $0x70] sm:$0xf] %v6627
        %7092 = vst [vmem:[%s729 + $0x7c] sm:$0xf] %v6628
        %7093 = vst [vmem:[%s729 + $0x88] sm:$0xf] %v6629
        %7094 = vst [vmem:[%s729 + $0x94] sm:$0xf] %v6630
        %7095 = vst [vmem:[%s729 + $0xa0] sm:$0xf] %v6631
        %7096 = vst [vmem:[%s729 + $0xac] sm:$0xf] %v6632
        %7097 = vst [vmem:[%s729 + $0xb8] sm:$0xf] %v6633
        %7098 = vst [vmem:[%s729 + $0xc4] sm:$0xf] %v6634
        %7099 = vst [vmem:[%s729 + $0xd0] sm:$0xf] %v6635
        %7100 = vst [vmem:[%s729 + $0xdc] sm:$0xf] %v6636
        %7101 = vst [vmem:[%s729 + $0xe8] sm:$0xf] %v6637
        %7102 = vst [vmem:[%s729 + $0xf4] sm:$0xf] %v6638
        %7103 = vst [vmem:[%s729 + $0x100] sm:$0xf] %v6639
        %7104 = vst [vmem:[%s729 + $0x10c] sm:$0xf] %v6640
        %7105 = vst [vmem:[%s729 + $0x118] sm:$0xf] %v6641
        %7106 = vst [vmem:[%s729 + $0x124] sm:$0xf] %v6642
        %7107 = vst [vmem:[%s729 + $0x130] sm:$0xf] %v6643
        %7108 = vst [vmem:[%s729 + $0x13c] sm:$0xf] %v6644
        %7109 = vst [vmem:[%s729 + $0x148] sm:$0xf] %v6645
        %7110 = vst [vmem:[%s729 + $0x154] sm:$0xf] %v6646
        %7111 = vst [vmem:[%s729 + $0x160] sm:$0xf] %v6647
        %7112 = vst [vmem:[%s729 + $0x16c] sm:$0xf] %v6648
        %7113 = vst [vmem:[%s729 + $0x178] sm:$0xf] %v6649
        %v7130 = vunpack.c.l.b16 %v6922
        %v7131 = vunpack.c.h.b16 %v6922
        %v7132 = vunpack.c.l.b16 %v6923
        %v7133 = vunpack.c.h.b16 %v6923
        %v7134 = vunpack.c.l.b16 %v6924
        %v7135 = vunpack.c.h.b16 %v6924
        %v7136 = vunpack.c.l.b16 %v6925
        %v7137 = vunpack.c.h.b16 %v6925
        %v7138 = vunpack.c.l.b16 %v6926
        %v7139 = vunpack.c.h.b16 %v6926
        %v7140 = vunpack.c.l.b16 %v6927
        %v7141 = vunpack.c.h.b16 %v6927
        %v7142 = vunpack.c.l.b16 %v6928
        %v7143 = vunpack.c.h.b16 %v6928
        %v7144 = vunpack.c.l.b16 %v6929
        %v7145 = vunpack.c.h.b16 %v6929
        %v7146 = vunpack.c.l.b16 %v6930
        %v7147 = vunpack.c.h.b16 %v6930
        %v7148 = vunpack.c.l.b16 %v6931
        %v7149 = vunpack.c.h.b16 %v6931
        %v7150 = vunpack.c.l.b16 %v6932
        %v7151 = vunpack.c.h.b16 %v6932
        %v7152 = vunpack.c.l.b16 %v6933
        %v7153 = vunpack.c.h.b16 %v6933
        %v7154 = vunpack.c.l.b16 %v6934
        %v7155 = vunpack.c.h.b16 %v6934
        %v7156 = vunpack.c.l.b16 %v6935
        %v7157 = vunpack.c.h.b16 %v6935
        %v7158 = vunpack.c.l.b16 %v6936
        %v7159 = vunpack.c.h.b16 %v6936
        %v7160 = vunpack.c.l.b16 %v6937
        %v7161 = vunpack.c.h.b16 %v6937
        %v7162 = vpack.c.b16 %v7130, %v7130
        %v7163 = vpack.c.b16 %v7131, %v7131
        %v7164 = vpack.c.b16 %v7132, %v7132
        %v7165 = vpack.c.b16 %v7133, %v7133
        %v7166 = vpack.c.b16 %v7134, %v7134
        %v7167 = vpack.c.b16 %v7135, %v7135
        %v7168 = vpack.c.b16 %v7136, %v7136
        %v7169 = vpack.c.b16 %v7137, %v7137
        %v7170 = vpack.c.b16 %v7138, %v7138
        %v7171 = vpack.c.b16 %v7139, %v7139
        %v7172 = vpack.c.b16 %v7140, %v7140
        %v7173 = vpack.c.b16 %v7141, %v7141
        %v7174 = vpack.c.b16 %v7142, %v7142
        %v7175 = vpack.c.b16 %v7143, %v7143
        %v7176 = vpack.c.b16 %v7144, %v7144
        %v7177 = vpack.c.b16 %v7145, %v7145
        %v7178 = vpack.c.b16 %v7146, %v7146
        %v7179 = vpack.c.b16 %v7147, %v7147
        %v7180 = vpack.c.b16 %v7148, %v7148
        %v7181 = vpack.c.b16 %v7149, %v7149
        %v7182 = vpack.c.b16 %v7150, %v7150
        %v7183 = vpack.c.b16 %v7151, %v7151
        %v7184 = vpack.c.b16 %v7152, %v7152
        %v7185 = vpack.c.b16 %v7153, %v7153
        %v7186 = vpack.c.b16 %v7154, %v7154
        %v7187 = vpack.c.b16 %v7155, %v7155
        %v7188 = vpack.c.b16 %v7156, %v7156
        %v7189 = vpack.c.b16 %v7157, %v7157
        %v7190 = vpack.c.b16 %v7158, %v7158
        %v7191 = vpack.c.b16 %v7159, %v7159
        %v7192 = vpack.c.b16 %v7160, %v7160
        %v7193 = vpack.c.b16 %v7161, %v7161
        %7226 = vst [vmem:[%s729 + $0x8] sm:$0xf] %v7162
        %7227 = vst [vmem:[%s729 + $0x14] sm:$0xf] %v7163
        %7228 = vst [vmem:[%s729 + $0x20] sm:$0xf] %v7164
        %7229 = vst [vmem:[%s729 + $0x2c] sm:$0xf] %v7165
        %7230 = vst [vmem:[%s729 + $0x38] sm:$0xf] %v7166
        %7231 = vst [vmem:[%s729 + $0x44] sm:$0xf] %v7167
        %7232 = vst [vmem:[%s729 + $0x50] sm:$0xf] %v7168
        %7233 = vst [vmem:[%s729 + $0x5c] sm:$0xf] %v7169
        %7234 = vst [vmem:[%s729 + $0x68] sm:$0xf] %v7170
        %7235 = vst [vmem:[%s729 + $0x74] sm:$0xf] %v7171
        %7236 = vst [vmem:[%s729 + $0x80] sm:$0xf] %v7172
        %7237 = vst [vmem:[%s729 + $0x8c] sm:$0xf] %v7173
        %7238 = vst [vmem:[%s729 + $0x98] sm:$0xf] %v7174
        %7239 = vst [vmem:[%s729 + $0xa4] sm:$0xf] %v7175
        %7240 = vst [vmem:[%s729 + $0xb0] sm:$0xf] %v7176
        %7241 = vst [vmem:[%s729 + $0xbc] sm:$0xf] %v7177
        %7242 = vst [vmem:[%s729 + $0xc8] sm:$0xf] %v7178
        %7243 = vst [vmem:[%s729 + $0xd4] sm:$0xf] %v7179
        %7244 = vst [vmem:[%s729 + $0xe0] sm:$0xf] %v7180
        %7245 = vst [vmem:[%s729 + $0xec] sm:$0xf] %v7181
        %7246 = vst [vmem:[%s729 + $0xf8] sm:$0xf] %v7182
        %7247 = vst [vmem:[%s729 + $0x104] sm:$0xf] %v7183
        %7248 = vst [vmem:[%s729 + $0x110] sm:$0xf] %v7184
        %7249 = vst [vmem:[%s729 + $0x11c] sm:$0xf] %v7185
        %7250 = vst [vmem:[%s729 + $0x128] sm:$0xf] %v7186
        %7251 = vst [vmem:[%s729 + $0x134] sm:$0xf] %v7187
        %7252 = vst [vmem:[%s729 + $0x140] sm:$0xf] %v7188
        %7253 = vst [vmem:[%s729 + $0x14c] sm:$0xf] %v7189
        %7254 = vst [vmem:[%s729 + $0x158] sm:$0xf] %v7190
        %7255 = vst [vmem:[%s729 + $0x164] sm:$0xf] %v7191
        %7256 = vst [vmem:[%s729 + $0x170] sm:$0xf] %v7192
        %7257 = vst [vmem:[%s729 + $0x17c] sm:$0xf] %v7193
        %v7258 = vld [vmem:[#allocation2] sm:$0xff]
        %v7259 = vld [vmem:[#allocation2 + $0x8] sm:$0xf]
        %v7260 = vld [vmem:[#allocation2 + $0xc] sm:$0xff]
        %v7261 = vld [vmem:[#allocation2 + $0x14] sm:$0xf]
        %v7262 = vld [vmem:[#allocation2 + $0x18] sm:$0xff]
        %v7263 = vld [vmem:[#allocation2 + $0x20] sm:$0xf]
        %v7264 = vld [vmem:[#allocation2 + $0x24] sm:$0xff]
        %v7265 = vld [vmem:[#allocation2 + $0x2c] sm:$0xf]
        %v7266 = vld [vmem:[#allocation2 + $0x30] sm:$0xff]
        %v7267 = vld [vmem:[#allocation2 + $0x38] sm:$0xf]
        %v7268 = vld [vmem:[#allocation2 + $0x3c] sm:$0xff]
        %v7269 = vld [vmem:[#allocation2 + $0x44] sm:$0xf]
        %v7270 = vld [vmem:[#allocation2 + $0x48] sm:$0xff]
        %v7271 = vld [vmem:[#allocation2 + $0x50] sm:$0xf]
        %v7272 = vld [vmem:[#allocation2 + $0x54] sm:$0xff]
        %v7273 = vld [vmem:[#allocation2 + $0x5c] sm:$0xf]
        %v7274 = vld [vmem:[#allocation2 + $0x60] sm:$0xff]
        %v7275 = vld [vmem:[#allocation2 + $0x68] sm:$0xf]
        %v7276 = vld [vmem:[#allocation2 + $0x6c] sm:$0xff]
        %v7277 = vld [vmem:[#allocation2 + $0x74] sm:$0xf]
        %v7278 = vld [vmem:[#allocation2 + $0x78] sm:$0xff]
        %v7279 = vld [vmem:[#allocation2 + $0x80] sm:$0xf]
        %v7280 = vld [vmem:[#allocation2 + $0x84] sm:$0xff]
        %v7281 = vld [vmem:[#allocation2 + $0x8c] sm:$0xf]
        %v7282 = vld [vmem:[#allocation2 + $0x90] sm:$0xff]
        %v7283 = vld [vmem:[#allocation2 + $0x98] sm:$0xf]
        %v7284 = vld [vmem:[#allocation2 + $0x9c] sm:$0xff]
        %v7285 = vld [vmem:[#allocation2 + $0xa4] sm:$0xf]
        %v7286 = vld [vmem:[#allocation2 + $0xa8] sm:$0xff]
        %v7287 = vld [vmem:[#allocation2 + $0xb0] sm:$0xf]
        %v7288 = vld [vmem:[#allocation2 + $0xb4] sm:$0xff]
        %v7289 = vld [vmem:[#allocation2 + $0xbc] sm:$0xf]
        %v7290 = vld [vmem:[#allocation2 + $0xc0] sm:$0xff]
        %v7291 = vld [vmem:[#allocation2 + $0xc8] sm:$0xf]
        %v7292 = vld [vmem:[#allocation2 + $0xcc] sm:$0xff]
        %v7293 = vld [vmem:[#allocation2 + $0xd4] sm:$0xf]
        %v7294 = vld [vmem:[#allocation2 + $0xd8] sm:$0xff]
        %v7295 = vld [vmem:[#allocation2 + $0xe0] sm:$0xf]
        %v7296 = vld [vmem:[#allocation2 + $0xe4] sm:$0xff]
        %v7297 = vld [vmem:[#allocation2 + $0xec] sm:$0xf]
        %v7298 = vld [vmem:[#allocation2 + $0xf0] sm:$0xff]
        %v7299 = vld [vmem:[#allocation2 + $0xf8] sm:$0xf]
        %v7300 = vld [vmem:[#allocation2 + $0xfc] sm:$0xff]
        %v7301 = vld [vmem:[#allocation2 + $0x104] sm:$0xf]
        %v7302 = vld [vmem:[#allocation2 + $0x108] sm:$0xff]
        %v7303 = vld [vmem:[#allocation2 + $0x110] sm:$0xf]
        %v7304 = vld [vmem:[#allocation2 + $0x114] sm:$0xff]
        %v7305 = vld [vmem:[#allocation2 + $0x11c] sm:$0xf]
        %v7306 = vld [vmem:[#allocation2 + $0x120] sm:$0xff]
        %v7307 = vld [vmem:[#allocation2 + $0x128] sm:$0xf]
        %v7308 = vld [vmem:[#allocation2 + $0x12c] sm:$0xff]
        %v7309 = vld [vmem:[#allocation2 + $0x134] sm:$0xf]
        %v7310 = vld [vmem:[#allocation2 + $0x138] sm:$0xff]
        %v7311 = vld [vmem:[#allocation2 + $0x140] sm:$0xf]
        %v7312 = vld [vmem:[#allocation2 + $0x144] sm:$0xff]
        %v7313 = vld [vmem:[#allocation2 + $0x14c] sm:$0xf]
        %v7314 = vld [vmem:[#allocation2 + $0x150] sm:$0xff]
        %v7315 = vld [vmem:[#allocation2 + $0x158] sm:$0xf]
        %v7316 = vld [vmem:[#allocation2 + $0x15c] sm:$0xff]
        %v7317 = vld [vmem:[#allocation2 + $0x164] sm:$0xf]
        %v7318 = vld [vmem:[#allocation2 + $0x168] sm:$0xff]
        %v7319 = vld [vmem:[#allocation2 + $0x170] sm:$0xf]
        %v7320 = vld [vmem:[#allocation2 + $0x174] sm:$0xff]
        %v7321 = vld [vmem:[#allocation2 + $0x17c] sm:$0xf]
        %v7322 = vld [vmem:[#allocation6] sm:$0xf]
        %v7323 = vld [vmem:[#allocation6 + $0x4] sm:$0xf]
        %v7324 = vld [vmem:[#allocation6 + $0x8] sm:$0xf]
        %v7325 = vld [vmem:[#allocation6 + $0xc] sm:$0xf]
        %v7326 = vld [vmem:[#allocation6 + $0x10] sm:$0xf]
        %v7327 = vld [vmem:[#allocation6 + $0x14] sm:$0xf]
        %v7328 = vld [vmem:[#allocation6 + $0x18] sm:$0xf]
        %v7329 = vld [vmem:[#allocation6 + $0x1c] sm:$0xf]
        %v7330 = vld [vmem:[#allocation6 + $0x20] sm:$0xf]
        %v7331 = vld [vmem:[#allocation6 + $0x24] sm:$0xf]
        %v7332 = vld [vmem:[#allocation6 + $0x28] sm:$0xf]
        %v7333 = vld [vmem:[#allocation6 + $0x2c] sm:$0xf]
        %v7334 = vld [vmem:[#allocation6 + $0x30] sm:$0xf]
        %v7335 = vld [vmem:[#allocation6 + $0x34] sm:$0xf]
        %v7336 = vld [vmem:[#allocation6 + $0x38] sm:$0xf]
        %v7337 = vld [vmem:[#allocation6 + $0x3c] sm:$0xf]
        %v7338 = vld [vmem:[#allocation6 + $0x40] sm:$0xf]
        %v7339 = vld [vmem:[#allocation6 + $0x44] sm:$0xf]
        %v7340 = vld [vmem:[#allocation6 + $0x48] sm:$0xf]
        %v7341 = vld [vmem:[#allocation6 + $0x4c] sm:$0xf]
        %v7342 = vld [vmem:[#allocation6 + $0x50] sm:$0xf]
        %v7343 = vld [vmem:[#allocation6 + $0x54] sm:$0xf]
        %v7344 = vld [vmem:[#allocation6 + $0x58] sm:$0xf]
        %v7345 = vld [vmem:[#allocation6 + $0x5c] sm:$0xf]
        %v7346 = vld [vmem:[#allocation6 + $0x60] sm:$0xf]
        %v7347 = vld [vmem:[#allocation6 + $0x64] sm:$0xf]
        %v7348 = vld [vmem:[#allocation6 + $0x68] sm:$0xf]
        %v7349 = vld [vmem:[#allocation6 + $0x6c] sm:$0xf]
        %v7350 = vld [vmem:[#allocation6 + $0x70] sm:$0xf]
        %v7351 = vld [vmem:[#allocation6 + $0x74] sm:$0xf]
        %v7352 = vld [vmem:[#allocation6 + $0x78] sm:$0xf]
        %v7353 = vld [vmem:[#allocation6 + $0x7c] sm:$0xf]
        %v7354 = vld [vmem:[#allocation6 + $0x80] sm:$0xf]
        %v7355 = vld [vmem:[#allocation6 + $0x84] sm:$0xf]
        %v7356 = vld [vmem:[#allocation6 + $0x88] sm:$0xf]
        %v7357 = vld [vmem:[#allocation6 + $0x8c] sm:$0xf]
        %v7358 = vld [vmem:[#allocation6 + $0x90] sm:$0xf]
        %v7359 = vld [vmem:[#allocation6 + $0x94] sm:$0xf]
        %v7360 = vld [vmem:[#allocation6 + $0x98] sm:$0xf]
        %v7361 = vld [vmem:[#allocation6 + $0x9c] sm:$0xf]
        %v7362 = vld [vmem:[#allocation6 + $0xa0] sm:$0xf]
        %v7363 = vld [vmem:[#allocation6 + $0xa4] sm:$0xf]
        %v7364 = vld [vmem:[#allocation6 + $0xa8] sm:$0xf]
        %v7365 = vld [vmem:[#allocation6 + $0xac] sm:$0xf]
        %v7366 = vld [vmem:[#allocation6 + $0xb0] sm:$0xf]
        %v7367 = vld [vmem:[#allocation6 + $0xb4] sm:$0xf]
        %v7368 = vld [vmem:[#allocation6 + $0xb8] sm:$0xf]
        %v7369 = vld [vmem:[#allocation6 + $0xbc] sm:$0xf]
        %v7370 = vld [vmem:[%s729] sm:$0xff]
        %v7371 = vld [vmem:[%s729 + $0x8] sm:$0xf]
        %v7372 = vld [vmem:[%s729 + $0xc] sm:$0xff]
        %v7373 = vld [vmem:[%s729 + $0x14] sm:$0xf]
        %v7374 = vld [vmem:[%s729 + $0x18] sm:$0xff]
        %v7375 = vld [vmem:[%s729 + $0x20] sm:$0xf]
        %v7376 = vld [vmem:[%s729 + $0x24] sm:$0xff]
        %v7377 = vld [vmem:[%s729 + $0x2c] sm:$0xf]
        %v7378 = vld [vmem:[%s729 + $0x30] sm:$0xff]
        %v7379 = vld [vmem:[%s729 + $0x38] sm:$0xf]
        %v7380 = vld [vmem:[%s729 + $0x3c] sm:$0xff]
        %v7381 = vld [vmem:[%s729 + $0x44] sm:$0xf]
        %v7382 = vld [vmem:[%s729 + $0x48] sm:$0xff]
        %v7383 = vld [vmem:[%s729 + $0x50] sm:$0xf]
        %v7384 = vld [vmem:[%s729 + $0x54] sm:$0xff]
        %v7385 = vld [vmem:[%s729 + $0x5c] sm:$0xf]
        %v7386 = vld [vmem:[%s729 + $0x60] sm:$0xff]
        %v7387 = vld [vmem:[%s729 + $0x68] sm:$0xf]
        %v7388 = vld [vmem:[%s729 + $0x6c] sm:$0xff]
        %v7389 = vld [vmem:[%s729 + $0x74] sm:$0xf]
        %v7390 = vld [vmem:[%s729 + $0x78] sm:$0xff]
        %v7391 = vld [vmem:[%s729 + $0x80] sm:$0xf]
        %v7392 = vld [vmem:[%s729 + $0x84] sm:$0xff]
        %v7393 = vld [vmem:[%s729 + $0x8c] sm:$0xf]
        %v7394 = vld [vmem:[%s729 + $0x90] sm:$0xff]
        %v7395 = vld [vmem:[%s729 + $0x98] sm:$0xf]
        %v7396 = vld [vmem:[%s729 + $0x9c] sm:$0xff]
        %v7397 = vld [vmem:[%s729 + $0xa4] sm:$0xf]
        %v7398 = vld [vmem:[%s729 + $0xa8] sm:$0xff]
        %v7399 = vld [vmem:[%s729 + $0xb0] sm:$0xf]
        %v7400 = vld [vmem:[%s729 + $0xb4] sm:$0xff]
        %v7401 = vld [vmem:[%s729 + $0xbc] sm:$0xf]
        %v7402 = vld [vmem:[%s729 + $0xc0] sm:$0xff]
        %v7403 = vld [vmem:[%s729 + $0xc8] sm:$0xf]
        %v7404 = vld [vmem:[%s729 + $0xcc] sm:$0xff]
        %v7405 = vld [vmem:[%s729 + $0xd4] sm:$0xf]
        %v7406 = vld [vmem:[%s729 + $0xd8] sm:$0xff]
        %v7407 = vld [vmem:[%s729 + $0xe0] sm:$0xf]
        %v7408 = vld [vmem:[%s729 + $0xe4] sm:$0xff]
        %v7409 = vld [vmem:[%s729 + $0xec] sm:$0xf]
        %v7410 = vld [vmem:[%s729 + $0xf0] sm:$0xff]
        %v7411 = vld [vmem:[%s729 + $0xf8] sm:$0xf]
        %v7412 = vld [vmem:[%s729 + $0xfc] sm:$0xff]
        %v7413 = vld [vmem:[%s729 + $0x104] sm:$0xf]
        %v7414 = vld [vmem:[%s729 + $0x108] sm:$0xff]
        %v7415 = vld [vmem:[%s729 + $0x110] sm:$0xf]
        %v7416 = vld [vmem:[%s729 + $0x114] sm:$0xff]
        %v7417 = vld [vmem:[%s729 + $0x11c] sm:$0xf]
        %v7418 = vld [vmem:[%s729 + $0x120] sm:$0xff]
        %v7419 = vld [vmem:[%s729 + $0x128] sm:$0xf]
        %v7420 = vld [vmem:[%s729 + $0x12c] sm:$0xff]
        %v7421 = vld [vmem:[%s729 + $0x134] sm:$0xf]
        %v7422 = vld [vmem:[%s729 + $0x138] sm:$0xff]
        %v7423 = vld [vmem:[%s729 + $0x140] sm:$0xf]
        %v7424 = vld [vmem:[%s729 + $0x144] sm:$0xff]
        %v7425 = vld [vmem:[%s729 + $0x14c] sm:$0xf]
        %v7426 = vld [vmem:[%s729 + $0x150] sm:$0xff]
        %v7427 = vld [vmem:[%s729 + $0x158] sm:$0xf]
        %v7428 = vld [vmem:[%s729 + $0x15c] sm:$0xff]
        %v7429 = vld [vmem:[%s729 + $0x164] sm:$0xf]
        %v7430 = vld [vmem:[%s729 + $0x168] sm:$0xff]
        %v7431 = vld [vmem:[%s729 + $0x170] sm:$0xf]
        %v7432 = vld [vmem:[%s729 + $0x174] sm:$0xff]
        %v7433 = vld [vmem:[%s729 + $0x17c] sm:$0xf]
        %v7434 = vld [vmem:[%s1114] sm:$0xf]
        %v7435 = vld [vmem:[%s1114 + $0x4] sm:$0xf]
        %v7436 = vld [vmem:[%s1114 + $0x8] sm:$0xf]
        %v7437 = vld [vmem:[%s1114 + $0xc] sm:$0xf]
        %v7438 = vld [vmem:[%s1114 + $0x10] sm:$0xf]
        %v7439 = vld [vmem:[%s1114 + $0x14] sm:$0xf]
        %v7440 = vld [vmem:[%s1114 + $0x18] sm:$0xf]
        %v7441 = vld [vmem:[%s1114 + $0x1c] sm:$0xf]
        %v7442 = vld [vmem:[%s1114 + $0x20] sm:$0xf]
        %v7443 = vld [vmem:[%s1114 + $0x24] sm:$0xf]
        %v7444 = vld [vmem:[%s1114 + $0x28] sm:$0xf]
        %v7445 = vld [vmem:[%s1114 + $0x2c] sm:$0xf]
        %v7446 = vld [vmem:[%s1114 + $0x30] sm:$0xf]
        %v7447 = vld [vmem:[%s1114 + $0x34] sm:$0xf]
        %v7448 = vld [vmem:[%s1114 + $0x38] sm:$0xf]
        %v7449 = vld [vmem:[%s1114 + $0x3c] sm:$0xf]
        %v7450 = vld [vmem:[%s1114 + $0x40] sm:$0xf]
        %v7451 = vld [vmem:[%s1114 + $0x44] sm:$0xf]
        %v7452 = vld [vmem:[%s1114 + $0x48] sm:$0xf]
        %v7453 = vld [vmem:[%s1114 + $0x4c] sm:$0xf]
        %v7454 = vld [vmem:[%s1114 + $0x50] sm:$0xf]
        %v7455 = vld [vmem:[%s1114 + $0x54] sm:$0xf]
        %v7456 = vld [vmem:[%s1114 + $0x58] sm:$0xf]
        %v7457 = vld [vmem:[%s1114 + $0x5c] sm:$0xf]
        %v7458 = vld [vmem:[%s1114 + $0x60] sm:$0xf]
        %v7459 = vld [vmem:[%s1114 + $0x64] sm:$0xf]
        %v7460 = vld [vmem:[%s1114 + $0x68] sm:$0xf]
        %v7461 = vld [vmem:[%s1114 + $0x6c] sm:$0xf]
        %v7462 = vld [vmem:[%s1114 + $0x70] sm:$0xf]
        %v7463 = vld [vmem:[%s1114 + $0x74] sm:$0xf]
        %v7464 = vld [vmem:[%s1114 + $0x78] sm:$0xf]
        %v7465 = vld [vmem:[%s1114 + $0x7c] sm:$0xf]
        %v7466 = vld [vmem:[%s1114 + $0x80] sm:$0xf]
        %v7467 = vld [vmem:[%s1114 + $0x84] sm:$0xf]
        %v7468 = vld [vmem:[%s1114 + $0x88] sm:$0xf]
        %v7469 = vld [vmem:[%s1114 + $0x8c] sm:$0xf]
        %v7470 = vld [vmem:[%s1114 + $0x90] sm:$0xf]
        %v7471 = vld [vmem:[%s1114 + $0x94] sm:$0xf]
        %v7472 = vld [vmem:[%s1114 + $0x98] sm:$0xf]
        %v7473 = vld [vmem:[%s1114 + $0x9c] sm:$0xf]
        %v7474 = vld [vmem:[%s1114 + $0xa0] sm:$0xf]
        %v7475 = vld [vmem:[%s1114 + $0xa4] sm:$0xf]
        %v7476 = vld [vmem:[%s1114 + $0xa8] sm:$0xf]
        %v7477 = vld [vmem:[%s1114 + $0xac] sm:$0xf]
        %v7478 = vld [vmem:[%s1114 + $0xb0] sm:$0xf]
        %v7479 = vld [vmem:[%s1114 + $0xb4] sm:$0xf]
        %v7480 = vld [vmem:[%s1114 + $0xb8] sm:$0xf]
        %v7481 = vld [vmem:[%s1114 + $0xbc] sm:$0xf]
        %v7546 = vunpack.c.l.b16 %v7370
        %v7547 = vunpack.c.h.b16 %v7370
        %v7548 = vunpack.c.l.b16 %v7371
        %v7549 = vunpack.c.l.b16 %v7372
        %v7550 = vunpack.c.h.b16 %v7372
        %v7551 = vunpack.c.l.b16 %v7373
        %v7552 = vunpack.c.l.b16 %v7374
        %v7553 = vunpack.c.h.b16 %v7374
        %v7554 = vunpack.c.l.b16 %v7375
        %v7555 = vunpack.c.l.b16 %v7376
        %v7556 = vunpack.c.h.b16 %v7376
        %v7557 = vunpack.c.l.b16 %v7377
        %v7558 = vunpack.c.l.b16 %v7378
        %v7559 = vunpack.c.h.b16 %v7378
        %v7560 = vunpack.c.l.b16 %v7379
        %v7561 = vunpack.c.l.b16 %v7380
        %v7562 = vunpack.c.h.b16 %v7380
        %v7563 = vunpack.c.l.b16 %v7381
        %v7564 = vunpack.c.l.b16 %v7382
        %v7565 = vunpack.c.h.b16 %v7382
        %v7566 = vunpack.c.l.b16 %v7383
        %v7567 = vunpack.c.l.b16 %v7384
        %v7568 = vunpack.c.h.b16 %v7384
        %v7569 = vunpack.c.l.b16 %v7385
        %v7570 = vunpack.c.l.b16 %v7386
        %v7571 = vunpack.c.h.b16 %v7386
        %v7572 = vunpack.c.l.b16 %v7387
        %v7573 = vunpack.c.l.b16 %v7388
        %v7574 = vunpack.c.h.b16 %v7388
        %v7575 = vunpack.c.l.b16 %v7389
        %v7576 = vunpack.c.l.b16 %v7390
        %v7577 = vunpack.c.h.b16 %v7390
        %v7578 = vunpack.c.l.b16 %v7391
        %v7579 = vunpack.c.l.b16 %v7392
        %v7580 = vunpack.c.h.b16 %v7392
        %v7581 = vunpack.c.l.b16 %v7393
        %v7582 = vunpack.c.l.b16 %v7394
        %v7583 = vunpack.c.h.b16 %v7394
        %v7584 = vunpack.c.l.b16 %v7395
        %v7585 = vunpack.c.l.b16 %v7396
        %v7586 = vunpack.c.h.b16 %v7396
        %v7587 = vunpack.c.l.b16 %v7397
        %v7588 = vunpack.c.l.b16 %v7398
        %v7589 = vunpack.c.h.b16 %v7398
        %v7590 = vunpack.c.l.b16 %v7399
        %v7591 = vunpack.c.l.b16 %v7400
        %v7592 = vunpack.c.h.b16 %v7400
        %v7593 = vunpack.c.l.b16 %v7401
        %v7594 = vunpack.c.l.b16 %v7402
        %v7595 = vunpack.c.h.b16 %v7402
        %v7596 = vunpack.c.l.b16 %v7403
        %v7597 = vunpack.c.l.b16 %v7404
        %v7598 = vunpack.c.h.b16 %v7404
        %v7599 = vunpack.c.l.b16 %v7405
        %v7600 = vunpack.c.l.b16 %v7406
        %v7601 = vunpack.c.h.b16 %v7406
        %v7602 = vunpack.c.l.b16 %v7407
        %v7603 = vunpack.c.l.b16 %v7408
        %v7604 = vunpack.c.h.b16 %v7408
        %v7605 = vunpack.c.l.b16 %v7409
        %v7606 = vunpack.c.l.b16 %v7410
        %v7607 = vunpack.c.h.b16 %v7410
        %v7608 = vunpack.c.l.b16 %v7411
        %v7609 = vunpack.c.l.b16 %v7412
        %v7610 = vunpack.c.h.b16 %v7412
        %v7611 = vunpack.c.l.b16 %v7413
        %v7612 = vunpack.c.l.b16 %v7414
        %v7613 = vunpack.c.h.b16 %v7414
        %v7614 = vunpack.c.l.b16 %v7415
        %v7615 = vunpack.c.l.b16 %v7416
        %v7616 = vunpack.c.h.b16 %v7416
        %v7617 = vunpack.c.l.b16 %v7417
        %v7618 = vunpack.c.l.b16 %v7418
        %v7619 = vunpack.c.h.b16 %v7418
        %v7620 = vunpack.c.l.b16 %v7419
        %v7621 = vunpack.c.l.b16 %v7420
        %v7622 = vunpack.c.h.b16 %v7420
        %v7623 = vunpack.c.l.b16 %v7421
        %v7624 = vunpack.c.l.b16 %v7422
        %v7625 = vunpack.c.h.b16 %v7422
        %v7626 = vunpack.c.l.b16 %v7423
        %v7627 = vunpack.c.l.b16 %v7424
        %v7628 = vunpack.c.h.b16 %v7424
        %v7629 = vunpack.c.l.b16 %v7425
        %v7630 = vunpack.c.l.b16 %v7426
        %v7631 = vunpack.c.h.b16 %v7426
        %v7632 = vunpack.c.l.b16 %v7427
        %v7633 = vunpack.c.l.b16 %v7428
        %v7634 = vunpack.c.h.b16 %v7428
        %v7635 = vunpack.c.l.b16 %v7429
        %v7636 = vunpack.c.l.b16 %v7430
        %v7637 = vunpack.c.h.b16 %v7430
        %v7638 = vunpack.c.l.b16 %v7431
        %v7639 = vunpack.c.l.b16 %v7432
        %v7640 = vunpack.c.h.b16 %v7432
        %v7641 = vunpack.c.l.b16 %v7433
        %v7642 = vpack.c.b16 %v7549, %v7546
        %v7643 = vpack.c.b16 %v7550, %v7547
        %v7644 = vpack.c.b16 %v7551, %v7548
        %v7645 = vpack.c.b16 %v7555, %v7552
        %v7646 = vpack.c.b16 %v7556, %v7553
        %v7647 = vpack.c.b16 %v7557, %v7554
        %v7648 = vpack.c.b16 %v7561, %v7558
        %v7649 = vpack.c.b16 %v7562, %v7559
        %v7650 = vpack.c.b16 %v7563, %v7560
        %v7651 = vpack.c.b16 %v7567, %v7564
        %v7652 = vpack.c.b16 %v7568, %v7565
        %v7653 = vpack.c.b16 %v7569, %v7566
        %v7654 = vpack.c.b16 %v7573, %v7570
        %v7655 = vpack.c.b16 %v7574, %v7571
        %v7656 = vpack.c.b16 %v7575, %v7572
        %v7657 = vpack.c.b16 %v7579, %v7576
        %v7658 = vpack.c.b16 %v7580, %v7577
        %v7659 = vpack.c.b16 %v7581, %v7578
        %v7660 = vpack.c.b16 %v7585, %v7582
        %v7661 = vpack.c.b16 %v7586, %v7583
        %v7662 = vpack.c.b16 %v7587, %v7584
        %v7663 = vpack.c.b16 %v7591, %v7588
        %v7664 = vpack.c.b16 %v7592, %v7589
        %v7665 = vpack.c.b16 %v7593, %v7590
        %v7666 = vpack.c.b16 %v7597, %v7594
        %v7667 = vpack.c.b16 %v7598, %v7595
        %v7668 = vpack.c.b16 %v7599, %v7596
        %v7669 = vpack.c.b16 %v7603, %v7600
        %v7670 = vpack.c.b16 %v7604, %v7601
        %v7671 = vpack.c.b16 %v7605, %v7602
        %v7672 = vpack.c.b16 %v7609, %v7606
        %v7673 = vpack.c.b16 %v7610, %v7607
        %v7674 = vpack.c.b16 %v7611, %v7608
        %v7675 = vpack.c.b16 %v7615, %v7612
        %v7676 = vpack.c.b16 %v7616, %v7613
        %v7677 = vpack.c.b16 %v7617, %v7614
        %v7678 = vpack.c.b16 %v7621, %v7618
        %v7679 = vpack.c.b16 %v7622, %v7619
        %v7680 = vpack.c.b16 %v7623, %v7620
        %v7681 = vpack.c.b16 %v7627, %v7624
        %v7682 = vpack.c.b16 %v7628, %v7625
        %v7683 = vpack.c.b16 %v7629, %v7626
        %v7684 = vpack.c.b16 %v7633, %v7630
        %v7685 = vpack.c.b16 %v7634, %v7631
        %v7686 = vpack.c.b16 %v7635, %v7632
        %v7687 = vpack.c.b16 %v7639, %v7636
        %v7688 = vpack.c.b16 %v7640, %v7637
        %v7689 = vpack.c.b16 %v7641, %v7638
        %v7786 = vunpack.c.l.b16 %v7434
        %v7787 = vunpack.c.l.b16 %v7435
        %v7788 = vunpack.c.l.b16 %v7436
        %v7789 = vunpack.c.l.b16 %v7437
        %v7790 = vunpack.c.l.b16 %v7438
        %v7791 = vunpack.c.l.b16 %v7439
        %v7792 = vunpack.c.l.b16 %v7440
        %v7793 = vunpack.c.l.b16 %v7441
        %v7794 = vunpack.c.l.b16 %v7442
        %v7795 = vunpack.c.l.b16 %v7443
        %v7796 = vunpack.c.l.b16 %v7444
        %v7797 = vunpack.c.l.b16 %v7445
        %v7798 = vunpack.c.l.b16 %v7446
        %v7799 = vunpack.c.l.b16 %v7447
        %v7800 = vunpack.c.l.b16 %v7448
        %v7801 = vunpack.c.l.b16 %v7449
        %v7802 = vunpack.c.l.b16 %v7450
        %v7803 = vunpack.c.l.b16 %v7451
        %v7804 = vunpack.c.l.b16 %v7452
        %v7805 = vunpack.c.l.b16 %v7453
        %v7806 = vunpack.c.l.b16 %v7454
        %v7807 = vunpack.c.l.b16 %v7455
        %v7808 = vunpack.c.l.b16 %v7456
        %v7809 = vunpack.c.l.b16 %v7457
        %v7810 = vunpack.c.l.b16 %v7458
        %v7811 = vunpack.c.l.b16 %v7459
        %v7812 = vunpack.c.l.b16 %v7460
        %v7813 = vunpack.c.l.b16 %v7461
        %v7814 = vunpack.c.l.b16 %v7462
        %v7815 = vunpack.c.l.b16 %v7463
        %v7816 = vunpack.c.l.b16 %v7464
        %v7817 = vunpack.c.l.b16 %v7465
        %v7818 = vunpack.c.l.b16 %v7466
        %v7819 = vunpack.c.l.b16 %v7467
        %v7820 = vunpack.c.l.b16 %v7468
        %v7821 = vunpack.c.l.b16 %v7469
        %v7822 = vunpack.c.l.b16 %v7470
        %v7823 = vunpack.c.l.b16 %v7471
        %v7824 = vunpack.c.l.b16 %v7472
        %v7825 = vunpack.c.l.b16 %v7473
        %v7826 = vunpack.c.l.b16 %v7474
        %v7827 = vunpack.c.l.b16 %v7475
        %v7828 = vunpack.c.l.b16 %v7476
        %v7829 = vunpack.c.l.b16 %v7477
        %v7830 = vunpack.c.l.b16 %v7478
        %v7831 = vunpack.c.l.b16 %v7479
        %v7832 = vunpack.c.l.b16 %v7480
        %v7833 = vunpack.c.l.b16 %v7481
        %v7834 = vpack.c.b16 %v7787, %v7786
        %v7835 = vpack.c.b16 %v7789, %v7788
        %v7836 = vpack.c.b16 %v7791, %v7790
        %v7837 = vpack.c.b16 %v7793, %v7792
        %v7838 = vpack.c.b16 %v7795, %v7794
        %v7839 = vpack.c.b16 %v7797, %v7796
        %v7840 = vpack.c.b16 %v7799, %v7798
        %v7841 = vpack.c.b16 %v7801, %v7800
        %v7842 = vpack.c.b16 %v7803, %v7802
        %v7843 = vpack.c.b16 %v7805, %v7804
        %v7844 = vpack.c.b16 %v7807, %v7806
        %v7845 = vpack.c.b16 %v7809, %v7808
        %v7846 = vpack.c.b16 %v7811, %v7810
        %v7847 = vpack.c.b16 %v7813, %v7812
        %v7848 = vpack.c.b16 %v7815, %v7814
        %v7849 = vpack.c.b16 %v7817, %v7816
        %v7850 = vpack.c.b16 %v7819, %v7818
        %v7851 = vpack.c.b16 %v7821, %v7820
        %v7852 = vpack.c.b16 %v7823, %v7822
        %v7853 = vpack.c.b16 %v7825, %v7824
        %v7854 = vpack.c.b16 %v7827, %v7826
        %v7855 = vpack.c.b16 %v7829, %v7828
        %v7856 = vpack.c.b16 %v7831, %v7830
        %v7857 = vpack.c.b16 %v7833, %v7832
        %7882 = vmatpush.bf16.msra.mxu0 %v7841
        %7883 = vmatpush.bf16.msra.mxu0 %v7840
        %7884 = vmatpush.bf16.msra.mxu0 %v7839
        %7885 = vmatpush.bf16.msra.mxu0 %v7838
        %7886 = vmatpush.bf16.msra.mxu0 %v7837
        %7887 = vmatpush.bf16.msra.mxu0 %v7836
        %7888 = vmatpush.bf16.msra.mxu0 %v7835
        %7889 = vmatpush.bf16.msra.mxu0 %v7834
        %7890 = vmatmul.bf16.gmra.mxu0 %v7642
        %v7891 = vpop.f32.mrf.mxu0
        %v7892 = vadd.f32 0.0, %v7891
        %v7893 = vpop.f32.mrf.mxu0
        %v7894 = vadd.f32 0.0, %v7893
        %7895 = vmatmul.bf16.gmra.mxu0 %v7645
        %v7896 = vpop.f32.mrf.mxu0
        %v7897 = vadd.f32 0.0, %v7896
        %v7898 = vpop.f32.mrf.mxu0
        %v7899 = vadd.f32 0.0, %v7898
        %7900 = vmatmul.bf16.gmra.mxu0 %v7648
        %v7901 = vpop.f32.mrf.mxu0
        %v7902 = vadd.f32 0.0, %v7901
        %v7903 = vpop.f32.mrf.mxu0
        %v7904 = vadd.f32 0.0, %v7903
        %7905 = vmatmul.bf16.gmra.mxu0 %v7651
        %v7906 = vpop.f32.mrf.mxu0
        %v7907 = vadd.f32 0.0, %v7906
        %v7908 = vpop.f32.mrf.mxu0
        %v7909 = vadd.f32 0.0, %v7908
        %7910 = vmatmul.bf16.gmra.mxu0 %v7654
        %v7911 = vpop.f32.mrf.mxu0
        %v7912 = vadd.f32 0.0, %v7911
        %v7913 = vpop.f32.mrf.mxu0
        %v7914 = vadd.f32 0.0, %v7913
        %7915 = vmatmul.bf16.gmra.mxu0 %v7657
        %v7916 = vpop.f32.mrf.mxu0
        %v7917 = vadd.f32 0.0, %v7916
        %v7918 = vpop.f32.mrf.mxu0
        %v7919 = vadd.f32 0.0, %v7918
        %7920 = vmatmul.bf16.gmra.mxu0 %v7660
        %v7921 = vpop.f32.mrf.mxu0
        %v7922 = vadd.f32 0.0, %v7921
        %v7923 = vpop.f32.mrf.mxu0
        %v7924 = vadd.f32 0.0, %v7923
        %7925 = vmatmul.bf16.gmra.mxu0 %v7663
        %v7926 = vpop.f32.mrf.mxu0
        %v7927 = vadd.f32 0.0, %v7926
        %v7928 = vpop.f32.mrf.mxu0
        %v7929 = vadd.f32 0.0, %v7928
        %7930 = vmatmul.bf16.gmra.mxu0 %v7666
        %v7931 = vpop.f32.mrf.mxu0
        %v7932 = vadd.f32 0.0, %v7931
        %v7933 = vpop.f32.mrf.mxu0
        %v7934 = vadd.f32 0.0, %v7933
        %7935 = vmatmul.bf16.gmra.mxu0 %v7669
        %v7936 = vpop.f32.mrf.mxu0
        %v7937 = vadd.f32 0.0, %v7936
        %v7938 = vpop.f32.mrf.mxu0
        %v7939 = vadd.f32 0.0, %v7938
        %7940 = vmatmul.bf16.gmra.mxu0 %v7672
        %v7941 = vpop.f32.mrf.mxu0
        %v7942 = vadd.f32 0.0, %v7941
        %v7943 = vpop.f32.mrf.mxu0
        %v7944 = vadd.f32 0.0, %v7943
        %7945 = vmatmul.bf16.gmra.mxu0 %v7675
        %v7946 = vpop.f32.mrf.mxu0
        %v7947 = vadd.f32 0.0, %v7946
        %v7948 = vpop.f32.mrf.mxu0
        %v7949 = vadd.f32 0.0, %v7948
        %7950 = vmatmul.bf16.gmra.mxu0 %v7678
        %v7951 = vpop.f32.mrf.mxu0
        %v7952 = vadd.f32 0.0, %v7951
        %v7953 = vpop.f32.mrf.mxu0
        %v7954 = vadd.f32 0.0, %v7953
        %7955 = vmatmul.bf16.gmra.mxu0 %v7681
        %v7956 = vpop.f32.mrf.mxu0
        %v7957 = vadd.f32 0.0, %v7956
        %v7958 = vpop.f32.mrf.mxu0
        %v7959 = vadd.f32 0.0, %v7958
        %7960 = vmatmul.bf16.gmra.mxu0 %v7684
        %v7961 = vpop.f32.mrf.mxu0
        %v7962 = vadd.f32 0.0, %v7961
        %v7963 = vpop.f32.mrf.mxu0
        %v7964 = vadd.f32 0.0, %v7963
        %7965 = vmatmul.bf16.gmra.mxu0 %v7687
        %v7966 = vpop.f32.mrf.mxu0
        %v7967 = vadd.f32 0.0, %v7966
        %v7968 = vpop.f32.mrf.mxu0
        %v7969 = vadd.f32 0.0, %v7968
        %7970 = vdwg.mxu0
        %7971 = vmatpush.bf16.msra.mxu0 %v7849
        %7972 = vmatpush.bf16.msra.mxu0 %v7848
        %7973 = vmatpush.bf16.msra.mxu0 %v7847
        %7974 = vmatpush.bf16.msra.mxu0 %v7846
        %7975 = vmatpush.bf16.msra.mxu0 %v7845
        %7976 = vmatpush.bf16.msra.mxu0 %v7844
        %7977 = vmatpush.bf16.msra.mxu0 %v7843
        %7978 = vmatpush.bf16.msra.mxu0 %v7842
        %7979 = vmatmul.bf16.gmra.mxu0 %v7643
        %v7980 = vpop.f32.mrf.mxu0
        %v7981 = vadd.f32 %v7892, %v7980
        %v7982 = vpop.f32.mrf.mxu0
        %v7983 = vadd.f32 %v7894, %v7982
        %7984 = vmatmul.bf16.gmra.mxu0 %v7646
        %v7985 = vpop.f32.mrf.mxu0
        %v7986 = vadd.f32 %v7897, %v7985
        %v7987 = vpop.f32.mrf.mxu0
        %v7988 = vadd.f32 %v7899, %v7987
        %7989 = vmatmul.bf16.gmra.mxu0 %v7649
        %v7990 = vpop.f32.mrf.mxu0
        %v7991 = vadd.f32 %v7902, %v7990
        %v7992 = vpop.f32.mrf.mxu0
        %v7993 = vadd.f32 %v7904, %v7992
        %7994 = vmatmul.bf16.gmra.mxu0 %v7652
        %v7995 = vpop.f32.mrf.mxu0
        %v7996 = vadd.f32 %v7907, %v7995
        %v7997 = vpop.f32.mrf.mxu0
        %v7998 = vadd.f32 %v7909, %v7997
        %7999 = vmatmul.bf16.gmra.mxu0 %v7655
        %v8000 = vpop.f32.mrf.mxu0
        %v8001 = vadd.f32 %v7912, %v8000
        %v8002 = vpop.f32.mrf.mxu0
        %v8003 = vadd.f32 %v7914, %v8002
        %8004 = vmatmul.bf16.gmra.mxu0 %v7658
        %v8005 = vpop.f32.mrf.mxu0
        %v8006 = vadd.f32 %v7917, %v8005
        %v8007 = vpop.f32.mrf.mxu0
        %v8008 = vadd.f32 %v7919, %v8007
        %8009 = vmatmul.bf16.gmra.mxu0 %v7661
        %v8010 = vpop.f32.mrf.mxu0
        %v8011 = vadd.f32 %v7922, %v8010
        %v8012 = vpop.f32.mrf.mxu0
        %v8013 = vadd.f32 %v7924, %v8012
        %8014 = vmatmul.bf16.gmra.mxu0 %v7664
        %v8015 = vpop.f32.mrf.mxu0
        %v8016 = vadd.f32 %v7927, %v8015
        %v8017 = vpop.f32.mrf.mxu0
        %v8018 = vadd.f32 %v7929, %v8017
        %8019 = vmatmul.bf16.gmra.mxu0 %v7667
        %v8020 = vpop.f32.mrf.mxu0
        %v8021 = vadd.f32 %v7932, %v8020
        %v8022 = vpop.f32.mrf.mxu0
        %v8023 = vadd.f32 %v7934, %v8022
        %8024 = vmatmul.bf16.gmra.mxu0 %v7670
        %v8025 = vpop.f32.mrf.mxu0
        %v8026 = vadd.f32 %v7937, %v8025
        %v8027 = vpop.f32.mrf.mxu0
        %v8028 = vadd.f32 %v7939, %v8027
        %8029 = vmatmul.bf16.gmra.mxu0 %v7673
        %v8030 = vpop.f32.mrf.mxu0
        %v8031 = vadd.f32 %v7942, %v8030
        %v8032 = vpop.f32.mrf.mxu0
        %v8033 = vadd.f32 %v7944, %v8032
        %8034 = vmatmul.bf16.gmra.mxu0 %v7676
        %v8035 = vpop.f32.mrf.mxu0
        %v8036 = vadd.f32 %v7947, %v8035
        %v8037 = vpop.f32.mrf.mxu0
        %v8038 = vadd.f32 %v7949, %v8037
        %8039 = vmatmul.bf16.gmra.mxu0 %v7679
        %v8040 = vpop.f32.mrf.mxu0
        %v8041 = vadd.f32 %v7952, %v8040
        %v8042 = vpop.f32.mrf.mxu0
        %v8043 = vadd.f32 %v7954, %v8042
        %8044 = vmatmul.bf16.gmra.mxu0 %v7682
        %v8045 = vpop.f32.mrf.mxu0
        %v8046 = vadd.f32 %v7957, %v8045
        %v8047 = vpop.f32.mrf.mxu0
        %v8048 = vadd.f32 %v7959, %v8047
        %8049 = vmatmul.bf16.gmra.mxu0 %v7685
        %v8050 = vpop.f32.mrf.mxu0
        %v8051 = vadd.f32 %v7962, %v8050
        %v8052 = vpop.f32.mrf.mxu0
        %v8053 = vadd.f32 %v7964, %v8052
        %8054 = vmatmul.bf16.gmra.mxu0 %v7688
        %v8055 = vpop.f32.mrf.mxu0
        %v8056 = vadd.f32 %v7967, %v8055
        %v8057 = vpop.f32.mrf.mxu0
        %v8058 = vadd.f32 %v7969, %v8057
        %8059 = vdwg.mxu0
        %8060 = vmatpush.bf16.msra.mxu0 %v7857
        %8061 = vmatpush.bf16.msra.mxu0 %v7856
        %8062 = vmatpush.bf16.msra.mxu0 %v7855
        %8063 = vmatpush.bf16.msra.mxu0 %v7854
        %8064 = vmatpush.bf16.msra.mxu0 %v7853
        %8065 = vmatpush.bf16.msra.mxu0 %v7852
        %8066 = vmatpush.bf16.msra.mxu0 %v7851
        %8067 = vmatpush.bf16.msra.mxu0 %v7850
        %8068 = vmatmul.bf16.gmra.mxu0 %v7644
        %v8069 = vpop.f32.mrf.mxu0
        %v8070 = vadd.f32 %v7981, %v8069
        %v8071 = vpop.f32.mrf.mxu0
        %v8072 = vadd.f32 %v7983, %v8071
        %8073 = vmatmul.bf16.gmra.mxu0 %v7647
        %v8074 = vpop.f32.mrf.mxu0
        %v8075 = vadd.f32 %v7986, %v8074
        %v8076 = vpop.f32.mrf.mxu0
        %v8077 = vadd.f32 %v7988, %v8076
        %8078 = vmatmul.bf16.gmra.mxu0 %v7650
        %v8079 = vpop.f32.mrf.mxu0
        %v8080 = vadd.f32 %v7991, %v8079
        %v8081 = vpop.f32.mrf.mxu0
        %v8082 = vadd.f32 %v7993, %v8081
        %8083 = vmatmul.bf16.gmra.mxu0 %v7653
        %v8084 = vpop.f32.mrf.mxu0
        %v8085 = vadd.f32 %v7996, %v8084
        %v8086 = vpop.f32.mrf.mxu0
        %v8087 = vadd.f32 %v7998, %v8086
        %8088 = vmatmul.bf16.gmra.mxu0 %v7656
        %v8089 = vpop.f32.mrf.mxu0
        %v8090 = vadd.f32 %v8001, %v8089
        %v8091 = vpop.f32.mrf.mxu0
        %v8092 = vadd.f32 %v8003, %v8091
        %8093 = vmatmul.bf16.gmra.mxu0 %v7659
        %v8094 = vpop.f32.mrf.mxu0
        %v8095 = vadd.f32 %v8006, %v8094
        %v8096 = vpop.f32.mrf.mxu0
        %v8097 = vadd.f32 %v8008, %v8096
        %8098 = vmatmul.bf16.gmra.mxu0 %v7662
        %v8099 = vpop.f32.mrf.mxu0
        %v8100 = vadd.f32 %v8011, %v8099
        %v8101 = vpop.f32.mrf.mxu0
        %v8102 = vadd.f32 %v8013, %v8101
        %8103 = vmatmul.bf16.gmra.mxu0 %v7665
        %v8104 = vpop.f32.mrf.mxu0
        %v8105 = vadd.f32 %v8016, %v8104
        %v8106 = vpop.f32.mrf.mxu0
        %v8107 = vadd.f32 %v8018, %v8106
        %8108 = vmatmul.bf16.gmra.mxu0 %v7668
        %v8109 = vpop.f32.mrf.mxu0
        %v8110 = vadd.f32 %v8021, %v8109
        %v8111 = vpop.f32.mrf.mxu0
        %v8112 = vadd.f32 %v8023, %v8111
        %8113 = vmatmul.bf16.gmra.mxu0 %v7671
        %v8114 = vpop.f32.mrf.mxu0
        %v8115 = vadd.f32 %v8026, %v8114
        %v8116 = vpop.f32.mrf.mxu0
        %v8117 = vadd.f32 %v8028, %v8116
        %8118 = vmatmul.bf16.gmra.mxu0 %v7674
        %v8119 = vpop.f32.mrf.mxu0
        %v8120 = vadd.f32 %v8031, %v8119
        %v8121 = vpop.f32.mrf.mxu0
        %v8122 = vadd.f32 %v8033, %v8121
        %8123 = vmatmul.bf16.gmra.mxu0 %v7677
        %v8124 = vpop.f32.mrf.mxu0
        %v8125 = vadd.f32 %v8036, %v8124
        %v8126 = vpop.f32.mrf.mxu0
        %v8127 = vadd.f32 %v8038, %v8126
        %8128 = vmatmul.bf16.gmra.mxu0 %v7680
        %v8129 = vpop.f32.mrf.mxu0
        %v8130 = vadd.f32 %v8041, %v8129
        %v8131 = vpop.f32.mrf.mxu0
        %v8132 = vadd.f32 %v8043, %v8131
        %8133 = vmatmul.bf16.gmra.mxu0 %v7683
        %v8134 = vpop.f32.mrf.mxu0
        %v8135 = vadd.f32 %v8046, %v8134
        %v8136 = vpop.f32.mrf.mxu0
        %v8137 = vadd.f32 %v8048, %v8136
        %8138 = vmatmul.bf16.gmra.mxu0 %v7686
        %v8139 = vpop.f32.mrf.mxu0
        %v8140 = vadd.f32 %v8051, %v8139
        %v8141 = vpop.f32.mrf.mxu0
        %v8142 = vadd.f32 %v8053, %v8141
        %8143 = vmatmul.bf16.gmra.mxu0 %v7689
        %v8144 = vpop.f32.mrf.mxu0
        %v8145 = vadd.f32 %v8056, %v8144
        %v8146 = vpop.f32.mrf.mxu0
        %v8147 = vadd.f32 %v8058, %v8146
        %8148 = vdwg.mxu0
        %v8213 = vunpack.c.l.b16 %v7258
        %v8214 = vunpack.c.h.b16 %v7258
        %v8215 = vunpack.c.l.b16 %v7259
        %v8216 = vunpack.c.l.b16 %v7260
        %v8217 = vunpack.c.h.b16 %v7260
        %v8218 = vunpack.c.l.b16 %v7261
        %v8219 = vunpack.c.l.b16 %v7262
        %v8220 = vunpack.c.h.b16 %v7262
        %v8221 = vunpack.c.l.b16 %v7263
        %v8222 = vunpack.c.l.b16 %v7264
        %v8223 = vunpack.c.h.b16 %v7264
        %v8224 = vunpack.c.l.b16 %v7265
        %v8225 = vunpack.c.l.b16 %v7266
        %v8226 = vunpack.c.h.b16 %v7266
        %v8227 = vunpack.c.l.b16 %v7267
        %v8228 = vunpack.c.l.b16 %v7268
        %v8229 = vunpack.c.h.b16 %v7268
        %v8230 = vunpack.c.l.b16 %v7269
        %v8231 = vunpack.c.l.b16 %v7270
        %v8232 = vunpack.c.h.b16 %v7270
        %v8233 = vunpack.c.l.b16 %v7271
        %v8234 = vunpack.c.l.b16 %v7272
        %v8235 = vunpack.c.h.b16 %v7272
        %v8236 = vunpack.c.l.b16 %v7273
        %v8237 = vunpack.c.l.b16 %v7274
        %v8238 = vunpack.c.h.b16 %v7274
        %v8239 = vunpack.c.l.b16 %v7275
        %v8240 = vunpack.c.l.b16 %v7276
        %v8241 = vunpack.c.h.b16 %v7276
        %v8242 = vunpack.c.l.b16 %v7277
        %v8243 = vunpack.c.l.b16 %v7278
        %v8244 = vunpack.c.h.b16 %v7278
        %v8245 = vunpack.c.l.b16 %v7279
        %v8246 = vunpack.c.l.b16 %v7280
        %v8247 = vunpack.c.h.b16 %v7280
        %v8248 = vunpack.c.l.b16 %v7281
        %v8249 = vunpack.c.l.b16 %v7282
        %v8250 = vunpack.c.h.b16 %v7282
        %v8251 = vunpack.c.l.b16 %v7283
        %v8252 = vunpack.c.l.b16 %v7284
        %v8253 = vunpack.c.h.b16 %v7284
        %v8254 = vunpack.c.l.b16 %v7285
        %v8255 = vunpack.c.l.b16 %v7286
        %v8256 = vunpack.c.h.b16 %v7286
        %v8257 = vunpack.c.l.b16 %v7287
        %v8258 = vunpack.c.l.b16 %v7288
        %v8259 = vunpack.c.h.b16 %v7288
        %v8260 = vunpack.c.l.b16 %v7289
        %v8261 = vunpack.c.l.b16 %v7290
        %v8262 = vunpack.c.h.b16 %v7290
        %v8263 = vunpack.c.l.b16 %v7291
        %v8264 = vunpack.c.l.b16 %v7292
        %v8265 = vunpack.c.h.b16 %v7292
        %v8266 = vunpack.c.l.b16 %v7293
        %v8267 = vunpack.c.l.b16 %v7294
        %v8268 = vunpack.c.h.b16 %v7294
        %v8269 = vunpack.c.l.b16 %v7295
        %v8270 = vunpack.c.l.b16 %v7296
        %v8271 = vunpack.c.h.b16 %v7296
        %v8272 = vunpack.c.l.b16 %v7297
        %v8273 = vunpack.c.l.b16 %v7298
        %v8274 = vunpack.c.h.b16 %v7298
        %v8275 = vunpack.c.l.b16 %v7299
        %v8276 = vunpack.c.l.b16 %v7300
        %v8277 = vunpack.c.h.b16 %v7300
        %v8278 = vunpack.c.l.b16 %v7301
        %v8279 = vunpack.c.l.b16 %v7302
        %v8280 = vunpack.c.h.b16 %v7302
        %v8281 = vunpack.c.l.b16 %v7303
        %v8282 = vunpack.c.l.b16 %v7304
        %v8283 = vunpack.c.h.b16 %v7304
        %v8284 = vunpack.c.l.b16 %v7305
        %v8285 = vunpack.c.l.b16 %v7306
        %v8286 = vunpack.c.h.b16 %v7306
        %v8287 = vunpack.c.l.b16 %v7307
        %v8288 = vunpack.c.l.b16 %v7308
        %v8289 = vunpack.c.h.b16 %v7308
        %v8290 = vunpack.c.l.b16 %v7309
        %v8291 = vunpack.c.l.b16 %v7310
        %v8292 = vunpack.c.h.b16 %v7310
        %v8293 = vunpack.c.l.b16 %v7311
        %v8294 = vunpack.c.l.b16 %v7312
        %v8295 = vunpack.c.h.b16 %v7312
        %v8296 = vunpack.c.l.b16 %v7313
        %v8297 = vunpack.c.l.b16 %v7314
        %v8298 = vunpack.c.h.b16 %v7314
        %v8299 = vunpack.c.l.b16 %v7315
        %v8300 = vunpack.c.l.b16 %v7316
        %v8301 = vunpack.c.h.b16 %v7316
        %v8302 = vunpack.c.l.b16 %v7317
        %v8303 = vunpack.c.l.b16 %v7318
        %v8304 = vunpack.c.h.b16 %v7318
        %v8305 = vunpack.c.l.b16 %v7319
        %v8306 = vunpack.c.l.b16 %v7320
        %v8307 = vunpack.c.h.b16 %v7320
        %v8308 = vunpack.c.l.b16 %v7321
        %v8309 = vpack.c.b16 %v8216, %v8213
        %v8310 = vpack.c.b16 %v8217, %v8214
        %v8311 = vpack.c.b16 %v8218, %v8215
        %v8312 = vpack.c.b16 %v8222, %v8219
        %v8313 = vpack.c.b16 %v8223, %v8220
        %v8314 = vpack.c.b16 %v8224, %v8221
        %v8315 = vpack.c.b16 %v8228, %v8225
        %v8316 = vpack.c.b16 %v8229, %v8226
        %v8317 = vpack.c.b16 %v8230, %v8227
        %v8318 = vpack.c.b16 %v8234, %v8231
        %v8319 = vpack.c.b16 %v8235, %v8232
        %v8320 = vpack.c.b16 %v8236, %v8233
        %v8321 = vpack.c.b16 %v8240, %v8237
        %v8322 = vpack.c.b16 %v8241, %v8238
        %v8323 = vpack.c.b16 %v8242, %v8239
        %v8324 = vpack.c.b16 %v8246, %v8243
        %v8325 = vpack.c.b16 %v8247, %v8244
        %v8326 = vpack.c.b16 %v8248, %v8245
        %v8327 = vpack.c.b16 %v8252, %v8249
        %v8328 = vpack.c.b16 %v8253, %v8250
        %v8329 = vpack.c.b16 %v8254, %v8251
        %v8330 = vpack.c.b16 %v8258, %v8255
        %v8331 = vpack.c.b16 %v8259, %v8256
        %v8332 = vpack.c.b16 %v8260, %v8257
        %v8333 = vpack.c.b16 %v8264, %v8261
        %v8334 = vpack.c.b16 %v8265, %v8262
        %v8335 = vpack.c.b16 %v8266, %v8263
        %v8336 = vpack.c.b16 %v8270, %v8267
        %v8337 = vpack.c.b16 %v8271, %v8268
        %v8338 = vpack.c.b16 %v8272, %v8269
        %v8339 = vpack.c.b16 %v8276, %v8273
        %v8340 = vpack.c.b16 %v8277, %v8274
        %v8341 = vpack.c.b16 %v8278, %v8275
        %v8342 = vpack.c.b16 %v8282, %v8279
        %v8343 = vpack.c.b16 %v8283, %v8280
        %v8344 = vpack.c.b16 %v8284, %v8281
        %v8345 = vpack.c.b16 %v8288, %v8285
        %v8346 = vpack.c.b16 %v8289, %v8286
        %v8347 = vpack.c.b16 %v8290, %v8287
        %v8348 = vpack.c.b16 %v8294, %v8291
        %v8349 = vpack.c.b16 %v8295, %v8292
        %v8350 = vpack.c.b16 %v8296, %v8293
        %v8351 = vpack.c.b16 %v8300, %v8297
        %v8352 = vpack.c.b16 %v8301, %v8298
        %v8353 = vpack.c.b16 %v8302, %v8299
        %v8354 = vpack.c.b16 %v8306, %v8303
        %v8355 = vpack.c.b16 %v8307, %v8304
        %v8356 = vpack.c.b16 %v8308, %v8305
        %v8453 = vunpack.c.l.b16 %v7322
        %v8454 = vunpack.c.l.b16 %v7323
        %v8455 = vunpack.c.l.b16 %v7324
        %v8456 = vunpack.c.l.b16 %v7325
        %v8457 = vunpack.c.l.b16 %v7326
        %v8458 = vunpack.c.l.b16 %v7327
        %v8459 = vunpack.c.l.b16 %v7328
        %v8460 = vunpack.c.l.b16 %v7329
        %v8461 = vunpack.c.l.b16 %v7330
        %v8462 = vunpack.c.l.b16 %v7331
        %v8463 = vunpack.c.l.b16 %v7332
        %v8464 = vunpack.c.l.b16 %v7333
        %v8465 = vunpack.c.l.b16 %v7334
        %v8466 = vunpack.c.l.b16 %v7335
        %v8467 = vunpack.c.l.b16 %v7336
        %v8468 = vunpack.c.l.b16 %v7337
        %v8469 = vunpack.c.l.b16 %v7338
        %v8470 = vunpack.c.l.b16 %v7339
        %v8471 = vunpack.c.l.b16 %v7340
        %v8472 = vunpack.c.l.b16 %v7341
        %v8473 = vunpack.c.l.b16 %v7342
        %v8474 = vunpack.c.l.b16 %v7343
        %v8475 = vunpack.c.l.b16 %v7344
        %v8476 = vunpack.c.l.b16 %v7345
        %v8477 = vunpack.c.l.b16 %v7346
        %v8478 = vunpack.c.l.b16 %v7347
        %v8479 = vunpack.c.l.b16 %v7348
        %v8480 = vunpack.c.l.b16 %v7349
        %v8481 = vunpack.c.l.b16 %v7350
        %v8482 = vunpack.c.l.b16 %v7351
        %v8483 = vunpack.c.l.b16 %v7352
        %v8484 = vunpack.c.l.b16 %v7353
        %v8485 = vunpack.c.l.b16 %v7354
        %v8486 = vunpack.c.l.b16 %v7355
        %v8487 = vunpack.c.l.b16 %v7356
        %v8488 = vunpack.c.l.b16 %v7357
        %v8489 = vunpack.c.l.b16 %v7358
        %v8490 = vunpack.c.l.b16 %v7359
        %v8491 = vunpack.c.l.b16 %v7360
        %v8492 = vunpack.c.l.b16 %v7361
        %v8493 = vunpack.c.l.b16 %v7362
        %v8494 = vunpack.c.l.b16 %v7363
        %v8495 = vunpack.c.l.b16 %v7364
        %v8496 = vunpack.c.l.b16 %v7365
        %v8497 = vunpack.c.l.b16 %v7366
        %v8498 = vunpack.c.l.b16 %v7367
        %v8499 = vunpack.c.l.b16 %v7368
        %v8500 = vunpack.c.l.b16 %v7369
        %v8501 = vpack.c.b16 %v8454, %v8453
        %v8502 = vpack.c.b16 %v8456, %v8455
        %v8503 = vpack.c.b16 %v8458, %v8457
        %v8504 = vpack.c.b16 %v8460, %v8459
        %v8505 = vpack.c.b16 %v8462, %v8461
        %v8506 = vpack.c.b16 %v8464, %v8463
        %v8507 = vpack.c.b16 %v8466, %v8465
        %v8508 = vpack.c.b16 %v8468, %v8467
        %v8509 = vpack.c.b16 %v8470, %v8469
        %v8510 = vpack.c.b16 %v8472, %v8471
        %v8511 = vpack.c.b16 %v8474, %v8473
        %v8512 = vpack.c.b16 %v8476, %v8475
        %v8513 = vpack.c.b16 %v8478, %v8477
        %v8514 = vpack.c.b16 %v8480, %v8479
        %v8515 = vpack.c.b16 %v8482, %v8481
        %v8516 = vpack.c.b16 %v8484, %v8483
        %v8517 = vpack.c.b16 %v8486, %v8485
        %v8518 = vpack.c.b16 %v8488, %v8487
        %v8519 = vpack.c.b16 %v8490, %v8489
        %v8520 = vpack.c.b16 %v8492, %v8491
        %v8521 = vpack.c.b16 %v8494, %v8493
        %v8522 = vpack.c.b16 %v8496, %v8495
        %v8523 = vpack.c.b16 %v8498, %v8497
        %v8524 = vpack.c.b16 %v8500, %v8499
        %8549 = vmatpush.bf16.msra.mxu0 %v8508
        %8550 = vmatpush.bf16.msra.mxu0 %v8507
        %8551 = vmatpush.bf16.msra.mxu0 %v8506
        %8552 = vmatpush.bf16.msra.mxu0 %v8505
        %8553 = vmatpush.bf16.msra.mxu0 %v8504
        %8554 = vmatpush.bf16.msra.mxu0 %v8503
        %8555 = vmatpush.bf16.msra.mxu0 %v8502
        %8556 = vmatpush.bf16.msra.mxu0 %v8501
        %8557 = vmatmul.bf16.gmra.mxu0 %v8309
        %v8558 = vpop.f32.mrf.mxu0
        %v8559 = vadd.f32 %v8070, %v8558
        %v8560 = vpop.f32.mrf.mxu0
        %v8561 = vadd.f32 %v8072, %v8560
        %8562 = vmatmul.bf16.gmra.mxu0 %v8312
        %v8563 = vpop.f32.mrf.mxu0
        %v8564 = vadd.f32 %v8075, %v8563
        %v8565 = vpop.f32.mrf.mxu0
        %v8566 = vadd.f32 %v8077, %v8565
        %8567 = vmatmul.bf16.gmra.mxu0 %v8315
        %v8568 = vpop.f32.mrf.mxu0
        %v8569 = vadd.f32 %v8080, %v8568
        %v8570 = vpop.f32.mrf.mxu0
        %v8571 = vadd.f32 %v8082, %v8570
        %8572 = vmatmul.bf16.gmra.mxu0 %v8318
        %v8573 = vpop.f32.mrf.mxu0
        %v8574 = vadd.f32 %v8085, %v8573
        %v8575 = vpop.f32.mrf.mxu0
        %v8576 = vadd.f32 %v8087, %v8575
        %8577 = vmatmul.bf16.gmra.mxu0 %v8321
        %v8578 = vpop.f32.mrf.mxu0
        %v8579 = vadd.f32 %v8090, %v8578
        %v8580 = vpop.f32.mrf.mxu0
        %v8581 = vadd.f32 %v8092, %v8580
        %8582 = vmatmul.bf16.gmra.mxu0 %v8324
        %v8583 = vpop.f32.mrf.mxu0
        %v8584 = vadd.f32 %v8095, %v8583
        %v8585 = vpop.f32.mrf.mxu0
        %v8586 = vadd.f32 %v8097, %v8585
        %8587 = vmatmul.bf16.gmra.mxu0 %v8327
        %v8588 = vpop.f32.mrf.mxu0
        %v8589 = vadd.f32 %v8100, %v8588
        %v8590 = vpop.f32.mrf.mxu0
        %v8591 = vadd.f32 %v8102, %v8590
        %8592 = vmatmul.bf16.gmra.mxu0 %v8330
        %v8593 = vpop.f32.mrf.mxu0
        %v8594 = vadd.f32 %v8105, %v8593
        %v8595 = vpop.f32.mrf.mxu0
        %v8596 = vadd.f32 %v8107, %v8595
        %8597 = vmatmul.bf16.gmra.mxu0 %v8333
        %v8598 = vpop.f32.mrf.mxu0
        %v8599 = vadd.f32 %v8110, %v8598
        %v8600 = vpop.f32.mrf.mxu0
        %v8601 = vadd.f32 %v8112, %v8600
        %8602 = vmatmul.bf16.gmra.mxu0 %v8336
        %v8603 = vpop.f32.mrf.mxu0
        %v8604 = vadd.f32 %v8115, %v8603
        %v8605 = vpop.f32.mrf.mxu0
        %v8606 = vadd.f32 %v8117, %v8605
        %8607 = vmatmul.bf16.gmra.mxu0 %v8339
        %v8608 = vpop.f32.mrf.mxu0
        %v8609 = vadd.f32 %v8120, %v8608
        %v8610 = vpop.f32.mrf.mxu0
        %v8611 = vadd.f32 %v8122, %v8610
        %8612 = vmatmul.bf16.gmra.mxu0 %v8342
        %v8613 = vpop.f32.mrf.mxu0
        %v8614 = vadd.f32 %v8125, %v8613
        %v8615 = vpop.f32.mrf.mxu0
        %v8616 = vadd.f32 %v8127, %v8615
        %8617 = vmatmul.bf16.gmra.mxu0 %v8345
        %v8618 = vpop.f32.mrf.mxu0
        %v8619 = vadd.f32 %v8130, %v8618
        %v8620 = vpop.f32.mrf.mxu0
        %v8621 = vadd.f32 %v8132, %v8620
        %8622 = vmatmul.bf16.gmra.mxu0 %v8348
        %v8623 = vpop.f32.mrf.mxu0
        %v8624 = vadd.f32 %v8135, %v8623
        %v8625 = vpop.f32.mrf.mxu0
        %v8626 = vadd.f32 %v8137, %v8625
        %8627 = vmatmul.bf16.gmra.mxu0 %v8351
        %v8628 = vpop.f32.mrf.mxu0
        %v8629 = vadd.f32 %v8140, %v8628
        %v8630 = vpop.f32.mrf.mxu0
        %v8631 = vadd.f32 %v8142, %v8630
        %8632 = vmatmul.bf16.gmra.mxu0 %v8354
        %v8633 = vpop.f32.mrf.mxu0
        %v8634 = vadd.f32 %v8145, %v8633
        %v8635 = vpop.f32.mrf.mxu0
        %v8636 = vadd.f32 %v8147, %v8635
        %8637 = vdwg.mxu0
        %8638 = vmatpush.bf16.msra.mxu0 %v8516
        %8639 = vmatpush.bf16.msra.mxu0 %v8515
        %8640 = vmatpush.bf16.msra.mxu0 %v8514
        %8641 = vmatpush.bf16.msra.mxu0 %v8513
        %8642 = vmatpush.bf16.msra.mxu0 %v8512
        %8643 = vmatpush.bf16.msra.mxu0 %v8511
        %8644 = vmatpush.bf16.msra.mxu0 %v8510
        %8645 = vmatpush.bf16.msra.mxu0 %v8509
        %8646 = vmatmul.bf16.gmra.mxu0 %v8310
        %v8647 = vpop.f32.mrf.mxu0
        %v8648 = vadd.f32 %v8559, %v8647
        %v8649 = vpop.f32.mrf.mxu0
        %v8650 = vadd.f32 %v8561, %v8649
        %8651 = vmatmul.bf16.gmra.mxu0 %v8313
        %v8652 = vpop.f32.mrf.mxu0
        %v8653 = vadd.f32 %v8564, %v8652
        %v8654 = vpop.f32.mrf.mxu0
        %v8655 = vadd.f32 %v8566, %v8654
        %8656 = vmatmul.bf16.gmra.mxu0 %v8316
        %v8657 = vpop.f32.mrf.mxu0
        %v8658 = vadd.f32 %v8569, %v8657
        %v8659 = vpop.f32.mrf.mxu0
        %v8660 = vadd.f32 %v8571, %v8659
        %8661 = vmatmul.bf16.gmra.mxu0 %v8319
        %v8662 = vpop.f32.mrf.mxu0
        %v8663 = vadd.f32 %v8574, %v8662
        %v8664 = vpop.f32.mrf.mxu0
        %v8665 = vadd.f32 %v8576, %v8664
        %8666 = vmatmul.bf16.gmra.mxu0 %v8322
        %v8667 = vpop.f32.mrf.mxu0
        %v8668 = vadd.f32 %v8579, %v8667
        %v8669 = vpop.f32.mrf.mxu0
        %v8670 = vadd.f32 %v8581, %v8669
        %8671 = vmatmul.bf16.gmra.mxu0 %v8325
        %v8672 = vpop.f32.mrf.mxu0
        %v8673 = vadd.f32 %v8584, %v8672
        %v8674 = vpop.f32.mrf.mxu0
        %v8675 = vadd.f32 %v8586, %v8674
        %8676 = vmatmul.bf16.gmra.mxu0 %v8328
        %v8677 = vpop.f32.mrf.mxu0
        %v8678 = vadd.f32 %v8589, %v8677
        %v8679 = vpop.f32.mrf.mxu0
        %v8680 = vadd.f32 %v8591, %v8679
        %8681 = vmatmul.bf16.gmra.mxu0 %v8331
        %v8682 = vpop.f32.mrf.mxu0
        %v8683 = vadd.f32 %v8594, %v8682
        %v8684 = vpop.f32.mrf.mxu0
        %v8685 = vadd.f32 %v8596, %v8684
        %8686 = vmatmul.bf16.gmra.mxu0 %v8334
        %v8687 = vpop.f32.mrf.mxu0
        %v8688 = vadd.f32 %v8599, %v8687
        %v8689 = vpop.f32.mrf.mxu0
        %v8690 = vadd.f32 %v8601, %v8689
        %8691 = vmatmul.bf16.gmra.mxu0 %v8337
        %v8692 = vpop.f32.mrf.mxu0
        %v8693 = vadd.f32 %v8604, %v8692
        %v8694 = vpop.f32.mrf.mxu0
        %v8695 = vadd.f32 %v8606, %v8694
        %8696 = vmatmul.bf16.gmra.mxu0 %v8340
        %v8697 = vpop.f32.mrf.mxu0
        %v8698 = vadd.f32 %v8609, %v8697
        %v8699 = vpop.f32.mrf.mxu0
        %v8700 = vadd.f32 %v8611, %v8699
        %8701 = vmatmul.bf16.gmra.mxu0 %v8343
        %v8702 = vpop.f32.mrf.mxu0
        %v8703 = vadd.f32 %v8614, %v8702
        %v8704 = vpop.f32.mrf.mxu0
        %v8705 = vadd.f32 %v8616, %v8704
        %8706 = vmatmul.bf16.gmra.mxu0 %v8346
        %v8707 = vpop.f32.mrf.mxu0
        %v8708 = vadd.f32 %v8619, %v8707
        %v8709 = vpop.f32.mrf.mxu0
        %v8710 = vadd.f32 %v8621, %v8709
        %8711 = vmatmul.bf16.gmra.mxu0 %v8349
        %v8712 = vpop.f32.mrf.mxu0
        %v8713 = vadd.f32 %v8624, %v8712
        %v8714 = vpop.f32.mrf.mxu0
        %v8715 = vadd.f32 %v8626, %v8714
        %8716 = vmatmul.bf16.gmra.mxu0 %v8352
        %v8717 = vpop.f32.mrf.mxu0
        %v8718 = vadd.f32 %v8629, %v8717
        %v8719 = vpop.f32.mrf.mxu0
        %v8720 = vadd.f32 %v8631, %v8719
        %8721 = vmatmul.bf16.gmra.mxu0 %v8355
        %v8722 = vpop.f32.mrf.mxu0
        %v8723 = vadd.f32 %v8634, %v8722
        %v8724 = vpop.f32.mrf.mxu0
        %v8725 = vadd.f32 %v8636, %v8724
        %8726 = vdwg.mxu0
        %8727 = vmatpush.bf16.msra.mxu0 %v8524
        %8728 = vmatpush.bf16.msra.mxu0 %v8523
        %8729 = vmatpush.bf16.msra.mxu0 %v8522
        %8730 = vmatpush.bf16.msra.mxu0 %v8521
        %8731 = vmatpush.bf16.msra.mxu0 %v8520
        %8732 = vmatpush.bf16.msra.mxu0 %v8519
        %8733 = vmatpush.bf16.msra.mxu0 %v8518
        %8734 = vmatpush.bf16.msra.mxu0 %v8517
        %8735 = vmatmul.bf16.gmra.mxu0 %v8311
        %v8736 = vpop.f32.mrf.mxu0
        %v8737 = vadd.f32 %v8648, %v8736
        %v8738 = vpop.f32.mrf.mxu0
        %v8739 = vadd.f32 %v8650, %v8738
        %8740 = vmatmul.bf16.gmra.mxu0 %v8314
        %v8741 = vpop.f32.mrf.mxu0
        %v8742 = vadd.f32 %v8653, %v8741
        %v8743 = vpop.f32.mrf.mxu0
        %v8744 = vadd.f32 %v8655, %v8743
        %8745 = vmatmul.bf16.gmra.mxu0 %v8317
        %v8746 = vpop.f32.mrf.mxu0
        %v8747 = vadd.f32 %v8658, %v8746
        %v8748 = vpop.f32.mrf.mxu0
        %v8749 = vadd.f32 %v8660, %v8748
        %8750 = vmatmul.bf16.gmra.mxu0 %v8320
        %v8751 = vpop.f32.mrf.mxu0
        %v8752 = vadd.f32 %v8663, %v8751
        %v8753 = vpop.f32.mrf.mxu0
        %v8754 = vadd.f32 %v8665, %v8753
        %8755 = vmatmul.bf16.gmra.mxu0 %v8323
        %v8756 = vpop.f32.mrf.mxu0
        %v8757 = vadd.f32 %v8668, %v8756
        %v8758 = vpop.f32.mrf.mxu0
        %v8759 = vadd.f32 %v8670, %v8758
        %8760 = vmatmul.bf16.gmra.mxu0 %v8326
        %v8761 = vpop.f32.mrf.mxu0
        %v8762 = vadd.f32 %v8673, %v8761
        %v8763 = vpop.f32.mrf.mxu0
        %v8764 = vadd.f32 %v8675, %v8763
        %8765 = vmatmul.bf16.gmra.mxu0 %v8329
        %v8766 = vpop.f32.mrf.mxu0
        %v8767 = vadd.f32 %v8678, %v8766
        %v8768 = vpop.f32.mrf.mxu0
        %v8769 = vadd.f32 %v8680, %v8768
        %8770 = vmatmul.bf16.gmra.mxu0 %v8332
        %v8771 = vpop.f32.mrf.mxu0
        %v8772 = vadd.f32 %v8683, %v8771
        %v8773 = vpop.f32.mrf.mxu0
        %v8774 = vadd.f32 %v8685, %v8773
        %8775 = vmatmul.bf16.gmra.mxu0 %v8335
        %v8776 = vpop.f32.mrf.mxu0
        %v8777 = vadd.f32 %v8688, %v8776
        %v8778 = vpop.f32.mrf.mxu0
        %v8779 = vadd.f32 %v8690, %v8778
        %8780 = vmatmul.bf16.gmra.mxu0 %v8338
        %v8781 = vpop.f32.mrf.mxu0
        %v8782 = vadd.f32 %v8693, %v8781
        %v8783 = vpop.f32.mrf.mxu0
        %v8784 = vadd.f32 %v8695, %v8783
        %8785 = vmatmul.bf16.gmra.mxu0 %v8341
        %v8786 = vpop.f32.mrf.mxu0
        %v8787 = vadd.f32 %v8698, %v8786
        %v8788 = vpop.f32.mrf.mxu0
        %v8789 = vadd.f32 %v8700, %v8788
        %8790 = vmatmul.bf16.gmra.mxu0 %v8344
        %v8791 = vpop.f32.mrf.mxu0
        %v8792 = vadd.f32 %v8703, %v8791
        %v8793 = vpop.f32.mrf.mxu0
        %v8794 = vadd.f32 %v8705, %v8793
        %8795 = vmatmul.bf16.gmra.mxu0 %v8347
        %v8796 = vpop.f32.mrf.mxu0
        %v8797 = vadd.f32 %v8708, %v8796
        %v8798 = vpop.f32.mrf.mxu0
        %v8799 = vadd.f32 %v8710, %v8798
        %8800 = vmatmul.bf16.gmra.mxu0 %v8350
        %v8801 = vpop.f32.mrf.mxu0
        %v8802 = vadd.f32 %v8713, %v8801
        %v8803 = vpop.f32.mrf.mxu0
        %v8804 = vadd.f32 %v8715, %v8803
        %8805 = vmatmul.bf16.gmra.mxu0 %v8353
        %v8806 = vpop.f32.mrf.mxu0
        %v8807 = vadd.f32 %v8718, %v8806
        %v8808 = vpop.f32.mrf.mxu0
        %v8809 = vadd.f32 %v8720, %v8808
        %8810 = vmatmul.bf16.gmra.mxu0 %v8356
        %v8811 = vpop.f32.mrf.mxu0
        %v8812 = vadd.f32 %v8723, %v8811
        %v8813 = vpop.f32.mrf.mxu0
        %v8814 = vadd.f32 %v8725, %v8813
        %8815 = vdwg.mxu0
        %v8816 = vld [vmem:[%s2497] sm:$0xff]
        %v8817 = vld [vmem:[%s2497 + $0x8] sm:$0xf]
        %v8818 = vld [vmem:[%s2497 + $0xc] sm:$0xff]
        %v8819 = vld [vmem:[%s2497 + $0x14] sm:$0xf]
        %v8820 = vld [vmem:[%s2497 + $0x18] sm:$0xff]
        %v8821 = vld [vmem:[%s2497 + $0x20] sm:$0xf]
        %v8822 = vld [vmem:[%s2497 + $0x24] sm:$0xff]
        %v8823 = vld [vmem:[%s2497 + $0x2c] sm:$0xf]
        %v8824 = vld [vmem:[%s2497 + $0x30] sm:$0xff]
        %v8825 = vld [vmem:[%s2497 + $0x38] sm:$0xf]
        %v8826 = vld [vmem:[%s2497 + $0x3c] sm:$0xff]
        %v8827 = vld [vmem:[%s2497 + $0x44] sm:$0xf]
        %v8828 = vld [vmem:[%s2497 + $0x48] sm:$0xff]
        %v8829 = vld [vmem:[%s2497 + $0x50] sm:$0xf]
        %v8830 = vld [vmem:[%s2497 + $0x54] sm:$0xff]
        %v8831 = vld [vmem:[%s2497 + $0x5c] sm:$0xf]
        %v8832 = vld [vmem:[%s2497 + $0x60] sm:$0xff]
        %v8833 = vld [vmem:[%s2497 + $0x68] sm:$0xf]
        %v8834 = vld [vmem:[%s2497 + $0x6c] sm:$0xff]
        %v8835 = vld [vmem:[%s2497 + $0x74] sm:$0xf]
        %v8836 = vld [vmem:[%s2497 + $0x78] sm:$0xff]
        %v8837 = vld [vmem:[%s2497 + $0x80] sm:$0xf]
        %v8838 = vld [vmem:[%s2497 + $0x84] sm:$0xff]
        %v8839 = vld [vmem:[%s2497 + $0x8c] sm:$0xf]
        %v8840 = vld [vmem:[%s2497 + $0x90] sm:$0xff]
        %v8841 = vld [vmem:[%s2497 + $0x98] sm:$0xf]
        %v8842 = vld [vmem:[%s2497 + $0x9c] sm:$0xff]
        %v8843 = vld [vmem:[%s2497 + $0xa4] sm:$0xf]
        %v8844 = vld [vmem:[%s2497 + $0xa8] sm:$0xff]
        %v8845 = vld [vmem:[%s2497 + $0xb0] sm:$0xf]
        %v8846 = vld [vmem:[%s2497 + $0xb4] sm:$0xff]
        %v8847 = vld [vmem:[%s2497 + $0xbc] sm:$0xf]
        %v8848 = vld [vmem:[%s2497 + $0xc0] sm:$0xff]
        %v8849 = vld [vmem:[%s2497 + $0xc8] sm:$0xf]
        %v8850 = vld [vmem:[%s2497 + $0xcc] sm:$0xff]
        %v8851 = vld [vmem:[%s2497 + $0xd4] sm:$0xf]
        %v8852 = vld [vmem:[%s2497 + $0xd8] sm:$0xff]
        %v8853 = vld [vmem:[%s2497 + $0xe0] sm:$0xf]
        %v8854 = vld [vmem:[%s2497 + $0xe4] sm:$0xff]
        %v8855 = vld [vmem:[%s2497 + $0xec] sm:$0xf]
        %v8856 = vld [vmem:[%s2497 + $0xf0] sm:$0xff]
        %v8857 = vld [vmem:[%s2497 + $0xf8] sm:$0xf]
        %v8858 = vld [vmem:[%s2497 + $0xfc] sm:$0xff]
        %v8859 = vld [vmem:[%s2497 + $0x104] sm:$0xf]
        %v8860 = vld [vmem:[%s2497 + $0x108] sm:$0xff]
        %v8861 = vld [vmem:[%s2497 + $0x110] sm:$0xf]
        %v8862 = vld [vmem:[%s2497 + $0x114] sm:$0xff]
        %v8863 = vld [vmem:[%s2497 + $0x11c] sm:$0xf]
        %v8864 = vld [vmem:[%s2497 + $0x120] sm:$0xff]
        %v8865 = vld [vmem:[%s2497 + $0x128] sm:$0xf]
        %v8866 = vld [vmem:[%s2497 + $0x12c] sm:$0xff]
        %v8867 = vld [vmem:[%s2497 + $0x134] sm:$0xf]
        %v8868 = vld [vmem:[%s2497 + $0x138] sm:$0xff]
        %v8869 = vld [vmem:[%s2497 + $0x140] sm:$0xf]
        %v8870 = vld [vmem:[%s2497 + $0x144] sm:$0xff]
        %v8871 = vld [vmem:[%s2497 + $0x14c] sm:$0xf]
        %v8872 = vld [vmem:[%s2497 + $0x150] sm:$0xff]
        %v8873 = vld [vmem:[%s2497 + $0x158] sm:$0xf]
        %v8874 = vld [vmem:[%s2497 + $0x15c] sm:$0xff]
        %v8875 = vld [vmem:[%s2497 + $0x164] sm:$0xf]
        %v8876 = vld [vmem:[%s2497 + $0x168] sm:$0xff]
        %v8877 = vld [vmem:[%s2497 + $0x170] sm:$0xf]
        %v8878 = vld [vmem:[%s2497 + $0x174] sm:$0xff]
        %v8879 = vld [vmem:[%s2497 + $0x17c] sm:$0xf]
        %v8880 = vld [vmem:[%s2562] sm:$0xf]
        %v8881 = vld [vmem:[%s2562 + $0x4] sm:$0xf]
        %v8882 = vld [vmem:[%s2562 + $0x8] sm:$0xf]
        %v8883 = vld [vmem:[%s2562 + $0xc] sm:$0xf]
        %v8884 = vld [vmem:[%s2562 + $0x10] sm:$0xf]
        %v8885 = vld [vmem:[%s2562 + $0x14] sm:$0xf]
        %v8886 = vld [vmem:[%s2562 + $0x18] sm:$0xf]
        %v8887 = vld [vmem:[%s2562 + $0x1c] sm:$0xf]
        %v8888 = vld [vmem:[%s2562 + $0x20] sm:$0xf]
        %v8889 = vld [vmem:[%s2562 + $0x24] sm:$0xf]
        %v8890 = vld [vmem:[%s2562 + $0x28] sm:$0xf]
        %v8891 = vld [vmem:[%s2562 + $0x2c] sm:$0xf]
        %v8892 = vld [vmem:[%s2562 + $0x30] sm:$0xf]
        %v8893 = vld [vmem:[%s2562 + $0x34] sm:$0xf]
        %v8894 = vld [vmem:[%s2562 + $0x38] sm:$0xf]
        %v8895 = vld [vmem:[%s2562 + $0x3c] sm:$0xf]
        %v8896 = vld [vmem:[%s2562 + $0x40] sm:$0xf]
        %v8897 = vld [vmem:[%s2562 + $0x44] sm:$0xf]
        %v8898 = vld [vmem:[%s2562 + $0x48] sm:$0xf]
        %v8899 = vld [vmem:[%s2562 + $0x4c] sm:$0xf]
        %v8900 = vld [vmem:[%s2562 + $0x50] sm:$0xf]
        %v8901 = vld [vmem:[%s2562 + $0x54] sm:$0xf]
        %v8902 = vld [vmem:[%s2562 + $0x58] sm:$0xf]
        %v8903 = vld [vmem:[%s2562 + $0x5c] sm:$0xf]
        %v8904 = vld [vmem:[%s2562 + $0x60] sm:$0xf]
        %v8905 = vld [vmem:[%s2562 + $0x64] sm:$0xf]
        %v8906 = vld [vmem:[%s2562 + $0x68] sm:$0xf]
        %v8907 = vld [vmem:[%s2562 + $0x6c] sm:$0xf]
        %v8908 = vld [vmem:[%s2562 + $0x70] sm:$0xf]
        %v8909 = vld [vmem:[%s2562 + $0x74] sm:$0xf]
        %v8910 = vld [vmem:[%s2562 + $0x78] sm:$0xf]
        %v8911 = vld [vmem:[%s2562 + $0x7c] sm:$0xf]
        %v8912 = vld [vmem:[%s2562 + $0x80] sm:$0xf]
        %v8913 = vld [vmem:[%s2562 + $0x84] sm:$0xf]
        %v8914 = vld [vmem:[%s2562 + $0x88] sm:$0xf]
        %v8915 = vld [vmem:[%s2562 + $0x8c] sm:$0xf]
        %v8916 = vld [vmem:[%s2562 + $0x90] sm:$0xf]
        %v8917 = vld [vmem:[%s2562 + $0x94] sm:$0xf]
        %v8918 = vld [vmem:[%s2562 + $0x98] sm:$0xf]
        %v8919 = vld [vmem:[%s2562 + $0x9c] sm:$0xf]
        %v8920 = vld [vmem:[%s2562 + $0xa0] sm:$0xf]
        %v8921 = vld [vmem:[%s2562 + $0xa4] sm:$0xf]
        %v8922 = vld [vmem:[%s2562 + $0xa8] sm:$0xf]
        %v8923 = vld [vmem:[%s2562 + $0xac] sm:$0xf]
        %v8924 = vld [vmem:[%s2562 + $0xb0] sm:$0xf]
        %v8925 = vld [vmem:[%s2562 + $0xb4] sm:$0xf]
        %v8926 = vld [vmem:[%s2562 + $0xb8] sm:$0xf]
        %v8927 = vld [vmem:[%s2562 + $0xbc] sm:$0xf]
        %v8992 = vunpack.c.l.b16 %v8816
        %v8993 = vunpack.c.h.b16 %v8816
        %v8994 = vunpack.c.l.b16 %v8817
        %v8995 = vunpack.c.l.b16 %v8818
        %v8996 = vunpack.c.h.b16 %v8818
        %v8997 = vunpack.c.l.b16 %v8819
        %v8998 = vunpack.c.l.b16 %v8820
        %v8999 = vunpack.c.h.b16 %v8820
        %v9000 = vunpack.c.l.b16 %v8821
        %v9001 = vunpack.c.l.b16 %v8822
        %v9002 = vunpack.c.h.b16 %v8822
        %v9003 = vunpack.c.l.b16 %v8823
        %v9004 = vunpack.c.l.b16 %v8824
        %v9005 = vunpack.c.h.b16 %v8824
        %v9006 = vunpack.c.l.b16 %v8825
        %v9007 = vunpack.c.l.b16 %v8826
        %v9008 = vunpack.c.h.b16 %v8826
        %v9009 = vunpack.c.l.b16 %v8827
        %v9010 = vunpack.c.l.b16 %v8828
        %v9011 = vunpack.c.h.b16 %v8828
        %v9012 = vunpack.c.l.b16 %v8829
        %v9013 = vunpack.c.l.b16 %v8830
        %v9014 = vunpack.c.h.b16 %v8830
        %v9015 = vunpack.c.l.b16 %v8831
        %v9016 = vunpack.c.l.b16 %v8832
        %v9017 = vunpack.c.h.b16 %v8832
        %v9018 = vunpack.c.l.b16 %v8833
        %v9019 = vunpack.c.l.b16 %v8834
        %v9020 = vunpack.c.h.b16 %v8834
        %v9021 = vunpack.c.l.b16 %v8835
        %v9022 = vunpack.c.l.b16 %v8836
        %v9023 = vunpack.c.h.b16 %v8836
        %v9024 = vunpack.c.l.b16 %v8837
        %v9025 = vunpack.c.l.b16 %v8838
        %v9026 = vunpack.c.h.b16 %v8838
        %v9027 = vunpack.c.l.b16 %v8839
        %v9028 = vunpack.c.l.b16 %v8840
        %v9029 = vunpack.c.h.b16 %v8840
        %v9030 = vunpack.c.l.b16 %v8841
        %v9031 = vunpack.c.l.b16 %v8842
        %v9032 = vunpack.c.h.b16 %v8842
        %v9033 = vunpack.c.l.b16 %v8843
        %v9034 = vunpack.c.l.b16 %v8844
        %v9035 = vunpack.c.h.b16 %v8844
        %v9036 = vunpack.c.l.b16 %v8845
        %v9037 = vunpack.c.l.b16 %v8846
        %v9038 = vunpack.c.h.b16 %v8846
        %v9039 = vunpack.c.l.b16 %v8847
        %v9040 = vunpack.c.l.b16 %v8848
        %v9041 = vunpack.c.h.b16 %v8848
        %v9042 = vunpack.c.l.b16 %v8849
        %v9043 = vunpack.c.l.b16 %v8850
        %v9044 = vunpack.c.h.b16 %v8850
        %v9045 = vunpack.c.l.b16 %v8851
        %v9046 = vunpack.c.l.b16 %v8852
        %v9047 = vunpack.c.h.b16 %v8852
        %v9048 = vunpack.c.l.b16 %v8853
        %v9049 = vunpack.c.l.b16 %v8854
        %v9050 = vunpack.c.h.b16 %v8854
        %v9051 = vunpack.c.l.b16 %v8855
        %v9052 = vunpack.c.l.b16 %v8856
        %v9053 = vunpack.c.h.b16 %v8856
        %v9054 = vunpack.c.l.b16 %v8857
        %v9055 = vunpack.c.l.b16 %v8858
        %v9056 = vunpack.c.h.b16 %v8858
        %v9057 = vunpack.c.l.b16 %v8859
        %v9058 = vunpack.c.l.b16 %v8860
        %v9059 = vunpack.c.h.b16 %v8860
        %v9060 = vunpack.c.l.b16 %v8861
        %v9061 = vunpack.c.l.b16 %v8862
        %v9062 = vunpack.c.h.b16 %v8862
        %v9063 = vunpack.c.l.b16 %v8863
        %v9064 = vunpack.c.l.b16 %v8864
        %v9065 = vunpack.c.h.b16 %v8864
        %v9066 = vunpack.c.l.b16 %v8865
        %v9067 = vunpack.c.l.b16 %v8866
        %v9068 = vunpack.c.h.b16 %v8866
        %v9069 = vunpack.c.l.b16 %v8867
        %v9070 = vunpack.c.l.b16 %v8868
        %v9071 = vunpack.c.h.b16 %v8868
        %v9072 = vunpack.c.l.b16 %v8869
        %v9073 = vunpack.c.l.b16 %v8870
        %v9074 = vunpack.c.h.b16 %v8870
        %v9075 = vunpack.c.l.b16 %v8871
        %v9076 = vunpack.c.l.b16 %v8872
        %v9077 = vunpack.c.h.b16 %v8872
        %v9078 = vunpack.c.l.b16 %v8873
        %v9079 = vunpack.c.l.b16 %v8874
        %v9080 = vunpack.c.h.b16 %v8874
        %v9081 = vunpack.c.l.b16 %v8875
        %v9082 = vunpack.c.l.b16 %v8876
        %v9083 = vunpack.c.h.b16 %v8876
        %v9084 = vunpack.c.l.b16 %v8877
        %v9085 = vunpack.c.l.b16 %v8878
        %v9086 = vunpack.c.h.b16 %v8878
        %v9087 = vunpack.c.l.b16 %v8879
        %v9088 = vpack.c.b16 %v8995, %v8992
        %v9089 = vpack.c.b16 %v8996, %v8993
        %v9090 = vpack.c.b16 %v8997, %v8994
        %v9091 = vpack.c.b16 %v9001, %v8998
        %v9092 = vpack.c.b16 %v9002, %v8999
        %v9093 = vpack.c.b16 %v9003, %v9000
        %v9094 = vpack.c.b16 %v9007, %v9004
        %v9095 = vpack.c.b16 %v9008, %v9005
        %v9096 = vpack.c.b16 %v9009, %v9006
        %v9097 = vpack.c.b16 %v9013, %v9010
        %v9098 = vpack.c.b16 %v9014, %v9011
        %v9099 = vpack.c.b16 %v9015, %v9012
        %v9100 = vpack.c.b16 %v9019, %v9016
        %v9101 = vpack.c.b16 %v9020, %v9017
        %v9102 = vpack.c.b16 %v9021, %v9018
        %v9103 = vpack.c.b16 %v9025, %v9022
        %v9104 = vpack.c.b16 %v9026, %v9023
        %v9105 = vpack.c.b16 %v9027, %v9024
        %v9106 = vpack.c.b16 %v9031, %v9028
        %v9107 = vpack.c.b16 %v9032, %v9029
        %v9108 = vpack.c.b16 %v9033, %v9030
        %v9109 = vpack.c.b16 %v9037, %v9034
        %v9110 = vpack.c.b16 %v9038, %v9035
        %v9111 = vpack.c.b16 %v9039, %v9036
        %v9112 = vpack.c.b16 %v9043, %v9040
        %v9113 = vpack.c.b16 %v9044, %v9041
        %v9114 = vpack.c.b16 %v9045, %v9042
        %v9115 = vpack.c.b16 %v9049, %v9046
        %v9116 = vpack.c.b16 %v9050, %v9047
        %v9117 = vpack.c.b16 %v9051, %v9048
        %v9118 = vpack.c.b16 %v9055, %v9052
        %v9119 = vpack.c.b16 %v9056, %v9053
        %v9120 = vpack.c.b16 %v9057, %v9054
        %v9121 = vpack.c.b16 %v9061, %v9058
        %v9122 = vpack.c.b16 %v9062, %v9059
        %v9123 = vpack.c.b16 %v9063, %v9060
        %v9124 = vpack.c.b16 %v9067, %v9064
        %v9125 = vpack.c.b16 %v9068, %v9065
        %v9126 = vpack.c.b16 %v9069, %v9066
        %v9127 = vpack.c.b16 %v9073, %v9070
        %v9128 = vpack.c.b16 %v9074, %v9071
        %v9129 = vpack.c.b16 %v9075, %v9072
        %v9130 = vpack.c.b16 %v9079, %v9076
        %v9131 = vpack.c.b16 %v9080, %v9077
        %v9132 = vpack.c.b16 %v9081, %v9078
        %v9133 = vpack.c.b16 %v9085, %v9082
        %v9134 = vpack.c.b16 %v9086, %v9083
        %v9135 = vpack.c.b16 %v9087, %v9084
        %v9232 = vunpack.c.l.b16 %v8880
        %v9233 = vunpack.c.l.b16 %v8881
        %v9234 = vunpack.c.l.b16 %v8882
        %v9235 = vunpack.c.l.b16 %v8883
        %v9236 = vunpack.c.l.b16 %v8884
        %v9237 = vunpack.c.l.b16 %v8885
        %v9238 = vunpack.c.l.b16 %v8886
        %v9239 = vunpack.c.l.b16 %v8887
        %v9240 = vunpack.c.l.b16 %v8888
        %v9241 = vunpack.c.l.b16 %v8889
        %v9242 = vunpack.c.l.b16 %v8890
        %v9243 = vunpack.c.l.b16 %v8891
        %v9244 = vunpack.c.l.b16 %v8892
        %v9245 = vunpack.c.l.b16 %v8893
        %v9246 = vunpack.c.l.b16 %v8894
        %v9247 = vunpack.c.l.b16 %v8895
        %v9248 = vunpack.c.l.b16 %v8896
        %v9249 = vunpack.c.l.b16 %v8897
        %v9250 = vunpack.c.l.b16 %v8898
        %v9251 = vunpack.c.l.b16 %v8899
        %v9252 = vunpack.c.l.b16 %v8900
        %v9253 = vunpack.c.l.b16 %v8901
        %v9254 = vunpack.c.l.b16 %v8902
        %v9255 = vunpack.c.l.b16 %v8903
        %v9256 = vunpack.c.l.b16 %v8904
        %v9257 = vunpack.c.l.b16 %v8905
        %v9258 = vunpack.c.l.b16 %v8906
        %v9259 = vunpack.c.l.b16 %v8907
        %v9260 = vunpack.c.l.b16 %v8908
        %v9261 = vunpack.c.l.b16 %v8909
        %v9262 = vunpack.c.l.b16 %v8910
        %v9263 = vunpack.c.l.b16 %v8911
        %v9264 = vunpack.c.l.b16 %v8912
        %v9265 = vunpack.c.l.b16 %v8913
        %v9266 = vunpack.c.l.b16 %v8914
        %v9267 = vunpack.c.l.b16 %v8915
        %v9268 = vunpack.c.l.b16 %v8916
        %v9269 = vunpack.c.l.b16 %v8917
        %v9270 = vunpack.c.l.b16 %v8918
        %v9271 = vunpack.c.l.b16 %v8919
        %v9272 = vunpack.c.l.b16 %v8920
        %v9273 = vunpack.c.l.b16 %v8921
        %v9274 = vunpack.c.l.b16 %v8922
        %v9275 = vunpack.c.l.b16 %v8923
        %v9276 = vunpack.c.l.b16 %v8924
        %v9277 = vunpack.c.l.b16 %v8925
        %v9278 = vunpack.c.l.b16 %v8926
        %v9279 = vunpack.c.l.b16 %v8927
        %v9280 = vpack.c.b16 %v9233, %v9232
        %v9281 = vpack.c.b16 %v9235, %v9234
        %v9282 = vpack.c.b16 %v9237, %v9236
        %v9283 = vpack.c.b16 %v9239, %v9238
        %v9284 = vpack.c.b16 %v9241, %v9240
        %v9285 = vpack.c.b16 %v9243, %v9242
        %v9286 = vpack.c.b16 %v9245, %v9244
        %v9287 = vpack.c.b16 %v9247, %v9246
        %v9288 = vpack.c.b16 %v9249, %v9248
        %v9289 = vpack.c.b16 %v9251, %v9250
        %v9290 = vpack.c.b16 %v9253, %v9252
        %v9291 = vpack.c.b16 %v9255, %v9254
        %v9292 = vpack.c.b16 %v9257, %v9256
        %v9293 = vpack.c.b16 %v9259, %v9258
        %v9294 = vpack.c.b16 %v9261, %v9260
        %v9295 = vpack.c.b16 %v9263, %v9262
        %v9296 = vpack.c.b16 %v9265, %v9264
        %v9297 = vpack.c.b16 %v9267, %v9266
        %v9298 = vpack.c.b16 %v9269, %v9268
        %v9299 = vpack.c.b16 %v9271, %v9270
        %v9300 = vpack.c.b16 %v9273, %v9272
        %v9301 = vpack.c.b16 %v9275, %v9274
        %v9302 = vpack.c.b16 %v9277, %v9276
        %v9303 = vpack.c.b16 %v9279, %v9278
        %9328 = vmatpush.bf16.msra.mxu0 %v9287
        %9329 = vmatpush.bf16.msra.mxu0 %v9286
        %9330 = vmatpush.bf16.msra.mxu0 %v9285
        %9331 = vmatpush.bf16.msra.mxu0 %v9284
        %9332 = vmatpush.bf16.msra.mxu0 %v9283
        %9333 = vmatpush.bf16.msra.mxu0 %v9282
        %9334 = vmatpush.bf16.msra.mxu0 %v9281
        %9335 = vmatpush.bf16.msra.mxu0 %v9280
        %9336 = vmatmul.bf16.gmra.mxu0 %v9088
        %v9337 = vpop.f32.mrf.mxu0
        %v9338 = vadd.f32 0.0, %v9337
        %v9339 = vpop.f32.mrf.mxu0
        %v9340 = vadd.f32 0.0, %v9339
        %9341 = vmatmul.bf16.gmra.mxu0 %v9091
        %v9342 = vpop.f32.mrf.mxu0
        %v9343 = vadd.f32 0.0, %v9342
        %v9344 = vpop.f32.mrf.mxu0
        %v9345 = vadd.f32 0.0, %v9344
        %9346 = vmatmul.bf16.gmra.mxu0 %v9094
        %v9347 = vpop.f32.mrf.mxu0
        %v9348 = vadd.f32 0.0, %v9347
        %v9349 = vpop.f32.mrf.mxu0
        %v9350 = vadd.f32 0.0, %v9349
        %9351 = vmatmul.bf16.gmra.mxu0 %v9097
        %v9352 = vpop.f32.mrf.mxu0
        %v9353 = vadd.f32 0.0, %v9352
        %v9354 = vpop.f32.mrf.mxu0
        %v9355 = vadd.f32 0.0, %v9354
        %9356 = vmatmul.bf16.gmra.mxu0 %v9100
        %v9357 = vpop.f32.mrf.mxu0
        %v9358 = vadd.f32 0.0, %v9357
        %v9359 = vpop.f32.mrf.mxu0
        %v9360 = vadd.f32 0.0, %v9359
        %9361 = vmatmul.bf16.gmra.mxu0 %v9103
        %v9362 = vpop.f32.mrf.mxu0
        %v9363 = vadd.f32 0.0, %v9362
        %v9364 = vpop.f32.mrf.mxu0
        %v9365 = vadd.f32 0.0, %v9364
        %9366 = vmatmul.bf16.gmra.mxu0 %v9106
        %v9367 = vpop.f32.mrf.mxu0
        %v9368 = vadd.f32 0.0, %v9367
        %v9369 = vpop.f32.mrf.mxu0
        %v9370 = vadd.f32 0.0, %v9369
        %9371 = vmatmul.bf16.gmra.mxu0 %v9109
        %v9372 = vpop.f32.mrf.mxu0
        %v9373 = vadd.f32 0.0, %v9372
        %v9374 = vpop.f32.mrf.mxu0
        %v9375 = vadd.f32 0.0, %v9374
        %9376 = vmatmul.bf16.gmra.mxu0 %v9112
        %v9377 = vpop.f32.mrf.mxu0
        %v9378 = vadd.f32 0.0, %v9377
        %v9379 = vpop.f32.mrf.mxu0
        %v9380 = vadd.f32 0.0, %v9379
        %9381 = vmatmul.bf16.gmra.mxu0 %v9115
        %v9382 = vpop.f32.mrf.mxu0
        %v9383 = vadd.f32 0.0, %v9382
        %v9384 = vpop.f32.mrf.mxu0
        %v9385 = vadd.f32 0.0, %v9384
        %9386 = vmatmul.bf16.gmra.mxu0 %v9118
        %v9387 = vpop.f32.mrf.mxu0
        %v9388 = vadd.f32 0.0, %v9387
        %v9389 = vpop.f32.mrf.mxu0
        %v9390 = vadd.f32 0.0, %v9389
        %9391 = vmatmul.bf16.gmra.mxu0 %v9121
        %v9392 = vpop.f32.mrf.mxu0
        %v9393 = vadd.f32 0.0, %v9392
        %v9394 = vpop.f32.mrf.mxu0
        %v9395 = vadd.f32 0.0, %v9394
        %9396 = vmatmul.bf16.gmra.mxu0 %v9124
        %v9397 = vpop.f32.mrf.mxu0
        %v9398 = vadd.f32 0.0, %v9397
        %v9399 = vpop.f32.mrf.mxu0
        %v9400 = vadd.f32 0.0, %v9399
        %9401 = vmatmul.bf16.gmra.mxu0 %v9127
        %v9402 = vpop.f32.mrf.mxu0
        %v9403 = vadd.f32 0.0, %v9402
        %v9404 = vpop.f32.mrf.mxu0
        %v9405 = vadd.f32 0.0, %v9404
        %9406 = vmatmul.bf16.gmra.mxu0 %v9130
        %v9407 = vpop.f32.mrf.mxu0
        %v9408 = vadd.f32 0.0, %v9407
        %v9409 = vpop.f32.mrf.mxu0
        %v9410 = vadd.f32 0.0, %v9409
        %9411 = vmatmul.bf16.gmra.mxu0 %v9133
        %v9412 = vpop.f32.mrf.mxu0
        %v9413 = vadd.f32 0.0, %v9412
        %v9414 = vpop.f32.mrf.mxu0
        %v9415 = vadd.f32 0.0, %v9414
        %9416 = vdwg.mxu0
        %9417 = vmatpush.bf16.msra.mxu0 %v9295
        %9418 = vmatpush.bf16.msra.mxu0 %v9294
        %9419 = vmatpush.bf16.msra.mxu0 %v9293
        %9420 = vmatpush.bf16.msra.mxu0 %v9292
        %9421 = vmatpush.bf16.msra.mxu0 %v9291
        %9422 = vmatpush.bf16.msra.mxu0 %v9290
        %9423 = vmatpush.bf16.msra.mxu0 %v9289
        %9424 = vmatpush.bf16.msra.mxu0 %v9288
        %9425 = vmatmul.bf16.gmra.mxu0 %v9089
        %v9426 = vpop.f32.mrf.mxu0
        %v9427 = vadd.f32 %v9338, %v9426
        %v9428 = vpop.f32.mrf.mxu0
        %v9429 = vadd.f32 %v9340, %v9428
        %9430 = vmatmul.bf16.gmra.mxu0 %v9092
        %v9431 = vpop.f32.mrf.mxu0
        %v9432 = vadd.f32 %v9343, %v9431
        %v9433 = vpop.f32.mrf.mxu0
        %v9434 = vadd.f32 %v9345, %v9433
        %9435 = vmatmul.bf16.gmra.mxu0 %v9095
        %v9436 = vpop.f32.mrf.mxu0
        %v9437 = vadd.f32 %v9348, %v9436
        %v9438 = vpop.f32.mrf.mxu0
        %v9439 = vadd.f32 %v9350, %v9438
        %9440 = vmatmul.bf16.gmra.mxu0 %v9098
        %v9441 = vpop.f32.mrf.mxu0
        %v9442 = vadd.f32 %v9353, %v9441
        %v9443 = vpop.f32.mrf.mxu0
        %v9444 = vadd.f32 %v9355, %v9443
        %9445 = vmatmul.bf16.gmra.mxu0 %v9101
        %v9446 = vpop.f32.mrf.mxu0
        %v9447 = vadd.f32 %v9358, %v9446
        %v9448 = vpop.f32.mrf.mxu0
        %v9449 = vadd.f32 %v9360, %v9448
        %9450 = vmatmul.bf16.gmra.mxu0 %v9104
        %v9451 = vpop.f32.mrf.mxu0
        %v9452 = vadd.f32 %v9363, %v9451
        %v9453 = vpop.f32.mrf.mxu0
        %v9454 = vadd.f32 %v9365, %v9453
        %9455 = vmatmul.bf16.gmra.mxu0 %v9107
        %v9456 = vpop.f32.mrf.mxu0
        %v9457 = vadd.f32 %v9368, %v9456
        %v9458 = vpop.f32.mrf.mxu0
        %v9459 = vadd.f32 %v9370, %v9458
        %9460 = vmatmul.bf16.gmra.mxu0 %v9110
        %v9461 = vpop.f32.mrf.mxu0
        %v9462 = vadd.f32 %v9373, %v9461
        %v9463 = vpop.f32.mrf.mxu0
        %v9464 = vadd.f32 %v9375, %v9463
        %9465 = vmatmul.bf16.gmra.mxu0 %v9113
        %v9466 = vpop.f32.mrf.mxu0
        %v9467 = vadd.f32 %v9378, %v9466
        %v9468 = vpop.f32.mrf.mxu0
        %v9469 = vadd.f32 %v9380, %v9468
        %9470 = vmatmul.bf16.gmra.mxu0 %v9116
        %v9471 = vpop.f32.mrf.mxu0
        %v9472 = vadd.f32 %v9383, %v9471
        %v9473 = vpop.f32.mrf.mxu0
        %v9474 = vadd.f32 %v9385, %v9473
        %9475 = vmatmul.bf16.gmra.mxu0 %v9119
        %v9476 = vpop.f32.mrf.mxu0
        %v9477 = vadd.f32 %v9388, %v9476
        %v9478 = vpop.f32.mrf.mxu0
        %v9479 = vadd.f32 %v9390, %v9478
        %9480 = vmatmul.bf16.gmra.mxu0 %v9122
        %v9481 = vpop.f32.mrf.mxu0
        %v9482 = vadd.f32 %v9393, %v9481
        %v9483 = vpop.f32.mrf.mxu0
        %v9484 = vadd.f32 %v9395, %v9483
        %9485 = vmatmul.bf16.gmra.mxu0 %v9125
        %v9486 = vpop.f32.mrf.mxu0
        %v9487 = vadd.f32 %v9398, %v9486
        %v9488 = vpop.f32.mrf.mxu0
        %v9489 = vadd.f32 %v9400, %v9488
        %9490 = vmatmul.bf16.gmra.mxu0 %v9128
        %v9491 = vpop.f32.mrf.mxu0
        %v9492 = vadd.f32 %v9403, %v9491
        %v9493 = vpop.f32.mrf.mxu0
        %v9494 = vadd.f32 %v9405, %v9493
        %9495 = vmatmul.bf16.gmra.mxu0 %v9131
        %v9496 = vpop.f32.mrf.mxu0
        %v9497 = vadd.f32 %v9408, %v9496
        %v9498 = vpop.f32.mrf.mxu0
        %v9499 = vadd.f32 %v9410, %v9498
        %9500 = vmatmul.bf16.gmra.mxu0 %v9134
        %v9501 = vpop.f32.mrf.mxu0
        %v9502 = vadd.f32 %v9413, %v9501
        %v9503 = vpop.f32.mrf.mxu0
        %v9504 = vadd.f32 %v9415, %v9503
        %9505 = vdwg.mxu0
        %9506 = vmatpush.bf16.msra.mxu0 %v9303
        %9507 = vmatpush.bf16.msra.mxu0 %v9302
        %9508 = vmatpush.bf16.msra.mxu0 %v9301
        %9509 = vmatpush.bf16.msra.mxu0 %v9300
        %9510 = vmatpush.bf16.msra.mxu0 %v9299
        %9511 = vmatpush.bf16.msra.mxu0 %v9298
        %9512 = vmatpush.bf16.msra.mxu0 %v9297
        %9513 = vmatpush.bf16.msra.mxu0 %v9296
        %9514 = vmatmul.bf16.gmra.mxu0 %v9090
        %v9515 = vpop.f32.mrf.mxu0
        %v9516 = vadd.f32 %v9427, %v9515
        %v9517 = vpop.f32.mrf.mxu0
        %v9518 = vadd.f32 %v9429, %v9517
        %9519 = vmatmul.bf16.gmra.mxu0 %v9093
        %v9520 = vpop.f32.mrf.mxu0
        %v9521 = vadd.f32 %v9432, %v9520
        %v9522 = vpop.f32.mrf.mxu0
        %v9523 = vadd.f32 %v9434, %v9522
        %9524 = vmatmul.bf16.gmra.mxu0 %v9096
        %v9525 = vpop.f32.mrf.mxu0
        %v9526 = vadd.f32 %v9437, %v9525
        %v9527 = vpop.f32.mrf.mxu0
        %v9528 = vadd.f32 %v9439, %v9527
        %9529 = vmatmul.bf16.gmra.mxu0 %v9099
        %v9530 = vpop.f32.mrf.mxu0
        %v9531 = vadd.f32 %v9442, %v9530
        %v9532 = vpop.f32.mrf.mxu0
        %v9533 = vadd.f32 %v9444, %v9532
        %9534 = vmatmul.bf16.gmra.mxu0 %v9102
        %v9535 = vpop.f32.mrf.mxu0
        %v9536 = vadd.f32 %v9447, %v9535
        %v9537 = vpop.f32.mrf.mxu0
        %v9538 = vadd.f32 %v9449, %v9537
        %9539 = vmatmul.bf16.gmra.mxu0 %v9105
        %v9540 = vpop.f32.mrf.mxu0
        %v9541 = vadd.f32 %v9452, %v9540
        %v9542 = vpop.f32.mrf.mxu0
        %v9543 = vadd.f32 %v9454, %v9542
        %9544 = vmatmul.bf16.gmra.mxu0 %v9108
        %v9545 = vpop.f32.mrf.mxu0
        %v9546 = vadd.f32 %v9457, %v9545
        %v9547 = vpop.f32.mrf.mxu0
        %v9548 = vadd.f32 %v9459, %v9547
        %9549 = vmatmul.bf16.gmra.mxu0 %v9111
        %v9550 = vpop.f32.mrf.mxu0
        %v9551 = vadd.f32 %v9462, %v9550
        %v9552 = vpop.f32.mrf.mxu0
        %v9553 = vadd.f32 %v9464, %v9552
        %9554 = vmatmul.bf16.gmra.mxu0 %v9114
        %v9555 = vpop.f32.mrf.mxu0
        %v9556 = vadd.f32 %v9467, %v9555
        %v9557 = vpop.f32.mrf.mxu0
        %v9558 = vadd.f32 %v9469, %v9557
        %9559 = vmatmul.bf16.gmra.mxu0 %v9117
        %v9560 = vpop.f32.mrf.mxu0
        %v9561 = vadd.f32 %v9472, %v9560
        %v9562 = vpop.f32.mrf.mxu0
        %v9563 = vadd.f32 %v9474, %v9562
        %9564 = vmatmul.bf16.gmra.mxu0 %v9120
        %v9565 = vpop.f32.mrf.mxu0
        %v9566 = vadd.f32 %v9477, %v9565
        %v9567 = vpop.f32.mrf.mxu0
        %v9568 = vadd.f32 %v9479, %v9567
        %9569 = vmatmul.bf16.gmra.mxu0 %v9123
        %v9570 = vpop.f32.mrf.mxu0
        %v9571 = vadd.f32 %v9482, %v9570
        %v9572 = vpop.f32.mrf.mxu0
        %v9573 = vadd.f32 %v9484, %v9572
        %9574 = vmatmul.bf16.gmra.mxu0 %v9126
        %v9575 = vpop.f32.mrf.mxu0
        %v9576 = vadd.f32 %v9487, %v9575
        %v9577 = vpop.f32.mrf.mxu0
        %v9578 = vadd.f32 %v9489, %v9577
        %9579 = vmatmul.bf16.gmra.mxu0 %v9129
        %v9580 = vpop.f32.mrf.mxu0
        %v9581 = vadd.f32 %v9492, %v9580
        %v9582 = vpop.f32.mrf.mxu0
        %v9583 = vadd.f32 %v9494, %v9582
        %9584 = vmatmul.bf16.gmra.mxu0 %v9132
        %v9585 = vpop.f32.mrf.mxu0
        %v9586 = vadd.f32 %v9497, %v9585
        %v9587 = vpop.f32.mrf.mxu0
        %v9588 = vadd.f32 %v9499, %v9587
        %9589 = vmatmul.bf16.gmra.mxu0 %v9135
        %v9590 = vpop.f32.mrf.mxu0
        %v9591 = vadd.f32 %v9502, %v9590
        %v9592 = vpop.f32.mrf.mxu0
        %v9593 = vadd.f32 %v9504, %v9592
        %9594 = vdwg.mxu0
        %v9595 = vadd.f32 %v8737, %v9516
        %v9596 = vadd.f32 %v8739, %v9518
        %v9597 = vadd.f32 %v8742, %v9521
        %v9598 = vadd.f32 %v8744, %v9523
        %v9599 = vadd.f32 %v8747, %v9526
        %v9600 = vadd.f32 %v8749, %v9528
        %v9601 = vadd.f32 %v8752, %v9531
        %v9602 = vadd.f32 %v8754, %v9533
        %v9603 = vadd.f32 %v8757, %v9536
        %v9604 = vadd.f32 %v8759, %v9538
        %v9605 = vadd.f32 %v8762, %v9541
        %v9606 = vadd.f32 %v8764, %v9543
        %v9607 = vadd.f32 %v8767, %v9546
        %v9608 = vadd.f32 %v8769, %v9548
        %v9609 = vadd.f32 %v8772, %v9551
        %v9610 = vadd.f32 %v8774, %v9553
        %v9611 = vadd.f32 %v8777, %v9556
        %v9612 = vadd.f32 %v8779, %v9558
        %v9613 = vadd.f32 %v8782, %v9561
        %v9614 = vadd.f32 %v8784, %v9563
        %v9615 = vadd.f32 %v8787, %v9566
        %v9616 = vadd.f32 %v8789, %v9568
        %v9617 = vadd.f32 %v8792, %v9571
        %v9618 = vadd.f32 %v8794, %v9573
        %v9619 = vadd.f32 %v8797, %v9576
        %v9620 = vadd.f32 %v8799, %v9578
        %v9621 = vadd.f32 %v8802, %v9581
        %v9622 = vadd.f32 %v8804, %v9583
        %v9623 = vadd.f32 %v8807, %v9586
        %v9624 = vadd.f32 %v8809, %v9588
        %v9625 = vadd.f32 %v8812, %v9591
        %v9626 = vadd.f32 %v8814, %v9593
        %v9627 = vld [vmem:[%s2] sm:$0x1]
        %v9629 = vperm.slane %v9627, 0
        %v9631 = vadd.f32 %v9595, %v9629
        %v9632 = vadd.f32 %v9596, %v9629
        %v9633 = vadd.f32 %v9597, %v9629
        %v9634 = vadd.f32 %v9598, %v9629
        %v9635 = vadd.f32 %v9599, %v9629
        %v9636 = vadd.f32 %v9600, %v9629
        %v9637 = vadd.f32 %v9601, %v9629
        %v9638 = vadd.f32 %v9602, %v9629
        %v9639 = vadd.f32 %v9603, %v9629
        %v9640 = vadd.f32 %v9604, %v9629
        %v9641 = vadd.f32 %v9605, %v9629
        %v9642 = vadd.f32 %v9606, %v9629
        %v9643 = vadd.f32 %v9607, %v9629
        %v9644 = vadd.f32 %v9608, %v9629
        %v9645 = vadd.f32 %v9609, %v9629
        %v9646 = vadd.f32 %v9610, %v9629
        %v9647 = vadd.f32 %v9611, %v9629
        %v9648 = vadd.f32 %v9612, %v9629
        %v9649 = vadd.f32 %v9613, %v9629
        %v9650 = vadd.f32 %v9614, %v9629
        %v9651 = vadd.f32 %v9615, %v9629
        %v9652 = vadd.f32 %v9616, %v9629
        %v9653 = vadd.f32 %v9617, %v9629
        %v9654 = vadd.f32 %v9618, %v9629
        %v9655 = vadd.f32 %v9619, %v9629
        %v9656 = vadd.f32 %v9620, %v9629
        %v9657 = vadd.f32 %v9621, %v9629
        %v9658 = vadd.f32 %v9622, %v9629
        %v9659 = vadd.f32 %v9623, %v9629
        %v9660 = vadd.f32 %v9624, %v9629
        %v9661 = vadd.f32 %v9625, %v9629
        %v9662 = vadd.f32 %v9626, %v9629
        %v9663 = vmax.f32 %v9631, 0.0
        %v9664 = vmax.f32 %v9632, 0.0
        %v9665 = vmax.f32 %v9633, 0.0
        %v9666 = vmax.f32 %v9634, 0.0
        %v9667 = vmax.f32 %v9635, 0.0
        %v9668 = vmax.f32 %v9636, 0.0
        %v9669 = vmax.f32 %v9637, 0.0
        %v9670 = vmax.f32 %v9638, 0.0
        %v9671 = vmax.f32 %v9639, 0.0
        %v9672 = vmax.f32 %v9640, 0.0
        %v9673 = vmax.f32 %v9641, 0.0
        %v9674 = vmax.f32 %v9642, 0.0
        %v9675 = vmax.f32 %v9643, 0.0
        %v9676 = vmax.f32 %v9644, 0.0
        %v9677 = vmax.f32 %v9645, 0.0
        %v9678 = vmax.f32 %v9646, 0.0
        %v9679 = vmax.f32 %v9647, 0.0
        %v9680 = vmax.f32 %v9648, 0.0
        %v9681 = vmax.f32 %v9649, 0.0
        %v9682 = vmax.f32 %v9650, 0.0
        %v9683 = vmax.f32 %v9651, 0.0
        %v9684 = vmax.f32 %v9652, 0.0
        %v9685 = vmax.f32 %v9653, 0.0
        %v9686 = vmax.f32 %v9654, 0.0
        %v9687 = vmax.f32 %v9655, 0.0
        %v9688 = vmax.f32 %v9656, 0.0
        %v9689 = vmax.f32 %v9657, 0.0
        %v9690 = vmax.f32 %v9658, 0.0
        %v9691 = vmax.f32 %v9659, 0.0
        %v9692 = vmax.f32 %v9660, 0.0
        %v9693 = vmax.f32 %v9661, 0.0
        %v9694 = vmax.f32 %v9662, 0.0
        %v9695 = vpack.c.bf16 %v9663, %v9663
        %v9696 = vpack.c.bf16 %v9664, %v9664
        %v9697 = vpack.c.bf16 %v9665, %v9665
        %v9698 = vpack.c.bf16 %v9666, %v9666
        %v9699 = vpack.c.bf16 %v9667, %v9667
        %v9700 = vpack.c.bf16 %v9668, %v9668
        %v9701 = vpack.c.bf16 %v9669, %v9669
        %v9702 = vpack.c.bf16 %v9670, %v9670
        %v9703 = vpack.c.bf16 %v9671, %v9671
        %v9704 = vpack.c.bf16 %v9672, %v9672
        %v9705 = vpack.c.bf16 %v9673, %v9673
        %v9706 = vpack.c.bf16 %v9674, %v9674
        %v9707 = vpack.c.bf16 %v9675, %v9675
        %v9708 = vpack.c.bf16 %v9676, %v9676
        %v9709 = vpack.c.bf16 %v9677, %v9677
        %v9710 = vpack.c.bf16 %v9678, %v9678
        %v9711 = vpack.c.bf16 %v9679, %v9679
        %v9712 = vpack.c.bf16 %v9680, %v9680
        %v9713 = vpack.c.bf16 %v9681, %v9681
        %v9714 = vpack.c.bf16 %v9682, %v9682
        %v9715 = vpack.c.bf16 %v9683, %v9683
        %v9716 = vpack.c.bf16 %v9684, %v9684
        %v9717 = vpack.c.bf16 %v9685, %v9685
        %v9718 = vpack.c.bf16 %v9686, %v9686
        %v9719 = vpack.c.bf16 %v9687, %v9687
        %v9720 = vpack.c.bf16 %v9688, %v9688
        %v9721 = vpack.c.bf16 %v9689, %v9689
        %v9722 = vpack.c.bf16 %v9690, %v9690
        %v9723 = vpack.c.bf16 %v9691, %v9691
        %v9724 = vpack.c.bf16 %v9692, %v9692
        %v9725 = vpack.c.bf16 %v9693, %v9693
        %v9726 = vpack.c.bf16 %v9694, %v9694
        %v9759 = vunpack.c.l.b16 %v9695
        %v9760 = vunpack.c.l.b16 %v9696
        %v9761 = vunpack.c.l.b16 %v9697
        %v9762 = vunpack.c.l.b16 %v9698
        %v9763 = vunpack.c.l.b16 %v9699
        %v9764 = vunpack.c.l.b16 %v9700
        %v9765 = vunpack.c.l.b16 %v9701
        %v9766 = vunpack.c.l.b16 %v9702
        %v9767 = vunpack.c.l.b16 %v9703
        %v9768 = vunpack.c.l.b16 %v9704
        %v9769 = vunpack.c.l.b16 %v9705
        %v9770 = vunpack.c.l.b16 %v9706
        %v9771 = vunpack.c.l.b16 %v9707
        %v9772 = vunpack.c.l.b16 %v9708
        %v9773 = vunpack.c.l.b16 %v9709
        %v9774 = vunpack.c.l.b16 %v9710
        %v9775 = vunpack.c.l.b16 %v9711
        %v9776 = vunpack.c.l.b16 %v9712
        %v9777 = vunpack.c.l.b16 %v9713
        %v9778 = vunpack.c.l.b16 %v9714
        %v9779 = vunpack.c.l.b16 %v9715
        %v9780 = vunpack.c.l.b16 %v9716
        %v9781 = vunpack.c.l.b16 %v9717
        %v9782 = vunpack.c.l.b16 %v9718
        %v9783 = vunpack.c.l.b16 %v9719
        %v9784 = vunpack.c.l.b16 %v9720
        %v9785 = vunpack.c.l.b16 %v9721
        %v9786 = vunpack.c.l.b16 %v9722
        %v9787 = vunpack.c.l.b16 %v9723
        %v9788 = vunpack.c.l.b16 %v9724
        %v9789 = vunpack.c.l.b16 %v9725
        %v9790 = vunpack.c.l.b16 %v9726
        %v9791 = vpack.c.b16 %v9760, %v9759
        %v9792 = vpack.c.b16 %v9762, %v9761
        %v9793 = vpack.c.b16 %v9764, %v9763
        %v9794 = vpack.c.b16 %v9766, %v9765
        %v9795 = vpack.c.b16 %v9768, %v9767
        %v9796 = vpack.c.b16 %v9770, %v9769
        %v9797 = vpack.c.b16 %v9772, %v9771
        %v9798 = vpack.c.b16 %v9774, %v9773
        %v9799 = vpack.c.b16 %v9776, %v9775
        %v9800 = vpack.c.b16 %v9778, %v9777
        %v9801 = vpack.c.b16 %v9780, %v9779
        %v9802 = vpack.c.b16 %v9782, %v9781
        %v9803 = vpack.c.b16 %v9784, %v9783
        %v9804 = vpack.c.b16 %v9786, %v9785
        %v9805 = vpack.c.b16 %v9788, %v9787
        %v9806 = vpack.c.b16 %v9790, %v9789
        %v9808 = vshrl.u32 %v9791, 16
        %v9810 = vrot.slane %v9808, 7
        %v9811 = vshll.u32 %v9791, 16
        %v9813 = vor.u32 %v9810, %v9811
        %v9815 = vshrl.u32 %v9792, 16
        %v9817 = vrot.slane %v9815, 7
        %v9818 = vshll.u32 %v9792, 16
        %v9820 = vor.u32 %v9817, %v9818
        %v9822 = vshrl.u32 %v9793, 16
        %v9824 = vrot.slane %v9822, 7
        %v9825 = vshll.u32 %v9793, 16
        %v9827 = vor.u32 %v9824, %v9825
        %v9829 = vshrl.u32 %v9794, 16
        %v9831 = vrot.slane %v9829, 7
        %v9832 = vshll.u32 %v9794, 16
        %v9834 = vor.u32 %v9831, %v9832
        %v9836 = vshrl.u32 %v9795, 16
        %v9838 = vrot.slane %v9836, 7
        %v9839 = vshll.u32 %v9795, 16
        %v9841 = vor.u32 %v9838, %v9839
        %v9843 = vshrl.u32 %v9796, 16
        %v9845 = vrot.slane %v9843, 7
        %v9846 = vshll.u32 %v9796, 16
        %v9848 = vor.u32 %v9845, %v9846
        %v9850 = vshrl.u32 %v9797, 16
        %v9852 = vrot.slane %v9850, 7
        %v9853 = vshll.u32 %v9797, 16
        %v9855 = vor.u32 %v9852, %v9853
        %v9857 = vshrl.u32 %v9798, 16
        %v9859 = vrot.slane %v9857, 7
        %v9860 = vshll.u32 %v9798, 16
        %v9862 = vor.u32 %v9859, %v9860
        %v9864 = vshrl.u32 %v9799, 16
        %v9866 = vrot.slane %v9864, 7
        %v9867 = vshll.u32 %v9799, 16
        %v9869 = vor.u32 %v9866, %v9867
        %v9871 = vshrl.u32 %v9800, 16
        %v9873 = vrot.slane %v9871, 7
        %v9874 = vshll.u32 %v9800, 16
        %v9876 = vor.u32 %v9873, %v9874
        %v9878 = vshrl.u32 %v9801, 16
        %v9880 = vrot.slane %v9878, 7
        %v9881 = vshll.u32 %v9801, 16
        %v9883 = vor.u32 %v9880, %v9881
        %v9885 = vshrl.u32 %v9802, 16
        %v9887 = vrot.slane %v9885, 7
        %v9888 = vshll.u32 %v9802, 16
        %v9890 = vor.u32 %v9887, %v9888
        %v9892 = vshrl.u32 %v9803, 16
        %v9894 = vrot.slane %v9892, 7
        %v9895 = vshll.u32 %v9803, 16
        %v9897 = vor.u32 %v9894, %v9895
        %v9899 = vshrl.u32 %v9804, 16
        %v9901 = vrot.slane %v9899, 7
        %v9902 = vshll.u32 %v9804, 16
        %v9904 = vor.u32 %v9901, %v9902
        %v9906 = vshrl.u32 %v9805, 16
        %v9908 = vrot.slane %v9906, 7
        %v9909 = vshll.u32 %v9805, 16
        %v9911 = vor.u32 %v9908, %v9909
        %v9913 = vshrl.u32 %v9806, 16
        %v9915 = vrot.slane %v9913, 7
        %v9916 = vshll.u32 %v9806, 16
        %v9918 = vor.u32 %v9915, %v9916
        %v9935 = vsel %vm533, 0, %v9813
        %v9936 = vsel %vm533, 0, %v9820
        %v9937 = vsel %vm533, 0, %v9827
        %v9938 = vsel %vm533, 0, %v9834
        %v9939 = vsel %vm533, 0, %v9841
        %v9940 = vsel %vm533, 0, %v9848
        %v9941 = vsel %vm533, 0, %v9855
        %v9942 = vsel %vm533, 0, %v9862
        %v9943 = vsel %vm533, 0, %v9869
        %v9944 = vsel %vm533, 0, %v9876
        %v9945 = vsel %vm533, 0, %v9883
        %v9946 = vsel %vm533, 0, %v9890
        %v9947 = vsel %vm533, 0, %v9897
        %v9948 = vsel %vm533, 0, %v9904
        %v9949 = vsel %vm533, 0, %v9911
        %v9950 = vsel %vm533, 0, %v9918
        %v9951 = vrot.slane %v9811, 1
        %v9952 = vor.u32 %v9808, %v9951
        %v9953 = vrot.slane %v9818, 1
        %v9954 = vor.u32 %v9815, %v9953
        %v9955 = vrot.slane %v9825, 1
        %v9956 = vor.u32 %v9822, %v9955
        %v9957 = vrot.slane %v9832, 1
        %v9958 = vor.u32 %v9829, %v9957
        %v9959 = vrot.slane %v9839, 1
        %v9960 = vor.u32 %v9836, %v9959
        %v9961 = vrot.slane %v9846, 1
        %v9962 = vor.u32 %v9843, %v9961
        %v9963 = vrot.slane %v9853, 1
        %v9964 = vor.u32 %v9850, %v9963
        %v9965 = vrot.slane %v9860, 1
        %v9966 = vor.u32 %v9857, %v9965
        %v9967 = vrot.slane %v9867, 1
        %v9968 = vor.u32 %v9864, %v9967
        %v9969 = vrot.slane %v9874, 1
        %v9970 = vor.u32 %v9871, %v9969
        %v9971 = vrot.slane %v9881, 1
        %v9972 = vor.u32 %v9878, %v9971
        %v9973 = vrot.slane %v9888, 1
        %v9974 = vor.u32 %v9885, %v9973
        %v9975 = vrot.slane %v9895, 1
        %v9976 = vor.u32 %v9892, %v9975
        %v9977 = vrot.slane %v9902, 1
        %v9978 = vor.u32 %v9899, %v9977
        %v9979 = vrot.slane %v9909, 1
        %v9980 = vor.u32 %v9906, %v9979
        %v9981 = vrot.slane %v9916, 1
        %v9982 = vor.u32 %v9913, %v9981
        %v9999 = vsel %vm600, %v9952, 0
        %v10000 = vsel %vm600, %v9954, 0
        %v10001 = vsel %vm600, %v9956, 0
        %v10002 = vsel %vm600, %v9958, 0
        %v10003 = vsel %vm600, %v9960, 0
        %v10004 = vsel %vm600, %v9962, 0
        %v10005 = vsel %vm600, %v9964, 0
        %v10006 = vsel %vm600, %v9966, 0
        %v10007 = vsel %vm600, %v9968, 0
        %v10008 = vsel %vm600, %v9970, 0
        %v10009 = vsel %vm600, %v9972, 0
        %v10010 = vsel %vm600, %v9974, 0
        %v10011 = vsel %vm600, %v9976, 0
        %v10012 = vsel %vm600, %v9978, 0
        %v10013 = vsel %vm600, %v9980, 0
        %v10014 = vsel %vm600, %v9982, 0
        %v10031 = vunpack.c.l.b16 %v9935
        %v10032 = vunpack.c.h.b16 %v9935
        %v10033 = vunpack.c.l.b16 %v9936
        %v10034 = vunpack.c.h.b16 %v9936
        %v10035 = vunpack.c.l.b16 %v9937
        %v10036 = vunpack.c.h.b16 %v9937
        %v10037 = vunpack.c.l.b16 %v9938
        %v10038 = vunpack.c.h.b16 %v9938
        %v10039 = vunpack.c.l.b16 %v9939
        %v10040 = vunpack.c.h.b16 %v9939
        %v10041 = vunpack.c.l.b16 %v9940
        %v10042 = vunpack.c.h.b16 %v9940
        %v10043 = vunpack.c.l.b16 %v9941
        %v10044 = vunpack.c.h.b16 %v9941
        %v10045 = vunpack.c.l.b16 %v9942
        %v10046 = vunpack.c.h.b16 %v9942
        %v10047 = vunpack.c.l.b16 %v9943
        %v10048 = vunpack.c.h.b16 %v9943
        %v10049 = vunpack.c.l.b16 %v9944
        %v10050 = vunpack.c.h.b16 %v9944
        %v10051 = vunpack.c.l.b16 %v9945
        %v10052 = vunpack.c.h.b16 %v9945
        %v10053 = vunpack.c.l.b16 %v9946
        %v10054 = vunpack.c.h.b16 %v9946
        %v10055 = vunpack.c.l.b16 %v9947
        %v10056 = vunpack.c.h.b16 %v9947
        %v10057 = vunpack.c.l.b16 %v9948
        %v10058 = vunpack.c.h.b16 %v9948
        %v10059 = vunpack.c.l.b16 %v9949
        %v10060 = vunpack.c.h.b16 %v9949
        %v10061 = vunpack.c.l.b16 %v9950
        %v10062 = vunpack.c.h.b16 %v9950
        %v10063 = vpack.c.b16 %v10031, %v10031
        %v10064 = vpack.c.b16 %v10032, %v10032
        %v10065 = vpack.c.b16 %v10033, %v10033
        %v10066 = vpack.c.b16 %v10034, %v10034
        %v10067 = vpack.c.b16 %v10035, %v10035
        %v10068 = vpack.c.b16 %v10036, %v10036
        %v10069 = vpack.c.b16 %v10037, %v10037
        %v10070 = vpack.c.b16 %v10038, %v10038
        %v10071 = vpack.c.b16 %v10039, %v10039
        %v10072 = vpack.c.b16 %v10040, %v10040
        %v10073 = vpack.c.b16 %v10041, %v10041
        %v10074 = vpack.c.b16 %v10042, %v10042
        %v10075 = vpack.c.b16 %v10043, %v10043
        %v10076 = vpack.c.b16 %v10044, %v10044
        %v10077 = vpack.c.b16 %v10045, %v10045
        %v10078 = vpack.c.b16 %v10046, %v10046
        %v10079 = vpack.c.b16 %v10047, %v10047
        %v10080 = vpack.c.b16 %v10048, %v10048
        %v10081 = vpack.c.b16 %v10049, %v10049
        %v10082 = vpack.c.b16 %v10050, %v10050
        %v10083 = vpack.c.b16 %v10051, %v10051
        %v10084 = vpack.c.b16 %v10052, %v10052
        %v10085 = vpack.c.b16 %v10053, %v10053
        %v10086 = vpack.c.b16 %v10054, %v10054
        %v10087 = vpack.c.b16 %v10055, %v10055
        %v10088 = vpack.c.b16 %v10056, %v10056
        %v10089 = vpack.c.b16 %v10057, %v10057
        %v10090 = vpack.c.b16 %v10058, %v10058
        %v10091 = vpack.c.b16 %v10059, %v10059
        %v10092 = vpack.c.b16 %v10060, %v10060
        %v10093 = vpack.c.b16 %v10061, %v10061
        %v10094 = vpack.c.b16 %v10062, %v10062
        %10127 = vst [vmem:[%s729] sm:$0xf] %v10063
        %10128 = vst [vmem:[%s729 + $0xc] sm:$0xf] %v10064
        %10129 = vst [vmem:[%s729 + $0x18] sm:$0xf] %v10065
        %10130 = vst [vmem:[%s729 + $0x24] sm:$0xf] %v10066
        %10131 = vst [vmem:[%s729 + $0x30] sm:$0xf] %v10067
        %10132 = vst [vmem:[%s729 + $0x3c] sm:$0xf] %v10068
        %10133 = vst [vmem:[%s729 + $0x48] sm:$0xf] %v10069
        %10134 = vst [vmem:[%s729 + $0x54] sm:$0xf] %v10070
        %10135 = vst [vmem:[%s729 + $0x60] sm:$0xf] %v10071
        %10136 = vst [vmem:[%s729 + $0x6c] sm:$0xf] %v10072
        %10137 = vst [vmem:[%s729 + $0x78] sm:$0xf] %v10073
        %10138 = vst [vmem:[%s729 + $0x84] sm:$0xf] %v10074
        %10139 = vst [vmem:[%s729 + $0x90] sm:$0xf] %v10075
        %10140 = vst [vmem:[%s729 + $0x9c] sm:$0xf] %v10076
        %10141 = vst [vmem:[%s729 + $0xa8] sm:$0xf] %v10077
        %10142 = vst [vmem:[%s729 + $0xb4] sm:$0xf] %v10078
        %10143 = vst [vmem:[%s729 + $0xc0] sm:$0xf] %v10079
        %10144 = vst [vmem:[%s729 + $0xcc] sm:$0xf] %v10080
        %10145 = vst [vmem:[%s729 + $0xd8] sm:$0xf] %v10081
        %10146 = vst [vmem:[%s729 + $0xe4] sm:$0xf] %v10082
        %10147 = vst [vmem:[%s729 + $0xf0] sm:$0xf] %v10083
        %10148 = vst [vmem:[%s729 + $0xfc] sm:$0xf] %v10084
        %10149 = vst [vmem:[%s729 + $0x108] sm:$0xf] %v10085
        %10150 = vst [vmem:[%s729 + $0x114] sm:$0xf] %v10086
        %10151 = vst [vmem:[%s729 + $0x120] sm:$0xf] %v10087
        %10152 = vst [vmem:[%s729 + $0x12c] sm:$0xf] %v10088
        %10153 = vst [vmem:[%s729 + $0x138] sm:$0xf] %v10089
        %10154 = vst [vmem:[%s729 + $0x144] sm:$0xf] %v10090
        %10155 = vst [vmem:[%s729 + $0x150] sm:$0xf] %v10091
        %10156 = vst [vmem:[%s729 + $0x15c] sm:$0xf] %v10092
        %10157 = vst [vmem:[%s729 + $0x168] sm:$0xf] %v10093
        %10158 = vst [vmem:[%s729 + $0x174] sm:$0xf] %v10094
        %10159 = vst [vmem:[%s729 + $0x4] sm:$0xf] %v9695
        %10160 = vst [vmem:[%s729 + $0x10] sm:$0xf] %v9696
        %10161 = vst [vmem:[%s729 + $0x1c] sm:$0xf] %v9697
        %10162 = vst [vmem:[%s729 + $0x28] sm:$0xf] %v9698
        %10163 = vst [vmem:[%s729 + $0x34] sm:$0xf] %v9699
        %10164 = vst [vmem:[%s729 + $0x40] sm:$0xf] %v9700
        %10165 = vst [vmem:[%s729 + $0x4c] sm:$0xf] %v9701
        %10166 = vst [vmem:[%s729 + $0x58] sm:$0xf] %v9702
        %10167 = vst [vmem:[%s729 + $0x64] sm:$0xf] %v9703
        %10168 = vst [vmem:[%s729 + $0x70] sm:$0xf] %v9704
        %10169 = vst [vmem:[%s729 + $0x7c] sm:$0xf] %v9705
        %10170 = vst [vmem:[%s729 + $0x88] sm:$0xf] %v9706
        %10171 = vst [vmem:[%s729 + $0x94] sm:$0xf] %v9707
        %10172 = vst [vmem:[%s729 + $0xa0] sm:$0xf] %v9708
        %10173 = vst [vmem:[%s729 + $0xac] sm:$0xf] %v9709
        %10174 = vst [vmem:[%s729 + $0xb8] sm:$0xf] %v9710
        %10175 = vst [vmem:[%s729 + $0xc4] sm:$0xf] %v9711
        %10176 = vst [vmem:[%s729 + $0xd0] sm:$0xf] %v9712
        %10177 = vst [vmem:[%s729 + $0xdc] sm:$0xf] %v9713
        %10178 = vst [vmem:[%s729 + $0xe8] sm:$0xf] %v9714
        %10179 = vst [vmem:[%s729 + $0xf4] sm:$0xf] %v9715
        %10180 = vst [vmem:[%s729 + $0x100] sm:$0xf] %v9716
        %10181 = vst [vmem:[%s729 + $0x10c] sm:$0xf] %v9717
        %10182 = vst [vmem:[%s729 + $0x118] sm:$0xf] %v9718
        %10183 = vst [vmem:[%s729 + $0x124] sm:$0xf] %v9719
        %10184 = vst [vmem:[%s729 + $0x130] sm:$0xf] %v9720
        %10185 = vst [vmem:[%s729 + $0x13c] sm:$0xf] %v9721
        %10186 = vst [vmem:[%s729 + $0x148] sm:$0xf] %v9722
        %10187 = vst [vmem:[%s729 + $0x154] sm:$0xf] %v9723
        %10188 = vst [vmem:[%s729 + $0x160] sm:$0xf] %v9724
        %10189 = vst [vmem:[%s729 + $0x16c] sm:$0xf] %v9725
        %10190 = vst [vmem:[%s729 + $0x178] sm:$0xf] %v9726
        %v10207 = vunpack.c.l.b16 %v9999
        %v10208 = vunpack.c.h.b16 %v9999
        %v10209 = vunpack.c.l.b16 %v10000
        %v10210 = vunpack.c.h.b16 %v10000
        %v10211 = vunpack.c.l.b16 %v10001
        %v10212 = vunpack.c.h.b16 %v10001
        %v10213 = vunpack.c.l.b16 %v10002
        %v10214 = vunpack.c.h.b16 %v10002
        %v10215 = vunpack.c.l.b16 %v10003
        %v10216 = vunpack.c.h.b16 %v10003
        %v10217 = vunpack.c.l.b16 %v10004
        %v10218 = vunpack.c.h.b16 %v10004
        %v10219 = vunpack.c.l.b16 %v10005
        %v10220 = vunpack.c.h.b16 %v10005
        %v10221 = vunpack.c.l.b16 %v10006
        %v10222 = vunpack.c.h.b16 %v10006
        %v10223 = vunpack.c.l.b16 %v10007
        %v10224 = vunpack.c.h.b16 %v10007
        %v10225 = vunpack.c.l.b16 %v10008
        %v10226 = vunpack.c.h.b16 %v10008
        %v10227 = vunpack.c.l.b16 %v10009
        %v10228 = vunpack.c.h.b16 %v10009
        %v10229 = vunpack.c.l.b16 %v10010
        %v10230 = vunpack.c.h.b16 %v10010
        %v10231 = vunpack.c.l.b16 %v10011
        %v10232 = vunpack.c.h.b16 %v10011
        %v10233 = vunpack.c.l.b16 %v10012
        %v10234 = vunpack.c.h.b16 %v10012
        %v10235 = vunpack.c.l.b16 %v10013
        %v10236 = vunpack.c.h.b16 %v10013
        %v10237 = vunpack.c.l.b16 %v10014
        %v10238 = vunpack.c.h.b16 %v10014
        %v10239 = vpack.c.b16 %v10207, %v10207
        %v10240 = vpack.c.b16 %v10208, %v10208
        %v10241 = vpack.c.b16 %v10209, %v10209
        %v10242 = vpack.c.b16 %v10210, %v10210
        %v10243 = vpack.c.b16 %v10211, %v10211
        %v10244 = vpack.c.b16 %v10212, %v10212
        %v10245 = vpack.c.b16 %v10213, %v10213
        %v10246 = vpack.c.b16 %v10214, %v10214
        %v10247 = vpack.c.b16 %v10215, %v10215
        %v10248 = vpack.c.b16 %v10216, %v10216
        %v10249 = vpack.c.b16 %v10217, %v10217
        %v10250 = vpack.c.b16 %v10218, %v10218
        %v10251 = vpack.c.b16 %v10219, %v10219
        %v10252 = vpack.c.b16 %v10220, %v10220
        %v10253 = vpack.c.b16 %v10221, %v10221
        %v10254 = vpack.c.b16 %v10222, %v10222
        %v10255 = vpack.c.b16 %v10223, %v10223
        %v10256 = vpack.c.b16 %v10224, %v10224
        %v10257 = vpack.c.b16 %v10225, %v10225
        %v10258 = vpack.c.b16 %v10226, %v10226
        %v10259 = vpack.c.b16 %v10227, %v10227
        %v10260 = vpack.c.b16 %v10228, %v10228
        %v10261 = vpack.c.b16 %v10229, %v10229
        %v10262 = vpack.c.b16 %v10230, %v10230
        %v10263 = vpack.c.b16 %v10231, %v10231
        %v10264 = vpack.c.b16 %v10232, %v10232
        %v10265 = vpack.c.b16 %v10233, %v10233
        %v10266 = vpack.c.b16 %v10234, %v10234
        %v10267 = vpack.c.b16 %v10235, %v10235
        %v10268 = vpack.c.b16 %v10236, %v10236
        %v10269 = vpack.c.b16 %v10237, %v10237
        %v10270 = vpack.c.b16 %v10238, %v10238
        %10303 = vst [vmem:[%s729 + $0x8] sm:$0xf] %v10239
        %10304 = vst [vmem:[%s729 + $0x14] sm:$0xf] %v10240
        %10305 = vst [vmem:[%s729 + $0x20] sm:$0xf] %v10241
        %10306 = vst [vmem:[%s729 + $0x2c] sm:$0xf] %v10242
        %10307 = vst [vmem:[%s729 + $0x38] sm:$0xf] %v10243
        %10308 = vst [vmem:[%s729 + $0x44] sm:$0xf] %v10244
        %10309 = vst [vmem:[%s729 + $0x50] sm:$0xf] %v10245
        %10310 = vst [vmem:[%s729 + $0x5c] sm:$0xf] %v10246
        %10311 = vst [vmem:[%s729 + $0x68] sm:$0xf] %v10247
        %10312 = vst [vmem:[%s729 + $0x74] sm:$0xf] %v10248
        %10313 = vst [vmem:[%s729 + $0x80] sm:$0xf] %v10249
        %10314 = vst [vmem:[%s729 + $0x8c] sm:$0xf] %v10250
        %10315 = vst [vmem:[%s729 + $0x98] sm:$0xf] %v10251
        %10316 = vst [vmem:[%s729 + $0xa4] sm:$0xf] %v10252
        %10317 = vst [vmem:[%s729 + $0xb0] sm:$0xf] %v10253
        %10318 = vst [vmem:[%s729 + $0xbc] sm:$0xf] %v10254
        %10319 = vst [vmem:[%s729 + $0xc8] sm:$0xf] %v10255
        %10320 = vst [vmem:[%s729 + $0xd4] sm:$0xf] %v10256
        %10321 = vst [vmem:[%s729 + $0xe0] sm:$0xf] %v10257
        %10322 = vst [vmem:[%s729 + $0xec] sm:$0xf] %v10258
        %10323 = vst [vmem:[%s729 + $0xf8] sm:$0xf] %v10259
        %10324 = vst [vmem:[%s729 + $0x104] sm:$0xf] %v10260
        %10325 = vst [vmem:[%s729 + $0x110] sm:$0xf] %v10261
        %10326 = vst [vmem:[%s729 + $0x11c] sm:$0xf] %v10262
        %10327 = vst [vmem:[%s729 + $0x128] sm:$0xf] %v10263
        %10328 = vst [vmem:[%s729 + $0x134] sm:$0xf] %v10264
        %10329 = vst [vmem:[%s729 + $0x140] sm:$0xf] %v10265
        %10330 = vst [vmem:[%s729 + $0x14c] sm:$0xf] %v10266
        %10331 = vst [vmem:[%s729 + $0x158] sm:$0xf] %v10267
        %10332 = vst [vmem:[%s729 + $0x164] sm:$0xf] %v10268
        %10333 = vst [vmem:[%s729 + $0x170] sm:$0xf] %v10269
        %10334 = vst [vmem:[%s729 + $0x17c] sm:$0xf] %v10270
        %v10335 = vld [vmem:[#allocation2] sm:$0xff]
        %v10336 = vld [vmem:[#allocation2 + $0x8] sm:$0xf]
        %v10337 = vld [vmem:[#allocation2 + $0xc] sm:$0xff]
        %v10338 = vld [vmem:[#allocation2 + $0x14] sm:$0xf]
        %v10339 = vld [vmem:[#allocation2 + $0x18] sm:$0xff]
        %v10340 = vld [vmem:[#allocation2 + $0x20] sm:$0xf]
        %v10341 = vld [vmem:[#allocation2 + $0x24] sm:$0xff]
        %v10342 = vld [vmem:[#allocation2 + $0x2c] sm:$0xf]
        %v10343 = vld [vmem:[#allocation2 + $0x30] sm:$0xff]
        %v10344 = vld [vmem:[#allocation2 + $0x38] sm:$0xf]
        %v10345 = vld [vmem:[#allocation2 + $0x3c] sm:$0xff]
        %v10346 = vld [vmem:[#allocation2 + $0x44] sm:$0xf]
        %v10347 = vld [vmem:[#allocation2 + $0x48] sm:$0xff]
        %v10348 = vld [vmem:[#allocation2 + $0x50] sm:$0xf]
        %v10349 = vld [vmem:[#allocation2 + $0x54] sm:$0xff]
        %v10350 = vld [vmem:[#allocation2 + $0x5c] sm:$0xf]
        %v10351 = vld [vmem:[#allocation2 + $0x60] sm:$0xff]
        %v10352 = vld [vmem:[#allocation2 + $0x68] sm:$0xf]
        %v10353 = vld [vmem:[#allocation2 + $0x6c] sm:$0xff]
        %v10354 = vld [vmem:[#allocation2 + $0x74] sm:$0xf]
        %v10355 = vld [vmem:[#allocation2 + $0x78] sm:$0xff]
        %v10356 = vld [vmem:[#allocation2 + $0x80] sm:$0xf]
        %v10357 = vld [vmem:[#allocation2 + $0x84] sm:$0xff]
        %v10358 = vld [vmem:[#allocation2 + $0x8c] sm:$0xf]
        %v10359 = vld [vmem:[#allocation2 + $0x90] sm:$0xff]
        %v10360 = vld [vmem:[#allocation2 + $0x98] sm:$0xf]
        %v10361 = vld [vmem:[#allocation2 + $0x9c] sm:$0xff]
        %v10362 = vld [vmem:[#allocation2 + $0xa4] sm:$0xf]
        %v10363 = vld [vmem:[#allocation2 + $0xa8] sm:$0xff]
        %v10364 = vld [vmem:[#allocation2 + $0xb0] sm:$0xf]
        %v10365 = vld [vmem:[#allocation2 + $0xb4] sm:$0xff]
        %v10366 = vld [vmem:[#allocation2 + $0xbc] sm:$0xf]
        %v10367 = vld [vmem:[#allocation2 + $0xc0] sm:$0xff]
        %v10368 = vld [vmem:[#allocation2 + $0xc8] sm:$0xf]
        %v10369 = vld [vmem:[#allocation2 + $0xcc] sm:$0xff]
        %v10370 = vld [vmem:[#allocation2 + $0xd4] sm:$0xf]
        %v10371 = vld [vmem:[#allocation2 + $0xd8] sm:$0xff]
        %v10372 = vld [vmem:[#allocation2 + $0xe0] sm:$0xf]
        %v10373 = vld [vmem:[#allocation2 + $0xe4] sm:$0xff]
        %v10374 = vld [vmem:[#allocation2 + $0xec] sm:$0xf]
        %v10375 = vld [vmem:[#allocation2 + $0xf0] sm:$0xff]
        %v10376 = vld [vmem:[#allocation2 + $0xf8] sm:$0xf]
        %v10377 = vld [vmem:[#allocation2 + $0xfc] sm:$0xff]
        %v10378 = vld [vmem:[#allocation2 + $0x104] sm:$0xf]
        %v10379 = vld [vmem:[#allocation2 + $0x108] sm:$0xff]
        %v10380 = vld [vmem:[#allocation2 + $0x110] sm:$0xf]
        %v10381 = vld [vmem:[#allocation2 + $0x114] sm:$0xff]
        %v10382 = vld [vmem:[#allocation2 + $0x11c] sm:$0xf]
        %v10383 = vld [vmem:[#allocation2 + $0x120] sm:$0xff]
        %v10384 = vld [vmem:[#allocation2 + $0x128] sm:$0xf]
        %v10385 = vld [vmem:[#allocation2 + $0x12c] sm:$0xff]
        %v10386 = vld [vmem:[#allocation2 + $0x134] sm:$0xf]
        %v10387 = vld [vmem:[#allocation2 + $0x138] sm:$0xff]
        %v10388 = vld [vmem:[#allocation2 + $0x140] sm:$0xf]
        %v10389 = vld [vmem:[#allocation2 + $0x144] sm:$0xff]
        %v10390 = vld [vmem:[#allocation2 + $0x14c] sm:$0xf]
        %v10391 = vld [vmem:[#allocation2 + $0x150] sm:$0xff]
        %v10392 = vld [vmem:[#allocation2 + $0x158] sm:$0xf]
        %v10393 = vld [vmem:[#allocation2 + $0x15c] sm:$0xff]
        %v10394 = vld [vmem:[#allocation2 + $0x164] sm:$0xf]
        %v10395 = vld [vmem:[#allocation2 + $0x168] sm:$0xff]
        %v10396 = vld [vmem:[#allocation2 + $0x170] sm:$0xf]
        %v10397 = vld [vmem:[#allocation2 + $0x174] sm:$0xff]
        %v10398 = vld [vmem:[#allocation2 + $0x17c] sm:$0xf]
        %v10399 = vld [vmem:[#allocation8] sm:$0xf]
        %v10400 = vld [vmem:[#allocation8 + $0x4] sm:$0xf]
        %v10401 = vld [vmem:[#allocation8 + $0x8] sm:$0xf]
        %v10402 = vld [vmem:[#allocation8 + $0xc] sm:$0xf]
        %v10403 = vld [vmem:[#allocation8 + $0x10] sm:$0xf]
        %v10404 = vld [vmem:[#allocation8 + $0x14] sm:$0xf]
        %v10405 = vld [vmem:[#allocation8 + $0x18] sm:$0xf]
        %v10406 = vld [vmem:[#allocation8 + $0x1c] sm:$0xf]
        %v10407 = vld [vmem:[#allocation8 + $0x20] sm:$0xf]
        %v10408 = vld [vmem:[#allocation8 + $0x24] sm:$0xf]
        %v10409 = vld [vmem:[#allocation8 + $0x28] sm:$0xf]
        %v10410 = vld [vmem:[#allocation8 + $0x2c] sm:$0xf]
        %v10411 = vld [vmem:[#allocation8 + $0x30] sm:$0xf]
        %v10412 = vld [vmem:[#allocation8 + $0x34] sm:$0xf]
        %v10413 = vld [vmem:[#allocation8 + $0x38] sm:$0xf]
        %v10414 = vld [vmem:[#allocation8 + $0x3c] sm:$0xf]
        %v10415 = vld [vmem:[#allocation8 + $0x40] sm:$0xf]
        %v10416 = vld [vmem:[#allocation8 + $0x44] sm:$0xf]
        %v10417 = vld [vmem:[#allocation8 + $0x48] sm:$0xf]
        %v10418 = vld [vmem:[#allocation8 + $0x4c] sm:$0xf]
        %v10419 = vld [vmem:[#allocation8 + $0x50] sm:$0xf]
        %v10420 = vld [vmem:[#allocation8 + $0x54] sm:$0xf]
        %v10421 = vld [vmem:[#allocation8 + $0x58] sm:$0xf]
        %v10422 = vld [vmem:[#allocation8 + $0x5c] sm:$0xf]
        %v10423 = vld [vmem:[#allocation8 + $0x60] sm:$0xf]
        %v10424 = vld [vmem:[#allocation8 + $0x64] sm:$0xf]
        %v10425 = vld [vmem:[#allocation8 + $0x68] sm:$0xf]
        %v10426 = vld [vmem:[#allocation8 + $0x6c] sm:$0xf]
        %v10427 = vld [vmem:[#allocation8 + $0x70] sm:$0xf]
        %v10428 = vld [vmem:[#allocation8 + $0x74] sm:$0xf]
        %v10429 = vld [vmem:[#allocation8 + $0x78] sm:$0xf]
        %v10430 = vld [vmem:[#allocation8 + $0x7c] sm:$0xf]
        %v10431 = vld [vmem:[#allocation8 + $0x80] sm:$0xf]
        %v10432 = vld [vmem:[#allocation8 + $0x84] sm:$0xf]
        %v10433 = vld [vmem:[#allocation8 + $0x88] sm:$0xf]
        %v10434 = vld [vmem:[#allocation8 + $0x8c] sm:$0xf]
        %v10435 = vld [vmem:[#allocation8 + $0x90] sm:$0xf]
        %v10436 = vld [vmem:[#allocation8 + $0x94] sm:$0xf]
        %v10437 = vld [vmem:[#allocation8 + $0x98] sm:$0xf]
        %v10438 = vld [vmem:[#allocation8 + $0x9c] sm:$0xf]
        %v10439 = vld [vmem:[#allocation8 + $0xa0] sm:$0xf]
        %v10440 = vld [vmem:[#allocation8 + $0xa4] sm:$0xf]
        %v10441 = vld [vmem:[#allocation8 + $0xa8] sm:$0xf]
        %v10442 = vld [vmem:[#allocation8 + $0xac] sm:$0xf]
        %v10443 = vld [vmem:[#allocation8 + $0xb0] sm:$0xf]
        %v10444 = vld [vmem:[#allocation8 + $0xb4] sm:$0xf]
        %v10445 = vld [vmem:[#allocation8 + $0xb8] sm:$0xf]
        %v10446 = vld [vmem:[#allocation8 + $0xbc] sm:$0xf]
        %v10447 = vld [vmem:[%s729] sm:$0xff]
        %v10448 = vld [vmem:[%s729 + $0x8] sm:$0xf]
        %v10449 = vld [vmem:[%s729 + $0xc] sm:$0xff]
        %v10450 = vld [vmem:[%s729 + $0x14] sm:$0xf]
        %v10451 = vld [vmem:[%s729 + $0x18] sm:$0xff]
        %v10452 = vld [vmem:[%s729 + $0x20] sm:$0xf]
        %v10453 = vld [vmem:[%s729 + $0x24] sm:$0xff]
        %v10454 = vld [vmem:[%s729 + $0x2c] sm:$0xf]
        %v10455 = vld [vmem:[%s729 + $0x30] sm:$0xff]
        %v10456 = vld [vmem:[%s729 + $0x38] sm:$0xf]
        %v10457 = vld [vmem:[%s729 + $0x3c] sm:$0xff]
        %v10458 = vld [vmem:[%s729 + $0x44] sm:$0xf]
        %v10459 = vld [vmem:[%s729 + $0x48] sm:$0xff]
        %v10460 = vld [vmem:[%s729 + $0x50] sm:$0xf]
        %v10461 = vld [vmem:[%s729 + $0x54] sm:$0xff]
        %v10462 = vld [vmem:[%s729 + $0x5c] sm:$0xf]
        %v10463 = vld [vmem:[%s729 + $0x60] sm:$0xff]
        %v10464 = vld [vmem:[%s729 + $0x68] sm:$0xf]
        %v10465 = vld [vmem:[%s729 + $0x6c] sm:$0xff]
        %v10466 = vld [vmem:[%s729 + $0x74] sm:$0xf]
        %v10467 = vld [vmem:[%s729 + $0x78] sm:$0xff]
        %v10468 = vld [vmem:[%s729 + $0x80] sm:$0xf]
        %v10469 = vld [vmem:[%s729 + $0x84] sm:$0xff]
        %v10470 = vld [vmem:[%s729 + $0x8c] sm:$0xf]
        %v10471 = vld [vmem:[%s729 + $0x90] sm:$0xff]
        %v10472 = vld [vmem:[%s729 + $0x98] sm:$0xf]
        %v10473 = vld [vmem:[%s729 + $0x9c] sm:$0xff]
        %v10474 = vld [vmem:[%s729 + $0xa4] sm:$0xf]
        %v10475 = vld [vmem:[%s729 + $0xa8] sm:$0xff]
        %v10476 = vld [vmem:[%s729 + $0xb0] sm:$0xf]
        %v10477 = vld [vmem:[%s729 + $0xb4] sm:$0xff]
        %v10478 = vld [vmem:[%s729 + $0xbc] sm:$0xf]
        %v10479 = vld [vmem:[%s729 + $0xc0] sm:$0xff]
        %v10480 = vld [vmem:[%s729 + $0xc8] sm:$0xf]
        %v10481 = vld [vmem:[%s729 + $0xcc] sm:$0xff]
        %v10482 = vld [vmem:[%s729 + $0xd4] sm:$0xf]
        %v10483 = vld [vmem:[%s729 + $0xd8] sm:$0xff]
        %v10484 = vld [vmem:[%s729 + $0xe0] sm:$0xf]
        %v10485 = vld [vmem:[%s729 + $0xe4] sm:$0xff]
        %v10486 = vld [vmem:[%s729 + $0xec] sm:$0xf]
        %v10487 = vld [vmem:[%s729 + $0xf0] sm:$0xff]
        %v10488 = vld [vmem:[%s729 + $0xf8] sm:$0xf]
        %v10489 = vld [vmem:[%s729 + $0xfc] sm:$0xff]
        %v10490 = vld [vmem:[%s729 + $0x104] sm:$0xf]
        %v10491 = vld [vmem:[%s729 + $0x108] sm:$0xff]
        %v10492 = vld [vmem:[%s729 + $0x110] sm:$0xf]
        %v10493 = vld [vmem:[%s729 + $0x114] sm:$0xff]
        %v10494 = vld [vmem:[%s729 + $0x11c] sm:$0xf]
        %v10495 = vld [vmem:[%s729 + $0x120] sm:$0xff]
        %v10496 = vld [vmem:[%s729 + $0x128] sm:$0xf]
        %v10497 = vld [vmem:[%s729 + $0x12c] sm:$0xff]
        %v10498 = vld [vmem:[%s729 + $0x134] sm:$0xf]
        %v10499 = vld [vmem:[%s729 + $0x138] sm:$0xff]
        %v10500 = vld [vmem:[%s729 + $0x140] sm:$0xf]
        %v10501 = vld [vmem:[%s729 + $0x144] sm:$0xff]
        %v10502 = vld [vmem:[%s729 + $0x14c] sm:$0xf]
        %v10503 = vld [vmem:[%s729 + $0x150] sm:$0xff]
        %v10504 = vld [vmem:[%s729 + $0x158] sm:$0xf]
        %v10505 = vld [vmem:[%s729 + $0x15c] sm:$0xff]
        %v10506 = vld [vmem:[%s729 + $0x164] sm:$0xf]
        %v10507 = vld [vmem:[%s729 + $0x168] sm:$0xff]
        %v10508 = vld [vmem:[%s729 + $0x170] sm:$0xf]
        %v10509 = vld [vmem:[%s729 + $0x174] sm:$0xff]
        %v10510 = vld [vmem:[%s729 + $0x17c] sm:$0xf]
        %v10511 = vld [vmem:[%s4194] sm:$0xf]
        %v10512 = vld [vmem:[%s4194 + $0x4] sm:$0xf]
        %v10513 = vld [vmem:[%s4194 + $0x8] sm:$0xf]
        %v10514 = vld [vmem:[%s4194 + $0xc] sm:$0xf]
        %v10515 = vld [vmem:[%s4194 + $0x10] sm:$0xf]
        %v10516 = vld [vmem:[%s4194 + $0x14] sm:$0xf]
        %v10517 = vld [vmem:[%s4194 + $0x18] sm:$0xf]
        %v10518 = vld [vmem:[%s4194 + $0x1c] sm:$0xf]
        %v10519 = vld [vmem:[%s4194 + $0x20] sm:$0xf]
        %v10520 = vld [vmem:[%s4194 + $0x24] sm:$0xf]
        %v10521 = vld [vmem:[%s4194 + $0x28] sm:$0xf]
        %v10522 = vld [vmem:[%s4194 + $0x2c] sm:$0xf]
        %v10523 = vld [vmem:[%s4194 + $0x30] sm:$0xf]
        %v10524 = vld [vmem:[%s4194 + $0x34] sm:$0xf]
        %v10525 = vld [vmem:[%s4194 + $0x38] sm:$0xf]
        %v10526 = vld [vmem:[%s4194 + $0x3c] sm:$0xf]
        %v10527 = vld [vmem:[%s4194 + $0x40] sm:$0xf]
        %v10528 = vld [vmem:[%s4194 + $0x44] sm:$0xf]
        %v10529 = vld [vmem:[%s4194 + $0x48] sm:$0xf]
        %v10530 = vld [vmem:[%s4194 + $0x4c] sm:$0xf]
        %v10531 = vld [vmem:[%s4194 + $0x50] sm:$0xf]
        %v10532 = vld [vmem:[%s4194 + $0x54] sm:$0xf]
        %v10533 = vld [vmem:[%s4194 + $0x58] sm:$0xf]
        %v10534 = vld [vmem:[%s4194 + $0x5c] sm:$0xf]
        %v10535 = vld [vmem:[%s4194 + $0x60] sm:$0xf]
        %v10536 = vld [vmem:[%s4194 + $0x64] sm:$0xf]
        %v10537 = vld [vmem:[%s4194 + $0x68] sm:$0xf]
        %v10538 = vld [vmem:[%s4194 + $0x6c] sm:$0xf]
        %v10539 = vld [vmem:[%s4194 + $0x70] sm:$0xf]
        %v10540 = vld [vmem:[%s4194 + $0x74] sm:$0xf]
        %v10541 = vld [vmem:[%s4194 + $0x78] sm:$0xf]
        %v10542 = vld [vmem:[%s4194 + $0x7c] sm:$0xf]
        %v10543 = vld [vmem:[%s4194 + $0x80] sm:$0xf]
        %v10544 = vld [vmem:[%s4194 + $0x84] sm:$0xf]
        %v10545 = vld [vmem:[%s4194 + $0x88] sm:$0xf]
        %v10546 = vld [vmem:[%s4194 + $0x8c] sm:$0xf]
        %v10547 = vld [vmem:[%s4194 + $0x90] sm:$0xf]
        %v10548 = vld [vmem:[%s4194 + $0x94] sm:$0xf]
        %v10549 = vld [vmem:[%s4194 + $0x98] sm:$0xf]
        %v10550 = vld [vmem:[%s4194 + $0x9c] sm:$0xf]
        %v10551 = vld [vmem:[%s4194 + $0xa0] sm:$0xf]
        %v10552 = vld [vmem:[%s4194 + $0xa4] sm:$0xf]
        %v10553 = vld [vmem:[%s4194 + $0xa8] sm:$0xf]
        %v10554 = vld [vmem:[%s4194 + $0xac] sm:$0xf]
        %v10555 = vld [vmem:[%s4194 + $0xb0] sm:$0xf]
        %v10556 = vld [vmem:[%s4194 + $0xb4] sm:$0xf]
        %v10557 = vld [vmem:[%s4194 + $0xb8] sm:$0xf]
        %v10558 = vld [vmem:[%s4194 + $0xbc] sm:$0xf]
        %v10623 = vunpack.c.l.b16 %v10447
        %v10624 = vunpack.c.h.b16 %v10447
        %v10625 = vunpack.c.l.b16 %v10448
        %v10626 = vunpack.c.l.b16 %v10449
        %v10627 = vunpack.c.h.b16 %v10449
        %v10628 = vunpack.c.l.b16 %v10450
        %v10629 = vunpack.c.l.b16 %v10451
        %v10630 = vunpack.c.h.b16 %v10451
        %v10631 = vunpack.c.l.b16 %v10452
        %v10632 = vunpack.c.l.b16 %v10453
        %v10633 = vunpack.c.h.b16 %v10453
        %v10634 = vunpack.c.l.b16 %v10454
        %v10635 = vunpack.c.l.b16 %v10455
        %v10636 = vunpack.c.h.b16 %v10455
        %v10637 = vunpack.c.l.b16 %v10456
        %v10638 = vunpack.c.l.b16 %v10457
        %v10639 = vunpack.c.h.b16 %v10457
        %v10640 = vunpack.c.l.b16 %v10458
        %v10641 = vunpack.c.l.b16 %v10459
        %v10642 = vunpack.c.h.b16 %v10459
        %v10643 = vunpack.c.l.b16 %v10460
        %v10644 = vunpack.c.l.b16 %v10461
        %v10645 = vunpack.c.h.b16 %v10461
        %v10646 = vunpack.c.l.b16 %v10462
        %v10647 = vunpack.c.l.b16 %v10463
        %v10648 = vunpack.c.h.b16 %v10463
        %v10649 = vunpack.c.l.b16 %v10464
        %v10650 = vunpack.c.l.b16 %v10465
        %v10651 = vunpack.c.h.b16 %v10465
        %v10652 = vunpack.c.l.b16 %v10466
        %v10653 = vunpack.c.l.b16 %v10467
        %v10654 = vunpack.c.h.b16 %v10467
        %v10655 = vunpack.c.l.b16 %v10468
        %v10656 = vunpack.c.l.b16 %v10469
        %v10657 = vunpack.c.h.b16 %v10469
        %v10658 = vunpack.c.l.b16 %v10470
        %v10659 = vunpack.c.l.b16 %v10471
        %v10660 = vunpack.c.h.b16 %v10471
        %v10661 = vunpack.c.l.b16 %v10472
        %v10662 = vunpack.c.l.b16 %v10473
        %v10663 = vunpack.c.h.b16 %v10473
        %v10664 = vunpack.c.l.b16 %v10474
        %v10665 = vunpack.c.l.b16 %v10475
        %v10666 = vunpack.c.h.b16 %v10475
        %v10667 = vunpack.c.l.b16 %v10476
        %v10668 = vunpack.c.l.b16 %v10477
        %v10669 = vunpack.c.h.b16 %v10477
        %v10670 = vunpack.c.l.b16 %v10478
        %v10671 = vunpack.c.l.b16 %v10479
        %v10672 = vunpack.c.h.b16 %v10479
        %v10673 = vunpack.c.l.b16 %v10480
        %v10674 = vunpack.c.l.b16 %v10481
        %v10675 = vunpack.c.h.b16 %v10481
        %v10676 = vunpack.c.l.b16 %v10482
        %v10677 = vunpack.c.l.b16 %v10483
        %v10678 = vunpack.c.h.b16 %v10483
        %v10679 = vunpack.c.l.b16 %v10484
        %v10680 = vunpack.c.l.b16 %v10485
        %v10681 = vunpack.c.h.b16 %v10485
        %v10682 = vunpack.c.l.b16 %v10486
        %v10683 = vunpack.c.l.b16 %v10487
        %v10684 = vunpack.c.h.b16 %v10487
        %v10685 = vunpack.c.l.b16 %v10488
        %v10686 = vunpack.c.l.b16 %v10489
        %v10687 = vunpack.c.h.b16 %v10489
        %v10688 = vunpack.c.l.b16 %v10490
        %v10689 = vunpack.c.l.b16 %v10491
        %v10690 = vunpack.c.h.b16 %v10491
        %v10691 = vunpack.c.l.b16 %v10492
        %v10692 = vunpack.c.l.b16 %v10493
        %v10693 = vunpack.c.h.b16 %v10493
        %v10694 = vunpack.c.l.b16 %v10494
        %v10695 = vunpack.c.l.b16 %v10495
        %v10696 = vunpack.c.h.b16 %v10495
        %v10697 = vunpack.c.l.b16 %v10496
        %v10698 = vunpack.c.l.b16 %v10497
        %v10699 = vunpack.c.h.b16 %v10497
        %v10700 = vunpack.c.l.b16 %v10498
        %v10701 = vunpack.c.l.b16 %v10499
        %v10702 = vunpack.c.h.b16 %v10499
        %v10703 = vunpack.c.l.b16 %v10500
        %v10704 = vunpack.c.l.b16 %v10501
        %v10705 = vunpack.c.h.b16 %v10501
        %v10706 = vunpack.c.l.b16 %v10502
        %v10707 = vunpack.c.l.b16 %v10503
        %v10708 = vunpack.c.h.b16 %v10503
        %v10709 = vunpack.c.l.b16 %v10504
        %v10710 = vunpack.c.l.b16 %v10505
        %v10711 = vunpack.c.h.b16 %v10505
        %v10712 = vunpack.c.l.b16 %v10506
        %v10713 = vunpack.c.l.b16 %v10507
        %v10714 = vunpack.c.h.b16 %v10507
        %v10715 = vunpack.c.l.b16 %v10508
        %v10716 = vunpack.c.l.b16 %v10509
        %v10717 = vunpack.c.h.b16 %v10509
        %v10718 = vunpack.c.l.b16 %v10510
        %v10719 = vpack.c.b16 %v10626, %v10623
        %v10720 = vpack.c.b16 %v10627, %v10624
        %v10721 = vpack.c.b16 %v10628, %v10625
        %v10722 = vpack.c.b16 %v10632, %v10629
        %v10723 = vpack.c.b16 %v10633, %v10630
        %v10724 = vpack.c.b16 %v10634, %v10631
        %v10725 = vpack.c.b16 %v10638, %v10635
        %v10726 = vpack.c.b16 %v10639, %v10636
        %v10727 = vpack.c.b16 %v10640, %v10637
        %v10728 = vpack.c.b16 %v10644, %v10641
        %v10729 = vpack.c.b16 %v10645, %v10642
        %v10730 = vpack.c.b16 %v10646, %v10643
        %v10731 = vpack.c.b16 %v10650, %v10647
        %v10732 = vpack.c.b16 %v10651, %v10648
        %v10733 = vpack.c.b16 %v10652, %v10649
        %v10734 = vpack.c.b16 %v10656, %v10653
        %v10735 = vpack.c.b16 %v10657, %v10654
        %v10736 = vpack.c.b16 %v10658, %v10655
        %v10737 = vpack.c.b16 %v10662, %v10659
        %v10738 = vpack.c.b16 %v10663, %v10660
        %v10739 = vpack.c.b16 %v10664, %v10661
        %v10740 = vpack.c.b16 %v10668, %v10665
        %v10741 = vpack.c.b16 %v10669, %v10666
        %v10742 = vpack.c.b16 %v10670, %v10667
        %v10743 = vpack.c.b16 %v10674, %v10671
        %v10744 = vpack.c.b16 %v10675, %v10672
        %v10745 = vpack.c.b16 %v10676, %v10673
        %v10746 = vpack.c.b16 %v10680, %v10677
        %v10747 = vpack.c.b16 %v10681, %v10678
        %v10748 = vpack.c.b16 %v10682, %v10679
        %v10749 = vpack.c.b16 %v10686, %v10683
        %v10750 = vpack.c.b16 %v10687, %v10684
        %v10751 = vpack.c.b16 %v10688, %v10685
        %v10752 = vpack.c.b16 %v10692, %v10689
        %v10753 = vpack.c.b16 %v10693, %v10690
        %v10754 = vpack.c.b16 %v10694, %v10691
        %v10755 = vpack.c.b16 %v10698, %v10695
        %v10756 = vpack.c.b16 %v10699, %v10696
        %v10757 = vpack.c.b16 %v10700, %v10697
        %v10758 = vpack.c.b16 %v10704, %v10701
        %v10759 = vpack.c.b16 %v10705, %v10702
        %v10760 = vpack.c.b16 %v10706, %v10703
        %v10761 = vpack.c.b16 %v10710, %v10707
        %v10762 = vpack.c.b16 %v10711, %v10708
        %v10763 = vpack.c.b16 %v10712, %v10709
        %v10764 = vpack.c.b16 %v10716, %v10713
        %v10765 = vpack.c.b16 %v10717, %v10714
        %v10766 = vpack.c.b16 %v10718, %v10715
        %v10863 = vunpack.c.l.b16 %v10511
        %v10864 = vunpack.c.l.b16 %v10512
        %v10865 = vunpack.c.l.b16 %v10513
        %v10866 = vunpack.c.l.b16 %v10514
        %v10867 = vunpack.c.l.b16 %v10515
        %v10868 = vunpack.c.l.b16 %v10516
        %v10869 = vunpack.c.l.b16 %v10517
        %v10870 = vunpack.c.l.b16 %v10518
        %v10871 = vunpack.c.l.b16 %v10519
        %v10872 = vunpack.c.l.b16 %v10520
        %v10873 = vunpack.c.l.b16 %v10521
        %v10874 = vunpack.c.l.b16 %v10522
        %v10875 = vunpack.c.l.b16 %v10523
        %v10876 = vunpack.c.l.b16 %v10524
        %v10877 = vunpack.c.l.b16 %v10525
        %v10878 = vunpack.c.l.b16 %v10526
        %v10879 = vunpack.c.l.b16 %v10527
        %v10880 = vunpack.c.l.b16 %v10528
        %v10881 = vunpack.c.l.b16 %v10529
        %v10882 = vunpack.c.l.b16 %v10530
        %v10883 = vunpack.c.l.b16 %v10531
        %v10884 = vunpack.c.l.b16 %v10532
        %v10885 = vunpack.c.l.b16 %v10533
        %v10886 = vunpack.c.l.b16 %v10534
        %v10887 = vunpack.c.l.b16 %v10535
        %v10888 = vunpack.c.l.b16 %v10536
        %v10889 = vunpack.c.l.b16 %v10537
        %v10890 = vunpack.c.l.b16 %v10538
        %v10891 = vunpack.c.l.b16 %v10539
        %v10892 = vunpack.c.l.b16 %v10540
        %v10893 = vunpack.c.l.b16 %v10541
        %v10894 = vunpack.c.l.b16 %v10542
        %v10895 = vunpack.c.l.b16 %v10543
        %v10896 = vunpack.c.l.b16 %v10544
        %v10897 = vunpack.c.l.b16 %v10545
        %v10898 = vunpack.c.l.b16 %v10546
        %v10899 = vunpack.c.l.b16 %v10547
        %v10900 = vunpack.c.l.b16 %v10548
        %v10901 = vunpack.c.l.b16 %v10549
        %v10902 = vunpack.c.l.b16 %v10550
        %v10903 = vunpack.c.l.b16 %v10551
        %v10904 = vunpack.c.l.b16 %v10552
        %v10905 = vunpack.c.l.b16 %v10553
        %v10906 = vunpack.c.l.b16 %v10554
        %v10907 = vunpack.c.l.b16 %v10555
        %v10908 = vunpack.c.l.b16 %v10556
        %v10909 = vunpack.c.l.b16 %v10557
        %v10910 = vunpack.c.l.b16 %v10558
        %v10911 = vpack.c.b16 %v10864, %v10863
        %v10912 = vpack.c.b16 %v10866, %v10865
        %v10913 = vpack.c.b16 %v10868, %v10867
        %v10914 = vpack.c.b16 %v10870, %v10869
        %v10915 = vpack.c.b16 %v10872, %v10871
        %v10916 = vpack.c.b16 %v10874, %v10873
        %v10917 = vpack.c.b16 %v10876, %v10875
        %v10918 = vpack.c.b16 %v10878, %v10877
        %v10919 = vpack.c.b16 %v10880, %v10879
        %v10920 = vpack.c.b16 %v10882, %v10881
        %v10921 = vpack.c.b16 %v10884, %v10883
        %v10922 = vpack.c.b16 %v10886, %v10885
        %v10923 = vpack.c.b16 %v10888, %v10887
        %v10924 = vpack.c.b16 %v10890, %v10889
        %v10925 = vpack.c.b16 %v10892, %v10891
        %v10926 = vpack.c.b16 %v10894, %v10893
        %v10927 = vpack.c.b16 %v10896, %v10895
        %v10928 = vpack.c.b16 %v10898, %v10897
        %v10929 = vpack.c.b16 %v10900, %v10899
        %v10930 = vpack.c.b16 %v10902, %v10901
        %v10931 = vpack.c.b16 %v10904, %v10903
        %v10932 = vpack.c.b16 %v10906, %v10905
        %v10933 = vpack.c.b16 %v10908, %v10907
        %v10934 = vpack.c.b16 %v10910, %v10909
        %10959 = vmatpush.bf16.msra.mxu0 %v10918
        %10960 = vmatpush.bf16.msra.mxu0 %v10917
        %10961 = vmatpush.bf16.msra.mxu0 %v10916
        %10962 = vmatpush.bf16.msra.mxu0 %v10915
        %10963 = vmatpush.bf16.msra.mxu0 %v10914
        %10964 = vmatpush.bf16.msra.mxu0 %v10913
        %10965 = vmatpush.bf16.msra.mxu0 %v10912
        %10966 = vmatpush.bf16.msra.mxu0 %v10911
        %10967 = vmatmul.bf16.gmra.mxu0 %v10719
        %v10968 = vpop.f32.mrf.mxu0
        %v10969 = vadd.f32 0.0, %v10968
        %v10970 = vpop.f32.mrf.mxu0
        %v10971 = vadd.f32 0.0, %v10970
        %10972 = vmatmul.bf16.gmra.mxu0 %v10722
        %v10973 = vpop.f32.mrf.mxu0
        %v10974 = vadd.f32 0.0, %v10973
        %v10975 = vpop.f32.mrf.mxu0
        %v10976 = vadd.f32 0.0, %v10975
        %10977 = vmatmul.bf16.gmra.mxu0 %v10725
        %v10978 = vpop.f32.mrf.mxu0
        %v10979 = vadd.f32 0.0, %v10978
        %v10980 = vpop.f32.mrf.mxu0
        %v10981 = vadd.f32 0.0, %v10980
        %10982 = vmatmul.bf16.gmra.mxu0 %v10728
        %v10983 = vpop.f32.mrf.mxu0
        %v10984 = vadd.f32 0.0, %v10983
        %v10985 = vpop.f32.mrf.mxu0
        %v10986 = vadd.f32 0.0, %v10985
        %10987 = vmatmul.bf16.gmra.mxu0 %v10731
        %v10988 = vpop.f32.mrf.mxu0
        %v10989 = vadd.f32 0.0, %v10988
        %v10990 = vpop.f32.mrf.mxu0
        %v10991 = vadd.f32 0.0, %v10990
        %10992 = vmatmul.bf16.gmra.mxu0 %v10734
        %v10993 = vpop.f32.mrf.mxu0
        %v10994 = vadd.f32 0.0, %v10993
        %v10995 = vpop.f32.mrf.mxu0
        %v10996 = vadd.f32 0.0, %v10995
        %10997 = vmatmul.bf16.gmra.mxu0 %v10737
        %v10998 = vpop.f32.mrf.mxu0
        %v10999 = vadd.f32 0.0, %v10998
        %v11000 = vpop.f32.mrf.mxu0
        %v11001 = vadd.f32 0.0, %v11000
        %11002 = vmatmul.bf16.gmra.mxu0 %v10740
        %v11003 = vpop.f32.mrf.mxu0
        %v11004 = vadd.f32 0.0, %v11003
        %v11005 = vpop.f32.mrf.mxu0
        %v11006 = vadd.f32 0.0, %v11005
        %11007 = vmatmul.bf16.gmra.mxu0 %v10743
        %v11008 = vpop.f32.mrf.mxu0
        %v11009 = vadd.f32 0.0, %v11008
        %v11010 = vpop.f32.mrf.mxu0
        %v11011 = vadd.f32 0.0, %v11010
        %11012 = vmatmul.bf16.gmra.mxu0 %v10746
        %v11013 = vpop.f32.mrf.mxu0
        %v11014 = vadd.f32 0.0, %v11013
        %v11015 = vpop.f32.mrf.mxu0
        %v11016 = vadd.f32 0.0, %v11015
        %11017 = vmatmul.bf16.gmra.mxu0 %v10749
        %v11018 = vpop.f32.mrf.mxu0
        %v11019 = vadd.f32 0.0, %v11018
        %v11020 = vpop.f32.mrf.mxu0
        %v11021 = vadd.f32 0.0, %v11020
        %11022 = vmatmul.bf16.gmra.mxu0 %v10752
        %v11023 = vpop.f32.mrf.mxu0
        %v11024 = vadd.f32 0.0, %v11023
        %v11025 = vpop.f32.mrf.mxu0
        %v11026 = vadd.f32 0.0, %v11025
        %11027 = vmatmul.bf16.gmra.mxu0 %v10755
        %v11028 = vpop.f32.mrf.mxu0
        %v11029 = vadd.f32 0.0, %v11028
        %v11030 = vpop.f32.mrf.mxu0
        %v11031 = vadd.f32 0.0, %v11030
        %11032 = vmatmul.bf16.gmra.mxu0 %v10758
        %v11033 = vpop.f32.mrf.mxu0
        %v11034 = vadd.f32 0.0, %v11033
        %v11035 = vpop.f32.mrf.mxu0
        %v11036 = vadd.f32 0.0, %v11035
        %11037 = vmatmul.bf16.gmra.mxu0 %v10761
        %v11038 = vpop.f32.mrf.mxu0
        %v11039 = vadd.f32 0.0, %v11038
        %v11040 = vpop.f32.mrf.mxu0
        %v11041 = vadd.f32 0.0, %v11040
        %11042 = vmatmul.bf16.gmra.mxu0 %v10764
        %v11043 = vpop.f32.mrf.mxu0
        %v11044 = vadd.f32 0.0, %v11043
        %v11045 = vpop.f32.mrf.mxu0
        %v11046 = vadd.f32 0.0, %v11045
        %11047 = vdwg.mxu0
        %11048 = vmatpush.bf16.msra.mxu0 %v10926
        %11049 = vmatpush.bf16.msra.mxu0 %v10925
        %11050 = vmatpush.bf16.msra.mxu0 %v10924
        %11051 = vmatpush.bf16.msra.mxu0 %v10923
        %11052 = vmatpush.bf16.msra.mxu0 %v10922
        %11053 = vmatpush.bf16.msra.mxu0 %v10921
        %11054 = vmatpush.bf16.msra.mxu0 %v10920
        %11055 = vmatpush.bf16.msra.mxu0 %v10919
        %11056 = vmatmul.bf16.gmra.mxu0 %v10720
        %v11057 = vpop.f32.mrf.mxu0
        %v11058 = vadd.f32 %v10969, %v11057
        %v11059 = vpop.f32.mrf.mxu0
        %v11060 = vadd.f32 %v10971, %v11059
        %11061 = vmatmul.bf16.gmra.mxu0 %v10723
        %v11062 = vpop.f32.mrf.mxu0
        %v11063 = vadd.f32 %v10974, %v11062
        %v11064 = vpop.f32.mrf.mxu0
        %v11065 = vadd.f32 %v10976, %v11064
        %11066 = vmatmul.bf16.gmra.mxu0 %v10726
        %v11067 = vpop.f32.mrf.mxu0
        %v11068 = vadd.f32 %v10979, %v11067
        %v11069 = vpop.f32.mrf.mxu0
        %v11070 = vadd.f32 %v10981, %v11069
        %11071 = vmatmul.bf16.gmra.mxu0 %v10729
        %v11072 = vpop.f32.mrf.mxu0
        %v11073 = vadd.f32 %v10984, %v11072
        %v11074 = vpop.f32.mrf.mxu0
        %v11075 = vadd.f32 %v10986, %v11074
        %11076 = vmatmul.bf16.gmra.mxu0 %v10732
        %v11077 = vpop.f32.mrf.mxu0
        %v11078 = vadd.f32 %v10989, %v11077
        %v11079 = vpop.f32.mrf.mxu0
        %v11080 = vadd.f32 %v10991, %v11079
        %11081 = vmatmul.bf16.gmra.mxu0 %v10735
        %v11082 = vpop.f32.mrf.mxu0
        %v11083 = vadd.f32 %v10994, %v11082
        %v11084 = vpop.f32.mrf.mxu0
        %v11085 = vadd.f32 %v10996, %v11084
        %11086 = vmatmul.bf16.gmra.mxu0 %v10738
        %v11087 = vpop.f32.mrf.mxu0
        %v11088 = vadd.f32 %v10999, %v11087
        %v11089 = vpop.f32.mrf.mxu0
        %v11090 = vadd.f32 %v11001, %v11089
        %11091 = vmatmul.bf16.gmra.mxu0 %v10741
        %v11092 = vpop.f32.mrf.mxu0
        %v11093 = vadd.f32 %v11004, %v11092
        %v11094 = vpop.f32.mrf.mxu0
        %v11095 = vadd.f32 %v11006, %v11094
        %11096 = vmatmul.bf16.gmra.mxu0 %v10744
        %v11097 = vpop.f32.mrf.mxu0
        %v11098 = vadd.f32 %v11009, %v11097
        %v11099 = vpop.f32.mrf.mxu0
        %v11100 = vadd.f32 %v11011, %v11099
        %11101 = vmatmul.bf16.gmra.mxu0 %v10747
        %v11102 = vpop.f32.mrf.mxu0
        %v11103 = vadd.f32 %v11014, %v11102
        %v11104 = vpop.f32.mrf.mxu0
        %v11105 = vadd.f32 %v11016, %v11104
        %11106 = vmatmul.bf16.gmra.mxu0 %v10750
        %v11107 = vpop.f32.mrf.mxu0
        %v11108 = vadd.f32 %v11019, %v11107
        %v11109 = vpop.f32.mrf.mxu0
        %v11110 = vadd.f32 %v11021, %v11109
        %11111 = vmatmul.bf16.gmra.mxu0 %v10753
        %v11112 = vpop.f32.mrf.mxu0
        %v11113 = vadd.f32 %v11024, %v11112
        %v11114 = vpop.f32.mrf.mxu0
        %v11115 = vadd.f32 %v11026, %v11114
        %11116 = vmatmul.bf16.gmra.mxu0 %v10756
        %v11117 = vpop.f32.mrf.mxu0
        %v11118 = vadd.f32 %v11029, %v11117
        %v11119 = vpop.f32.mrf.mxu0
        %v11120 = vadd.f32 %v11031, %v11119
        %11121 = vmatmul.bf16.gmra.mxu0 %v10759
        %v11122 = vpop.f32.mrf.mxu0
        %v11123 = vadd.f32 %v11034, %v11122
        %v11124 = vpop.f32.mrf.mxu0
        %v11125 = vadd.f32 %v11036, %v11124
        %11126 = vmatmul.bf16.gmra.mxu0 %v10762
        %v11127 = vpop.f32.mrf.mxu0
        %v11128 = vadd.f32 %v11039, %v11127
        %v11129 = vpop.f32.mrf.mxu0
        %v11130 = vadd.f32 %v11041, %v11129
        %11131 = vmatmul.bf16.gmra.mxu0 %v10765
        %v11132 = vpop.f32.mrf.mxu0
        %v11133 = vadd.f32 %v11044, %v11132
        %v11134 = vpop.f32.mrf.mxu0
        %v11135 = vadd.f32 %v11046, %v11134
        %11136 = vdwg.mxu0
        %11137 = vmatpush.bf16.msra.mxu0 %v10934
        %11138 = vmatpush.bf16.msra.mxu0 %v10933
        %11139 = vmatpush.bf16.msra.mxu0 %v10932
        %11140 = vmatpush.bf16.msra.mxu0 %v10931
        %11141 = vmatpush.bf16.msra.mxu0 %v10930
        %11142 = vmatpush.bf16.msra.mxu0 %v10929
        %11143 = vmatpush.bf16.msra.mxu0 %v10928
        %11144 = vmatpush.bf16.msra.mxu0 %v10927
        %11145 = vmatmul.bf16.gmra.mxu0 %v10721
        %v11146 = vpop.f32.mrf.mxu0
        %v11147 = vadd.f32 %v11058, %v11146
        %v11148 = vpop.f32.mrf.mxu0
        %v11149 = vadd.f32 %v11060, %v11148
        %11150 = vmatmul.bf16.gmra.mxu0 %v10724
        %v11151 = vpop.f32.mrf.mxu0
        %v11152 = vadd.f32 %v11063, %v11151
        %v11153 = vpop.f32.mrf.mxu0
        %v11154 = vadd.f32 %v11065, %v11153
        %11155 = vmatmul.bf16.gmra.mxu0 %v10727
        %v11156 = vpop.f32.mrf.mxu0
        %v11157 = vadd.f32 %v11068, %v11156
        %v11158 = vpop.f32.mrf.mxu0
        %v11159 = vadd.f32 %v11070, %v11158
        %11160 = vmatmul.bf16.gmra.mxu0 %v10730
        %v11161 = vpop.f32.mrf.mxu0
        %v11162 = vadd.f32 %v11073, %v11161
        %v11163 = vpop.f32.mrf.mxu0
        %v11164 = vadd.f32 %v11075, %v11163
        %11165 = vmatmul.bf16.gmra.mxu0 %v10733
        %v11166 = vpop.f32.mrf.mxu0
        %v11167 = vadd.f32 %v11078, %v11166
        %v11168 = vpop.f32.mrf.mxu0
        %v11169 = vadd.f32 %v11080, %v11168
        %11170 = vmatmul.bf16.gmra.mxu0 %v10736
        %v11171 = vpop.f32.mrf.mxu0
        %v11172 = vadd.f32 %v11083, %v11171
        %v11173 = vpop.f32.mrf.mxu0
        %v11174 = vadd.f32 %v11085, %v11173
        %11175 = vmatmul.bf16.gmra.mxu0 %v10739
        %v11176 = vpop.f32.mrf.mxu0
        %v11177 = vadd.f32 %v11088, %v11176
        %v11178 = vpop.f32.mrf.mxu0
        %v11179 = vadd.f32 %v11090, %v11178
        %11180 = vmatmul.bf16.gmra.mxu0 %v10742
        %v11181 = vpop.f32.mrf.mxu0
        %v11182 = vadd.f32 %v11093, %v11181
        %v11183 = vpop.f32.mrf.mxu0
        %v11184 = vadd.f32 %v11095, %v11183
        %11185 = vmatmul.bf16.gmra.mxu0 %v10745
        %v11186 = vpop.f32.mrf.mxu0
        %v11187 = vadd.f32 %v11098, %v11186
        %v11188 = vpop.f32.mrf.mxu0
        %v11189 = vadd.f32 %v11100, %v11188
        %11190 = vmatmul.bf16.gmra.mxu0 %v10748
        %v11191 = vpop.f32.mrf.mxu0
        %v11192 = vadd.f32 %v11103, %v11191
        %v11193 = vpop.f32.mrf.mxu0
        %v11194 = vadd.f32 %v11105, %v11193
        %11195 = vmatmul.bf16.gmra.mxu0 %v10751
        %v11196 = vpop.f32.mrf.mxu0
        %v11197 = vadd.f32 %v11108, %v11196
        %v11198 = vpop.f32.mrf.mxu0
        %v11199 = vadd.f32 %v11110, %v11198
        %11200 = vmatmul.bf16.gmra.mxu0 %v10754
        %v11201 = vpop.f32.mrf.mxu0
        %v11202 = vadd.f32 %v11113, %v11201
        %v11203 = vpop.f32.mrf.mxu0
        %v11204 = vadd.f32 %v11115, %v11203
        %11205 = vmatmul.bf16.gmra.mxu0 %v10757
        %v11206 = vpop.f32.mrf.mxu0
        %v11207 = vadd.f32 %v11118, %v11206
        %v11208 = vpop.f32.mrf.mxu0
        %v11209 = vadd.f32 %v11120, %v11208
        %11210 = vmatmul.bf16.gmra.mxu0 %v10760
        %v11211 = vpop.f32.mrf.mxu0
        %v11212 = vadd.f32 %v11123, %v11211
        %v11213 = vpop.f32.mrf.mxu0
        %v11214 = vadd.f32 %v11125, %v11213
        %11215 = vmatmul.bf16.gmra.mxu0 %v10763
        %v11216 = vpop.f32.mrf.mxu0
        %v11217 = vadd.f32 %v11128, %v11216
        %v11218 = vpop.f32.mrf.mxu0
        %v11219 = vadd.f32 %v11130, %v11218
        %11220 = vmatmul.bf16.gmra.mxu0 %v10766
        %v11221 = vpop.f32.mrf.mxu0
        %v11222 = vadd.f32 %v11133, %v11221
        %v11223 = vpop.f32.mrf.mxu0
        %v11224 = vadd.f32 %v11135, %v11223
        %11225 = vdwg.mxu0
        %v11290 = vunpack.c.l.b16 %v10335
        %v11291 = vunpack.c.h.b16 %v10335
        %v11292 = vunpack.c.l.b16 %v10336
        %v11293 = vunpack.c.l.b16 %v10337
        %v11294 = vunpack.c.h.b16 %v10337
        %v11295 = vunpack.c.l.b16 %v10338
        %v11296 = vunpack.c.l.b16 %v10339
        %v11297 = vunpack.c.h.b16 %v10339
        %v11298 = vunpack.c.l.b16 %v10340
        %v11299 = vunpack.c.l.b16 %v10341
        %v11300 = vunpack.c.h.b16 %v10341
        %v11301 = vunpack.c.l.b16 %v10342
        %v11302 = vunpack.c.l.b16 %v10343
        %v11303 = vunpack.c.h.b16 %v10343
        %v11304 = vunpack.c.l.b16 %v10344
        %v11305 = vunpack.c.l.b16 %v10345
        %v11306 = vunpack.c.h.b16 %v10345
        %v11307 = vunpack.c.l.b16 %v10346
        %v11308 = vunpack.c.l.b16 %v10347
        %v11309 = vunpack.c.h.b16 %v10347
        %v11310 = vunpack.c.l.b16 %v10348
        %v11311 = vunpack.c.l.b16 %v10349
        %v11312 = vunpack.c.h.b16 %v10349
        %v11313 = vunpack.c.l.b16 %v10350
        %v11314 = vunpack.c.l.b16 %v10351
        %v11315 = vunpack.c.h.b16 %v10351
        %v11316 = vunpack.c.l.b16 %v10352
        %v11317 = vunpack.c.l.b16 %v10353
        %v11318 = vunpack.c.h.b16 %v10353
        %v11319 = vunpack.c.l.b16 %v10354
        %v11320 = vunpack.c.l.b16 %v10355
        %v11321 = vunpack.c.h.b16 %v10355
        %v11322 = vunpack.c.l.b16 %v10356
        %v11323 = vunpack.c.l.b16 %v10357
        %v11324 = vunpack.c.h.b16 %v10357
        %v11325 = vunpack.c.l.b16 %v10358
        %v11326 = vunpack.c.l.b16 %v10359
        %v11327 = vunpack.c.h.b16 %v10359
        %v11328 = vunpack.c.l.b16 %v10360
        %v11329 = vunpack.c.l.b16 %v10361
        %v11330 = vunpack.c.h.b16 %v10361
        %v11331 = vunpack.c.l.b16 %v10362
        %v11332 = vunpack.c.l.b16 %v10363
        %v11333 = vunpack.c.h.b16 %v10363
        %v11334 = vunpack.c.l.b16 %v10364
        %v11335 = vunpack.c.l.b16 %v10365
        %v11336 = vunpack.c.h.b16 %v10365
        %v11337 = vunpack.c.l.b16 %v10366
        %v11338 = vunpack.c.l.b16 %v10367
        %v11339 = vunpack.c.h.b16 %v10367
        %v11340 = vunpack.c.l.b16 %v10368
        %v11341 = vunpack.c.l.b16 %v10369
        %v11342 = vunpack.c.h.b16 %v10369
        %v11343 = vunpack.c.l.b16 %v10370
        %v11344 = vunpack.c.l.b16 %v10371
        %v11345 = vunpack.c.h.b16 %v10371
        %v11346 = vunpack.c.l.b16 %v10372
        %v11347 = vunpack.c.l.b16 %v10373
        %v11348 = vunpack.c.h.b16 %v10373
        %v11349 = vunpack.c.l.b16 %v10374
        %v11350 = vunpack.c.l.b16 %v10375
        %v11351 = vunpack.c.h.b16 %v10375
        %v11352 = vunpack.c.l.b16 %v10376
        %v11353 = vunpack.c.l.b16 %v10377
        %v11354 = vunpack.c.h.b16 %v10377
        %v11355 = vunpack.c.l.b16 %v10378
        %v11356 = vunpack.c.l.b16 %v10379
        %v11357 = vunpack.c.h.b16 %v10379
        %v11358 = vunpack.c.l.b16 %v10380
        %v11359 = vunpack.c.l.b16 %v10381
        %v11360 = vunpack.c.h.b16 %v10381
        %v11361 = vunpack.c.l.b16 %v10382
        %v11362 = vunpack.c.l.b16 %v10383
        %v11363 = vunpack.c.h.b16 %v10383
        %v11364 = vunpack.c.l.b16 %v10384
        %v11365 = vunpack.c.l.b16 %v10385
        %v11366 = vunpack.c.h.b16 %v10385
        %v11367 = vunpack.c.l.b16 %v10386
        %v11368 = vunpack.c.l.b16 %v10387
        %v11369 = vunpack.c.h.b16 %v10387
        %v11370 = vunpack.c.l.b16 %v10388
        %v11371 = vunpack.c.l.b16 %v10389
        %v11372 = vunpack.c.h.b16 %v10389
        %v11373 = vunpack.c.l.b16 %v10390
        %v11374 = vunpack.c.l.b16 %v10391
        %v11375 = vunpack.c.h.b16 %v10391
        %v11376 = vunpack.c.l.b16 %v10392
        %v11377 = vunpack.c.l.b16 %v10393
        %v11378 = vunpack.c.h.b16 %v10393
        %v11379 = vunpack.c.l.b16 %v10394
        %v11380 = vunpack.c.l.b16 %v10395
        %v11381 = vunpack.c.h.b16 %v10395
        %v11382 = vunpack.c.l.b16 %v10396
        %v11383 = vunpack.c.l.b16 %v10397
        %v11384 = vunpack.c.h.b16 %v10397
        %v11385 = vunpack.c.l.b16 %v10398
        %v11386 = vpack.c.b16 %v11293, %v11290
        %v11387 = vpack.c.b16 %v11294, %v11291
        %v11388 = vpack.c.b16 %v11295, %v11292
        %v11389 = vpack.c.b16 %v11299, %v11296
        %v11390 = vpack.c.b16 %v11300, %v11297
        %v11391 = vpack.c.b16 %v11301, %v11298
        %v11392 = vpack.c.b16 %v11305, %v11302
        %v11393 = vpack.c.b16 %v11306, %v11303
        %v11394 = vpack.c.b16 %v11307, %v11304
        %v11395 = vpack.c.b16 %v11311, %v11308
        %v11396 = vpack.c.b16 %v11312, %v11309
        %v11397 = vpack.c.b16 %v11313, %v11310
        %v11398 = vpack.c.b16 %v11317, %v11314
        %v11399 = vpack.c.b16 %v11318, %v11315
        %v11400 = vpack.c.b16 %v11319, %v11316
        %v11401 = vpack.c.b16 %v11323, %v11320
        %v11402 = vpack.c.b16 %v11324, %v11321
        %v11403 = vpack.c.b16 %v11325, %v11322
        %v11404 = vpack.c.b16 %v11329, %v11326
        %v11405 = vpack.c.b16 %v11330, %v11327
        %v11406 = vpack.c.b16 %v11331, %v11328
        %v11407 = vpack.c.b16 %v11335, %v11332
        %v11408 = vpack.c.b16 %v11336, %v11333
        %v11409 = vpack.c.b16 %v11337, %v11334
        %v11410 = vpack.c.b16 %v11341, %v11338
        %v11411 = vpack.c.b16 %v11342, %v11339
        %v11412 = vpack.c.b16 %v11343, %v11340
        %v11413 = vpack.c.b16 %v11347, %v11344
        %v11414 = vpack.c.b16 %v11348, %v11345
        %v11415 = vpack.c.b16 %v11349, %v11346
        %v11416 = vpack.c.b16 %v11353, %v11350
        %v11417 = vpack.c.b16 %v11354, %v11351
        %v11418 = vpack.c.b16 %v11355, %v11352
        %v11419 = vpack.c.b16 %v11359, %v11356
        %v11420 = vpack.c.b16 %v11360, %v11357
        %v11421 = vpack.c.b16 %v11361, %v11358
        %v11422 = vpack.c.b16 %v11365, %v11362
        %v11423 = vpack.c.b16 %v11366, %v11363
        %v11424 = vpack.c.b16 %v11367, %v11364
        %v11425 = vpack.c.b16 %v11371, %v11368
        %v11426 = vpack.c.b16 %v11372, %v11369
        %v11427 = vpack.c.b16 %v11373, %v11370
        %v11428 = vpack.c.b16 %v11377, %v11374
        %v11429 = vpack.c.b16 %v11378, %v11375
        %v11430 = vpack.c.b16 %v11379, %v11376
        %v11431 = vpack.c.b16 %v11383, %v11380
        %v11432 = vpack.c.b16 %v11384, %v11381
        %v11433 = vpack.c.b16 %v11385, %v11382
        %v11530 = vunpack.c.l.b16 %v10399
        %v11531 = vunpack.c.l.b16 %v10400
        %v11532 = vunpack.c.l.b16 %v10401
        %v11533 = vunpack.c.l.b16 %v10402
        %v11534 = vunpack.c.l.b16 %v10403
        %v11535 = vunpack.c.l.b16 %v10404
        %v11536 = vunpack.c.l.b16 %v10405
        %v11537 = vunpack.c.l.b16 %v10406
        %v11538 = vunpack.c.l.b16 %v10407
        %v11539 = vunpack.c.l.b16 %v10408
        %v11540 = vunpack.c.l.b16 %v10409
        %v11541 = vunpack.c.l.b16 %v10410
        %v11542 = vunpack.c.l.b16 %v10411
        %v11543 = vunpack.c.l.b16 %v10412
        %v11544 = vunpack.c.l.b16 %v10413
        %v11545 = vunpack.c.l.b16 %v10414
        %v11546 = vunpack.c.l.b16 %v10415
        %v11547 = vunpack.c.l.b16 %v10416
        %v11548 = vunpack.c.l.b16 %v10417
        %v11549 = vunpack.c.l.b16 %v10418
        %v11550 = vunpack.c.l.b16 %v10419
        %v11551 = vunpack.c.l.b16 %v10420
        %v11552 = vunpack.c.l.b16 %v10421
        %v11553 = vunpack.c.l.b16 %v10422
        %v11554 = vunpack.c.l.b16 %v10423
        %v11555 = vunpack.c.l.b16 %v10424
        %v11556 = vunpack.c.l.b16 %v10425
        %v11557 = vunpack.c.l.b16 %v10426
        %v11558 = vunpack.c.l.b16 %v10427
        %v11559 = vunpack.c.l.b16 %v10428
        %v11560 = vunpack.c.l.b16 %v10429
        %v11561 = vunpack.c.l.b16 %v10430
        %v11562 = vunpack.c.l.b16 %v10431
        %v11563 = vunpack.c.l.b16 %v10432
        %v11564 = vunpack.c.l.b16 %v10433
        %v11565 = vunpack.c.l.b16 %v10434
        %v11566 = vunpack.c.l.b16 %v10435
        %v11567 = vunpack.c.l.b16 %v10436
        %v11568 = vunpack.c.l.b16 %v10437
        %v11569 = vunpack.c.l.b16 %v10438
        %v11570 = vunpack.c.l.b16 %v10439
        %v11571 = vunpack.c.l.b16 %v10440
        %v11572 = vunpack.c.l.b16 %v10441
        %v11573 = vunpack.c.l.b16 %v10442
        %v11574 = vunpack.c.l.b16 %v10443
        %v11575 = vunpack.c.l.b16 %v10444
        %v11576 = vunpack.c.l.b16 %v10445
        %v11577 = vunpack.c.l.b16 %v10446
        %v11578 = vpack.c.b16 %v11531, %v11530
        %v11579 = vpack.c.b16 %v11533, %v11532
        %v11580 = vpack.c.b16 %v11535, %v11534
        %v11581 = vpack.c.b16 %v11537, %v11536
        %v11582 = vpack.c.b16 %v11539, %v11538
        %v11583 = vpack.c.b16 %v11541, %v11540
        %v11584 = vpack.c.b16 %v11543, %v11542
        %v11585 = vpack.c.b16 %v11545, %v11544
        %v11586 = vpack.c.b16 %v11547, %v11546
        %v11587 = vpack.c.b16 %v11549, %v11548
        %v11588 = vpack.c.b16 %v11551, %v11550
        %v11589 = vpack.c.b16 %v11553, %v11552
        %v11590 = vpack.c.b16 %v11555, %v11554
        %v11591 = vpack.c.b16 %v11557, %v11556
        %v11592 = vpack.c.b16 %v11559, %v11558
        %v11593 = vpack.c.b16 %v11561, %v11560
        %v11594 = vpack.c.b16 %v11563, %v11562
        %v11595 = vpack.c.b16 %v11565, %v11564
        %v11596 = vpack.c.b16 %v11567, %v11566
        %v11597 = vpack.c.b16 %v11569, %v11568
        %v11598 = vpack.c.b16 %v11571, %v11570
        %v11599 = vpack.c.b16 %v11573, %v11572
        %v11600 = vpack.c.b16 %v11575, %v11574
        %v11601 = vpack.c.b16 %v11577, %v11576
        %11626 = vmatpush.bf16.msra.mxu0 %v11585
        %11627 = vmatpush.bf16.msra.mxu0 %v11584
        %11628 = vmatpush.bf16.msra.mxu0 %v11583
        %11629 = vmatpush.bf16.msra.mxu0 %v11582
        %11630 = vmatpush.bf16.msra.mxu0 %v11581
        %11631 = vmatpush.bf16.msra.mxu0 %v11580
        %11632 = vmatpush.bf16.msra.mxu0 %v11579
        %11633 = vmatpush.bf16.msra.mxu0 %v11578
        %11634 = vmatmul.bf16.gmra.mxu0 %v11386
        %v11635 = vpop.f32.mrf.mxu0
        %v11636 = vadd.f32 %v11147, %v11635
        %v11637 = vpop.f32.mrf.mxu0
        %v11638 = vadd.f32 %v11149, %v11637
        %11639 = vmatmul.bf16.gmra.mxu0 %v11389
        %v11640 = vpop.f32.mrf.mxu0
        %v11641 = vadd.f32 %v11152, %v11640
        %v11642 = vpop.f32.mrf.mxu0
        %v11643 = vadd.f32 %v11154, %v11642
        %11644 = vmatmul.bf16.gmra.mxu0 %v11392
        %v11645 = vpop.f32.mrf.mxu0
        %v11646 = vadd.f32 %v11157, %v11645
        %v11647 = vpop.f32.mrf.mxu0
        %v11648 = vadd.f32 %v11159, %v11647
        %11649 = vmatmul.bf16.gmra.mxu0 %v11395
        %v11650 = vpop.f32.mrf.mxu0
        %v11651 = vadd.f32 %v11162, %v11650
        %v11652 = vpop.f32.mrf.mxu0
        %v11653 = vadd.f32 %v11164, %v11652
        %11654 = vmatmul.bf16.gmra.mxu0 %v11398
        %v11655 = vpop.f32.mrf.mxu0
        %v11656 = vadd.f32 %v11167, %v11655
        %v11657 = vpop.f32.mrf.mxu0
        %v11658 = vadd.f32 %v11169, %v11657
        %11659 = vmatmul.bf16.gmra.mxu0 %v11401
        %v11660 = vpop.f32.mrf.mxu0
        %v11661 = vadd.f32 %v11172, %v11660
        %v11662 = vpop.f32.mrf.mxu0
        %v11663 = vadd.f32 %v11174, %v11662
        %11664 = vmatmul.bf16.gmra.mxu0 %v11404
        %v11665 = vpop.f32.mrf.mxu0
        %v11666 = vadd.f32 %v11177, %v11665
        %v11667 = vpop.f32.mrf.mxu0
        %v11668 = vadd.f32 %v11179, %v11667
        %11669 = vmatmul.bf16.gmra.mxu0 %v11407
        %v11670 = vpop.f32.mrf.mxu0
        %v11671 = vadd.f32 %v11182, %v11670
        %v11672 = vpop.f32.mrf.mxu0
        %v11673 = vadd.f32 %v11184, %v11672
        %11674 = vmatmul.bf16.gmra.mxu0 %v11410
        %v11675 = vpop.f32.mrf.mxu0
        %v11676 = vadd.f32 %v11187, %v11675
        %v11677 = vpop.f32.mrf.mxu0
        %v11678 = vadd.f32 %v11189, %v11677
        %11679 = vmatmul.bf16.gmra.mxu0 %v11413
        %v11680 = vpop.f32.mrf.mxu0
        %v11681 = vadd.f32 %v11192, %v11680
        %v11682 = vpop.f32.mrf.mxu0
        %v11683 = vadd.f32 %v11194, %v11682
        %11684 = vmatmul.bf16.gmra.mxu0 %v11416
        %v11685 = vpop.f32.mrf.mxu0
        %v11686 = vadd.f32 %v11197, %v11685
        %v11687 = vpop.f32.mrf.mxu0
        %v11688 = vadd.f32 %v11199, %v11687
        %11689 = vmatmul.bf16.gmra.mxu0 %v11419
        %v11690 = vpop.f32.mrf.mxu0
        %v11691 = vadd.f32 %v11202, %v11690
        %v11692 = vpop.f32.mrf.mxu0
        %v11693 = vadd.f32 %v11204, %v11692
        %11694 = vmatmul.bf16.gmra.mxu0 %v11422
        %v11695 = vpop.f32.mrf.mxu0
        %v11696 = vadd.f32 %v11207, %v11695
        %v11697 = vpop.f32.mrf.mxu0
        %v11698 = vadd.f32 %v11209, %v11697
        %11699 = vmatmul.bf16.gmra.mxu0 %v11425
        %v11700 = vpop.f32.mrf.mxu0
        %v11701 = vadd.f32 %v11212, %v11700
        %v11702 = vpop.f32.mrf.mxu0
        %v11703 = vadd.f32 %v11214, %v11702
        %11704 = vmatmul.bf16.gmra.mxu0 %v11428
        %v11705 = vpop.f32.mrf.mxu0
        %v11706 = vadd.f32 %v11217, %v11705
        %v11707 = vpop.f32.mrf.mxu0
        %v11708 = vadd.f32 %v11219, %v11707
        %11709 = vmatmul.bf16.gmra.mxu0 %v11431
        %v11710 = vpop.f32.mrf.mxu0
        %v11711 = vadd.f32 %v11222, %v11710
        %v11712 = vpop.f32.mrf.mxu0
        %v11713 = vadd.f32 %v11224, %v11712
        %11714 = vdwg.mxu0
        %11715 = vmatpush.bf16.msra.mxu0 %v11593
        %11716 = vmatpush.bf16.msra.mxu0 %v11592
        %11717 = vmatpush.bf16.msra.mxu0 %v11591
        %11718 = vmatpush.bf16.msra.mxu0 %v11590
        %11719 = vmatpush.bf16.msra.mxu0 %v11589
        %11720 = vmatpush.bf16.msra.mxu0 %v11588
        %11721 = vmatpush.bf16.msra.mxu0 %v11587
        %11722 = vmatpush.bf16.msra.mxu0 %v11586
        %11723 = vmatmul.bf16.gmra.mxu0 %v11387
        %v11724 = vpop.f32.mrf.mxu0
        %v11725 = vadd.f32 %v11636, %v11724
        %v11726 = vpop.f32.mrf.mxu0
        %v11727 = vadd.f32 %v11638, %v11726
        %11728 = vmatmul.bf16.gmra.mxu0 %v11390
        %v11729 = vpop.f32.mrf.mxu0
        %v11730 = vadd.f32 %v11641, %v11729
        %v11731 = vpop.f32.mrf.mxu0
        %v11732 = vadd.f32 %v11643, %v11731
        %11733 = vmatmul.bf16.gmra.mxu0 %v11393
        %v11734 = vpop.f32.mrf.mxu0
        %v11735 = vadd.f32 %v11646, %v11734
        %v11736 = vpop.f32.mrf.mxu0
        %v11737 = vadd.f32 %v11648, %v11736
        %11738 = vmatmul.bf16.gmra.mxu0 %v11396
        %v11739 = vpop.f32.mrf.mxu0
        %v11740 = vadd.f32 %v11651, %v11739
        %v11741 = vpop.f32.mrf.mxu0
        %v11742 = vadd.f32 %v11653, %v11741
        %11743 = vmatmul.bf16.gmra.mxu0 %v11399
        %v11744 = vpop.f32.mrf.mxu0
        %v11745 = vadd.f32 %v11656, %v11744
        %v11746 = vpop.f32.mrf.mxu0
        %v11747 = vadd.f32 %v11658, %v11746
        %11748 = vmatmul.bf16.gmra.mxu0 %v11402
        %v11749 = vpop.f32.mrf.mxu0
        %v11750 = vadd.f32 %v11661, %v11749
        %v11751 = vpop.f32.mrf.mxu0
        %v11752 = vadd.f32 %v11663, %v11751
        %11753 = vmatmul.bf16.gmra.mxu0 %v11405
        %v11754 = vpop.f32.mrf.mxu0
        %v11755 = vadd.f32 %v11666, %v11754
        %v11756 = vpop.f32.mrf.mxu0
        %v11757 = vadd.f32 %v11668, %v11756
        %11758 = vmatmul.bf16.gmra.mxu0 %v11408
        %v11759 = vpop.f32.mrf.mxu0
        %v11760 = vadd.f32 %v11671, %v11759
        %v11761 = vpop.f32.mrf.mxu0
        %v11762 = vadd.f32 %v11673, %v11761
        %11763 = vmatmul.bf16.gmra.mxu0 %v11411
        %v11764 = vpop.f32.mrf.mxu0
        %v11765 = vadd.f32 %v11676, %v11764
        %v11766 = vpop.f32.mrf.mxu0
        %v11767 = vadd.f32 %v11678, %v11766
        %11768 = vmatmul.bf16.gmra.mxu0 %v11414
        %v11769 = vpop.f32.mrf.mxu0
        %v11770 = vadd.f32 %v11681, %v11769
        %v11771 = vpop.f32.mrf.mxu0
        %v11772 = vadd.f32 %v11683, %v11771
        %11773 = vmatmul.bf16.gmra.mxu0 %v11417
        %v11774 = vpop.f32.mrf.mxu0
        %v11775 = vadd.f32 %v11686, %v11774
        %v11776 = vpop.f32.mrf.mxu0
        %v11777 = vadd.f32 %v11688, %v11776
        %11778 = vmatmul.bf16.gmra.mxu0 %v11420
        %v11779 = vpop.f32.mrf.mxu0
        %v11780 = vadd.f32 %v11691, %v11779
        %v11781 = vpop.f32.mrf.mxu0
        %v11782 = vadd.f32 %v11693, %v11781
        %11783 = vmatmul.bf16.gmra.mxu0 %v11423
        %v11784 = vpop.f32.mrf.mxu0
        %v11785 = vadd.f32 %v11696, %v11784
        %v11786 = vpop.f32.mrf.mxu0
        %v11787 = vadd.f32 %v11698, %v11786
        %11788 = vmatmul.bf16.gmra.mxu0 %v11426
        %v11789 = vpop.f32.mrf.mxu0
        %v11790 = vadd.f32 %v11701, %v11789
        %v11791 = vpop.f32.mrf.mxu0
        %v11792 = vadd.f32 %v11703, %v11791
        %11793 = vmatmul.bf16.gmra.mxu0 %v11429
        %v11794 = vpop.f32.mrf.mxu0
        %v11795 = vadd.f32 %v11706, %v11794
        %v11796 = vpop.f32.mrf.mxu0
        %v11797 = vadd.f32 %v11708, %v11796
        %11798 = vmatmul.bf16.gmra.mxu0 %v11432
        %v11799 = vpop.f32.mrf.mxu0
        %v11800 = vadd.f32 %v11711, %v11799
        %v11801 = vpop.f32.mrf.mxu0
        %v11802 = vadd.f32 %v11713, %v11801
        %11803 = vdwg.mxu0
        %11804 = vmatpush.bf16.msra.mxu0 %v11601
        %11805 = vmatpush.bf16.msra.mxu0 %v11600
        %11806 = vmatpush.bf16.msra.mxu0 %v11599
        %11807 = vmatpush.bf16.msra.mxu0 %v11598
        %11808 = vmatpush.bf16.msra.mxu0 %v11597
        %11809 = vmatpush.bf16.msra.mxu0 %v11596
        %11810 = vmatpush.bf16.msra.mxu0 %v11595
        %11811 = vmatpush.bf16.msra.mxu0 %v11594
        %11812 = vmatmul.bf16.gmra.mxu0 %v11388
        %v11813 = vpop.f32.mrf.mxu0
        %v11814 = vadd.f32 %v11725, %v11813
        %v11815 = vpop.f32.mrf.mxu0
        %v11816 = vadd.f32 %v11727, %v11815
        %11817 = vmatmul.bf16.gmra.mxu0 %v11391
        %v11818 = vpop.f32.mrf.mxu0
        %v11819 = vadd.f32 %v11730, %v11818
        %v11820 = vpop.f32.mrf.mxu0
        %v11821 = vadd.f32 %v11732, %v11820
        %11822 = vmatmul.bf16.gmra.mxu0 %v11394
        %v11823 = vpop.f32.mrf.mxu0
        %v11824 = vadd.f32 %v11735, %v11823
        %v11825 = vpop.f32.mrf.mxu0
        %v11826 = vadd.f32 %v11737, %v11825
        %11827 = vmatmul.bf16.gmra.mxu0 %v11397
        %v11828 = vpop.f32.mrf.mxu0
        %v11829 = vadd.f32 %v11740, %v11828
        %v11830 = vpop.f32.mrf.mxu0
        %v11831 = vadd.f32 %v11742, %v11830
        %11832 = vmatmul.bf16.gmra.mxu0 %v11400
        %v11833 = vpop.f32.mrf.mxu0
        %v11834 = vadd.f32 %v11745, %v11833
        %v11835 = vpop.f32.mrf.mxu0
        %v11836 = vadd.f32 %v11747, %v11835
        %11837 = vmatmul.bf16.gmra.mxu0 %v11403
        %v11838 = vpop.f32.mrf.mxu0
        %v11839 = vadd.f32 %v11750, %v11838
        %v11840 = vpop.f32.mrf.mxu0
        %v11841 = vadd.f32 %v11752, %v11840
        %11842 = vmatmul.bf16.gmra.mxu0 %v11406
        %v11843 = vpop.f32.mrf.mxu0
        %v11844 = vadd.f32 %v11755, %v11843
        %v11845 = vpop.f32.mrf.mxu0
        %v11846 = vadd.f32 %v11757, %v11845
        %11847 = vmatmul.bf16.gmra.mxu0 %v11409
        %v11848 = vpop.f32.mrf.mxu0
        %v11849 = vadd.f32 %v11760, %v11848
        %v11850 = vpop.f32.mrf.mxu0
        %v11851 = vadd.f32 %v11762, %v11850
        %11852 = vmatmul.bf16.gmra.mxu0 %v11412
        %v11853 = vpop.f32.mrf.mxu0
        %v11854 = vadd.f32 %v11765, %v11853
        %v11855 = vpop.f32.mrf.mxu0
        %v11856 = vadd.f32 %v11767, %v11855
        %11857 = vmatmul.bf16.gmra.mxu0 %v11415
        %v11858 = vpop.f32.mrf.mxu0
        %v11859 = vadd.f32 %v11770, %v11858
        %v11860 = vpop.f32.mrf.mxu0
        %v11861 = vadd.f32 %v11772, %v11860
        %11862 = vmatmul.bf16.gmra.mxu0 %v11418
        %v11863 = vpop.f32.mrf.mxu0
        %v11864 = vadd.f32 %v11775, %v11863
        %v11865 = vpop.f32.mrf.mxu0
        %v11866 = vadd.f32 %v11777, %v11865
        %11867 = vmatmul.bf16.gmra.mxu0 %v11421
        %v11868 = vpop.f32.mrf.mxu0
        %v11869 = vadd.f32 %v11780, %v11868
        %v11870 = vpop.f32.mrf.mxu0
        %v11871 = vadd.f32 %v11782, %v11870
        %11872 = vmatmul.bf16.gmra.mxu0 %v11424
        %v11873 = vpop.f32.mrf.mxu0
        %v11874 = vadd.f32 %v11785, %v11873
        %v11875 = vpop.f32.mrf.mxu0
        %v11876 = vadd.f32 %v11787, %v11875
        %11877 = vmatmul.bf16.gmra.mxu0 %v11427
        %v11878 = vpop.f32.mrf.mxu0
        %v11879 = vadd.f32 %v11790, %v11878
        %v11880 = vpop.f32.mrf.mxu0
        %v11881 = vadd.f32 %v11792, %v11880
        %11882 = vmatmul.bf16.gmra.mxu0 %v11430
        %v11883 = vpop.f32.mrf.mxu0
        %v11884 = vadd.f32 %v11795, %v11883
        %v11885 = vpop.f32.mrf.mxu0
        %v11886 = vadd.f32 %v11797, %v11885
        %11887 = vmatmul.bf16.gmra.mxu0 %v11433
        %v11888 = vpop.f32.mrf.mxu0
        %v11889 = vadd.f32 %v11800, %v11888
        %v11890 = vpop.f32.mrf.mxu0
        %v11891 = vadd.f32 %v11802, %v11890
        %11892 = vdwg.mxu0
        %v11893 = vld [vmem:[%s2497] sm:$0xff]
        %v11894 = vld [vmem:[%s2497 + $0x8] sm:$0xf]
        %v11895 = vld [vmem:[%s2497 + $0xc] sm:$0xff]
        %v11896 = vld [vmem:[%s2497 + $0x14] sm:$0xf]
        %v11897 = vld [vmem:[%s2497 + $0x18] sm:$0xff]
        %v11898 = vld [vmem:[%s2497 + $0x20] sm:$0xf]
        %v11899 = vld [vmem:[%s2497 + $0x24] sm:$0xff]
        %v11900 = vld [vmem:[%s2497 + $0x2c] sm:$0xf]
        %v11901 = vld [vmem:[%s2497 + $0x30] sm:$0xff]
        %v11902 = vld [vmem:[%s2497 + $0x38] sm:$0xf]
        %v11903 = vld [vmem:[%s2497 + $0x3c] sm:$0xff]
        %v11904 = vld [vmem:[%s2497 + $0x44] sm:$0xf]
        %v11905 = vld [vmem:[%s2497 + $0x48] sm:$0xff]
        %v11906 = vld [vmem:[%s2497 + $0x50] sm:$0xf]
        %v11907 = vld [vmem:[%s2497 + $0x54] sm:$0xff]
        %v11908 = vld [vmem:[%s2497 + $0x5c] sm:$0xf]
        %v11909 = vld [vmem:[%s2497 + $0x60] sm:$0xff]
        %v11910 = vld [vmem:[%s2497 + $0x68] sm:$0xf]
        %v11911 = vld [vmem:[%s2497 + $0x6c] sm:$0xff]
        %v11912 = vld [vmem:[%s2497 + $0x74] sm:$0xf]
        %v11913 = vld [vmem:[%s2497 + $0x78] sm:$0xff]
        %v11914 = vld [vmem:[%s2497 + $0x80] sm:$0xf]
        %v11915 = vld [vmem:[%s2497 + $0x84] sm:$0xff]
        %v11916 = vld [vmem:[%s2497 + $0x8c] sm:$0xf]
        %v11917 = vld [vmem:[%s2497 + $0x90] sm:$0xff]
        %v11918 = vld [vmem:[%s2497 + $0x98] sm:$0xf]
        %v11919 = vld [vmem:[%s2497 + $0x9c] sm:$0xff]
        %v11920 = vld [vmem:[%s2497 + $0xa4] sm:$0xf]
        %v11921 = vld [vmem:[%s2497 + $0xa8] sm:$0xff]
        %v11922 = vld [vmem:[%s2497 + $0xb0] sm:$0xf]
        %v11923 = vld [vmem:[%s2497 + $0xb4] sm:$0xff]
        %v11924 = vld [vmem:[%s2497 + $0xbc] sm:$0xf]
        %v11925 = vld [vmem:[%s2497 + $0xc0] sm:$0xff]
        %v11926 = vld [vmem:[%s2497 + $0xc8] sm:$0xf]
        %v11927 = vld [vmem:[%s2497 + $0xcc] sm:$0xff]
        %v11928 = vld [vmem:[%s2497 + $0xd4] sm:$0xf]
        %v11929 = vld [vmem:[%s2497 + $0xd8] sm:$0xff]
        %v11930 = vld [vmem:[%s2497 + $0xe0] sm:$0xf]
        %v11931 = vld [vmem:[%s2497 + $0xe4] sm:$0xff]
        %v11932 = vld [vmem:[%s2497 + $0xec] sm:$0xf]
        %v11933 = vld [vmem:[%s2497 + $0xf0] sm:$0xff]
        %v11934 = vld [vmem:[%s2497 + $0xf8] sm:$0xf]
        %v11935 = vld [vmem:[%s2497 + $0xfc] sm:$0xff]
        %v11936 = vld [vmem:[%s2497 + $0x104] sm:$0xf]
        %v11937 = vld [vmem:[%s2497 + $0x108] sm:$0xff]
        %v11938 = vld [vmem:[%s2497 + $0x110] sm:$0xf]
        %v11939 = vld [vmem:[%s2497 + $0x114] sm:$0xff]
        %v11940 = vld [vmem:[%s2497 + $0x11c] sm:$0xf]
        %v11941 = vld [vmem:[%s2497 + $0x120] sm:$0xff]
        %v11942 = vld [vmem:[%s2497 + $0x128] sm:$0xf]
        %v11943 = vld [vmem:[%s2497 + $0x12c] sm:$0xff]
        %v11944 = vld [vmem:[%s2497 + $0x134] sm:$0xf]
        %v11945 = vld [vmem:[%s2497 + $0x138] sm:$0xff]
        %v11946 = vld [vmem:[%s2497 + $0x140] sm:$0xf]
        %v11947 = vld [vmem:[%s2497 + $0x144] sm:$0xff]
        %v11948 = vld [vmem:[%s2497 + $0x14c] sm:$0xf]
        %v11949 = vld [vmem:[%s2497 + $0x150] sm:$0xff]
        %v11950 = vld [vmem:[%s2497 + $0x158] sm:$0xf]
        %v11951 = vld [vmem:[%s2497 + $0x15c] sm:$0xff]
        %v11952 = vld [vmem:[%s2497 + $0x164] sm:$0xf]
        %v11953 = vld [vmem:[%s2497 + $0x168] sm:$0xff]
        %v11954 = vld [vmem:[%s2497 + $0x170] sm:$0xf]
        %v11955 = vld [vmem:[%s2497 + $0x174] sm:$0xff]
        %v11956 = vld [vmem:[%s2497 + $0x17c] sm:$0xf]
        %v11957 = vld [vmem:[%s5641] sm:$0xf]
        %v11958 = vld [vmem:[%s5641 + $0x4] sm:$0xf]
        %v11959 = vld [vmem:[%s5641 + $0x8] sm:$0xf]
        %v11960 = vld [vmem:[%s5641 + $0xc] sm:$0xf]
        %v11961 = vld [vmem:[%s5641 + $0x10] sm:$0xf]
        %v11962 = vld [vmem:[%s5641 + $0x14] sm:$0xf]
        %v11963 = vld [vmem:[%s5641 + $0x18] sm:$0xf]
        %v11964 = vld [vmem:[%s5641 + $0x1c] sm:$0xf]
        %v11965 = vld [vmem:[%s5641 + $0x20] sm:$0xf]
        %v11966 = vld [vmem:[%s5641 + $0x24] sm:$0xf]
        %v11967 = vld [vmem:[%s5641 + $0x28] sm:$0xf]
        %v11968 = vld [vmem:[%s5641 + $0x2c] sm:$0xf]
        %v11969 = vld [vmem:[%s5641 + $0x30] sm:$0xf]
        %v11970 = vld [vmem:[%s5641 + $0x34] sm:$0xf]
        %v11971 = vld [vmem:[%s5641 + $0x38] sm:$0xf]
        %v11972 = vld [vmem:[%s5641 + $0x3c] sm:$0xf]
        %v11973 = vld [vmem:[%s5641 + $0x40] sm:$0xf]
        %v11974 = vld [vmem:[%s5641 + $0x44] sm:$0xf]
        %v11975 = vld [vmem:[%s5641 + $0x48] sm:$0xf]
        %v11976 = vld [vmem:[%s5641 + $0x4c] sm:$0xf]
        %v11977 = vld [vmem:[%s5641 + $0x50] sm:$0xf]
        %v11978 = vld [vmem:[%s5641 + $0x54] sm:$0xf]
        %v11979 = vld [vmem:[%s5641 + $0x58] sm:$0xf]
        %v11980 = vld [vmem:[%s5641 + $0x5c] sm:$0xf]
        %v11981 = vld [vmem:[%s5641 + $0x60] sm:$0xf]
        %v11982 = vld [vmem:[%s5641 + $0x64] sm:$0xf]
        %v11983 = vld [vmem:[%s5641 + $0x68] sm:$0xf]
        %v11984 = vld [vmem:[%s5641 + $0x6c] sm:$0xf]
        %v11985 = vld [vmem:[%s5641 + $0x70] sm:$0xf]
        %v11986 = vld [vmem:[%s5641 + $0x74] sm:$0xf]
        %v11987 = vld [vmem:[%s5641 + $0x78] sm:$0xf]
        %v11988 = vld [vmem:[%s5641 + $0x7c] sm:$0xf]
        %v11989 = vld [vmem:[%s5641 + $0x80] sm:$0xf]
        %v11990 = vld [vmem:[%s5641 + $0x84] sm:$0xf]
        %v11991 = vld [vmem:[%s5641 + $0x88] sm:$0xf]
        %v11992 = vld [vmem:[%s5641 + $0x8c] sm:$0xf]
        %v11993 = vld [vmem:[%s5641 + $0x90] sm:$0xf]
        %v11994 = vld [vmem:[%s5641 + $0x94] sm:$0xf]
        %v11995 = vld [vmem:[%s5641 + $0x98] sm:$0xf]
        %v11996 = vld [vmem:[%s5641 + $0x9c] sm:$0xf]
        %v11997 = vld [vmem:[%s5641 + $0xa0] sm:$0xf]
        %v11998 = vld [vmem:[%s5641 + $0xa4] sm:$0xf]
        %v11999 = vld [vmem:[%s5641 + $0xa8] sm:$0xf]
        %v12000 = vld [vmem:[%s5641 + $0xac] sm:$0xf]
        %v12001 = vld [vmem:[%s5641 + $0xb0] sm:$0xf]
        %v12002 = vld [vmem:[%s5641 + $0xb4] sm:$0xf]
        %v12003 = vld [vmem:[%s5641 + $0xb8] sm:$0xf]
        %v12004 = vld [vmem:[%s5641 + $0xbc] sm:$0xf]
        %v12069 = vunpack.c.l.b16 %v11893
        %v12070 = vunpack.c.h.b16 %v11893
        %v12071 = vunpack.c.l.b16 %v11894
        %v12072 = vunpack.c.l.b16 %v11895
        %v12073 = vunpack.c.h.b16 %v11895
        %v12074 = vunpack.c.l.b16 %v11896
        %v12075 = vunpack.c.l.b16 %v11897
        %v12076 = vunpack.c.h.b16 %v11897
        %v12077 = vunpack.c.l.b16 %v11898
        %v12078 = vunpack.c.l.b16 %v11899
        %v12079 = vunpack.c.h.b16 %v11899
        %v12080 = vunpack.c.l.b16 %v11900
        %v12081 = vunpack.c.l.b16 %v11901
        %v12082 = vunpack.c.h.b16 %v11901
        %v12083 = vunpack.c.l.b16 %v11902
        %v12084 = vunpack.c.l.b16 %v11903
        %v12085 = vunpack.c.h.b16 %v11903
        %v12086 = vunpack.c.l.b16 %v11904
        %v12087 = vunpack.c.l.b16 %v11905
        %v12088 = vunpack.c.h.b16 %v11905
        %v12089 = vunpack.c.l.b16 %v11906
        %v12090 = vunpack.c.l.b16 %v11907
        %v12091 = vunpack.c.h.b16 %v11907
        %v12092 = vunpack.c.l.b16 %v11908
        %v12093 = vunpack.c.l.b16 %v11909
        %v12094 = vunpack.c.h.b16 %v11909
        %v12095 = vunpack.c.l.b16 %v11910
        %v12096 = vunpack.c.l.b16 %v11911
        %v12097 = vunpack.c.h.b16 %v11911
        %v12098 = vunpack.c.l.b16 %v11912
        %v12099 = vunpack.c.l.b16 %v11913
        %v12100 = vunpack.c.h.b16 %v11913
        %v12101 = vunpack.c.l.b16 %v11914
        %v12102 = vunpack.c.l.b16 %v11915
        %v12103 = vunpack.c.h.b16 %v11915
        %v12104 = vunpack.c.l.b16 %v11916
        %v12105 = vunpack.c.l.b16 %v11917
        %v12106 = vunpack.c.h.b16 %v11917
        %v12107 = vunpack.c.l.b16 %v11918
        %v12108 = vunpack.c.l.b16 %v11919
        %v12109 = vunpack.c.h.b16 %v11919
        %v12110 = vunpack.c.l.b16 %v11920
        %v12111 = vunpack.c.l.b16 %v11921
        %v12112 = vunpack.c.h.b16 %v11921
        %v12113 = vunpack.c.l.b16 %v11922
        %v12114 = vunpack.c.l.b16 %v11923
        %v12115 = vunpack.c.h.b16 %v11923
        %v12116 = vunpack.c.l.b16 %v11924
        %v12117 = vunpack.c.l.b16 %v11925
        %v12118 = vunpack.c.h.b16 %v11925
        %v12119 = vunpack.c.l.b16 %v11926
        %v12120 = vunpack.c.l.b16 %v11927
        %v12121 = vunpack.c.h.b16 %v11927
        %v12122 = vunpack.c.l.b16 %v11928
        %v12123 = vunpack.c.l.b16 %v11929
        %v12124 = vunpack.c.h.b16 %v11929
        %v12125 = vunpack.c.l.b16 %v11930
        %v12126 = vunpack.c.l.b16 %v11931
        %v12127 = vunpack.c.h.b16 %v11931
        %v12128 = vunpack.c.l.b16 %v11932
        %v12129 = vunpack.c.l.b16 %v11933
        %v12130 = vunpack.c.h.b16 %v11933
        %v12131 = vunpack.c.l.b16 %v11934
        %v12132 = vunpack.c.l.b16 %v11935
        %v12133 = vunpack.c.h.b16 %v11935
        %v12134 = vunpack.c.l.b16 %v11936
        %v12135 = vunpack.c.l.b16 %v11937
        %v12136 = vunpack.c.h.b16 %v11937
        %v12137 = vunpack.c.l.b16 %v11938
        %v12138 = vunpack.c.l.b16 %v11939
        %v12139 = vunpack.c.h.b16 %v11939
        %v12140 = vunpack.c.l.b16 %v11940
        %v12141 = vunpack.c.l.b16 %v11941
        %v12142 = vunpack.c.h.b16 %v11941
        %v12143 = vunpack.c.l.b16 %v11942
        %v12144 = vunpack.c.l.b16 %v11943
        %v12145 = vunpack.c.h.b16 %v11943
        %v12146 = vunpack.c.l.b16 %v11944
        %v12147 = vunpack.c.l.b16 %v11945
        %v12148 = vunpack.c.h.b16 %v11945
        %v12149 = vunpack.c.l.b16 %v11946
        %v12150 = vunpack.c.l.b16 %v11947
        %v12151 = vunpack.c.h.b16 %v11947
        %v12152 = vunpack.c.l.b16 %v11948
        %v12153 = vunpack.c.l.b16 %v11949
        %v12154 = vunpack.c.h.b16 %v11949
        %v12155 = vunpack.c.l.b16 %v11950
        %v12156 = vunpack.c.l.b16 %v11951
        %v12157 = vunpack.c.h.b16 %v11951
        %v12158 = vunpack.c.l.b16 %v11952
        %v12159 = vunpack.c.l.b16 %v11953
        %v12160 = vunpack.c.h.b16 %v11953
        %v12161 = vunpack.c.l.b16 %v11954
        %v12162 = vunpack.c.l.b16 %v11955
        %v12163 = vunpack.c.h.b16 %v11955
        %v12164 = vunpack.c.l.b16 %v11956
        %v12165 = vpack.c.b16 %v12072, %v12069
        %v12166 = vpack.c.b16 %v12073, %v12070
        %v12167 = vpack.c.b16 %v12074, %v12071
        %v12168 = vpack.c.b16 %v12078, %v12075
        %v12169 = vpack.c.b16 %v12079, %v12076
        %v12170 = vpack.c.b16 %v12080, %v12077
        %v12171 = vpack.c.b16 %v12084, %v12081
        %v12172 = vpack.c.b16 %v12085, %v12082
        %v12173 = vpack.c.b16 %v12086, %v12083
        %v12174 = vpack.c.b16 %v12090, %v12087
        %v12175 = vpack.c.b16 %v12091, %v12088
        %v12176 = vpack.c.b16 %v12092, %v12089
        %v12177 = vpack.c.b16 %v12096, %v12093
        %v12178 = vpack.c.b16 %v12097, %v12094
        %v12179 = vpack.c.b16 %v12098, %v12095
        %v12180 = vpack.c.b16 %v12102, %v12099
        %v12181 = vpack.c.b16 %v12103, %v12100
        %v12182 = vpack.c.b16 %v12104, %v12101
        %v12183 = vpack.c.b16 %v12108, %v12105
        %v12184 = vpack.c.b16 %v12109, %v12106
        %v12185 = vpack.c.b16 %v12110, %v12107
        %v12186 = vpack.c.b16 %v12114, %v12111
        %v12187 = vpack.c.b16 %v12115, %v12112
        %v12188 = vpack.c.b16 %v12116, %v12113
        %v12189 = vpack.c.b16 %v12120, %v12117
        %v12190 = vpack.c.b16 %v12121, %v12118
        %v12191 = vpack.c.b16 %v12122, %v12119
        %v12192 = vpack.c.b16 %v12126, %v12123
        %v12193 = vpack.c.b16 %v12127, %v12124
        %v12194 = vpack.c.b16 %v12128, %v12125
        %v12195 = vpack.c.b16 %v12132, %v12129
        %v12196 = vpack.c.b16 %v12133, %v12130
        %v12197 = vpack.c.b16 %v12134, %v12131
        %v12198 = vpack.c.b16 %v12138, %v12135
        %v12199 = vpack.c.b16 %v12139, %v12136
        %v12200 = vpack.c.b16 %v12140, %v12137
        %v12201 = vpack.c.b16 %v12144, %v12141
        %v12202 = vpack.c.b16 %v12145, %v12142
        %v12203 = vpack.c.b16 %v12146, %v12143
        %v12204 = vpack.c.b16 %v12150, %v12147
        %v12205 = vpack.c.b16 %v12151, %v12148
        %v12206 = vpack.c.b16 %v12152, %v12149
        %v12207 = vpack.c.b16 %v12156, %v12153
        %v12208 = vpack.c.b16 %v12157, %v12154
        %v12209 = vpack.c.b16 %v12158, %v12155
        %v12210 = vpack.c.b16 %v12162, %v12159
        %v12211 = vpack.c.b16 %v12163, %v12160
        %v12212 = vpack.c.b16 %v12164, %v12161
        %v12309 = vunpack.c.l.b16 %v11957
        %v12310 = vunpack.c.l.b16 %v11958
        %v12311 = vunpack.c.l.b16 %v11959
        %v12312 = vunpack.c.l.b16 %v11960
        %v12313 = vunpack.c.l.b16 %v11961
        %v12314 = vunpack.c.l.b16 %v11962
        %v12315 = vunpack.c.l.b16 %v11963
        %v12316 = vunpack.c.l.b16 %v11964
        %v12317 = vunpack.c.l.b16 %v11965
        %v12318 = vunpack.c.l.b16 %v11966
        %v12319 = vunpack.c.l.b16 %v11967
        %v12320 = vunpack.c.l.b16 %v11968
        %v12321 = vunpack.c.l.b16 %v11969
        %v12322 = vunpack.c.l.b16 %v11970
        %v12323 = vunpack.c.l.b16 %v11971
        %v12324 = vunpack.c.l.b16 %v11972
        %v12325 = vunpack.c.l.b16 %v11973
        %v12326 = vunpack.c.l.b16 %v11974
        %v12327 = vunpack.c.l.b16 %v11975
        %v12328 = vunpack.c.l.b16 %v11976
        %v12329 = vunpack.c.l.b16 %v11977
        %v12330 = vunpack.c.l.b16 %v11978
        %v12331 = vunpack.c.l.b16 %v11979
        %v12332 = vunpack.c.l.b16 %v11980
        %v12333 = vunpack.c.l.b16 %v11981
        %v12334 = vunpack.c.l.b16 %v11982
        %v12335 = vunpack.c.l.b16 %v11983
        %v12336 = vunpack.c.l.b16 %v11984
        %v12337 = vunpack.c.l.b16 %v11985
        %v12338 = vunpack.c.l.b16 %v11986
        %v12339 = vunpack.c.l.b16 %v11987
        %v12340 = vunpack.c.l.b16 %v11988
        %v12341 = vunpack.c.l.b16 %v11989
        %v12342 = vunpack.c.l.b16 %v11990
        %v12343 = vunpack.c.l.b16 %v11991
        %v12344 = vunpack.c.l.b16 %v11992
        %v12345 = vunpack.c.l.b16 %v11993
        %v12346 = vunpack.c.l.b16 %v11994
        %v12347 = vunpack.c.l.b16 %v11995
        %v12348 = vunpack.c.l.b16 %v11996
        %v12349 = vunpack.c.l.b16 %v11997
        %v12350 = vunpack.c.l.b16 %v11998
        %v12351 = vunpack.c.l.b16 %v11999
        %v12352 = vunpack.c.l.b16 %v12000
        %v12353 = vunpack.c.l.b16 %v12001
        %v12354 = vunpack.c.l.b16 %v12002
        %v12355 = vunpack.c.l.b16 %v12003
        %v12356 = vunpack.c.l.b16 %v12004
        %v12357 = vpack.c.b16 %v12310, %v12309
        %v12358 = vpack.c.b16 %v12312, %v12311
        %v12359 = vpack.c.b16 %v12314, %v12313
        %v12360 = vpack.c.b16 %v12316, %v12315
        %v12361 = vpack.c.b16 %v12318, %v12317
        %v12362 = vpack.c.b16 %v12320, %v12319
        %v12363 = vpack.c.b16 %v12322, %v12321
        %v12364 = vpack.c.b16 %v12324, %v12323
        %v12365 = vpack.c.b16 %v12326, %v12325
        %v12366 = vpack.c.b16 %v12328, %v12327
        %v12367 = vpack.c.b16 %v12330, %v12329
        %v12368 = vpack.c.b16 %v12332, %v12331
        %v12369 = vpack.c.b16 %v12334, %v12333
        %v12370 = vpack.c.b16 %v12336, %v12335
        %v12371 = vpack.c.b16 %v12338, %v12337
        %v12372 = vpack.c.b16 %v12340, %v12339
        %v12373 = vpack.c.b16 %v12342, %v12341
        %v12374 = vpack.c.b16 %v12344, %v12343
        %v12375 = vpack.c.b16 %v12346, %v12345
        %v12376 = vpack.c.b16 %v12348, %v12347
        %v12377 = vpack.c.b16 %v12350, %v12349
        %v12378 = vpack.c.b16 %v12352, %v12351
        %v12379 = vpack.c.b16 %v12354, %v12353
        %v12380 = vpack.c.b16 %v12356, %v12355
        %12405 = vmatpush.bf16.msra.mxu0 %v12364
        %12406 = vmatpush.bf16.msra.mxu0 %v12363
        %12407 = vmatpush.bf16.msra.mxu0 %v12362
        %12408 = vmatpush.bf16.msra.mxu0 %v12361
        %12409 = vmatpush.bf16.msra.mxu0 %v12360
        %12410 = vmatpush.bf16.msra.mxu0 %v12359
        %12411 = vmatpush.bf16.msra.mxu0 %v12358
        %12412 = vmatpush.bf16.msra.mxu0 %v12357
        %12413 = vmatmul.bf16.gmra.mxu0 %v12165
        %v12414 = vpop.f32.mrf.mxu0
        %v12415 = vadd.f32 0.0, %v12414
        %v12416 = vpop.f32.mrf.mxu0
        %v12417 = vadd.f32 0.0, %v12416
        %12418 = vmatmul.bf16.gmra.mxu0 %v12168
        %v12419 = vpop.f32.mrf.mxu0
        %v12420 = vadd.f32 0.0, %v12419
        %v12421 = vpop.f32.mrf.mxu0
        %v12422 = vadd.f32 0.0, %v12421
        %12423 = vmatmul.bf16.gmra.mxu0 %v12171
        %v12424 = vpop.f32.mrf.mxu0
        %v12425 = vadd.f32 0.0, %v12424
        %v12426 = vpop.f32.mrf.mxu0
        %v12427 = vadd.f32 0.0, %v12426
        %12428 = vmatmul.bf16.gmra.mxu0 %v12174
        %v12429 = vpop.f32.mrf.mxu0
        %v12430 = vadd.f32 0.0, %v12429
        %v12431 = vpop.f32.mrf.mxu0
        %v12432 = vadd.f32 0.0, %v12431
        %12433 = vmatmul.bf16.gmra.mxu0 %v12177
        %v12434 = vpop.f32.mrf.mxu0
        %v12435 = vadd.f32 0.0, %v12434
        %v12436 = vpop.f32.mrf.mxu0
        %v12437 = vadd.f32 0.0, %v12436
        %12438 = vmatmul.bf16.gmra.mxu0 %v12180
        %v12439 = vpop.f32.mrf.mxu0
        %v12440 = vadd.f32 0.0, %v12439
        %v12441 = vpop.f32.mrf.mxu0
        %v12442 = vadd.f32 0.0, %v12441
        %12443 = vmatmul.bf16.gmra.mxu0 %v12183
        %v12444 = vpop.f32.mrf.mxu0
        %v12445 = vadd.f32 0.0, %v12444
        %v12446 = vpop.f32.mrf.mxu0
        %v12447 = vadd.f32 0.0, %v12446
        %12448 = vmatmul.bf16.gmra.mxu0 %v12186
        %v12449 = vpop.f32.mrf.mxu0
        %v12450 = vadd.f32 0.0, %v12449
        %v12451 = vpop.f32.mrf.mxu0
        %v12452 = vadd.f32 0.0, %v12451
        %12453 = vmatmul.bf16.gmra.mxu0 %v12189
        %v12454 = vpop.f32.mrf.mxu0
        %v12455 = vadd.f32 0.0, %v12454
        %v12456 = vpop.f32.mrf.mxu0
        %v12457 = vadd.f32 0.0, %v12456
        %12458 = vmatmul.bf16.gmra.mxu0 %v12192
        %v12459 = vpop.f32.mrf.mxu0
        %v12460 = vadd.f32 0.0, %v12459
        %v12461 = vpop.f32.mrf.mxu0
        %v12462 = vadd.f32 0.0, %v12461
        %12463 = vmatmul.bf16.gmra.mxu0 %v12195
        %v12464 = vpop.f32.mrf.mxu0
        %v12465 = vadd.f32 0.0, %v12464
        %v12466 = vpop.f32.mrf.mxu0
        %v12467 = vadd.f32 0.0, %v12466
        %12468 = vmatmul.bf16.gmra.mxu0 %v12198
        %v12469 = vpop.f32.mrf.mxu0
        %v12470 = vadd.f32 0.0, %v12469
        %v12471 = vpop.f32.mrf.mxu0
        %v12472 = vadd.f32 0.0, %v12471
        %12473 = vmatmul.bf16.gmra.mxu0 %v12201
        %v12474 = vpop.f32.mrf.mxu0
        %v12475 = vadd.f32 0.0, %v12474
        %v12476 = vpop.f32.mrf.mxu0
        %v12477 = vadd.f32 0.0, %v12476
        %12478 = vmatmul.bf16.gmra.mxu0 %v12204
        %v12479 = vpop.f32.mrf.mxu0
        %v12480 = vadd.f32 0.0, %v12479
        %v12481 = vpop.f32.mrf.mxu0
        %v12482 = vadd.f32 0.0, %v12481
        %12483 = vmatmul.bf16.gmra.mxu0 %v12207
        %v12484 = vpop.f32.mrf.mxu0
        %v12485 = vadd.f32 0.0, %v12484
        %v12486 = vpop.f32.mrf.mxu0
        %v12487 = vadd.f32 0.0, %v12486
        %12488 = vmatmul.bf16.gmra.mxu0 %v12210
        %v12489 = vpop.f32.mrf.mxu0
        %v12490 = vadd.f32 0.0, %v12489
        %v12491 = vpop.f32.mrf.mxu0
        %v12492 = vadd.f32 0.0, %v12491
        %12493 = vdwg.mxu0
        %12494 = vmatpush.bf16.msra.mxu0 %v12372
        %12495 = vmatpush.bf16.msra.mxu0 %v12371
        %12496 = vmatpush.bf16.msra.mxu0 %v12370
        %12497 = vmatpush.bf16.msra.mxu0 %v12369
        %12498 = vmatpush.bf16.msra.mxu0 %v12368
        %12499 = vmatpush.bf16.msra.mxu0 %v12367
        %12500 = vmatpush.bf16.msra.mxu0 %v12366
        %12501 = vmatpush.bf16.msra.mxu0 %v12365
        %12502 = vmatmul.bf16.gmra.mxu0 %v12166
        %v12503 = vpop.f32.mrf.mxu0
        %v12504 = vadd.f32 %v12415, %v12503
        %v12505 = vpop.f32.mrf.mxu0
        %v12506 = vadd.f32 %v12417, %v12505
        %12507 = vmatmul.bf16.gmra.mxu0 %v12169
        %v12508 = vpop.f32.mrf.mxu0
        %v12509 = vadd.f32 %v12420, %v12508
        %v12510 = vpop.f32.mrf.mxu0
        %v12511 = vadd.f32 %v12422, %v12510
        %12512 = vmatmul.bf16.gmra.mxu0 %v12172
        %v12513 = vpop.f32.mrf.mxu0
        %v12514 = vadd.f32 %v12425, %v12513
        %v12515 = vpop.f32.mrf.mxu0
        %v12516 = vadd.f32 %v12427, %v12515
        %12517 = vmatmul.bf16.gmra.mxu0 %v12175
        %v12518 = vpop.f32.mrf.mxu0
        %v12519 = vadd.f32 %v12430, %v12518
        %v12520 = vpop.f32.mrf.mxu0
        %v12521 = vadd.f32 %v12432, %v12520
        %12522 = vmatmul.bf16.gmra.mxu0 %v12178
        %v12523 = vpop.f32.mrf.mxu0
        %v12524 = vadd.f32 %v12435, %v12523
        %v12525 = vpop.f32.mrf.mxu0
        %v12526 = vadd.f32 %v12437, %v12525
        %12527 = vmatmul.bf16.gmra.mxu0 %v12181
        %v12528 = vpop.f32.mrf.mxu0
        %v12529 = vadd.f32 %v12440, %v12528
        %v12530 = vpop.f32.mrf.mxu0
        %v12531 = vadd.f32 %v12442, %v12530
        %12532 = vmatmul.bf16.gmra.mxu0 %v12184
        %v12533 = vpop.f32.mrf.mxu0
        %v12534 = vadd.f32 %v12445, %v12533
        %v12535 = vpop.f32.mrf.mxu0
        %v12536 = vadd.f32 %v12447, %v12535
        %12537 = vmatmul.bf16.gmra.mxu0 %v12187
        %v12538 = vpop.f32.mrf.mxu0
        %v12539 = vadd.f32 %v12450, %v12538
        %v12540 = vpop.f32.mrf.mxu0
        %v12541 = vadd.f32 %v12452, %v12540
        %12542 = vmatmul.bf16.gmra.mxu0 %v12190
        %v12543 = vpop.f32.mrf.mxu0
        %v12544 = vadd.f32 %v12455, %v12543
        %v12545 = vpop.f32.mrf.mxu0
        %v12546 = vadd.f32 %v12457, %v12545
        %12547 = vmatmul.bf16.gmra.mxu0 %v12193
        %v12548 = vpop.f32.mrf.mxu0
        %v12549 = vadd.f32 %v12460, %v12548
        %v12550 = vpop.f32.mrf.mxu0
        %v12551 = vadd.f32 %v12462, %v12550
        %12552 = vmatmul.bf16.gmra.mxu0 %v12196
        %v12553 = vpop.f32.mrf.mxu0
        %v12554 = vadd.f32 %v12465, %v12553
        %v12555 = vpop.f32.mrf.mxu0
        %v12556 = vadd.f32 %v12467, %v12555
        %12557 = vmatmul.bf16.gmra.mxu0 %v12199
        %v12558 = vpop.f32.mrf.mxu0
        %v12559 = vadd.f32 %v12470, %v12558
        %v12560 = vpop.f32.mrf.mxu0
        %v12561 = vadd.f32 %v12472, %v12560
        %12562 = vmatmul.bf16.gmra.mxu0 %v12202
        %v12563 = vpop.f32.mrf.mxu0
        %v12564 = vadd.f32 %v12475, %v12563
        %v12565 = vpop.f32.mrf.mxu0
        %v12566 = vadd.f32 %v12477, %v12565
        %12567 = vmatmul.bf16.gmra.mxu0 %v12205
        %v12568 = vpop.f32.mrf.mxu0
        %v12569 = vadd.f32 %v12480, %v12568
        %v12570 = vpop.f32.mrf.mxu0
        %v12571 = vadd.f32 %v12482, %v12570
        %12572 = vmatmul.bf16.gmra.mxu0 %v12208
        %v12573 = vpop.f32.mrf.mxu0
        %v12574 = vadd.f32 %v12485, %v12573
        %v12575 = vpop.f32.mrf.mxu0
        %v12576 = vadd.f32 %v12487, %v12575
        %12577 = vmatmul.bf16.gmra.mxu0 %v12211
        %v12578 = vpop.f32.mrf.mxu0
        %v12579 = vadd.f32 %v12490, %v12578
        %v12580 = vpop.f32.mrf.mxu0
        %v12581 = vadd.f32 %v12492, %v12580
        %12582 = vdwg.mxu0
        %12583 = vmatpush.bf16.msra.mxu0 %v12380
        %12584 = vmatpush.bf16.msra.mxu0 %v12379
        %12585 = vmatpush.bf16.msra.mxu0 %v12378
        %12586 = vmatpush.bf16.msra.mxu0 %v12377
        %12587 = vmatpush.bf16.msra.mxu0 %v12376
        %12588 = vmatpush.bf16.msra.mxu0 %v12375
        %12589 = vmatpush.bf16.msra.mxu0 %v12374
        %12590 = vmatpush.bf16.msra.mxu0 %v12373
        %12591 = vmatmul.bf16.gmra.mxu0 %v12167
        %v12592 = vpop.f32.mrf.mxu0
        %v12593 = vadd.f32 %v12504, %v12592
        %v12594 = vpop.f32.mrf.mxu0
        %v12595 = vadd.f32 %v12506, %v12594
        %12596 = vmatmul.bf16.gmra.mxu0 %v12170
        %v12597 = vpop.f32.mrf.mxu0
        %v12598 = vadd.f32 %v12509, %v12597
        %v12599 = vpop.f32.mrf.mxu0
        %v12600 = vadd.f32 %v12511, %v12599
        %12601 = vmatmul.bf16.gmra.mxu0 %v12173
        %v12602 = vpop.f32.mrf.mxu0
        %v12603 = vadd.f32 %v12514, %v12602
        %v12604 = vpop.f32.mrf.mxu0
        %v12605 = vadd.f32 %v12516, %v12604
        %12606 = vmatmul.bf16.gmra.mxu0 %v12176
        %v12607 = vpop.f32.mrf.mxu0
        %v12608 = vadd.f32 %v12519, %v12607
        %v12609 = vpop.f32.mrf.mxu0
        %v12610 = vadd.f32 %v12521, %v12609
        %12611 = vmatmul.bf16.gmra.mxu0 %v12179
        %v12612 = vpop.f32.mrf.mxu0
        %v12613 = vadd.f32 %v12524, %v12612
        %v12614 = vpop.f32.mrf.mxu0
        %v12615 = vadd.f32 %v12526, %v12614
        %12616 = vmatmul.bf16.gmra.mxu0 %v12182
        %v12617 = vpop.f32.mrf.mxu0
        %v12618 = vadd.f32 %v12529, %v12617
        %v12619 = vpop.f32.mrf.mxu0
        %v12620 = vadd.f32 %v12531, %v12619
        %12621 = vmatmul.bf16.gmra.mxu0 %v12185
        %v12622 = vpop.f32.mrf.mxu0
        %v12623 = vadd.f32 %v12534, %v12622
        %v12624 = vpop.f32.mrf.mxu0
        %v12625 = vadd.f32 %v12536, %v12624
        %12626 = vmatmul.bf16.gmra.mxu0 %v12188
        %v12627 = vpop.f32.mrf.mxu0
        %v12628 = vadd.f32 %v12539, %v12627
        %v12629 = vpop.f32.mrf.mxu0
        %v12630 = vadd.f32 %v12541, %v12629
        %12631 = vmatmul.bf16.gmra.mxu0 %v12191
        %v12632 = vpop.f32.mrf.mxu0
        %v12633 = vadd.f32 %v12544, %v12632
        %v12634 = vpop.f32.mrf.mxu0
        %v12635 = vadd.f32 %v12546, %v12634
        %12636 = vmatmul.bf16.gmra.mxu0 %v12194
        %v12637 = vpop.f32.mrf.mxu0
        %v12638 = vadd.f32 %v12549, %v12637
        %v12639 = vpop.f32.mrf.mxu0
        %v12640 = vadd.f32 %v12551, %v12639
        %12641 = vmatmul.bf16.gmra.mxu0 %v12197
        %v12642 = vpop.f32.mrf.mxu0
        %v12643 = vadd.f32 %v12554, %v12642
        %v12644 = vpop.f32.mrf.mxu0
        %v12645 = vadd.f32 %v12556, %v12644
        %12646 = vmatmul.bf16.gmra.mxu0 %v12200
        %v12647 = vpop.f32.mrf.mxu0
        %v12648 = vadd.f32 %v12559, %v12647
        %v12649 = vpop.f32.mrf.mxu0
        %v12650 = vadd.f32 %v12561, %v12649
        %12651 = vmatmul.bf16.gmra.mxu0 %v12203
        %v12652 = vpop.f32.mrf.mxu0
        %v12653 = vadd.f32 %v12564, %v12652
        %v12654 = vpop.f32.mrf.mxu0
        %v12655 = vadd.f32 %v12566, %v12654
        %12656 = vmatmul.bf16.gmra.mxu0 %v12206
        %v12657 = vpop.f32.mrf.mxu0
        %v12658 = vadd.f32 %v12569, %v12657
        %v12659 = vpop.f32.mrf.mxu0
        %v12660 = vadd.f32 %v12571, %v12659
        %12661 = vmatmul.bf16.gmra.mxu0 %v12209
        %v12662 = vpop.f32.mrf.mxu0
        %v12663 = vadd.f32 %v12574, %v12662
        %v12664 = vpop.f32.mrf.mxu0
        %v12665 = vadd.f32 %v12576, %v12664
        %12666 = vmatmul.bf16.gmra.mxu0 %v12212
        %v12667 = vpop.f32.mrf.mxu0
        %v12668 = vadd.f32 %v12579, %v12667
        %v12669 = vpop.f32.mrf.mxu0
        %v12670 = vadd.f32 %v12581, %v12669
        %12671 = vdwg.mxu0
        %v12672 = vadd.f32 %v11814, %v12593
        %v12673 = vadd.f32 %v11816, %v12595
        %v12674 = vadd.f32 %v11819, %v12598
        %v12675 = vadd.f32 %v11821, %v12600
        %v12676 = vadd.f32 %v11824, %v12603
        %v12677 = vadd.f32 %v11826, %v12605
        %v12678 = vadd.f32 %v11829, %v12608
        %v12679 = vadd.f32 %v11831, %v12610
        %v12680 = vadd.f32 %v11834, %v12613
        %v12681 = vadd.f32 %v11836, %v12615
        %v12682 = vadd.f32 %v11839, %v12618
        %v12683 = vadd.f32 %v11841, %v12620
        %v12684 = vadd.f32 %v11844, %v12623
        %v12685 = vadd.f32 %v11846, %v12625
        %v12686 = vadd.f32 %v11849, %v12628
        %v12687 = vadd.f32 %v11851, %v12630
        %v12688 = vadd.f32 %v11854, %v12633
        %v12689 = vadd.f32 %v11856, %v12635
        %v12690 = vadd.f32 %v11859, %v12638
        %v12691 = vadd.f32 %v11861, %v12640
        %v12692 = vadd.f32 %v11864, %v12643
        %v12693 = vadd.f32 %v11866, %v12645
        %v12694 = vadd.f32 %v11869, %v12648
        %v12695 = vadd.f32 %v11871, %v12650
        %v12696 = vadd.f32 %v11874, %v12653
        %v12697 = vadd.f32 %v11876, %v12655
        %v12698 = vadd.f32 %v11879, %v12658
        %v12699 = vadd.f32 %v11881, %v12660
        %v12700 = vadd.f32 %v11884, %v12663
        %v12701 = vadd.f32 %v11886, %v12665
        %v12702 = vadd.f32 %v11889, %v12668
        %v12703 = vadd.f32 %v11891, %v12670
        %v12704 = vld [vmem:[%s4] sm:$0x1]
        %v12706 = vperm.slane %v12704, 0
        %v12708 = vadd.f32 %v12672, %v12706
        %v12709 = vadd.f32 %v12673, %v12706
        %v12710 = vadd.f32 %v12674, %v12706
        %v12711 = vadd.f32 %v12675, %v12706
        %v12712 = vadd.f32 %v12676, %v12706
        %v12713 = vadd.f32 %v12677, %v12706
        %v12714 = vadd.f32 %v12678, %v12706
        %v12715 = vadd.f32 %v12679, %v12706
        %v12716 = vadd.f32 %v12680, %v12706
        %v12717 = vadd.f32 %v12681, %v12706
        %v12718 = vadd.f32 %v12682, %v12706
        %v12719 = vadd.f32 %v12683, %v12706
        %v12720 = vadd.f32 %v12684, %v12706
        %v12721 = vadd.f32 %v12685, %v12706
        %v12722 = vadd.f32 %v12686, %v12706
        %v12723 = vadd.f32 %v12687, %v12706
        %v12724 = vadd.f32 %v12688, %v12706
        %v12725 = vadd.f32 %v12689, %v12706
        %v12726 = vadd.f32 %v12690, %v12706
        %v12727 = vadd.f32 %v12691, %v12706
        %v12728 = vadd.f32 %v12692, %v12706
        %v12729 = vadd.f32 %v12693, %v12706
        %v12730 = vadd.f32 %v12694, %v12706
        %v12731 = vadd.f32 %v12695, %v12706
        %v12732 = vadd.f32 %v12696, %v12706
        %v12733 = vadd.f32 %v12697, %v12706
        %v12734 = vadd.f32 %v12698, %v12706
        %v12735 = vadd.f32 %v12699, %v12706
        %v12736 = vadd.f32 %v12700, %v12706
        %v12737 = vadd.f32 %v12701, %v12706
        %v12738 = vadd.f32 %v12702, %v12706
        %v12739 = vadd.f32 %v12703, %v12706
        %v12740 = vld [vmem:[%s6617] sm:$0xf]
        %v12741 = vld [vmem:[%s6617 + $0x4] sm:$0xf]
        %v12742 = vld [vmem:[%s6617 + $0x8] sm:$0xf]
        %v12743 = vld [vmem:[%s6617 + $0xc] sm:$0xf]
        %v12744 = vld [vmem:[%s6617 + $0x10] sm:$0xf]
        %v12745 = vld [vmem:[%s6617 + $0x14] sm:$0xf]
        %v12746 = vld [vmem:[%s6617 + $0x18] sm:$0xf]
        %v12747 = vld [vmem:[%s6617 + $0x1c] sm:$0xf]
        %v12748 = vld [vmem:[%s6617 + $0x20] sm:$0xf]
        %v12749 = vld [vmem:[%s6617 + $0x24] sm:$0xf]
        %v12750 = vld [vmem:[%s6617 + $0x28] sm:$0xf]
        %v12751 = vld [vmem:[%s6617 + $0x2c] sm:$0xf]
        %v12752 = vld [vmem:[%s6617 + $0x30] sm:$0xf]
        %v12753 = vld [vmem:[%s6617 + $0x34] sm:$0xf]
        %v12754 = vld [vmem:[%s6617 + $0x38] sm:$0xf]
        %v12755 = vld [vmem:[%s6617 + $0x3c] sm:$0xf]
        %v12756 = vld [vmem:[%s6617 + $0x40] sm:$0xf]
        %v12757 = vld [vmem:[%s6617 + $0x44] sm:$0xf]
        %v12758 = vld [vmem:[%s6617 + $0x48] sm:$0xf]
        %v12759 = vld [vmem:[%s6617 + $0x4c] sm:$0xf]
        %v12760 = vld [vmem:[%s6617 + $0x50] sm:$0xf]
        %v12761 = vld [vmem:[%s6617 + $0x54] sm:$0xf]
        %v12762 = vld [vmem:[%s6617 + $0x58] sm:$0xf]
        %v12763 = vld [vmem:[%s6617 + $0x5c] sm:$0xf]
        %v12764 = vld [vmem:[%s6617 + $0x60] sm:$0xf]
        %v12765 = vld [vmem:[%s6617 + $0x64] sm:$0xf]
        %v12766 = vld [vmem:[%s6617 + $0x68] sm:$0xf]
        %v12767 = vld [vmem:[%s6617 + $0x6c] sm:$0xf]
        %v12768 = vld [vmem:[%s6617 + $0x70] sm:$0xf]
        %v12769 = vld [vmem:[%s6617 + $0x74] sm:$0xf]
        %v12770 = vld [vmem:[%s6617 + $0x78] sm:$0xf]
        %v12771 = vld [vmem:[%s6617 + $0x7c] sm:$0xf]
        %v12772 = vunpack.c.l.bf16 %v12740
        %v12773 = vunpack.c.l.bf16 %v12741
        %v12774 = vunpack.c.l.bf16 %v12742
        %v12775 = vunpack.c.l.bf16 %v12743
        %v12776 = vunpack.c.l.bf16 %v12744
        %v12777 = vunpack.c.l.bf16 %v12745
        %v12778 = vunpack.c.l.bf16 %v12746
        %v12779 = vunpack.c.l.bf16 %v12747
        %v12780 = vunpack.c.l.bf16 %v12748
        %v12781 = vunpack.c.l.bf16 %v12749
        %v12782 = vunpack.c.l.bf16 %v12750
        %v12783 = vunpack.c.l.bf16 %v12751
        %v12784 = vunpack.c.l.bf16 %v12752
        %v12785 = vunpack.c.l.bf16 %v12753
        %v12786 = vunpack.c.l.bf16 %v12754
        %v12787 = vunpack.c.l.bf16 %v12755
        %v12788 = vunpack.c.l.bf16 %v12756
        %v12789 = vunpack.c.l.bf16 %v12757
        %v12790 = vunpack.c.l.bf16 %v12758
        %v12791 = vunpack.c.l.bf16 %v12759
        %v12792 = vunpack.c.l.bf16 %v12760
        %v12793 = vunpack.c.l.bf16 %v12761
        %v12794 = vunpack.c.l.bf16 %v12762
        %v12795 = vunpack.c.l.bf16 %v12763
        %v12796 = vunpack.c.l.bf16 %v12764
        %v12797 = vunpack.c.l.bf16 %v12765
        %v12798 = vunpack.c.l.bf16 %v12766
        %v12799 = vunpack.c.l.bf16 %v12767
        %v12800 = vunpack.c.l.bf16 %v12768
        %v12801 = vunpack.c.l.bf16 %v12769
        %v12802 = vunpack.c.l.bf16 %v12770
        %v12803 = vunpack.c.l.bf16 %v12771
        %v12804 = vadd.f32 %v12708, %v12772
        %v12805 = vadd.f32 %v12709, %v12773
        %v12806 = vadd.f32 %v12710, %v12774
        %v12807 = vadd.f32 %v12711, %v12775
        %v12808 = vadd.f32 %v12712, %v12776
        %v12809 = vadd.f32 %v12713, %v12777
        %v12810 = vadd.f32 %v12714, %v12778
        %v12811 = vadd.f32 %v12715, %v12779
        %v12812 = vadd.f32 %v12716, %v12780
        %v12813 = vadd.f32 %v12717, %v12781
        %v12814 = vadd.f32 %v12718, %v12782
        %v12815 = vadd.f32 %v12719, %v12783
        %v12816 = vadd.f32 %v12720, %v12784
        %v12817 = vadd.f32 %v12721, %v12785
        %v12818 = vadd.f32 %v12722, %v12786
        %v12819 = vadd.f32 %v12723, %v12787
        %v12820 = vadd.f32 %v12724, %v12788
        %v12821 = vadd.f32 %v12725, %v12789
        %v12822 = vadd.f32 %v12726, %v12790
        %v12823 = vadd.f32 %v12727, %v12791
        %v12824 = vadd.f32 %v12728, %v12792
        %v12825 = vadd.f32 %v12729, %v12793
        %v12826 = vadd.f32 %v12730, %v12794
        %v12827 = vadd.f32 %v12731, %v12795
        %v12828 = vadd.f32 %v12732, %v12796
        %v12829 = vadd.f32 %v12733, %v12797
        %v12830 = vadd.f32 %v12734, %v12798
        %v12831 = vadd.f32 %v12735, %v12799
        %v12832 = vadd.f32 %v12736, %v12800
        %v12833 = vadd.f32 %v12737, %v12801
        %v12834 = vadd.f32 %v12738, %v12802
        %v12835 = vadd.f32 %v12739, %v12803
        %v12836 = vmax.f32 %v12804, 0.0
        %v12837 = vmax.f32 %v12805, 0.0
        %v12838 = vmax.f32 %v12806, 0.0
        %v12839 = vmax.f32 %v12807, 0.0
        %v12840 = vmax.f32 %v12808, 0.0
        %v12841 = vmax.f32 %v12809, 0.0
        %v12842 = vmax.f32 %v12810, 0.0
        %v12843 = vmax.f32 %v12811, 0.0
        %v12844 = vmax.f32 %v12812, 0.0
        %v12845 = vmax.f32 %v12813, 0.0
        %v12846 = vmax.f32 %v12814, 0.0
        %v12847 = vmax.f32 %v12815, 0.0
        %v12848 = vmax.f32 %v12816, 0.0
        %v12849 = vmax.f32 %v12817, 0.0
        %v12850 = vmax.f32 %v12818, 0.0
        %v12851 = vmax.f32 %v12819, 0.0
        %v12852 = vmax.f32 %v12820, 0.0
        %v12853 = vmax.f32 %v12821, 0.0
        %v12854 = vmax.f32 %v12822, 0.0
        %v12855 = vmax.f32 %v12823, 0.0
        %v12856 = vmax.f32 %v12824, 0.0
        %v12857 = vmax.f32 %v12825, 0.0
        %v12858 = vmax.f32 %v12826, 0.0
        %v12859 = vmax.f32 %v12827, 0.0
        %v12860 = vmax.f32 %v12828, 0.0
        %v12861 = vmax.f32 %v12829, 0.0
        %v12862 = vmax.f32 %v12830, 0.0
        %v12863 = vmax.f32 %v12831, 0.0
        %v12864 = vmax.f32 %v12832, 0.0
        %v12865 = vmax.f32 %v12833, 0.0
        %v12866 = vmax.f32 %v12834, 0.0
        %v12867 = vmax.f32 %v12835, 0.0
        %v12868 = vpack.c.bf16 %v12836, %v12836
        %v12869 = vpack.c.bf16 %v12837, %v12837
        %v12870 = vpack.c.bf16 %v12838, %v12838
        %v12871 = vpack.c.bf16 %v12839, %v12839
        %v12872 = vpack.c.bf16 %v12840, %v12840
        %v12873 = vpack.c.bf16 %v12841, %v12841
        %v12874 = vpack.c.bf16 %v12842, %v12842
        %v12875 = vpack.c.bf16 %v12843, %v12843
        %v12876 = vpack.c.bf16 %v12844, %v12844
        %v12877 = vpack.c.bf16 %v12845, %v12845
        %v12878 = vpack.c.bf16 %v12846, %v12846
        %v12879 = vpack.c.bf16 %v12847, %v12847
        %v12880 = vpack.c.bf16 %v12848, %v12848
        %v12881 = vpack.c.bf16 %v12849, %v12849
        %v12882 = vpack.c.bf16 %v12850, %v12850
        %v12883 = vpack.c.bf16 %v12851, %v12851
        %v12884 = vpack.c.bf16 %v12852, %v12852
        %v12885 = vpack.c.bf16 %v12853, %v12853
        %v12886 = vpack.c.bf16 %v12854, %v12854
        %v12887 = vpack.c.bf16 %v12855, %v12855
        %v12888 = vpack.c.bf16 %v12856, %v12856
        %v12889 = vpack.c.bf16 %v12857, %v12857
        %v12890 = vpack.c.bf16 %v12858, %v12858
        %v12891 = vpack.c.bf16 %v12859, %v12859
        %v12892 = vpack.c.bf16 %v12860, %v12860
        %v12893 = vpack.c.bf16 %v12861, %v12861
        %v12894 = vpack.c.bf16 %v12862, %v12862
        %v12895 = vpack.c.bf16 %v12863, %v12863
        %v12896 = vpack.c.bf16 %v12864, %v12864
        %v12897 = vpack.c.bf16 %v12865, %v12865
        %v12898 = vpack.c.bf16 %v12866, %v12866
        %v12899 = vpack.c.bf16 %v12867, %v12867
        %s12900 = scalar_lea.vmem %s278, 128 [#allocation9]
        %12901 = vst [vmem:[%s12900] sm:$0xf] %v12868
        %12902 = vst [vmem:[%s12900 + $0x4] sm:$0xf] %v12869
        %12903 = vst [vmem:[%s12900 + $0x8] sm:$0xf] %v12870
        %12904 = vst [vmem:[%s12900 + $0xc] sm:$0xf] %v12871
        %12905 = vst [vmem:[%s12900 + $0x10] sm:$0xf] %v12872
        %12906 = vst [vmem:[%s12900 + $0x14] sm:$0xf] %v12873
        %12907 = vst [vmem:[%s12900 + $0x18] sm:$0xf] %v12874
        %12908 = vst [vmem:[%s12900 + $0x1c] sm:$0xf] %v12875
        %12909 = vst [vmem:[%s12900 + $0x20] sm:$0xf] %v12876
        %12910 = vst [vmem:[%s12900 + $0x24] sm:$0xf] %v12877
        %12911 = vst [vmem:[%s12900 + $0x28] sm:$0xf] %v12878
        %12912 = vst [vmem:[%s12900 + $0x2c] sm:$0xf] %v12879
        %12913 = vst [vmem:[%s12900 + $0x30] sm:$0xf] %v12880
        %12914 = vst [vmem:[%s12900 + $0x34] sm:$0xf] %v12881
        %12915 = vst [vmem:[%s12900 + $0x38] sm:$0xf] %v12882
        %12916 = vst [vmem:[%s12900 + $0x3c] sm:$0xf] %v12883
        %12917 = vst [vmem:[%s12900 + $0x40] sm:$0xf] %v12884
        %12918 = vst [vmem:[%s12900 + $0x44] sm:$0xf] %v12885
        %12919 = vst [vmem:[%s12900 + $0x48] sm:$0xf] %v12886
        %12920 = vst [vmem:[%s12900 + $0x4c] sm:$0xf] %v12887
        %12921 = vst [vmem:[%s12900 + $0x50] sm:$0xf] %v12888
        %12922 = vst [vmem:[%s12900 + $0x54] sm:$0xf] %v12889
        %12923 = vst [vmem:[%s12900 + $0x58] sm:$0xf] %v12890
        %12924 = vst [vmem:[%s12900 + $0x5c] sm:$0xf] %v12891
        %12925 = vst [vmem:[%s12900 + $0x60] sm:$0xf] %v12892
        %12926 = vst [vmem:[%s12900 + $0x64] sm:$0xf] %v12893
        %12927 = vst [vmem:[%s12900 + $0x68] sm:$0xf] %v12894
        %12928 = vst [vmem:[%s12900 + $0x6c] sm:$0xf] %v12895
        %12929 = vst [vmem:[%s12900 + $0x70] sm:$0xf] %v12896
        %12930 = vst [vmem:[%s12900 + $0x74] sm:$0xf] %v12897
        %12931 = vst [vmem:[%s12900 + $0x78] sm:$0xf] %v12898
        %12932 = vst [vmem:[%s12900 + $0x7c] sm:$0xf] %v12899
        %s12933 = sand.u32 %s141, 1
        %s12934 = scalar_lea.sflag [#allocation5], %s12933
        %s12935 = sand.u32 %s141, 1
        %s12936 = smul.addr %s12935, 256
        %s12937 = scalar_lea.vmem [#allocation9], %s12936
        // Predicated region
        $region53: #{tpu_custom_call.1} parent=39 // pred_check
          %p12938 = pneg %p151
        $region54: #{tpu_custom_call.1} parent=39 // pred_check_branch
          %12940 = sbr.rel (%p12938) target = $region56
        $region55: #{tpu_custom_call.1} parent=39 // pred_region
          %s12941 = smul.u32 2, %s23
          %12943 = vsyncadd %s12934, 0
          %s12944 = smul.addr %s12941, 32
          %s12945 = smul.addr %s12944, 4
          %s12946 = scalar_lea.hbm %s5, %s12945
          %s12947 = sshll.u32 %s12937, 4
          %s12948 = int_to_ptr.vmem [resolvable:$true] %s12947
          %s12949 = sshll.u32 %s12946, 4
          %s12950 = int_to_ptr.hbm [resolvable:$true] %s12949
          %12955 = dma.vmem_to_hbm [thread:$0]  %s12948, 4096, %s12950, %s12934, 64, 64, 4
        $region56: #{tpu_custom_call.1} parent=39 // pred_fallthru
          _
      $region40: #{tpu_custom_call.1} parent=5 // pred_fallthru
        _
      %p12956 = scmp.le.s32.totalorder 2, %s18
      // Predicated region
      $region57: #{tpu_custom_call.1} parent=5 // pred_check
        %p12957 = pneg %p12956
      $region58: #{tpu_custom_call.1} parent=5 // pred_check_branch
        %12959 = sbr.rel (%p12957) target = $region60
      $region59: #{tpu_custom_call.1} parent=5 // pred_region
        %s12960 = ssub.s32 %s18, 2
        // Predicated region
        $region61: #{tpu_custom_call.1} parent=59 // pred_check
          %p12961 = pneg %p157
        $region62: #{tpu_custom_call.1} parent=59 // pred_check_branch
          %12963 = sbr.rel (%p12961) target = $region64
        $region63: #{tpu_custom_call.1} parent=59 // pred_region
          %s12964 = sand.u32 %s142, 1
          %s12965 = scalar_lea.sflag [#allocation5], %s12964
          %s12966 = sand.u32 %s142, 1
          %s12967 = smul.addr %s12966, 256
          %s12968 = scalar_lea.vmem [#allocation9], %s12967
          %12970 = dma.done %s12965, 4096
        $region64: #{tpu_custom_call.1} parent=59 // pred_fallthru
          _
      $region60: #{tpu_custom_call.1} parent=5 // pred_fallthru
        _
    $region6: #{tpu_custom_call.1} parent=1 // loop_footer
      %s22 = sadd.s32 1, %s18
    $region7: #{tpu_custom_call.1} parent=1 // loop_footer_branch
      %17 = sbr.rel target = $region3
    $region8: #{tpu_custom_call.1} parent=1 // loop_exit
      _
    %12971 = vsyncpa [#allocation4], 1
    %s12972 = scalar_lea.sflag [#allocation4], 1
    %12973 = vsyncpa %s12972, 1
    %12974 = vsyncpa [#allocation7], 1
    %12975 = vsyncpa [#allocation5], 1
    %s12976 = scalar_lea.sflag [#allocation5], 1
    %12977 = vsyncpa %s12976, 1

</llo_original>
